<compile_context>
chip_gen: v6e
topology: v6e:2x2x1
jax: 0.10.0
libtpu: 0.0.40
codegen_flags: <defaults>
</compile_context>

<pallas_src>
import jax
import jax.numpy as jnp
from jax.experimental import pallas as pl
from jax.experimental.pallas import tpu as pltpu

NEG_SLOPE = 0.01   # nn.LeakyReLU default negative_slope
BN_EPS = 1e-5
K_TEMPORAL = 9     # temporal kernel size used by the module


# ----------------------------- kernels --------------------------------------

def _leaky(x):
    return jnp.where(x >= 0, x, NEG_SLOPE * x)


def _make_block_kernel(K, pad, fuse_input_norm, identity_res):
    """Fused residual-block kernel; one batch item (1, T, V*C) per grid step.

    All intermediates stay in VMEM / vregs; the only HBM traffic per step is
    the input block, the (lane-dense) output block and the (revisited, hence
    not re-DMA'd) weights.
    """

    def kernel(*args):
        i = 0
        x_ref = args[i]; i += 1
        if fuse_input_norm:
            dnsc_ref, dnsh_ref = args[i], args[i + 1]; i += 2
        if not identity_res:
            wres_ref = args[i]; i += 1
        w1_ref, sc1_ref, sh1_ref = args[i:i + 3]; i += 3
        wsp_ref, aI_ref, sc2_ref, sh2_ref = args[i:i + 4]; i += 4
        w2_ref, b2_ref, sc3_ref, sh3_ref = args[i:i + 4]; i += 4
        o_ref = args[i]; i += 1
        xp1_ref, xp2_ref = args[i], args[i + 1]

        T = o_ref.shape[1]
        Lo = o_ref.shape[2]
        L1 = w1_ref.shape[2]

        x = x_ref[0].astype(jnp.float32)                       # (T, V*Cin)
        if fuse_input_norm:                                    # data_norm + LReLU
            x = _leaky(x * dnsc_ref[0] + dnsh_ref[0])

        # residual branch: identity or 1x1 conv as block-diagonal matmul
        if identity_res:
            res = x
        else:
            res = jnp.dot(x.astype(jnp.bfloat16), wres_ref[...],
                          preferred_element_type=jnp.float32)  # (T, V*Out)

        # ---- TempConv1 (k=K) -> BN -> LeakyReLU (bias folded into sh1) ------
        # zero-padded copy lives only in VMEM scratch; K contiguous row-slice
        # matmuls accumulate in f32 (no per-tap reshape).
        xp1_ref[...] = jnp.zeros_like(xp1_ref)
        xp1_ref[pl.ds(pad, T), :] = x.astype(xp1_ref.dtype)
        acc = jnp.zeros((T, L1), jnp.float32)
        for k in range(K):
            acc = acc + jnp.dot(
                xp1_ref[pl.ds(k, T), :].astype(jnp.bfloat16), w1_ref[k],
                preferred_element_type=jnp.float32)
        h = _leaky(acc * sc1_ref[0] + sh1_ref[0])              # (T, V*C1)

        # ---- SpecConv: 1x1 conv -> graph prop -> BN -> LeakyReLU ------------
        # graph propagation is one lane-preserving matmul with kron(A*E, I_C);
        # conv bias (times column sums of A*E) is folded into sh2.
        h2 = jnp.dot(h.astype(jnp.bfloat16), wsp_ref[...],
                     preferred_element_type=jnp.float32)
        g = jnp.dot(h2.astype(jnp.bfloat16), aI_ref[...],
                    preferred_element_type=jnp.float32)
        g = _leaky(g * sc2_ref[0] + sh2_ref[0])                # (T, V*Cspec)

        # ---- TempConv2 (k=K) -> LeakyReLU ------------------------------------
        xp2_ref[...] = jnp.zeros_like(xp2_ref)
        xp2_ref[pl.ds(pad, T), :] = g.astype(xp2_ref.dtype)
        acc2 = jnp.zeros((T, Lo), jnp.float32)
        for k in range(K):
            acc2 = acc2 + jnp.dot(
                xp2_ref[pl.ds(k, T), :].astype(jnp.bfloat16), w2_ref[k],
                preferred_element_type=jnp.float32)
        h3 = _leaky(acc2 + b2_ref[0])

        # ---- add residual -> BN -> LeakyReLU (res bias folded into sh3) -----
        y = _leaky((h3 + res) * sc3_ref[0] + sh3_ref[0])
        o_ref[...] = y.reshape(1, T, Lo).astype(o_ref.dtype)

    return kernel


def _fcn_head_kernel(x_ref, w_ref, sc_ref, sh_ref, o_ref):
    # encode head: 1x1 conv (block-diag) -> BN (bias folded) -> mean over time
    y = jnp.dot(x_ref[0].astype(jnp.bfloat16), w_ref[...],
                preferred_element_type=jnp.float32)
    y = y * sc_ref[0] + sh_ref[0]
    o_ref[...] = jnp.mean(y, axis=0, keepdims=True)[None]      # (1, 1, V*out)


# ----------------------------- wrappers --------------------------------------

def _rep_spec(shape):
    n = len(shape)
    return pl.BlockSpec(shape, lambda *_: (0,) * n)


def fused_block(x, blk, dn=None):
    """One pallas_call for a full residual block; grid over batch items."""
    B, T, Lin = x.shape
    pad = (K_TEMPORAL - 1) // 2
    Tp = T + 2 * pad
    Lsp = blk['wsp'].shape[1]
    Lo = blk['w2'].shape[2]
    identity_res = blk['wres'] is None
    fuse_in = dn is not None

    args = [x]
    specs = [pl.BlockSpec((1, T, Lin), lambda i: (i, 0, 0))]
    if fuse_in:
        args += [dn[0], dn[1]]
        specs += [_rep_spec(dn[0].shape), _rep_spec(dn[1].shape)]
    if not identity_res:
        args.append(blk['wres'])
        specs.append(_rep_spec(blk['wres'].shape))
    for name in ('w1', 'sc1', 'sh1', 'wsp', 'aI', 'sc2', 'sh2',
                 'w2', 'b2', 'sc3', 'sh3'):
        args.append(blk[name])
        specs.append(_rep_spec(blk[name].shape))

    return pl.pallas_call(
        _make_block_kernel(K_TEMPORAL, pad, fuse_in, identity_res),
        out_shape=jax.ShapeDtypeStruct((B, T, Lo), jnp.float32),
        grid=(B,),
        in_specs=specs,
        out_specs=pl.BlockSpec((1, T, Lo), lambda i: (i, 0, 0)),
        scratch_shapes=[pltpu.VMEM((Tp, Lin), jnp.float32),
                        pltpu.VMEM((Tp, Lsp), jnp.float32)],
        compiler_params=pltpu.CompilerParams(
            dimension_semantics=("parallel",)),
    )(*args)


def fcn_head(x, w, sc, sh):
    B, T, L = x.shape
    return pl.pallas_call(
        _fcn_head_kernel,
        out_shape=jax.ShapeDtypeStruct((B, 1, L), jnp.float32),
        grid=(B,),
        in_specs=[pl.BlockSpec((1, T, L), lambda i: (i, 0, 0)),
                  _rep_spec((L, L)),
                  _rep_spec((1, L)),
                  _rep_spec((1, L))],
        out_specs=pl.BlockSpec((1, 1, L), lambda i: (i, 0, 0)),
        compiler_params=pltpu.CompilerParams(
            dimension_semantics=("parallel",)),
    )(x, w, sc, sh)


# ----------------------------- model glue ------------------------------------

def get_normalized_adj(A):
    A = A + jnp.eye(A.shape[0], dtype=A.dtype)
    D = jnp.maximum(jnp.sum(A, axis=1), 1e-4)
    diag = 1.0 / jnp.sqrt(D)
    return diag[:, None] * A * diag[None, :]


def init_params(key, arch, V, C_in):
    keys = iter(jax.random.split(key, 256))

    def nk():
        return next(keys)

    def rnd(shape):
        return (0.1 * jax.random.normal(nk(), shape)).astype(jnp.float32)

    def bn(c):
        gamma = 1.0 + 0.1 * jax.random.normal(nk(), (c,))
        beta = 0.1 * jax.random.normal(nk(), (c,))
        mean = 0.1 * jax.random.normal(nk(), (c,))
        var = 1.0 + 0.5 * jax.random.uniform(nk(), (c,))
        scale = (gamma / jnp.sqrt(var + BN_EPS)).astype(jnp.float32)
        shift = (beta - mean * scale).astype(jnp.float32)
        return scale.reshape(1, c), shift.reshape(1, c)

    params = {'dn': bn(C_in * V), 'blocks': []}
    for (c_in, c_out, spec_out, out) in arch:
        params['blocks'].append({
            'w_t1': rnd((K_TEMPORAL, c_in, c_out)), 'b_t1': rnd((1, c_out)),
            'bn1': bn(c_out),
            'w_sp': rnd((c_out, spec_out)), 'b_sp': rnd((1, spec_out)),
            'bn2': bn(spec_out),
            'w_t2': rnd((K_TEMPORAL, spec_out, out)), 'b_t2': rnd((1, out)),
            'w_res': rnd((c_in, out)), 'b_res': rnd((1, out)),
            'bn3': bn(out),
            'E': jnp.ones((V, V), jnp.float32),   # edge_importance init = ones
            'identity_res': (c_in == out),
        })
    out = arch[-1][-1]
    params['w_fcn'] = rnd((out, out))
    params['b_fcn'] = rnd((1, out))
    params['bn_fcn'] = bn(out)
    return params


def prepare_params(params, A_norm, V):
    """Host-side prep: fold conv biases into BN shifts, kron-expand weights to
    the (T, V*C) lane layout, cast matmul weights to bf16."""
    eyeV = jnp.eye(V, dtype=jnp.float32)

    def bdiag(w):                       # (ci, co) -> kron(I_V, w): (V*ci, V*co)
        return jnp.kron(eyeV, w)

    def tile_lane(v):                   # per-channel (1, c) -> per-lane (1, V*c)
        return jnp.tile(v[0], V)[None]

    prep = {'dn_sc': params['dn'][0], 'dn_sh': params['dn'][1], 'blocks': []}
    for blk in params['blocks']:
        csp = blk['w_sp'].shape[1]
        sc1, sh1 = blk['bn1']
        sc2, sh2 = blk['bn2']
        sc3, sh3 = blk['bn3']
        A_eff = A_norm * blk['E']
        colsum = jnp.sum(A_eff, axis=0)             # sum_v A_eff[v, w]

        if blk['identity_res']:
            wres = None
            b_res = jnp.zeros_like(blk['b_res'])
        else:
            wres = bdiag(blk['w_res']).astype(jnp.bfloat16)
            b_res = blk['b_res']

        prep['blocks'].append({
            'wres': wres,
            'w1': jnp.stack([bdiag(blk['w_t1'][k]) for k in range(K_TEMPORAL)]
                            ).astype(jnp.bfloat16),
            'sc1': tile_lane(sc1),
            'sh1': tile_lane(sh1 + blk['b_t1'] * sc1),
            'wsp': bdiag(blk['w_sp']).astype(jnp.bfloat16),
            'aI': jnp.kron(A_eff, jnp.eye(csp, dtype=jnp.float32)
                           ).astype(jnp.bfloat16),
            'sc2': tile_lane(sc2),
            'sh2': (tile_lane(sh2) +
                    tile_lane(sc2 * blk['b_sp']) *
                    jnp.repeat(colsum, csp)[None]),
            'w2': jnp.stack([bdiag(blk['w_t2'][k]) for k in range(K_TEMPORAL)]
                            ).astype(jnp.bfloat16),
            'b2': tile_lane(blk['b_t2']),
            'sc3': tile_lane(sc3),
            'sh3': tile_lane(sh3 + b_res * sc3),
        })

    scf, shf = params['bn_fcn']
    prep['w_fcn'] = bdiag(params['w_fcn']).astype(jnp.bfloat16)
    prep['sc_fcn'] = tile_lane(scf)
    prep['sh_fcn'] = tile_lane(shf + params['b_fcn'] * scf)
    return prep


def temporal_info_graph_forward(X, prep):
    """X: (N, C, T, V, M) as in the PyTorch module; returns (global, local)."""
    N, C, T, V, M = X.shape
    B = N * M
    # (N, C, T, V, M) -> (N, M, T, V, C) -> (B, T, V*C); lane index = v*C + c,
    # matching the BatchNorm1d(V*C) channel ordering of the reference model.
    Xc = jnp.transpose(X, (0, 4, 2, 3, 1)).reshape(B, T, V * C)

    for bi, blk in enumerate(prep['blocks']):
        Xc = fused_block(
            Xc, blk,
            dn=(prep['dn_sc'], prep['dn_sh']) if bi == 0 else None)

    P = fcn_head(Xc, prep['w_fcn'], prep['sc_fcn'], prep['sh_fcn'])  # (B,1,V*out)
    out = prep['w_fcn'].shape[1] // V
    P = P.reshape(N, M, V, out).mean(axis=1)     # (N, V, out), mean over persons
    local = jnp.transpose(P, (0, 2, 1))          # (N, out, V)
    glob = local.mean(axis=-1)                   # (N, out)
    return glob, local


# ----------------------------- main -------------------------------------------

if __name__ == "__main__":
    key = jax.random.PRNGKey(0)
    k_x, k_p = jax.random.split(key)

    # small shapes: N batch, C input channels, T time, V nodes, M persons
    N, C_in, T, V, M = 2, 4, 16, 8, 2
    arch = [(4, 8, 8, 16), (16, 16, 16, 32)]

    X = jax.random.normal(k_x, (N, C_in, T, V, M), dtype=jnp.float32)

    # deterministic ring-graph adjacency, symmetrically normalized
    idx = jnp.arange(V)
    A = jnp.zeros((V, V), jnp.float32).at[idx, (idx + 1) % V].set(1.0)
    A = A + A.T
    A_norm = get_normalized_adj(A)

    params = init_params(k_p, arch, V, C_in)
    prep = prepare_params(params, A_norm, V)

    fwd = jax.jit(lambda x: temporal_info_graph_forward(x, prep))
    glob, local = fwd(X)
    jax.block_until_ready((glob, local))

    assert glob.shape == (N, arch[-1][-1]), glob.shape
    assert local.shape == (N, arch[-1][-1], V), local.shape
    assert bool(jnp.all(jnp.isfinite(glob))) and bool(jnp.all(jnp.isfinite(local)))
    print("KERNEL_OK")
</pallas_src>

<mosaic_0001>
module attributes {stable_mosaic.version = 11 : i64} {
  func.func @kernel(%arg0: i32, %arg1: memref<1x16x128xf32, #tpu.memory_space<vmem>>, %arg2: memref<128x256xbf16, #tpu.memory_space<vmem>>, %arg3: memref<9x128x128xbf16, #tpu.memory_space<vmem>>, %arg4: memref<1x128xf32, #tpu.memory_space<vmem>>, %arg5: memref<1x128xf32, #tpu.memory_space<vmem>>, %arg6: memref<128x128xbf16, #tpu.memory_space<vmem>>, %arg7: memref<128x128xbf16, #tpu.memory_space<vmem>>, %arg8: memref<1x128xf32, #tpu.memory_space<vmem>>, %arg9: memref<1x128xf32, #tpu.memory_space<vmem>>, %arg10: memref<9x128x256xbf16, #tpu.memory_space<vmem>>, %arg11: memref<1x256xf32, #tpu.memory_space<vmem>>, %arg12: memref<1x256xf32, #tpu.memory_space<vmem>>, %arg13: memref<1x256xf32, #tpu.memory_space<vmem>>, %arg14: memref<1x16x256xf32, #tpu.memory_space<vmem>>, %arg15: memref<24x128xf32, #tpu.memory_space<vmem>>, %arg16: memref<24x128xf32, #tpu.memory_space<vmem>>) attributes {dimension_semantics = [#tpu.dimension_semantics<parallel>], iteration_bounds = array<i64: 4>, scalar_prefetch = 0 : i64, scratch_operands = 2 : i64, tpu.core_type = #tpu.core_type<tc>, window_params = [{transform_indices = @transform_0, window_bounds = array<i64: 1, 16, 128>}, {pipeline_mode = #tpu.pipeline_mode<synchronous>, transform_indices = @transform_1, window_bounds = array<i64: 128, 256>}, {pipeline_mode = #tpu.pipeline_mode<synchronous>, transform_indices = @transform_2, window_bounds = array<i64: 9, 128, 128>}, {pipeline_mode = #tpu.pipeline_mode<synchronous>, transform_indices = @transform_3, window_bounds = array<i64: 1, 128>}, {pipeline_mode = #tpu.pipeline_mode<synchronous>, transform_indices = @transform_4, window_bounds = array<i64: 1, 128>}, {pipeline_mode = #tpu.pipeline_mode<synchronous>, transform_indices = @transform_5, window_bounds = array<i64: 128, 128>}, {pipeline_mode = #tpu.pipeline_mode<synchronous>, transform_indices = @transform_6, window_bounds = array<i64: 128, 128>}, {pipeline_mode = #tpu.pipeline_mode<synchronous>, transform_indices = @transform_7, window_bounds = array<i64: 1, 128>}, {pipeline_mode = #tpu.pipeline_mode<synchronous>, transform_indices = @transform_8, window_bounds = array<i64: 1, 128>}, {pipeline_mode = #tpu.pipeline_mode<synchronous>, transform_indices = @transform_9, window_bounds = array<i64: 9, 128, 256>}, {pipeline_mode = #tpu.pipeline_mode<synchronous>, transform_indices = @transform_10, window_bounds = array<i64: 1, 256>}, {pipeline_mode = #tpu.pipeline_mode<synchronous>, transform_indices = @transform_11, window_bounds = array<i64: 1, 256>}, {pipeline_mode = #tpu.pipeline_mode<synchronous>, transform_indices = @transform_12, window_bounds = array<i64: 1, 256>}, {transform_indices = @transform_13, window_bounds = array<i64: 1, 16, 256>}]} {
    %c0 = arith.constant 0 : index
    %c0_0 = arith.constant 0 : index
    %c0_1 = arith.constant 0 : index
    %0 = vector.load %arg1[%c0, %c0_0, %c0_1] : memref<1x16x128xf32, #tpu.memory_space<vmem>>, vector<1x16x128xf32>
    %1 = vector.shape_cast %0 : vector<1x16x128xf32> to vector<16x128xf32>
    %2 = arith.truncf %1 : vector<16x128xf32> to vector<16x128xbf16>
    %c0_2 = arith.constant 0 : index
    %c0_3 = arith.constant 0 : index
    %3 = vector.load %arg2[%c0_2, %c0_3] : memref<128x256xbf16, #tpu.memory_space<vmem>>, vector<128x256xbf16>
    %cst = arith.constant dense<0.000000e+00> : vector<16x256xf32>
    %4 = tpu.matmul %2, %3, %cst {dimension_numbers = #tpu.dot_dimension_numbers<[1], [0], [0], [1], [0, 0, 1, 1], [], []>} : vector<16x128xbf16>, vector<128x256xbf16>, vector<16x256xf32> -> vector<16x256xf32>
    %cst_4 = arith.constant 0.000000e+00 : f32
    %5 = vector.broadcast %cst_4 : f32 to vector<24x128xf32>
    %c0_5 = arith.constant 0 : index
    %c0_6 = arith.constant 0 : index
    %6 = vector.load %arg15[%c0_5, %c0_6] : memref<24x128xf32, #tpu.memory_space<vmem>>, vector<24x128xf32>
    tpu.vector_store %arg15[%c0_5, %c0_6], %5 {strides = array<i32>} : memref<24x128xf32, #tpu.memory_space<vmem>>, vector<24x128xf32>,
    %c4 = arith.constant 4 : index
    %c0_7 = arith.constant 0 : index
    %7 = vector.load %arg15[%c4, %c0_7] : memref<24x128xf32, #tpu.memory_space<vmem>>, vector<16x128xf32>
    tpu.vector_store %arg15[%c4, %c0_7], %1 {strides = array<i32>} : memref<24x128xf32, #tpu.memory_space<vmem>>, vector<16x128xf32>,
    %cst_8 = arith.constant 0.000000e+00 : f32
    %8 = vector.broadcast %cst_8 : f32 to vector<16x128xf32>
    %c0_9 = arith.constant 0 : index
    %c0_10 = arith.constant 0 : index
    %9 = vector.load %arg15[%c0_9, %c0_10] : memref<24x128xf32, #tpu.memory_space<vmem>>, vector<16x128xf32>
    %10 = arith.truncf %9 : vector<16x128xf32> to vector<16x128xbf16>
    %c0_11 = arith.constant 0 : index
    %c0_12 = arith.constant 0 : index
    %c0_13 = arith.constant 0 : index
    %11 = vector.load %arg3[%c0_11, %c0_12, %c0_13] : memref<9x128x128xbf16, #tpu.memory_space<vmem>>, vector<1x128x128xbf16>
    %12 = vector.shape_cast %11 : vector<1x128x128xbf16> to vector<128x128xbf16>
    %cst_14 = arith.constant dense<0.000000e+00> : vector<16x128xf32>
    %13 = tpu.matmul %10, %12, %cst_14 {dimension_numbers = #tpu.dot_dimension_numbers<[1], [0], [0], [1], [0, 0, 1, 1], [], []>} : vector<16x128xbf16>, vector<128x128xbf16>, vector<16x128xf32> -> vector<16x128xf32>
    %14 = arith.addf %8, %13 : vector<16x128xf32>
    %c1 = arith.constant 1 : index
    %c0_15 = arith.constant 0 : index
    %15 = vector.load %arg15[%c1, %c0_15] : memref<24x128xf32, #tpu.memory_space<vmem>>, vector<16x128xf32>
    %16 = arith.truncf %15 : vector<16x128xf32> to vector<16x128xbf16>
    %c1_16 = arith.constant 1 : index
    %c0_17 = arith.constant 0 : index
    %c0_18 = arith.constant 0 : index
    %17 = vector.load %arg3[%c1_16, %c0_17, %c0_18] : memref<9x128x128xbf16, #tpu.memory_space<vmem>>, vector<1x128x128xbf16>
    %18 = vector.shape_cast %17 : vector<1x128x128xbf16> to vector<128x128xbf16>
    %cst_19 = arith.constant dense<0.000000e+00> : vector<16x128xf32>
    %19 = tpu.matmul %16, %18, %cst_19 {dimension_numbers = #tpu.dot_dimension_numbers<[1], [0], [0], [1], [0, 0, 1, 1], [], []>} : vector<16x128xbf16>, vector<128x128xbf16>, vector<16x128xf32> -> vector<16x128xf32>
    %20 = arith.addf %14, %19 : vector<16x128xf32>
    %c2 = arith.constant 2 : index
    %c0_20 = arith.constant 0 : index
    %21 = vector.load %arg15[%c2, %c0_20] : memref<24x128xf32, #tpu.memory_space<vmem>>, vector<16x128xf32>
    %22 = arith.truncf %21 : vector<16x128xf32> to vector<16x128xbf16>
    %c2_21 = arith.constant 2 : index
    %c0_22 = arith.constant 0 : index
    %c0_23 = arith.constant 0 : index
    %23 = vector.load %arg3[%c2_21, %c0_22, %c0_23] : memref<9x128x128xbf16, #tpu.memory_space<vmem>>, vector<1x128x128xbf16>
    %24 = vector.shape_cast %23 : vector<1x128x128xbf16> to vector<128x128xbf16>
    %cst_24 = arith.constant dense<0.000000e+00> : vector<16x128xf32>
    %25 = tpu.matmul %22, %24, %cst_24 {dimension_numbers = #tpu.dot_dimension_numbers<[1], [0], [0], [1], [0, 0, 1, 1], [], []>} : vector<16x128xbf16>, vector<128x128xbf16>, vector<16x128xf32> -> vector<16x128xf32>
    %26 = arith.addf %20, %25 : vector<16x128xf32>
    %c3 = arith.constant 3 : index
    %c0_25 = arith.constant 0 : index
    %27 = vector.load %arg15[%c3, %c0_25] : memref<24x128xf32, #tpu.memory_space<vmem>>, vector<16x128xf32>
    %28 = arith.truncf %27 : vector<16x128xf32> to vector<16x128xbf16>
    %c3_26 = arith.constant 3 : index
    %c0_27 = arith.constant 0 : index
    %c0_28 = arith.constant 0 : index
    %29 = vector.load %arg3[%c3_26, %c0_27, %c0_28] : memref<9x128x128xbf16, #tpu.memory_space<vmem>>, vector<1x128x128xbf16>
    %30 = vector.shape_cast %29 : vector<1x128x128xbf16> to vector<128x128xbf16>
    %cst_29 = arith.constant dense<0.000000e+00> : vector<16x128xf32>
    %31 = tpu.matmul %28, %30, %cst_29 {dimension_numbers = #tpu.dot_dimension_numbers<[1], [0], [0], [1], [0, 0, 1, 1], [], []>} : vector<16x128xbf16>, vector<128x128xbf16>, vector<16x128xf32> -> vector<16x128xf32>
    %32 = arith.addf %26, %31 : vector<16x128xf32>
    %c4_30 = arith.constant 4 : index
    %c0_31 = arith.constant 0 : index
    %33 = vector.load %arg15[%c4_30, %c0_31] : memref<24x128xf32, #tpu.memory_space<vmem>>, vector<16x128xf32>
    %34 = arith.truncf %33 : vector<16x128xf32> to vector<16x128xbf16>
    %c4_32 = arith.constant 4 : index
    %c0_33 = arith.constant 0 : index
    %c0_34 = arith.constant 0 : index
    %35 = vector.load %arg3[%c4_32, %c0_33, %c0_34] : memref<9x128x128xbf16, #tpu.memory_space<vmem>>, vector<1x128x128xbf16>
    %36 = vector.shape_cast %35 : vector<1x128x128xbf16> to vector<128x128xbf16>
    %cst_35 = arith.constant dense<0.000000e+00> : vector<16x128xf32>
    %37 = tpu.matmul %34, %36, %cst_35 {dimension_numbers = #tpu.dot_dimension_numbers<[1], [0], [0], [1], [0, 0, 1, 1], [], []>} : vector<16x128xbf16>, vector<128x128xbf16>, vector<16x128xf32> -> vector<16x128xf32>
    %38 = arith.addf %32, %37 : vector<16x128xf32>
    %c5 = arith.constant 5 : index
    %c0_36 = arith.constant 0 : index
    %39 = vector.load %arg15[%c5, %c0_36] : memref<24x128xf32, #tpu.memory_space<vmem>>, vector<16x128xf32>
    %40 = arith.truncf %39 : vector<16x128xf32> to vector<16x128xbf16>
    %c5_37 = arith.constant 5 : index
    %c0_38 = arith.constant 0 : index
    %c0_39 = arith.constant 0 : index
    %41 = vector.load %arg3[%c5_37, %c0_38, %c0_39] : memref<9x128x128xbf16, #tpu.memory_space<vmem>>, vector<1x128x128xbf16>
    %42 = vector.shape_cast %41 : vector<1x128x128xbf16> to vector<128x128xbf16>
    %cst_40 = arith.constant dense<0.000000e+00> : vector<16x128xf32>
    %43 = tpu.matmul %40, %42, %cst_40 {dimension_numbers = #tpu.dot_dimension_numbers<[1], [0], [0], [1], [0, 0, 1, 1], [], []>} : vector<16x128xbf16>, vector<128x128xbf16>, vector<16x128xf32> -> vector<16x128xf32>
    %44 = arith.addf %38, %43 : vector<16x128xf32>
    %c6 = arith.constant 6 : index
    %c0_41 = arith.constant 0 : index
    %45 = vector.load %arg15[%c6, %c0_41] : memref<24x128xf32, #tpu.memory_space<vmem>>, vector<16x128xf32>
    %46 = arith.truncf %45 : vector<16x128xf32> to vector<16x128xbf16>
    %c6_42 = arith.constant 6 : index
    %c0_43 = arith.constant 0 : index
    %c0_44 = arith.constant 0 : index
    %47 = vector.load %arg3[%c6_42, %c0_43, %c0_44] : memref<9x128x128xbf16, #tpu.memory_space<vmem>>, vector<1x128x128xbf16>
    %48 = vector.shape_cast %47 : vector<1x128x128xbf16> to vector<128x128xbf16>
    %cst_45 = arith.constant dense<0.000000e+00> : vector<16x128xf32>
    %49 = tpu.matmul %46, %48, %cst_45 {dimension_numbers = #tpu.dot_dimension_numbers<[1], [0], [0], [1], [0, 0, 1, 1], [], []>} : vector<16x128xbf16>, vector<128x128xbf16>, vector<16x128xf32> -> vector<16x128xf32>
    %50 = arith.addf %44, %49 : vector<16x128xf32>
    %c7 = arith.constant 7 : index
    %c0_46 = arith.constant 0 : index
    %51 = vector.load %arg15[%c7, %c0_46] : memref<24x128xf32, #tpu.memory_space<vmem>>, vector<16x128xf32>
    %52 = arith.truncf %51 : vector<16x128xf32> to vector<16x128xbf16>
    %c7_47 = arith.constant 7 : index
    %c0_48 = arith.constant 0 : index
    %c0_49 = arith.constant 0 : index
    %53 = vector.load %arg3[%c7_47, %c0_48, %c0_49] : memref<9x128x128xbf16, #tpu.memory_space<vmem>>, vector<1x128x128xbf16>
    %54 = vector.shape_cast %53 : vector<1x128x128xbf16> to vector<128x128xbf16>
    %cst_50 = arith.constant dense<0.000000e+00> : vector<16x128xf32>
    %55 = tpu.matmul %52, %54, %cst_50 {dimension_numbers = #tpu.dot_dimension_numbers<[1], [0], [0], [1], [0, 0, 1, 1], [], []>} : vector<16x128xbf16>, vector<128x128xbf16>, vector<16x128xf32> -> vector<16x128xf32>
    %56 = arith.addf %50, %55 : vector<16x128xf32>
    %c8 = arith.constant 8 : index
    %c0_51 = arith.constant 0 : index
    %57 = vector.load %arg15[%c8, %c0_51] : memref<24x128xf32, #tpu.memory_space<vmem>>, vector<16x128xf32>
    %58 = arith.truncf %57 : vector<16x128xf32> to vector<16x128xbf16>
    %c8_52 = arith.constant 8 : index
    %c0_53 = arith.constant 0 : index
    %c0_54 = arith.constant 0 : index
    %59 = vector.load %arg3[%c8_52, %c0_53, %c0_54] : memref<9x128x128xbf16, #tpu.memory_space<vmem>>, vector<1x128x128xbf16>
    %60 = vector.shape_cast %59 : vector<1x128x128xbf16> to vector<128x128xbf16>
    %cst_55 = arith.constant dense<0.000000e+00> : vector<16x128xf32>
    %61 = tpu.matmul %58, %60, %cst_55 {dimension_numbers = #tpu.dot_dimension_numbers<[1], [0], [0], [1], [0, 0, 1, 1], [], []>} : vector<16x128xbf16>, vector<128x128xbf16>, vector<16x128xf32> -> vector<16x128xf32>
    %62 = arith.addf %56, %61 : vector<16x128xf32>
    %c0_56 = arith.constant 0 : index
    %c0_57 = arith.constant 0 : index
    %63 = vector.load %arg4[%c0_56, %c0_57] : memref<1x128xf32, #tpu.memory_space<vmem>>, vector<1x128xf32>
    %64 = vector.shape_cast %63 : vector<1x128xf32> to vector<128xf32>
    %65 = vector.shape_cast %64 : vector<128xf32> to vector<1x128xf32>
    %66 = vector.broadcast %65 : vector<1x128xf32> to vector<16x128xf32>
    %67 = arith.mulf %62, %66 : vector<16x128xf32>
    %c0_58 = arith.constant 0 : index
    %c0_59 = arith.constant 0 : index
    %68 = vector.load %arg5[%c0_58, %c0_59] : memref<1x128xf32, #tpu.memory_space<vmem>>, vector<1x128xf32>
    %69 = vector.shape_cast %68 : vector<1x128xf32> to vector<128xf32>
    %70 = vector.shape_cast %69 : vector<128xf32> to vector<1x128xf32>
    %71 = vector.broadcast %70 : vector<1x128xf32> to vector<16x128xf32>
    %72 = arith.addf %67, %71 : vector<16x128xf32>
    %cst_60 = arith.constant 0.000000e+00 : f32
    %73 = vector.broadcast %cst_60 : f32 to vector<16x128xf32>
    %74 = arith.cmpf oge, %72, %73 : vector<16x128xf32>
    %cst_61 = arith.constant 0.00999999977 : f32
    %75 = vector.broadcast %cst_61 : f32 to vector<16x128xf32>
    %76 = arith.mulf %75, %72 : vector<16x128xf32>
    %77 = arith.select %74, %72, %76 : vector<16x128xi1>, vector<16x128xf32>
    %78 = arith.truncf %77 : vector<16x128xf32> to vector<16x128xbf16>
    %c0_62 = arith.constant 0 : index
    %c0_63 = arith.constant 0 : index
    %79 = vector.load %arg6[%c0_62, %c0_63] : memref<128x128xbf16, #tpu.memory_space<vmem>>, vector<128x128xbf16>
    %cst_64 = arith.constant dense<0.000000e+00> : vector<16x128xf32>
    %80 = tpu.matmul %78, %79, %cst_64 {dimension_numbers = #tpu.dot_dimension_numbers<[1], [0], [0], [1], [0, 0, 1, 1], [], []>} : vector<16x128xbf16>, vector<128x128xbf16>, vector<16x128xf32> -> vector<16x128xf32>
    %81 = arith.truncf %80 : vector<16x128xf32> to vector<16x128xbf16>
    %c0_65 = arith.constant 0 : index
    %c0_66 = arith.constant 0 : index
    %82 = vector.load %arg7[%c0_65, %c0_66] : memref<128x128xbf16, #tpu.memory_space<vmem>>, vector<128x128xbf16>
    %cst_67 = arith.constant dense<0.000000e+00> : vector<16x128xf32>
    %83 = tpu.matmul %81, %82, %cst_67 {dimension_numbers = #tpu.dot_dimension_numbers<[1], [0], [0], [1], [0, 0, 1, 1], [], []>} : vector<16x128xbf16>, vector<128x128xbf16>, vector<16x128xf32> -> vector<16x128xf32>
    %c0_68 = arith.constant 0 : index
    %c0_69 = arith.constant 0 : index
    %84 = vector.load %arg8[%c0_68, %c0_69] : memref<1x128xf32, #tpu.memory_space<vmem>>, vector<1x128xf32>
    %85 = vector.shape_cast %84 : vector<1x128xf32> to vector<128xf32>
    %86 = vector.shape_cast %85 : vector<128xf32> to vector<1x128xf32>
    %87 = vector.broadcast %86 : vector<1x128xf32> to vector<16x128xf32>
    %88 = arith.mulf %83, %87 : vector<16x128xf32>
    %c0_70 = arith.constant 0 : index
    %c0_71 = arith.constant 0 : index
    %89 = vector.load %arg9[%c0_70, %c0_71] : memref<1x128xf32, #tpu.memory_space<vmem>>, vector<1x128xf32>
    %90 = vector.shape_cast %89 : vector<1x128xf32> to vector<128xf32>
    %91 = vector.shape_cast %90 : vector<128xf32> to vector<1x128xf32>
    %92 = vector.broadcast %91 : vector<1x128xf32> to vector<16x128xf32>
    %93 = arith.addf %88, %92 : vector<16x128xf32>
    %cst_72 = arith.constant 0.000000e+00 : f32
    %94 = vector.broadcast %cst_72 : f32 to vector<16x128xf32>
    %95 = arith.cmpf oge, %93, %94 : vector<16x128xf32>
    %cst_73 = arith.constant 0.00999999977 : f32
    %96 = vector.broadcast %cst_73 : f32 to vector<16x128xf32>
    %97 = arith.mulf %96, %93 : vector<16x128xf32>
    %98 = arith.select %95, %93, %97 : vector<16x128xi1>, vector<16x128xf32>
    %cst_74 = arith.constant 0.000000e+00 : f32
    %99 = vector.broadcast %cst_74 : f32 to vector<24x128xf32>
    %c0_75 = arith.constant 0 : index
    %c0_76 = arith.constant 0 : index
    %100 = vector.load %arg16[%c0_75, %c0_76] : memref<24x128xf32, #tpu.memory_space<vmem>>, vector<24x128xf32>
    tpu.vector_store %arg16[%c0_75, %c0_76], %99 {strides = array<i32>} : memref<24x128xf32, #tpu.memory_space<vmem>>, vector<24x128xf32>,
    %c4_77 = arith.constant 4 : index
    %c0_78 = arith.constant 0 : index
    %101 = vector.load %arg16[%c4_77, %c0_78] : memref<24x128xf32, #tpu.memory_space<vmem>>, vector<16x128xf32>
    tpu.vector_store %arg16[%c4_77, %c0_78], %98 {strides = array<i32>} : memref<24x128xf32, #tpu.memory_space<vmem>>, vector<16x128xf32>,
    %cst_79 = arith.constant 0.000000e+00 : f32
    %102 = vector.broadcast %cst_79 : f32 to vector<16x256xf32>
    %c0_80 = arith.constant 0 : index
    %c0_81 = arith.constant 0 : index
    %103 = vector.load %arg16[%c0_80, %c0_81] : memref<24x128xf32, #tpu.memory_space<vmem>>, vector<16x128xf32>
    %104 = arith.truncf %103 : vector<16x128xf32> to vector<16x128xbf16>
    %c0_82 = arith.constant 0 : index
    %c0_83 = arith.constant 0 : index
    %c0_84 = arith.constant 0 : index
    %105 = vector.load %arg10[%c0_82, %c0_83, %c0_84] : memref<9x128x256xbf16, #tpu.memory_space<vmem>>, vector<1x128x256xbf16>
    %106 = vector.shape_cast %105 : vector<1x128x256xbf16> to vector<128x256xbf16>
    %cst_85 = arith.constant dense<0.000000e+00> : vector<16x256xf32>
    %107 = tpu.matmul %104, %106, %cst_85 {dimension_numbers = #tpu.dot_dimension_numbers<[1], [0], [0], [1], [0, 0, 1, 1], [], []>} : vector<16x128xbf16>, vector<128x256xbf16>, vector<16x256xf32> -> vector<16x256xf32>
    %108 = arith.addf %102, %107 : vector<16x256xf32>
    %c1_86 = arith.constant 1 : index
    %c0_87 = arith.constant 0 : index
    %109 = vector.load %arg16[%c1_86, %c0_87] : memref<24x128xf32, #tpu.memory_space<vmem>>, vector<16x128xf32>
    %110 = arith.truncf %109 : vector<16x128xf32> to vector<16x128xbf16>
    %c1_88 = arith.constant 1 : index
    %c0_89 = arith.constant 0 : index
    %c0_90 = arith.constant 0 : index
    %111 = vector.load %arg10[%c1_88, %c0_89, %c0_90] : memref<9x128x256xbf16, #tpu.memory_space<vmem>>, vector<1x128x256xbf16>
    %112 = vector.shape_cast %111 : vector<1x128x256xbf16> to vector<128x256xbf16>
    %cst_91 = arith.constant dense<0.000000e+00> : vector<16x256xf32>
    %113 = tpu.matmul %110, %112, %cst_91 {dimension_numbers = #tpu.dot_dimension_numbers<[1], [0], [0], [1], [0, 0, 1, 1], [], []>} : vector<16x128xbf16>, vector<128x256xbf16>, vector<16x256xf32> -> vector<16x256xf32>
    %114 = arith.addf %108, %113 : vector<16x256xf32>
    %c2_92 = arith.constant 2 : index
    %c0_93 = arith.constant 0 : index
    %115 = vector.load %arg16[%c2_92, %c0_93] : memref<24x128xf32, #tpu.memory_space<vmem>>, vector<16x128xf32>
    %116 = arith.truncf %115 : vector<16x128xf32> to vector<16x128xbf16>
    %c2_94 = arith.constant 2 : index
    %c0_95 = arith.constant 0 : index
    %c0_96 = arith.constant 0 : index
    %117 = vector.load %arg10[%c2_94, %c0_95, %c0_96] : memref<9x128x256xbf16, #tpu.memory_space<vmem>>, vector<1x128x256xbf16>
    %118 = vector.shape_cast %117 : vector<1x128x256xbf16> to vector<128x256xbf16>
    %cst_97 = arith.constant dense<0.000000e+00> : vector<16x256xf32>
    %119 = tpu.matmul %116, %118, %cst_97 {dimension_numbers = #tpu.dot_dimension_numbers<[1], [0], [0], [1], [0, 0, 1, 1], [], []>} : vector<16x128xbf16>, vector<128x256xbf16>, vector<16x256xf32> -> vector<16x256xf32>
    %120 = arith.addf %114, %119 : vector<16x256xf32>
    %c3_98 = arith.constant 3 : index
    %c0_99 = arith.constant 0 : index
    %121 = vector.load %arg16[%c3_98, %c0_99] : memref<24x128xf32, #tpu.memory_space<vmem>>, vector<16x128xf32>
    %122 = arith.truncf %121 : vector<16x128xf32> to vector<16x128xbf16>
    %c3_100 = arith.constant 3 : index
    %c0_101 = arith.constant 0 : index
    %c0_102 = arith.constant 0 : index
    %123 = vector.load %arg10[%c3_100, %c0_101, %c0_102] : memref<9x128x256xbf16, #tpu.memory_space<vmem>>, vector<1x128x256xbf16>
    %124 = vector.shape_cast %123 : vector<1x128x256xbf16> to vector<128x256xbf16>
    %cst_103 = arith.constant dense<0.000000e+00> : vector<16x256xf32>
    %125 = tpu.matmul %122, %124, %cst_103 {dimension_numbers = #tpu.dot_dimension_numbers<[1], [0], [0], [1], [0, 0, 1, 1], [], []>} : vector<16x128xbf16>, vector<128x256xbf16>, vector<16x256xf32> -> vector<16x256xf32>
    %126 = arith.addf %120, %125 : vector<16x256xf32>
    %c4_104 = arith.constant 4 : index
    %c0_105 = arith.constant 0 : index
    %127 = vector.load %arg16[%c4_104, %c0_105] : memref<24x128xf32, #tpu.memory_space<vmem>>, vector<16x128xf32>
    %128 = arith.truncf %127 : vector<16x128xf32> to vector<16x128xbf16>
    %c4_106 = arith.constant 4 : index
    %c0_107 = arith.constant 0 : index
    %c0_108 = arith.constant 0 : index
    %129 = vector.load %arg10[%c4_106, %c0_107, %c0_108] : memref<9x128x256xbf16, #tpu.memory_space<vmem>>, vector<1x128x256xbf16>
    %130 = vector.shape_cast %129 : vector<1x128x256xbf16> to vector<128x256xbf16>
    %cst_109 = arith.constant dense<0.000000e+00> : vector<16x256xf32>
    %131 = tpu.matmul %128, %130, %cst_109 {dimension_numbers = #tpu.dot_dimension_numbers<[1], [0], [0], [1], [0, 0, 1, 1], [], []>} : vector<16x128xbf16>, vector<128x256xbf16>, vector<16x256xf32> -> vector<16x256xf32>
    %132 = arith.addf %126, %131 : vector<16x256xf32>
    %c5_110 = arith.constant 5 : index
    %c0_111 = arith.constant 0 : index
    %133 = vector.load %arg16[%c5_110, %c0_111] : memref<24x128xf32, #tpu.memory_space<vmem>>, vector<16x128xf32>
    %134 = arith.truncf %133 : vector<16x128xf32> to vector<16x128xbf16>
    %c5_112 = arith.constant 5 : index
    %c0_113 = arith.constant 0 : index
    %c0_114 = arith.constant 0 : index
    %135 = vector.load %arg10[%c5_112, %c0_113, %c0_114] : memref<9x128x256xbf16, #tpu.memory_space<vmem>>, vector<1x128x256xbf16>
    %136 = vector.shape_cast %135 : vector<1x128x256xbf16> to vector<128x256xbf16>
    %cst_115 = arith.constant dense<0.000000e+00> : vector<16x256xf32>
    %137 = tpu.matmul %134, %136, %cst_115 {dimension_numbers = #tpu.dot_dimension_numbers<[1], [0], [0], [1], [0, 0, 1, 1], [], []>} : vector<16x128xbf16>, vector<128x256xbf16>, vector<16x256xf32> -> vector<16x256xf32>
    %138 = arith.addf %132, %137 : vector<16x256xf32>
    %c6_116 = arith.constant 6 : index
    %c0_117 = arith.constant 0 : index
    %139 = vector.load %arg16[%c6_116, %c0_117] : memref<24x128xf32, #tpu.memory_space<vmem>>, vector<16x128xf32>
    %140 = arith.truncf %139 : vector<16x128xf32> to vector<16x128xbf16>
    %c6_118 = arith.constant 6 : index
    %c0_119 = arith.constant 0 : index
    %c0_120 = arith.constant 0 : index
    %141 = vector.load %arg10[%c6_118, %c0_119, %c0_120] : memref<9x128x256xbf16, #tpu.memory_space<vmem>>, vector<1x128x256xbf16>
    %142 = vector.shape_cast %141 : vector<1x128x256xbf16> to vector<128x256xbf16>
    %cst_121 = arith.constant dense<0.000000e+00> : vector<16x256xf32>
    %143 = tpu.matmul %140, %142, %cst_121 {dimension_numbers = #tpu.dot_dimension_numbers<[1], [0], [0], [1], [0, 0, 1, 1], [], []>} : vector<16x128xbf16>, vector<128x256xbf16>, vector<16x256xf32> -> vector<16x256xf32>
    %144 = arith.addf %138, %143 : vector<16x256xf32>
    %c7_122 = arith.constant 7 : index
    %c0_123 = arith.constant 0 : index
    %145 = vector.load %arg16[%c7_122, %c0_123] : memref<24x128xf32, #tpu.memory_space<vmem>>, vector<16x128xf32>
    %146 = arith.truncf %145 : vector<16x128xf32> to vector<16x128xbf16>
    %c7_124 = arith.constant 7 : index
    %c0_125 = arith.constant 0 : index
    %c0_126 = arith.constant 0 : index
    %147 = vector.load %arg10[%c7_124, %c0_125, %c0_126] : memref<9x128x256xbf16, #tpu.memory_space<vmem>>, vector<1x128x256xbf16>
    %148 = vector.shape_cast %147 : vector<1x128x256xbf16> to vector<128x256xbf16>
    %cst_127 = arith.constant dense<0.000000e+00> : vector<16x256xf32>
    %149 = tpu.matmul %146, %148, %cst_127 {dimension_numbers = #tpu.dot_dimension_numbers<[1], [0], [0], [1], [0, 0, 1, 1], [], []>} : vector<16x128xbf16>, vector<128x256xbf16>, vector<16x256xf32> -> vector<16x256xf32>
    %150 = arith.addf %144, %149 : vector<16x256xf32>
    %c8_128 = arith.constant 8 : index
    %c0_129 = arith.constant 0 : index
    %151 = vector.load %arg16[%c8_128, %c0_129] : memref<24x128xf32, #tpu.memory_space<vmem>>, vector<16x128xf32>
    %152 = arith.truncf %151 : vector<16x128xf32> to vector<16x128xbf16>
    %c8_130 = arith.constant 8 : index
    %c0_131 = arith.constant 0 : index
    %c0_132 = arith.constant 0 : index
    %153 = vector.load %arg10[%c8_130, %c0_131, %c0_132] : memref<9x128x256xbf16, #tpu.memory_space<vmem>>, vector<1x128x256xbf16>
    %154 = vector.shape_cast %153 : vector<1x128x256xbf16> to vector<128x256xbf16>
    %cst_133 = arith.constant dense<0.000000e+00> : vector<16x256xf32>
    %155 = tpu.matmul %152, %154, %cst_133 {dimension_numbers = #tpu.dot_dimension_numbers<[1], [0], [0], [1], [0, 0, 1, 1], [], []>} : vector<16x128xbf16>, vector<128x256xbf16>, vector<16x256xf32> -> vector<16x256xf32>
    %156 = arith.addf %150, %155 : vector<16x256xf32>
    %c0_134 = arith.constant 0 : index
    %c0_135 = arith.constant 0 : index
    %157 = vector.load %arg11[%c0_134, %c0_135] : memref<1x256xf32, #tpu.memory_space<vmem>>, vector<1x256xf32>
    %158 = vector.shape_cast %157 : vector<1x256xf32> to vector<256xf32>
    %159 = vector.shape_cast %158 : vector<256xf32> to vector<1x256xf32>
    %160 = vector.broadcast %159 : vector<1x256xf32> to vector<16x256xf32>
    %161 = arith.addf %156, %160 : vector<16x256xf32>
    %cst_136 = arith.constant 0.000000e+00 : f32
    %162 = vector.broadcast %cst_136 : f32 to vector<16x256xf32>
    %163 = arith.cmpf oge, %161, %162 : vector<16x256xf32>
    %cst_137 = arith.constant 0.00999999977 : f32
    %164 = vector.broadcast %cst_137 : f32 to vector<16x256xf32>
    %165 = arith.mulf %164, %161 : vector<16x256xf32>
    %166 = arith.select %163, %161, %165 : vector<16x256xi1>, vector<16x256xf32>
    %167 = arith.addf %166, %4 : vector<16x256xf32>
    %c0_138 = arith.constant 0 : index
    %c0_139 = arith.constant 0 : index
    %168 = vector.load %arg12[%c0_138, %c0_139] : memref<1x256xf32, #tpu.memory_space<vmem>>, vector<1x256xf32>
    %169 = vector.shape_cast %168 : vector<1x256xf32> to vector<256xf32>
    %170 = vector.shape_cast %169 : vector<256xf32> to vector<1x256xf32>
    %171 = vector.broadcast %170 : vector<1x256xf32> to vector<16x256xf32>
    %172 = arith.mulf %167, %171 : vector<16x256xf32>
    %c0_140 = arith.constant 0 : index
    %c0_141 = arith.constant 0 : index
    %173 = vector.load %arg13[%c0_140, %c0_141] : memref<1x256xf32, #tpu.memory_space<vmem>>, vector<1x256xf32>
    %174 = vector.shape_cast %173 : vector<1x256xf32> to vector<256xf32>
    %175 = vector.shape_cast %174 : vector<256xf32> to vector<1x256xf32>
    %176 = vector.broadcast %175 : vector<1x256xf32> to vector<16x256xf32>
    %177 = arith.addf %172, %176 : vector<16x256xf32>
    %cst_142 = arith.constant 0.000000e+00 : f32
    %178 = vector.broadcast %cst_142 : f32 to vector<16x256xf32>
    %179 = arith.cmpf oge, %177, %178 : vector<16x256xf32>
    %cst_143 = arith.constant 0.00999999977 : f32
    %180 = vector.broadcast %cst_143 : f32 to vector<16x256xf32>
    %181 = arith.mulf %180, %177 : vector<16x256xf32>
    %182 = arith.select %179, %177, %181 : vector<16x256xi1>, vector<16x256xf32>
    %183 = vector.shape_cast %182 : vector<16x256xf32> to vector<1x16x256xf32>
    %c0_144 = arith.constant 0 : index
    %c0_145 = arith.constant 0 : index
    %c0_146 = arith.constant 0 : index
    %184 = vector.load %arg14[%c0_144, %c0_145, %c0_146] : memref<1x16x256xf32, #tpu.memory_space<vmem>>, vector<1x16x256xf32>
    tpu.vector_store %arg14[%c0_144, %c0_145, %c0_146], %183 {strides = array<i32>} : memref<1x16x256xf32, #tpu.memory_space<vmem>>, vector<1x16x256xf32>,
    return
  }
  func.func @transform_0(%arg0: i32) -> (i32, i32, i32) {
    %c0_i32 = arith.constant 0 : i32
    %c0_i32_0 = arith.constant 0 : i32
    %c0_i32_1 = arith.constant 0 : i32
    return %arg0, %c0_i32, %c0_i32_0 : i32, i32, i32
  }
  func.func @transform_1(%arg0: i32) -> (i32, i32) {
    %c0_i32 = arith.constant 0 : i32
    %c0_i32_0 = arith.constant 0 : i32
    %c0_i32_1 = arith.constant 0 : i32
    return %c0_i32, %c0_i32_0 : i32, i32
  }
  func.func @transform_2(%arg0: i32) -> (i32, i32, i32) {
    %c0_i32 = arith.constant 0 : i32
    %c0_i32_0 = arith.constant 0 : i32
    %c0_i32_1 = arith.constant 0 : i32
    %c0_i32_2 = arith.constant 0 : i32
    return %c0_i32, %c0_i32_0, %c0_i32_1 : i32, i32, i32
  }
  func.func @transform_3(%arg0: i32) -> (i32, i32) {
    %c0_i32 = arith.constant 0 : i32
    %c0_i32_0 = arith.constant 0 : i32
    %c0_i32_1 = arith.constant 0 : i32
    return %c0_i32, %c0_i32_0 : i32, i32
  }
  func.func @transform_4(%arg0: i32) -> (i32, i32) {
    %c0_i32 = arith.constant 0 : i32
    %c0_i32_0 = arith.constant 0 : i32
    %c0_i32_1 = arith.constant 0 : i32
    return %c0_i32, %c0_i32_0 : i32, i32
  }
  func.func @transform_5(%arg0: i32) -> (i32, i32) {
    %c0_i32 = arith.constant 0 : i32
    %c0_i32_0 = arith.constant 0 : i32
    %c0_i32_1 = arith.constant 0 : i32
    return %c0_i32, %c0_i32_0 : i32, i32
  }
  func.func @transform_6(%arg0: i32) -> (i32, i32) {
    %c0_i32 = arith.constant 0 : i32
    %c0_i32_0 = arith.constant 0 : i32
    %c0_i32_1 = arith.constant 0 : i32
    return %c0_i32, %c0_i32_0 : i32, i32
  }
  func.func @transform_7(%arg0: i32) -> (i32, i32) {
    %c0_i32 = arith.constant 0 : i32
    %c0_i32_0 = arith.constant 0 : i32
    %c0_i32_1 = arith.constant 0 : i32
    return %c0_i32, %c0_i32_0 : i32, i32
  }
  func.func @transform_8(%arg0: i32) -> (i32, i32) {
    %c0_i32 = arith.constant 0 : i32
    %c0_i32_0 = arith.constant 0 : i32
    %c0_i32_1 = arith.constant 0 : i32
    return %c0_i32, %c0_i32_0 : i32, i32
  }
  func.func @transform_9(%arg0: i32) -> (i32, i32, i32) {
    %c0_i32 = arith.constant 0 : i32
    %c0_i32_0 = arith.constant 0 : i32
    %c0_i32_1 = arith.constant 0 : i32
    %c0_i32_2 = arith.constant 0 : i32
    return %c0_i32, %c0_i32_0, %c0_i32_1 : i32, i32, i32
  }
  func.func @transform_10(%arg0: i32) -> (i32, i32) {
    %c0_i32 = arith.constant 0 : i32
    %c0_i32_0 = arith.constant 0 : i32
    %c0_i32_1 = arith.constant 0 : i32
    return %c0_i32, %c0_i32_0 : i32, i32
  }
  func.func @transform_11(%arg0: i32) -> (i32, i32) {
    %c0_i32 = arith.constant 0 : i32
    %c0_i32_0 = arith.constant 0 : i32
    %c0_i32_1 = arith.constant 0 : i32
    return %c0_i32, %c0_i32_0 : i32, i32
  }
  func.func @transform_12(%arg0: i32) -> (i32, i32) {
    %c0_i32 = arith.constant 0 : i32
    %c0_i32_0 = arith.constant 0 : i32
    %c0_i32_1 = arith.constant 0 : i32
    return %c0_i32, %c0_i32_0 : i32, i32
  }
  func.func @transform_13(%arg0: i32) -> (i32, i32, i32) {
    %c0_i32 = arith.constant 0 : i32
    %c0_i32_0 = arith.constant 0 : i32
    %c0_i32_1 = arith.constant 0 : i32
    return %arg0, %c0_i32, %c0_i32_0 : i32, i32, i32
  }
}

module attributes {stable_mosaic.version = 11 : i64} {
  func.func @kernel(%arg0: i32, %arg1: memref<1x16x32xf32, #tpu.memory_space<vmem>>, %arg2: memref<1x32xf32, #tpu.memory_space<vmem>>, %arg3: memref<1x32xf32, #tpu.memory_space<vmem>>, %arg4: memref<32x128xbf16, #tpu.memory_space<vmem>>, %arg5: memref<9x32x64xbf16, #tpu.memory_space<vmem>>, %arg6: memref<1x64xf32, #tpu.memory_space<vmem>>, %arg7: memref<1x64xf32, #tpu.memory_space<vmem>>, %arg8: memref<64x64xbf16, #tpu.memory_space<vmem>>, %arg9: memref<64x64xbf16, #tpu.memory_space<vmem>>, %arg10: memref<1x64xf32, #tpu.memory_space<vmem>>, %arg11: memref<1x64xf32, #tpu.memory_space<vmem>>, %arg12: memref<9x64x128xbf16, #tpu.memory_space<vmem>>, %arg13: memref<1x128xf32, #tpu.memory_space<vmem>>, %arg14: memref<1x128xf32, #tpu.memory_space<vmem>>, %arg15: memref<1x128xf32, #tpu.memory_space<vmem>>, %arg16: memref<1x16x128xf32, #tpu.memory_space<vmem>>, %arg17: memref<24x32xf32, #tpu.memory_space<vmem>>, %arg18: memref<24x64xf32, #tpu.memory_space<vmem>>) attributes {dimension_semantics = [#tpu.dimension_semantics<parallel>], iteration_bounds = array<i64: 4>, scalar_prefetch = 0 : i64, scratch_operands = 2 : i64, tpu.core_type = #tpu.core_type<tc>, window_params = [{transform_indices = @transform_0, window_bounds = array<i64: 1, 16, 32>}, {pipeline_mode = #tpu.pipeline_mode<synchronous>, transform_indices = @transform_1, window_bounds = array<i64: 1, 32>}, {pipeline_mode = #tpu.pipeline_mode<synchronous>, transform_indices = @transform_2, window_bounds = array<i64: 1, 32>}, {pipeline_mode = #tpu.pipeline_mode<synchronous>, transform_indices = @transform_3, window_bounds = array<i64: 32, 128>}, {pipeline_mode = #tpu.pipeline_mode<synchronous>, transform_indices = @transform_4, window_bounds = array<i64: 9, 32, 64>}, {pipeline_mode = #tpu.pipeline_mode<synchronous>, transform_indices = @transform_5, window_bounds = array<i64: 1, 64>}, {pipeline_mode = #tpu.pipeline_mode<synchronous>, transform_indices = @transform_6, window_bounds = array<i64: 1, 64>}, {pipeline_mode = #tpu.pipeline_mode<synchronous>, transform_indices = @transform_7, window_bounds = array<i64: 64, 64>}, {pipeline_mode = #tpu.pipeline_mode<synchronous>, transform_indices = @transform_8, window_bounds = array<i64: 64, 64>}, {pipeline_mode = #tpu.pipeline_mode<synchronous>, transform_indices = @transform_9, window_bounds = array<i64: 1, 64>}, {pipeline_mode = #tpu.pipeline_mode<synchronous>, transform_indices = @transform_10, window_bounds = array<i64: 1, 64>}, {pipeline_mode = #tpu.pipeline_mode<synchronous>, transform_indices = @transform_11, window_bounds = array<i64: 9, 64, 128>}, {pipeline_mode = #tpu.pipeline_mode<synchronous>, transform_indices = @transform_12, window_bounds = array<i64: 1, 128>}, {pipeline_mode = #tpu.pipeline_mode<synchronous>, transform_indices = @transform_13, window_bounds = array<i64: 1, 128>}, {pipeline_mode = #tpu.pipeline_mode<synchronous>, transform_indices = @transform_14, window_bounds = array<i64: 1, 128>}, {transform_indices = @transform_15, window_bounds = array<i64: 1, 16, 128>}]} {
    %c0 = arith.constant 0 : index
    %c0_0 = arith.constant 0 : index
    %c0_1 = arith.constant 0 : index
    %0 = vector.load %arg1[%c0, %c0_0, %c0_1] : memref<1x16x32xf32, #tpu.memory_space<vmem>>, vector<1x16x32xf32>
    %1 = vector.shape_cast %0 : vector<1x16x32xf32> to vector<16x32xf32>
    %c0_2 = arith.constant 0 : index
    %c0_3 = arith.constant 0 : index
    %2 = vector.load %arg2[%c0_2, %c0_3] : memref<1x32xf32, #tpu.memory_space<vmem>>, vector<1x32xf32>
    %3 = vector.shape_cast %2 : vector<1x32xf32> to vector<32xf32>
    %4 = vector.shape_cast %3 : vector<32xf32> to vector<1x32xf32>
    %5 = vector.broadcast %4 : vector<1x32xf32> to vector<16x32xf32>
    %6 = arith.mulf %1, %5 : vector<16x32xf32>
    %c0_4 = arith.constant 0 : index
    %c0_5 = arith.constant 0 : index
    %7 = vector.load %arg3[%c0_4, %c0_5] : memref<1x32xf32, #tpu.memory_space<vmem>>, vector<1x32xf32>
    %8 = vector.shape_cast %7 : vector<1x32xf32> to vector<32xf32>
    %9 = vector.shape_cast %8 : vector<32xf32> to vector<1x32xf32>
    %10 = vector.broadcast %9 : vector<1x32xf32> to vector<16x32xf32>
    %11 = arith.addf %6, %10 : vector<16x32xf32>
    %cst = arith.constant 0.000000e+00 : f32
    %12 = vector.broadcast %cst : f32 to vector<16x32xf32>
    %13 = arith.cmpf oge, %11, %12 : vector<16x32xf32>
    %cst_6 = arith.constant 0.00999999977 : f32
    %14 = vector.broadcast %cst_6 : f32 to vector<16x32xf32>
    %15 = arith.mulf %14, %11 : vector<16x32xf32>
    %16 = arith.select %13, %11, %15 : vector<16x32xi1>, vector<16x32xf32>
    %17 = arith.truncf %16 : vector<16x32xf32> to vector<16x32xbf16>
    %c0_7 = arith.constant 0 : index
    %c0_8 = arith.constant 0 : index
    %18 = vector.load %arg4[%c0_7, %c0_8] : memref<32x128xbf16, #tpu.memory_space<vmem>>, vector<32x128xbf16>
    %cst_9 = arith.constant dense<0.000000e+00> : vector<16x128xf32>
    %19 = tpu.matmul %17, %18, %cst_9 {dimension_numbers = #tpu.dot_dimension_numbers<[1], [0], [0], [1], [0, 0, 1, 1], [], []>} : vector<16x32xbf16>, vector<32x128xbf16>, vector<16x128xf32> -> vector<16x128xf32>
    %cst_10 = arith.constant 0.000000e+00 : f32
    %20 = vector.broadcast %cst_10 : f32 to vector<24x32xf32>
    %c0_11 = arith.constant 0 : index
    %c0_12 = arith.constant 0 : index
    %21 = vector.load %arg17[%c0_11, %c0_12] : memref<24x32xf32, #tpu.memory_space<vmem>>, vector<24x32xf32>
    tpu.vector_store %arg17[%c0_11, %c0_12], %20 {strides = array<i32>} : memref<24x32xf32, #tpu.memory_space<vmem>>, vector<24x32xf32>,
    %c4 = arith.constant 4 : index
    %c0_13 = arith.constant 0 : index
    %22 = vector.load %arg17[%c4, %c0_13] : memref<24x32xf32, #tpu.memory_space<vmem>>, vector<16x32xf32>
    tpu.vector_store %arg17[%c4, %c0_13], %16 {strides = array<i32>} : memref<24x32xf32, #tpu.memory_space<vmem>>, vector<16x32xf32>,
    %cst_14 = arith.constant 0.000000e+00 : f32
    %23 = vector.broadcast %cst_14 : f32 to vector<16x64xf32>
    %c0_15 = arith.constant 0 : index
    %c0_16 = arith.constant 0 : index
    %24 = vector.load %arg17[%c0_15, %c0_16] : memref<24x32xf32, #tpu.memory_space<vmem>>, vector<16x32xf32>
    %25 = arith.truncf %24 : vector<16x32xf32> to vector<16x32xbf16>
    %c0_17 = arith.constant 0 : index
    %c0_18 = arith.constant 0 : index
    %c0_19 = arith.constant 0 : index
    %26 = vector.load %arg5[%c0_17, %c0_18, %c0_19] : memref<9x32x64xbf16, #tpu.memory_space<vmem>>, vector<1x32x64xbf16>
    %27 = vector.shape_cast %26 : vector<1x32x64xbf16> to vector<32x64xbf16>
    %cst_20 = arith.constant dense<0.000000e+00> : vector<16x64xf32>
    %28 = tpu.matmul %25, %27, %cst_20 {dimension_numbers = #tpu.dot_dimension_numbers<[1], [0], [0], [1], [0, 0, 1, 1], [], []>} : vector<16x32xbf16>, vector<32x64xbf16>, vector<16x64xf32> -> vector<16x64xf32>
    %29 = arith.addf %23, %28 : vector<16x64xf32>
    %c1 = arith.constant 1 : index
    %c0_21 = arith.constant 0 : index
    %30 = vector.load %arg17[%c1, %c0_21] : memref<24x32xf32, #tpu.memory_space<vmem>>, vector<16x32xf32>
    %31 = arith.truncf %30 : vector<16x32xf32> to vector<16x32xbf16>
    %c1_22 = arith.constant 1 : index
    %c0_23 = arith.constant 0 : index
    %c0_24 = arith.constant 0 : index
    %32 = vector.load %arg5[%c1_22, %c0_23, %c0_24] : memref<9x32x64xbf16, #tpu.memory_space<vmem>>, vector<1x32x64xbf16>
    %33 = vector.shape_cast %32 : vector<1x32x64xbf16> to vector<32x64xbf16>
    %cst_25 = arith.constant dense<0.000000e+00> : vector<16x64xf32>
    %34 = tpu.matmul %31, %33, %cst_25 {dimension_numbers = #tpu.dot_dimension_numbers<[1], [0], [0], [1], [0, 0, 1, 1], [], []>} : vector<16x32xbf16>, vector<32x64xbf16>, vector<16x64xf32> -> vector<16x64xf32>
    %35 = arith.addf %29, %34 : vector<16x64xf32>
    %c2 = arith.constant 2 : index
    %c0_26 = arith.constant 0 : index
    %36 = vector.load %arg17[%c2, %c0_26] : memref<24x32xf32, #tpu.memory_space<vmem>>, vector<16x32xf32>
    %37 = arith.truncf %36 : vector<16x32xf32> to vector<16x32xbf16>
    %c2_27 = arith.constant 2 : index
    %c0_28 = arith.constant 0 : index
    %c0_29 = arith.constant 0 : index
    %38 = vector.load %arg5[%c2_27, %c0_28, %c0_29] : memref<9x32x64xbf16, #tpu.memory_space<vmem>>, vector<1x32x64xbf16>
    %39 = vector.shape_cast %38 : vector<1x32x64xbf16> to vector<32x64xbf16>
    %cst_30 = arith.constant dense<0.000000e+00> : vector<16x64xf32>
    %40 = tpu.matmul %37, %39, %cst_30 {dimension_numbers = #tpu.dot_dimension_numbers<[1], [0], [0], [1], [0, 0, 1, 1], [], []>} : vector<16x32xbf16>, vector<32x64xbf16>, vector<16x64xf32> -> vector<16x64xf32>
    %41 = arith.addf %35, %40 : vector<16x64xf32>
    %c3 = arith.constant 3 : index
    %c0_31 = arith.constant 0 : index
    %42 = vector.load %arg17[%c3, %c0_31] : memref<24x32xf32, #tpu.memory_space<vmem>>, vector<16x32xf32>
    %43 = arith.truncf %42 : vector<16x32xf32> to vector<16x32xbf16>
    %c3_32 = arith.constant 3 : index
    %c0_33 = arith.constant 0 : index
    %c0_34 = arith.constant 0 : index
    %44 = vector.load %arg5[%c3_32, %c0_33, %c0_34] : memref<9x32x64xbf16, #tpu.memory_space<vmem>>, vector<1x32x64xbf16>
    %45 = vector.shape_cast %44 : vector<1x32x64xbf16> to vector<32x64xbf16>
    %cst_35 = arith.constant dense<0.000000e+00> : vector<16x64xf32>
    %46 = tpu.matmul %43, %45, %cst_35 {dimension_numbers = #tpu.dot_dimension_numbers<[1], [0], [0], [1], [0, 0, 1, 1], [], []>} : vector<16x32xbf16>, vector<32x64xbf16>, vector<16x64xf32> -> vector<16x64xf32>
    %47 = arith.addf %41, %46 : vector<16x64xf32>
    %c4_36 = arith.constant 4 : index
    %c0_37 = arith.constant 0 : index
    %48 = vector.load %arg17[%c4_36, %c0_37] : memref<24x32xf32, #tpu.memory_space<vmem>>, vector<16x32xf32>
    %49 = arith.truncf %48 : vector<16x32xf32> to vector<16x32xbf16>
    %c4_38 = arith.constant 4 : index
    %c0_39 = arith.constant 0 : index
    %c0_40 = arith.constant 0 : index
    %50 = vector.load %arg5[%c4_38, %c0_39, %c0_40] : memref<9x32x64xbf16, #tpu.memory_space<vmem>>, vector<1x32x64xbf16>
    %51 = vector.shape_cast %50 : vector<1x32x64xbf16> to vector<32x64xbf16>
    %cst_41 = arith.constant dense<0.000000e+00> : vector<16x64xf32>
    %52 = tpu.matmul %49, %51, %cst_41 {dimension_numbers = #tpu.dot_dimension_numbers<[1], [0], [0], [1], [0, 0, 1, 1], [], []>} : vector<16x32xbf16>, vector<32x64xbf16>, vector<16x64xf32> -> vector<16x64xf32>
    %53 = arith.addf %47, %52 : vector<16x64xf32>
    %c5 = arith.constant 5 : index
    %c0_42 = arith.constant 0 : index
    %54 = vector.load %arg17[%c5, %c0_42] : memref<24x32xf32, #tpu.memory_space<vmem>>, vector<16x32xf32>
    %55 = arith.truncf %54 : vector<16x32xf32> to vector<16x32xbf16>
    %c5_43 = arith.constant 5 : index
    %c0_44 = arith.constant 0 : index
    %c0_45 = arith.constant 0 : index
    %56 = vector.load %arg5[%c5_43, %c0_44, %c0_45] : memref<9x32x64xbf16, #tpu.memory_space<vmem>>, vector<1x32x64xbf16>
    %57 = vector.shape_cast %56 : vector<1x32x64xbf16> to vector<32x64xbf16>
    %cst_46 = arith.constant dense<0.000000e+00> : vector<16x64xf32>
    %58 = tpu.matmul %55, %57, %cst_46 {dimension_numbers = #tpu.dot_dimension_numbers<[1], [0], [0], [1], [0, 0, 1, 1], [], []>} : vector<16x32xbf16>, vector<32x64xbf16>, vector<16x64xf32> -> vector<16x64xf32>
    %59 = arith.addf %53, %58 : vector<16x64xf32>
    %c6 = arith.constant 6 : index
    %c0_47 = arith.constant 0 : index
    %60 = vector.load %arg17[%c6, %c0_47] : memref<24x32xf32, #tpu.memory_space<vmem>>, vector<16x32xf32>
    %61 = arith.truncf %60 : vector<16x32xf32> to vector<16x32xbf16>
    %c6_48 = arith.constant 6 : index
    %c0_49 = arith.constant 0 : index
    %c0_50 = arith.constant 0 : index
    %62 = vector.load %arg5[%c6_48, %c0_49, %c0_50] : memref<9x32x64xbf16, #tpu.memory_space<vmem>>, vector<1x32x64xbf16>
    %63 = vector.shape_cast %62 : vector<1x32x64xbf16> to vector<32x64xbf16>
    %cst_51 = arith.constant dense<0.000000e+00> : vector<16x64xf32>
    %64 = tpu.matmul %61, %63, %cst_51 {dimension_numbers = #tpu.dot_dimension_numbers<[1], [0], [0], [1], [0, 0, 1, 1], [], []>} : vector<16x32xbf16>, vector<32x64xbf16>, vector<16x64xf32> -> vector<16x64xf32>
    %65 = arith.addf %59, %64 : vector<16x64xf32>
    %c7 = arith.constant 7 : index
    %c0_52 = arith.constant 0 : index
    %66 = vector.load %arg17[%c7, %c0_52] : memref<24x32xf32, #tpu.memory_space<vmem>>, vector<16x32xf32>
    %67 = arith.truncf %66 : vector<16x32xf32> to vector<16x32xbf16>
    %c7_53 = arith.constant 7 : index
    %c0_54 = arith.constant 0 : index
    %c0_55 = arith.constant 0 : index
    %68 = vector.load %arg5[%c7_53, %c0_54, %c0_55] : memref<9x32x64xbf16, #tpu.memory_space<vmem>>, vector<1x32x64xbf16>
    %69 = vector.shape_cast %68 : vector<1x32x64xbf16> to vector<32x64xbf16>
    %cst_56 = arith.constant dense<0.000000e+00> : vector<16x64xf32>
    %70 = tpu.matmul %67, %69, %cst_56 {dimension_numbers = #tpu.dot_dimension_numbers<[1], [0], [0], [1], [0, 0, 1, 1], [], []>} : vector<16x32xbf16>, vector<32x64xbf16>, vector<16x64xf32> -> vector<16x64xf32>
    %71 = arith.addf %65, %70 : vector<16x64xf32>
    %c8 = arith.constant 8 : index
    %c0_57 = arith.constant 0 : index
    %72 = vector.load %arg17[%c8, %c0_57] : memref<24x32xf32, #tpu.memory_space<vmem>>, vector<16x32xf32>
    %73 = arith.truncf %72 : vector<16x32xf32> to vector<16x32xbf16>
    %c8_58 = arith.constant 8 : index
    %c0_59 = arith.constant 0 : index
    %c0_60 = arith.constant 0 : index
    %74 = vector.load %arg5[%c8_58, %c0_59, %c0_60] : memref<9x32x64xbf16, #tpu.memory_space<vmem>>, vector<1x32x64xbf16>
    %75 = vector.shape_cast %74 : vector<1x32x64xbf16> to vector<32x64xbf16>
    %cst_61 = arith.constant dense<0.000000e+00> : vector<16x64xf32>
    %76 = tpu.matmul %73, %75, %cst_61 {dimension_numbers = #tpu.dot_dimension_numbers<[1], [0], [0], [1], [0, 0, 1, 1], [], []>} : vector<16x32xbf16>, vector<32x64xbf16>, vector<16x64xf32> -> vector<16x64xf32>
    %77 = arith.addf %71, %76 : vector<16x64xf32>
    %c0_62 = arith.constant 0 : index
    %c0_63 = arith.constant 0 : index
    %78 = vector.load %arg6[%c0_62, %c0_63] : memref<1x64xf32, #tpu.memory_space<vmem>>, vector<1x64xf32>
    %79 = vector.shape_cast %78 : vector<1x64xf32> to vector<64xf32>
    %80 = vector.shape_cast %79 : vector<64xf32> to vector<1x64xf32>
    %81 = vector.broadcast %80 : vector<1x64xf32> to vector<16x64xf32>
    %82 = arith.mulf %77, %81 : vector<16x64xf32>
    %c0_64 = arith.constant 0 : index
    %c0_65 = arith.constant 0 : index
    %83 = vector.load %arg7[%c0_64, %c0_65] : memref<1x64xf32, #tpu.memory_space<vmem>>, vector<1x64xf32>
    %84 = vector.shape_cast %83 : vector<1x64xf32> to vector<64xf32>
    %85 = vector.shape_cast %84 : vector<64xf32> to vector<1x64xf32>
    %86 = vector.broadcast %85 : vector<1x64xf32> to vector<16x64xf32>
    %87 = arith.addf %82, %86 : vector<16x64xf32>
    %cst_66 = arith.constant 0.000000e+00 : f32
    %88 = vector.broadcast %cst_66 : f32 to vector<16x64xf32>
    %89 = arith.cmpf oge, %87, %88 : vector<16x64xf32>
    %cst_67 = arith.constant 0.00999999977 : f32
    %90 = vector.broadcast %cst_67 : f32 to vector<16x64xf32>
    %91 = arith.mulf %90, %87 : vector<16x64xf32>
    %92 = arith.select %89, %87, %91 : vector<16x64xi1>, vector<16x64xf32>
    %93 = arith.truncf %92 : vector<16x64xf32> to vector<16x64xbf16>
    %c0_68 = arith.constant 0 : index
    %c0_69 = arith.constant 0 : index
    %94 = vector.load %arg8[%c0_68, %c0_69] : memref<64x64xbf16, #tpu.memory_space<vmem>>, vector<64x64xbf16>
    %cst_70 = arith.constant dense<0.000000e+00> : vector<16x64xf32>
    %95 = tpu.matmul %93, %94, %cst_70 {dimension_numbers = #tpu.dot_dimension_numbers<[1], [0], [0], [1], [0, 0, 1, 1], [], []>} : vector<16x64xbf16>, vector<64x64xbf16>, vector<16x64xf32> -> vector<16x64xf32>
    %96 = arith.truncf %95 : vector<16x64xf32> to vector<16x64xbf16>
    %c0_71 = arith.constant 0 : index
    %c0_72 = arith.constant 0 : index
    %97 = vector.load %arg9[%c0_71, %c0_72] : memref<64x64xbf16, #tpu.memory_space<vmem>>, vector<64x64xbf16>
    %cst_73 = arith.constant dense<0.000000e+00> : vector<16x64xf32>
    %98 = tpu.matmul %96, %97, %cst_73 {dimension_numbers = #tpu.dot_dimension_numbers<[1], [0], [0], [1], [0, 0, 1, 1], [], []>} : vector<16x64xbf16>, vector<64x64xbf16>, vector<16x64xf32> -> vector<16x64xf32>
    %c0_74 = arith.constant 0 : index
    %c0_75 = arith.constant 0 : index
    %99 = vector.load %arg10[%c0_74, %c0_75] : memref<1x64xf32, #tpu.memory_space<vmem>>, vector<1x64xf32>
    %100 = vector.shape_cast %99 : vector<1x64xf32> to vector<64xf32>
    %101 = vector.shape_cast %100 : vector<64xf32> to vector<1x64xf32>
    %102 = vector.broadcast %101 : vector<1x64xf32> to vector<16x64xf32>
    %103 = arith.mulf %98, %102 : vector<16x64xf32>
    %c0_76 = arith.constant 0 : index
    %c0_77 = arith.constant 0 : index
    %104 = vector.load %arg11[%c0_76, %c0_77] : memref<1x64xf32, #tpu.memory_space<vmem>>, vector<1x64xf32>
    %105 = vector.shape_cast %104 : vector<1x64xf32> to vector<64xf32>
    %106 = vector.shape_cast %105 : vector<64xf32> to vector<1x64xf32>
    %107 = vector.broadcast %106 : vector<1x64xf32> to vector<16x64xf32>
    %108 = arith.addf %103, %107 : vector<16x64xf32>
    %cst_78 = arith.constant 0.000000e+00 : f32
    %109 = vector.broadcast %cst_78 : f32 to vector<16x64xf32>
    %110 = arith.cmpf oge, %108, %109 : vector<16x64xf32>
    %cst_79 = arith.constant 0.00999999977 : f32
    %111 = vector.broadcast %cst_79 : f32 to vector<16x64xf32>
    %112 = arith.mulf %111, %108 : vector<16x64xf32>
    %113 = arith.select %110, %108, %112 : vector<16x64xi1>, vector<16x64xf32>
    %cst_80 = arith.constant 0.000000e+00 : f32
    %114 = vector.broadcast %cst_80 : f32 to vector<24x64xf32>
    %c0_81 = arith.constant 0 : index
    %c0_82 = arith.constant 0 : index
    %115 = vector.load %arg18[%c0_81, %c0_82] : memref<24x64xf32, #tpu.memory_space<vmem>>, vector<24x64xf32>
    tpu.vector_store %arg18[%c0_81, %c0_82], %114 {strides = array<i32>} : memref<24x64xf32, #tpu.memory_space<vmem>>, vector<24x64xf32>,
    %c4_83 = arith.constant 4 : index
    %c0_84 = arith.constant 0 : index
    %116 = vector.load %arg18[%c4_83, %c0_84] : memref<24x64xf32, #tpu.memory_space<vmem>>, vector<16x64xf32>
    tpu.vector_store %arg18[%c4_83, %c0_84], %113 {strides = array<i32>} : memref<24x64xf32, #tpu.memory_space<vmem>>, vector<16x64xf32>,
    %cst_85 = arith.constant 0.000000e+00 : f32
    %117 = vector.broadcast %cst_85 : f32 to vector<16x128xf32>
    %c0_86 = arith.constant 0 : index
    %c0_87 = arith.constant 0 : index
    %118 = vector.load %arg18[%c0_86, %c0_87] : memref<24x64xf32, #tpu.memory_space<vmem>>, vector<16x64xf32>
    %119 = arith.truncf %118 : vector<16x64xf32> to vector<16x64xbf16>
    %c0_88 = arith.constant 0 : index
    %c0_89 = arith.constant 0 : index
    %c0_90 = arith.constant 0 : index
    %120 = vector.load %arg12[%c0_88, %c0_89, %c0_90] : memref<9x64x128xbf16, #tpu.memory_space<vmem>>, vector<1x64x128xbf16>
    %121 = vector.shape_cast %120 : vector<1x64x128xbf16> to vector<64x128xbf16>
    %cst_91 = arith.constant dense<0.000000e+00> : vector<16x128xf32>
    %122 = tpu.matmul %119, %121, %cst_91 {dimension_numbers = #tpu.dot_dimension_numbers<[1], [0], [0], [1], [0, 0, 1, 1], [], []>} : vector<16x64xbf16>, vector<64x128xbf16>, vector<16x128xf32> -> vector<16x128xf32>
    %123 = arith.addf %117, %122 : vector<16x128xf32>
    %c1_92 = arith.constant 1 : index
    %c0_93 = arith.constant 0 : index
    %124 = vector.load %arg18[%c1_92, %c0_93] : memref<24x64xf32, #tpu.memory_space<vmem>>, vector<16x64xf32>
    %125 = arith.truncf %124 : vector<16x64xf32> to vector<16x64xbf16>
    %c1_94 = arith.constant 1 : index
    %c0_95 = arith.constant 0 : index
    %c0_96 = arith.constant 0 : index
    %126 = vector.load %arg12[%c1_94, %c0_95, %c0_96] : memref<9x64x128xbf16, #tpu.memory_space<vmem>>, vector<1x64x128xbf16>
    %127 = vector.shape_cast %126 : vector<1x64x128xbf16> to vector<64x128xbf16>
    %cst_97 = arith.constant dense<0.000000e+00> : vector<16x128xf32>
    %128 = tpu.matmul %125, %127, %cst_97 {dimension_numbers = #tpu.dot_dimension_numbers<[1], [0], [0], [1], [0, 0, 1, 1], [], []>} : vector<16x64xbf16>, vector<64x128xbf16>, vector<16x128xf32> -> vector<16x128xf32>
    %129 = arith.addf %123, %128 : vector<16x128xf32>
    %c2_98 = arith.constant 2 : index
    %c0_99 = arith.constant 0 : index
    %130 = vector.load %arg18[%c2_98, %c0_99] : memref<24x64xf32, #tpu.memory_space<vmem>>, vector<16x64xf32>
    %131 = arith.truncf %130 : vector<16x64xf32> to vector<16x64xbf16>
    %c2_100 = arith.constant 2 : index
    %c0_101 = arith.constant 0 : index
    %c0_102 = arith.constant 0 : index
    %132 = vector.load %arg12[%c2_100, %c0_101, %c0_102] : memref<9x64x128xbf16, #tpu.memory_space<vmem>>, vector<1x64x128xbf16>
    %133 = vector.shape_cast %132 : vector<1x64x128xbf16> to vector<64x128xbf16>
    %cst_103 = arith.constant dense<0.000000e+00> : vector<16x128xf32>
    %134 = tpu.matmul %131, %133, %cst_103 {dimension_numbers = #tpu.dot_dimension_numbers<[1], [0], [0], [1], [0, 0, 1, 1], [], []>} : vector<16x64xbf16>, vector<64x128xbf16>, vector<16x128xf32> -> vector<16x128xf32>
    %135 = arith.addf %129, %134 : vector<16x128xf32>
    %c3_104 = arith.constant 3 : index
    %c0_105 = arith.constant 0 : index
    %136 = vector.load %arg18[%c3_104, %c0_105] : memref<24x64xf32, #tpu.memory_space<vmem>>, vector<16x64xf32>
    %137 = arith.truncf %136 : vector<16x64xf32> to vector<16x64xbf16>
    %c3_106 = arith.constant 3 : index
    %c0_107 = arith.constant 0 : index
    %c0_108 = arith.constant 0 : index
    %138 = vector.load %arg12[%c3_106, %c0_107, %c0_108] : memref<9x64x128xbf16, #tpu.memory_space<vmem>>, vector<1x64x128xbf16>
    %139 = vector.shape_cast %138 : vector<1x64x128xbf16> to vector<64x128xbf16>
    %cst_109 = arith.constant dense<0.000000e+00> : vector<16x128xf32>
    %140 = tpu.matmul %137, %139, %cst_109 {dimension_numbers = #tpu.dot_dimension_numbers<[1], [0], [0], [1], [0, 0, 1, 1], [], []>} : vector<16x64xbf16>, vector<64x128xbf16>, vector<16x128xf32> -> vector<16x128xf32>
    %141 = arith.addf %135, %140 : vector<16x128xf32>
    %c4_110 = arith.constant 4 : index
    %c0_111 = arith.constant 0 : index
    %142 = vector.load %arg18[%c4_110, %c0_111] : memref<24x64xf32, #tpu.memory_space<vmem>>, vector<16x64xf32>
    %143 = arith.truncf %142 : vector<16x64xf32> to vector<16x64xbf16>
    %c4_112 = arith.constant 4 : index
    %c0_113 = arith.constant 0 : index
    %c0_114 = arith.constant 0 : index
    %144 = vector.load %arg12[%c4_112, %c0_113, %c0_114] : memref<9x64x128xbf16, #tpu.memory_space<vmem>>, vector<1x64x128xbf16>
    %145 = vector.shape_cast %144 : vector<1x64x128xbf16> to vector<64x128xbf16>
    %cst_115 = arith.constant dense<0.000000e+00> : vector<16x128xf32>
    %146 = tpu.matmul %143, %145, %cst_115 {dimension_numbers = #tpu.dot_dimension_numbers<[1], [0], [0], [1], [0, 0, 1, 1], [], []>} : vector<16x64xbf16>, vector<64x128xbf16>, vector<16x128xf32> -> vector<16x128xf32>
    %147 = arith.addf %141, %146 : vector<16x128xf32>
    %c5_116 = arith.constant 5 : index
    %c0_117 = arith.constant 0 : index
    %148 = vector.load %arg18[%c5_116, %c0_117] : memref<24x64xf32, #tpu.memory_space<vmem>>, vector<16x64xf32>
    %149 = arith.truncf %148 : vector<16x64xf32> to vector<16x64xbf16>
    %c5_118 = arith.constant 5 : index
    %c0_119 = arith.constant 0 : index
    %c0_120 = arith.constant 0 : index
    %150 = vector.load %arg12[%c5_118, %c0_119, %c0_120] : memref<9x64x128xbf16, #tpu.memory_space<vmem>>, vector<1x64x128xbf16>
    %151 = vector.shape_cast %150 : vector<1x64x128xbf16> to vector<64x128xbf16>
    %cst_121 = arith.constant dense<0.000000e+00> : vector<16x128xf32>
    %152 = tpu.matmul %149, %151, %cst_121 {dimension_numbers = #tpu.dot_dimension_numbers<[1], [0], [0], [1], [0, 0, 1, 1], [], []>} : vector<16x64xbf16>, vector<64x128xbf16>, vector<16x128xf32> -> vector<16x128xf32>
    %153 = arith.addf %147, %152 : vector<16x128xf32>
    %c6_122 = arith.constant 6 : index
    %c0_123 = arith.constant 0 : index
    %154 = vector.load %arg18[%c6_122, %c0_123] : memref<24x64xf32, #tpu.memory_space<vmem>>, vector<16x64xf32>
    %155 = arith.truncf %154 : vector<16x64xf32> to vector<16x64xbf16>
    %c6_124 = arith.constant 6 : index
    %c0_125 = arith.constant 0 : index
    %c0_126 = arith.constant 0 : index
    %156 = vector.load %arg12[%c6_124, %c0_125, %c0_126] : memref<9x64x128xbf16, #tpu.memory_space<vmem>>, vector<1x64x128xbf16>
    %157 = vector.shape_cast %156 : vector<1x64x128xbf16> to vector<64x128xbf16>
    %cst_127 = arith.constant dense<0.000000e+00> : vector<16x128xf32>
    %158 = tpu.matmul %155, %157, %cst_127 {dimension_numbers = #tpu.dot_dimension_numbers<[1], [0], [0], [1], [0, 0, 1, 1], [], []>} : vector<16x64xbf16>, vector<64x128xbf16>, vector<16x128xf32> -> vector<16x128xf32>
    %159 = arith.addf %153, %158 : vector<16x128xf32>
    %c7_128 = arith.constant 7 : index
    %c0_129 = arith.constant 0 : index
    %160 = vector.load %arg18[%c7_128, %c0_129] : memref<24x64xf32, #tpu.memory_space<vmem>>, vector<16x64xf32>
    %161 = arith.truncf %160 : vector<16x64xf32> to vector<16x64xbf16>
    %c7_130 = arith.constant 7 : index
    %c0_131 = arith.constant 0 : index
    %c0_132 = arith.constant 0 : index
    %162 = vector.load %arg12[%c7_130, %c0_131, %c0_132] : memref<9x64x128xbf16, #tpu.memory_space<vmem>>, vector<1x64x128xbf16>
    %163 = vector.shape_cast %162 : vector<1x64x128xbf16> to vector<64x128xbf16>
    %cst_133 = arith.constant dense<0.000000e+00> : vector<16x128xf32>
    %164 = tpu.matmul %161, %163, %cst_133 {dimension_numbers = #tpu.dot_dimension_numbers<[1], [0], [0], [1], [0, 0, 1, 1], [], []>} : vector<16x64xbf16>, vector<64x128xbf16>, vector<16x128xf32> -> vector<16x128xf32>
    %165 = arith.addf %159, %164 : vector<16x128xf32>
    %c8_134 = arith.constant 8 : index
    %c0_135 = arith.constant 0 : index
    %166 = vector.load %arg18[%c8_134, %c0_135] : memref<24x64xf32, #tpu.memory_space<vmem>>, vector<16x64xf32>
    %167 = arith.truncf %166 : vector<16x64xf32> to vector<16x64xbf16>
    %c8_136 = arith.constant 8 : index
    %c0_137 = arith.constant 0 : index
    %c0_138 = arith.constant 0 : index
    %168 = vector.load %arg12[%c8_136, %c0_137, %c0_138] : memref<9x64x128xbf16, #tpu.memory_space<vmem>>, vector<1x64x128xbf16>
    %169 = vector.shape_cast %168 : vector<1x64x128xbf16> to vector<64x128xbf16>
    %cst_139 = arith.constant dense<0.000000e+00> : vector<16x128xf32>
    %170 = tpu.matmul %167, %169, %cst_139 {dimension_numbers = #tpu.dot_dimension_numbers<[1], [0], [0], [1], [0, 0, 1, 1], [], []>} : vector<16x64xbf16>, vector<64x128xbf16>, vector<16x128xf32> -> vector<16x128xf32>
    %171 = arith.addf %165, %170 : vector<16x128xf32>
    %c0_140 = arith.constant 0 : index
    %c0_141 = arith.constant 0 : index
    %172 = vector.load %arg13[%c0_140, %c0_141] : memref<1x128xf32, #tpu.memory_space<vmem>>, vector<1x128xf32>
    %173 = vector.shape_cast %172 : vector<1x128xf32> to vector<128xf32>
    %174 = vector.shape_cast %173 : vector<128xf32> to vector<1x128xf32>
    %175 = vector.broadcast %174 : vector<1x128xf32> to vector<16x128xf32>
    %176 = arith.addf %171, %175 : vector<16x128xf32>
    %cst_142 = arith.constant 0.000000e+00 : f32
    %177 = vector.broadcast %cst_142 : f32 to vector<16x128xf32>
    %178 = arith.cmpf oge, %176, %177 : vector<16x128xf32>
    %cst_143 = arith.constant 0.00999999977 : f32
    %179 = vector.broadcast %cst_143 : f32 to vector<16x128xf32>
    %180 = arith.mulf %179, %176 : vector<16x128xf32>
    %181 = arith.select %178, %176, %180 : vector<16x128xi1>, vector<16x128xf32>
    %182 = arith.addf %181, %19 : vector<16x128xf32>
    %c0_144 = arith.constant 0 : index
    %c0_145 = arith.constant 0 : index
    %183 = vector.load %arg14[%c0_144, %c0_145] : memref<1x128xf32, #tpu.memory_space<vmem>>, vector<1x128xf32>
    %184 = vector.shape_cast %183 : vector<1x128xf32> to vector<128xf32>
    %185 = vector.shape_cast %184 : vector<128xf32> to vector<1x128xf32>
    %186 = vector.broadcast %185 : vector<1x128xf32> to vector<16x128xf32>
    %187 = arith.mulf %182, %186 : vector<16x128xf32>
    %c0_146 = arith.constant 0 : index
    %c0_147 = arith.constant 0 : index
    %188 = vector.load %arg15[%c0_146, %c0_147] : memref<1x128xf32, #tpu.memory_space<vmem>>, vector<1x128xf32>
    %189 = vector.shape_cast %188 : vector<1x128xf32> to vector<128xf32>
    %190 = vector.shape_cast %189 : vector<128xf32> to vector<1x128xf32>
    %191 = vector.broadcast %190 : vector<1x128xf32> to vector<16x128xf32>
    %192 = arith.addf %187, %191 : vector<16x128xf32>
    %cst_148 = arith.constant 0.000000e+00 : f32
    %193 = vector.broadcast %cst_148 : f32 to vector<16x128xf32>
    %194 = arith.cmpf oge, %192, %193 : vector<16x128xf32>
    %cst_149 = arith.constant 0.00999999977 : f32
    %195 = vector.broadcast %cst_149 : f32 to vector<16x128xf32>
    %196 = arith.mulf %195, %192 : vector<16x128xf32>
    %197 = arith.select %194, %192, %196 : vector<16x128xi1>, vector<16x128xf32>
    %198 = vector.shape_cast %197 : vector<16x128xf32> to vector<1x16x128xf32>
    %c0_150 = arith.constant 0 : index
    %c0_151 = arith.constant 0 : index
    %c0_152 = arith.constant 0 : index
    %199 = vector.load %arg16[%c0_150, %c0_151, %c0_152] : memref<1x16x128xf32, #tpu.memory_space<vmem>>, vector<1x16x128xf32>
    tpu.vector_store %arg16[%c0_150, %c0_151, %c0_152], %198 {strides = array<i32>} : memref<1x16x128xf32, #tpu.memory_space<vmem>>, vector<1x16x128xf32>,
    return
  }
  func.func @transform_0(%arg0: i32) -> (i32, i32, i32) {
    %c0_i32 = arith.constant 0 : i32
    %c0_i32_0 = arith.constant 0 : i32
    %c0_i32_1 = arith.constant 0 : i32
    return %arg0, %c0_i32, %c0_i32_0 : i32, i32, i32
  }
  func.func @transform_1(%arg0: i32) -> (i32, i32) {
    %c0_i32 = arith.constant 0 : i32
    %c0_i32_0 = arith.constant 0 : i32
    %c0_i32_1 = arith.constant 0 : i32
    return %c0_i32, %c0_i32_0 : i32, i32
  }
  func.func @transform_2(%arg0: i32) -> (i32, i32) {
    %c0_i32 = arith.constant 0 : i32
    %c0_i32_0 = arith.constant 0 : i32
    %c0_i32_1 = arith.constant 0 : i32
    return %c0_i32, %c0_i32_0 : i32, i32
  }
  func.func @transform_3(%arg0: i32) -> (i32, i32) {
    %c0_i32 = arith.constant 0 : i32
    %c0_i32_0 = arith.constant 0 : i32
    %c0_i32_1 = arith.constant 0 : i32
    return %c0_i32, %c0_i32_0 : i32, i32
  }
  func.func @transform_4(%arg0: i32) -> (i32, i32, i32) {
    %c0_i32 = arith.constant 0 : i32
    %c0_i32_0 = arith.constant 0 : i32
    %c0_i32_1 = arith.constant 0 : i32
    %c0_i32_2 = arith.constant 0 : i32
    return %c0_i32, %c0_i32_0, %c0_i32_1 : i32, i32, i32
  }
  func.func @transform_5(%arg0: i32) -> (i32, i32) {
    %c0_i32 = arith.constant 0 : i32
    %c0_i32_0 = arith.constant 0 : i32
    %c0_i32_1 = arith.constant 0 : i32
    return %c0_i32, %c0_i32_0 : i32, i32
  }
  func.func @transform_6(%arg0: i32) -> (i32, i32) {
    %c0_i32 = arith.constant 0 : i32
    %c0_i32_0 = arith.constant 0 : i32
    %c0_i32_1 = arith.constant 0 : i32
    return %c0_i32, %c0_i32_0 : i32, i32
  }
  func.func @transform_7(%arg0: i32) -> (i32, i32) {
    %c0_i32 = arith.constant 0 : i32
    %c0_i32_0 = arith.constant 0 : i32
    %c0_i32_1 = arith.constant 0 : i32
    return %c0_i32, %c0_i32_0 : i32, i32
  }
  func.func @transform_8(%arg0: i32) -> (i32, i32) {
    %c0_i32 = arith.constant 0 : i32
    %c0_i32_0 = arith.constant 0 : i32
    %c0_i32_1 = arith.constant 0 : i32
    return %c0_i32, %c0_i32_0 : i32, i32
  }
  func.func @transform_9(%arg0: i32) -> (i32, i32) {
    %c0_i32 = arith.constant 0 : i32
    %c0_i32_0 = arith.constant 0 : i32
    %c0_i32_1 = arith.constant 0 : i32
    return %c0_i32, %c0_i32_0 : i32, i32
  }
  func.func @transform_10(%arg0: i32) -> (i32, i32) {
    %c0_i32 = arith.constant 0 : i32
    %c0_i32_0 = arith.constant 0 : i32
    %c0_i32_1 = arith.constant 0 : i32
    return %c0_i32, %c0_i32_0 : i32, i32
  }
  func.func @transform_11(%arg0: i32) -> (i32, i32, i32) {
    %c0_i32 = arith.constant 0 : i32
    %c0_i32_0 = arith.constant 0 : i32
    %c0_i32_1 = arith.constant 0 : i32
    %c0_i32_2 = arith.constant 0 : i32
    return %c0_i32, %c0_i32_0, %c0_i32_1 : i32, i32, i32
  }
  func.func @transform_12(%arg0: i32) -> (i32, i32) {
    %c0_i32 = arith.constant 0 : i32
    %c0_i32_0 = arith.constant 0 : i32
    %c0_i32_1 = arith.constant 0 : i32
    return %c0_i32, %c0_i32_0 : i32, i32
  }
  func.func @transform_13(%arg0: i32) -> (i32, i32) {
    %c0_i32 = arith.constant 0 : i32
    %c0_i32_0 = arith.constant 0 : i32
    %c0_i32_1 = arith.constant 0 : i32
    return %c0_i32, %c0_i32_0 : i32, i32
  }
  func.func @transform_14(%arg0: i32) -> (i32, i32) {
    %c0_i32 = arith.constant 0 : i32
    %c0_i32_0 = arith.constant 0 : i32
    %c0_i32_1 = arith.constant 0 : i32
    return %c0_i32, %c0_i32_0 : i32, i32
  }
  func.func @transform_15(%arg0: i32) -> (i32, i32, i32) {
    %c0_i32 = arith.constant 0 : i32
    %c0_i32_0 = arith.constant 0 : i32
    %c0_i32_1 = arith.constant 0 : i32
    return %arg0, %c0_i32, %c0_i32_0 : i32, i32, i32
  }
}

module attributes {stable_mosaic.version = 11 : i64} {
  func.func @_fcn_head_kernel(%arg0: i32, %arg1: memref<1x16x256xf32, #tpu.memory_space<vmem>>, %arg2: memref<256x256xbf16, #tpu.memory_space<vmem>>, %arg3: memref<1x256xf32, #tpu.memory_space<vmem>>, %arg4: memref<1x256xf32, #tpu.memory_space<vmem>>, %arg5: memref<1x1x256xf32, #tpu.memory_space<vmem>>) attributes {dimension_semantics = [#tpu.dimension_semantics<parallel>], iteration_bounds = array<i64: 4>, scalar_prefetch = 0 : i64, scratch_operands = 0 : i64, tpu.core_type = #tpu.core_type<tc>, window_params = [{transform_indices = @transform_0, window_bounds = array<i64: 1, 16, 256>}, {pipeline_mode = #tpu.pipeline_mode<synchronous>, transform_indices = @transform_1, window_bounds = array<i64: 256, 256>}, {pipeline_mode = #tpu.pipeline_mode<synchronous>, transform_indices = @transform_2, window_bounds = array<i64: 1, 256>}, {pipeline_mode = #tpu.pipeline_mode<synchronous>, transform_indices = @transform_3, window_bounds = array<i64: 1, 256>}, {transform_indices = @transform_4, window_bounds = array<i64: 1, 1, 256>}]} {
    %c0 = arith.constant 0 : index
    %c0_0 = arith.constant 0 : index
    %c0_1 = arith.constant 0 : index
    %0 = vector.load %arg1[%c0, %c0_0, %c0_1] : memref<1x16x256xf32, #tpu.memory_space<vmem>>, vector<1x16x256xf32>
    %1 = vector.shape_cast %0 : vector<1x16x256xf32> to vector<16x256xf32>
    %2 = arith.truncf %1 : vector<16x256xf32> to vector<16x256xbf16>
    %c0_2 = arith.constant 0 : index
    %c0_3 = arith.constant 0 : index
    %3 = vector.load %arg2[%c0_2, %c0_3] : memref<256x256xbf16, #tpu.memory_space<vmem>>, vector<256x256xbf16>
    %cst = arith.constant dense<0.000000e+00> : vector<16x256xf32>
    %4 = tpu.matmul %2, %3, %cst {dimension_numbers = #tpu.dot_dimension_numbers<[1], [0], [0], [1], [0, 0, 1, 1], [], []>} : vector<16x256xbf16>, vector<256x256xbf16>, vector<16x256xf32> -> vector<16x256xf32>
    %c0_4 = arith.constant 0 : index
    %c0_5 = arith.constant 0 : index
    %5 = vector.load %arg3[%c0_4, %c0_5] : memref<1x256xf32, #tpu.memory_space<vmem>>, vector<1x256xf32>
    %6 = vector.shape_cast %5 : vector<1x256xf32> to vector<256xf32>
    %7 = vector.shape_cast %6 : vector<256xf32> to vector<1x256xf32>
    %8 = vector.broadcast %7 : vector<1x256xf32> to vector<16x256xf32>
    %9 = arith.mulf %4, %8 : vector<16x256xf32>
    %c0_6 = arith.constant 0 : index
    %c0_7 = arith.constant 0 : index
    %10 = vector.load %arg4[%c0_6, %c0_7] : memref<1x256xf32, #tpu.memory_space<vmem>>, vector<1x256xf32>
    %11 = vector.shape_cast %10 : vector<1x256xf32> to vector<256xf32>
    %12 = vector.shape_cast %11 : vector<256xf32> to vector<1x256xf32>
    %13 = vector.broadcast %12 : vector<1x256xf32> to vector<16x256xf32>
    %14 = arith.addf %9, %13 : vector<16x256xf32>
    %cst_8 = arith.constant dense<0.000000e+00> : vector<256xf32>
    %15 = vector.multi_reduction <add>, %14, %cst_8 [0] : vector<16x256xf32> to vector<256xf32>
    %16 = vector.shape_cast %15 : vector<256xf32> to vector<1x256xf32>
    %cst_9 = arith.constant 1.600000e+01 : f32
    %17 = vector.broadcast %cst_9 : f32 to vector<1x256xf32>
    %18 = arith.divf %16, %17 : vector<1x256xf32>
    %19 = vector.shape_cast %18 : vector<1x256xf32> to vector<1x1x256xf32>
    %c0_10 = arith.constant 0 : index
    %c0_11 = arith.constant 0 : index
    %c0_12 = arith.constant 0 : index
    %20 = vector.load %arg5[%c0_10, %c0_11, %c0_12] : memref<1x1x256xf32, #tpu.memory_space<vmem>>, vector<1x1x256xf32>
    tpu.vector_store %arg5[%c0_10, %c0_11, %c0_12], %19 {strides = array<i32>} : memref<1x1x256xf32, #tpu.memory_space<vmem>>, vector<1x1x256xf32>,
    return
  }
  func.func @transform_0(%arg0: i32) -> (i32, i32, i32) {
    %c0_i32 = arith.constant 0 : i32
    %c0_i32_0 = arith.constant 0 : i32
    %c0_i32_1 = arith.constant 0 : i32
    return %arg0, %c0_i32, %c0_i32_0 : i32, i32, i32
  }
  func.func @transform_1(%arg0: i32) -> (i32, i32) {
    %c0_i32 = arith.constant 0 : i32
    %c0_i32_0 = arith.constant 0 : i32
    %c0_i32_1 = arith.constant 0 : i32
    return %c0_i32, %c0_i32_0 : i32, i32
  }
  func.func @transform_2(%arg0: i32) -> (i32, i32) {
    %c0_i32 = arith.constant 0 : i32
    %c0_i32_0 = arith.constant 0 : i32
    %c0_i32_1 = arith.constant 0 : i32
    return %c0_i32, %c0_i32_0 : i32, i32
  }
  func.func @transform_3(%arg0: i32) -> (i32, i32) {
    %c0_i32 = arith.constant 0 : i32
    %c0_i32_0 = arith.constant 0 : i32
    %c0_i32_1 = arith.constant 0 : i32
    return %c0_i32, %c0_i32_0 : i32, i32
  }
  func.func @transform_4(%arg0: i32) -> (i32, i32, i32) {
    %c0_i32 = arith.constant 0 : i32
    %c0_i32_0 = arith.constant 0 : i32
    %c0_i32_1 = arith.constant 0 : i32
    return %arg0, %c0_i32, %c0_i32_0 : i32, i32, i32
  }
}

</mosaic_0001>

<llo_original>
// kernel: _lambda_.5
$region0: #{_lambda_.5}
  #allocation0 [shape = 'u32[]', space=smem, size = 0x4, offset = 0x4, fixed_abs, tag = 'smem constant byte address 0x4 - core index']
  #allocation1 [shape = 'u32[144,128]{1,0:T(1,128)}', space=vmem, size = 0x12000, scoped, tag = 'internal scratch']
  %s0 = inlined_call_operand.vmem [shape: f32[4,16,256], index: 0, kind: input, shape index: {}]
  %s1 = inlined_call_operand.vmem [shape: bf16[256,256], index: 1, kind: input, shape index: {}]
  %s2 = inlined_call_operand.vmem [shape: f32[1,256], index: 2, kind: input, shape index: {}]
  %s3 = inlined_call_operand.vmem [shape: f32[1,256], index: 3, kind: input, shape index: {}]
  %s4 = inlined_call_operand.vmem [shape: f32[4,1,256], index: 4, kind: output, shape index: {}]
  %s5 = sld [smem:[#allocation0]]
  $region49: #{_lambda_.5} parent=0
    _
  %s7 = ssub.s32 1, %s5
  %s8 = scalar_select 0, %s7, %s5
  loop: start=0, step=1, limit=6
  $region2: #{_lambda_.5} parent=0 // loop_pre_header
    _
  $region3: #{_lambda_.5} parent=0 // loop_header
    %s10 = sphi 0, %s14
    %p11 = scmp.ge.s32.totalorder %s10, 6
    %s20 = sphi 0, %s22
    %s23 = sphi 0, %s20
    %s24 = sphi 0, %s23
    %s40 = sphi 0, %s24
    %s44 = sphi 0, %s44
    %s46 = sphi 0, %s44
    %s47 = sphi 0, %s46
    %s61 = sphi 0, %s47
    %s65 = sphi 0, %s65
    %s67 = sphi 0, %s65
    %s68 = sphi 0, %s67
    %s82 = sphi 0, %s68
    %s86 = sphi 0, %s86
    %s88 = sphi 0, %s86
    %s89 = sphi 0, %s88
    %s103 = sphi 0, %s89
    %s109 = sphi 0, %s111
    %s112 = sphi 0, %s109
    %s113 = sphi 0, %s112
    %s129 = sphi 0, %s113
  $region4: #{_lambda_.5} parent=0 // loop_header_branch
    %13 = sbr.rel (%p11) target = $region8
  $region5: #{_lambda_.5} parent=0 // loop_body
    %s15 = ssub.s32 %s10, 1
    %s16 = ssub.s32 %s10, 2
    %s17 = sadd.s32 %s10, 1
    %s18 = ssub.s32 %s10, %s17
    %p19 = scmp.eq.s32.totalorder %s18, 0
    %s21 = sadd.s32 %s20, 1
    %s22 = scalar_select %p19, %s20, %s21
    %p25 = pneg %p19
    %p26 = scmp.eq.s32.totalorder %s10, 3
    %p27 = por %p25, %p26
    %p28 = scmp.ne.s32.totalorder %s20, %s23
    %p29 = scmp.eq.s32.totalorder %s10, 0
    %p30 = por %p28, %p29
    %p31 = scmp.ne.s32.totalorder %s20, %s23
    %p32 = scmp.eq.s32.totalorder %s15, 3
    %p33 = por %p31, %p32
    %p34 = scmp.ne.s32.totalorder %s23, %s24
    %p35 = scmp.eq.s32.totalorder %s15, 0
    %p36 = por %p34, %p35
    %p37 = scmp.ne.s32.totalorder %s23, %s24
    %p38 = scmp.eq.s32.totalorder %s16, 3
    %p39 = por %p37, %p38
    %p41 = scmp.ne.s32.totalorder %s24, %s40
    %p42 = scmp.eq.s32.totalorder %s16, 0
    %p43 = por %p41, %p42
    %s45 = sadd.s32 %s44, 1
    %p48 = scmp.eq.s32.totalorder %s10, 3
    %p49 = scmp.ne.s32.totalorder %s44, %s46
    %p50 = scmp.eq.s32.totalorder %s10, 0
    %p51 = por %p49, %p50
    %p52 = scmp.ne.s32.totalorder %s44, %s46
    %p53 = scmp.eq.s32.totalorder %s15, 3
    %p54 = por %p52, %p53
    %p55 = scmp.ne.s32.totalorder %s46, %s47
    %p56 = scmp.eq.s32.totalorder %s15, 0
    %p57 = por %p55, %p56
    %p58 = scmp.ne.s32.totalorder %s46, %s47
    %p59 = scmp.eq.s32.totalorder %s16, 3
    %p60 = por %p58, %p59
    %p62 = scmp.ne.s32.totalorder %s47, %s61
    %p63 = scmp.eq.s32.totalorder %s16, 0
    %p64 = por %p62, %p63
    %s66 = sadd.s32 %s65, 1
    %p69 = scmp.eq.s32.totalorder %s10, 3
    %p70 = scmp.ne.s32.totalorder %s65, %s67
    %p71 = scmp.eq.s32.totalorder %s10, 0
    %p72 = por %p70, %p71
    %p73 = scmp.ne.s32.totalorder %s65, %s67
    %p74 = scmp.eq.s32.totalorder %s15, 3
    %p75 = por %p73, %p74
    %p76 = scmp.ne.s32.totalorder %s67, %s68
    %p77 = scmp.eq.s32.totalorder %s15, 0
    %p78 = por %p76, %p77
    %p79 = scmp.ne.s32.totalorder %s67, %s68
    %p80 = scmp.eq.s32.totalorder %s16, 3
    %p81 = por %p79, %p80
    %p83 = scmp.ne.s32.totalorder %s68, %s82
    %p84 = scmp.eq.s32.totalorder %s16, 0
    %p85 = por %p83, %p84
    %s87 = sadd.s32 %s86, 1
    %p90 = scmp.eq.s32.totalorder %s10, 3
    %p91 = scmp.ne.s32.totalorder %s86, %s88
    %p92 = scmp.eq.s32.totalorder %s10, 0
    %p93 = por %p91, %p92
    %p94 = scmp.ne.s32.totalorder %s86, %s88
    %p95 = scmp.eq.s32.totalorder %s15, 3
    %p96 = por %p94, %p95
    %p97 = scmp.ne.s32.totalorder %s88, %s89
    %p98 = scmp.eq.s32.totalorder %s15, 0
    %p99 = por %p97, %p98
    %p100 = scmp.ne.s32.totalorder %s88, %s89
    %p101 = scmp.eq.s32.totalorder %s16, 3
    %p102 = por %p100, %p101
    %p104 = scmp.ne.s32.totalorder %s89, %s103
    %p105 = scmp.eq.s32.totalorder %s16, 0
    %p106 = por %p104, %p105
    %s107 = ssub.s32 %s10, %s17
    %p108 = scmp.eq.s32.totalorder %s107, 0
    %s110 = sadd.s32 %s109, 1
    %s111 = scalar_select %p108, %s109, %s110
    %p114 = pneg %p108
    %p115 = scmp.eq.s32.totalorder %s10, 3
    %p116 = por %p114, %p115
    %p117 = scmp.ne.s32.totalorder %s109, %s112
    %p118 = scmp.eq.s32.totalorder %s10, 0
    %p119 = por %p117, %p118
    %p120 = scmp.ne.s32.totalorder %s109, %s112
    %p121 = scmp.eq.s32.totalorder %s15, 3
    %p122 = por %p120, %p121
    %p123 = scmp.ne.s32.totalorder %s112, %s113
    %p124 = scmp.eq.s32.totalorder %s15, 0
    %p125 = por %p123, %p124
    %p126 = scmp.ne.s32.totalorder %s112, %s113
    %p127 = scmp.eq.s32.totalorder %s16, 3
    %p128 = por %p126, %p127
    %p130 = scmp.ne.s32.totalorder %s113, %s129
    %p131 = scmp.eq.s32.totalorder %s16, 0
    %p132 = por %p130, %p131
    %p133 = scmp.le.s32.totalorder 1, %s10
    %p134 = scmp.lt.s32.totalorder %s10, 5
    %p135 = pnand %p133, %p134
    %p136 = pneg %p135
    // Predicated region
    $region9: #{_lambda_.5} parent=5 // pred_check
      _
    $region10: #{_lambda_.5} parent=5 // pred_check_branch
      %138 = sbr.rel (%p135) target = $region12
    $region11: #{_lambda_.5} parent=5 // pred_region
      %s139 = ssub.s32 %s10, 1
      // Predicated region
      $region13: #{_lambda_.5} parent=11 // pred_check
        %p140 = pneg %p57
      $region14: #{_lambda_.5} parent=11 // pred_check_branch
        %142 = sbr.rel (%p140) target = $region16
      $region15: #{_lambda_.5} parent=11 // pred_region
        _
      $region16: #{_lambda_.5} parent=11 // pred_fallthru
        _
      // Predicated region
      $region17: #{_lambda_.5} parent=11 // pred_check
        %p143 = pneg %p78
      $region18: #{_lambda_.5} parent=11 // pred_check_branch
        %145 = sbr.rel (%p143) target = $region20
      $region19: #{_lambda_.5} parent=11 // pred_region
        _
      $region20: #{_lambda_.5} parent=11 // pred_fallthru
        _
      // Predicated region
      $region21: #{_lambda_.5} parent=11 // pred_check
        %p146 = pneg %p99
      $region22: #{_lambda_.5} parent=11 // pred_check_branch
        %148 = sbr.rel (%p146) target = $region24
      $region23: #{_lambda_.5} parent=11 // pred_region
        _
      $region24: #{_lambda_.5} parent=11 // pred_fallthru
        _
    $region12: #{_lambda_.5} parent=5 // pred_fallthru
      _
    %p149 = scmp.lt.s32.totalorder %s10, 4
    // Predicated region
    $region25: #{_lambda_.5} parent=5 // pred_check
      %p150 = pneg %p149
    $region26: #{_lambda_.5} parent=5 // pred_check_branch
      %152 = sbr.rel (%p150) target = $region28
    $region27: #{_lambda_.5} parent=5 // pred_region
      // Predicated region
      $region29: #{_lambda_.5} parent=27 // pred_check
        %p153 = pneg %p30
      $region30: #{_lambda_.5} parent=27 // pred_check_branch
        %155 = sbr.rel (%p153) target = $region32
      $region31: #{_lambda_.5} parent=27 // pred_region
        %p156 = scmp.lt.s32.totalorder %s10, 3
        %s157 = scalar_select %p156, %s10, 3
        %s158 = smul.addr %s157, 4
        %s159 = smul.addr %s158, 8
        %s160 = scalar_lea.vmem %s0, %s159
      $region32: #{_lambda_.5} parent=27 // pred_fallthru
        _
    $region28: #{_lambda_.5} parent=5 // pred_fallthru
      _
    %p161 = scmp.le.s32.totalorder 1, %s10
    %p162 = scmp.lt.s32.totalorder %s10, 5
    %p163 = pnand %p161, %p162
    %p164 = pneg %p163
    // Predicated region
    $region33: #{_lambda_.5} parent=5 // pred_check
      _
    $region34: #{_lambda_.5} parent=5 // pred_check_branch
      %166 = sbr.rel (%p163) target = $region36
    $region35: #{_lambda_.5} parent=5 // pred_region
      %s167 = ssub.s32 %s10, 1
      %p168 = scmp.lt.s32.totalorder %s15, 3
      %s169 = scalar_select %p168, %s15, 3
      %s170 = smul.addr %s169, 4
      %s171 = smul.addr %s170, 8
      %s172 = scalar_lea.vmem %s0, %s171
      %p173 = pneg %p36
      %p174 = pneg %p33
      %p175 = pneg %p57
      %p176 = pneg %p54
      %p177 = pneg %p78
      %p178 = pneg %p75
      %p179 = pneg %p99
      %p180 = pneg %p96
      %p181 = pneg %p125
      %p182 = pneg %p122
      %p183 = scmp.lt.s32.totalorder %s15, 3
      %s184 = scalar_select %p183, %s15, 3
      %s185 = smul.addr %s184, 2
      %s186 = scalar_lea.vmem %s4, %s185
      %p187 = scmp.lt.s32.totalorder %s15, 3
      %s188 = scalar_select %p187, %s15, 3
      %s189 = smul.addr %s188, 4
      %s190 = smul.addr %s189, 8
      %s191 = scalar_lea.vmem %s0, %s190
      %p192 = scmp.lt.s32.totalorder %s15, 3
      %s193 = scalar_select %p192, %s15, 3
      %s194 = smul.addr %s193, 2
      %s195 = scalar_lea.vmem %s4, %s194
      %v196 = vld [vmem:[%s191] sm:$0xff]
      %v197 = vld [vmem:[%s191 + $0x8] sm:$0xff]
      %v198 = vld [vmem:[%s191 + $0x10] sm:$0xff]
      %v199 = vld [vmem:[%s191 + $0x18] sm:$0xff]
      %v200 = vpack.c.bf16 %v198, %v196
      %v201 = vpack.c.bf16 %v199, %v197
      %v202 = vld [vmem:[%s1] sm:$0xff]
      %v203 = vld [vmem:[%s1 + $0x8] sm:$0xff]
      %v204 = vld [vmem:[%s1 + $0x10] sm:$0xff]
      %v205 = vld [vmem:[%s1 + $0x18] sm:$0xff]
      %v206 = vld [vmem:[%s1 + $0x20] sm:$0xff]
      %v207 = vld [vmem:[%s1 + $0x28] sm:$0xff]
      %v208 = vld [vmem:[%s1 + $0x30] sm:$0xff]
      %v209 = vld [vmem:[%s1 + $0x38] sm:$0xff]
      %v210 = vld [vmem:[%s1 + $0x40] sm:$0xff]
      %v211 = vld [vmem:[%s1 + $0x48] sm:$0xff]
      %v212 = vld [vmem:[%s1 + $0x50] sm:$0xff]
      %v213 = vld [vmem:[%s1 + $0x58] sm:$0xff]
      %v214 = vld [vmem:[%s1 + $0x60] sm:$0xff]
      %v215 = vld [vmem:[%s1 + $0x68] sm:$0xff]
      %v216 = vld [vmem:[%s1 + $0x70] sm:$0xff]
      %v217 = vld [vmem:[%s1 + $0x78] sm:$0xff]
      %v218 = vld [vmem:[%s1 + $0x80] sm:$0xff]
      %v219 = vld [vmem:[%s1 + $0x88] sm:$0xff]
      %v220 = vld [vmem:[%s1 + $0x90] sm:$0xff]
      %v221 = vld [vmem:[%s1 + $0x98] sm:$0xff]
      %v222 = vld [vmem:[%s1 + $0xa0] sm:$0xff]
      %v223 = vld [vmem:[%s1 + $0xa8] sm:$0xff]
      %v224 = vld [vmem:[%s1 + $0xb0] sm:$0xff]
      %v225 = vld [vmem:[%s1 + $0xb8] sm:$0xff]
      %v226 = vld [vmem:[%s1 + $0xc0] sm:$0xff]
      %v227 = vld [vmem:[%s1 + $0xc8] sm:$0xff]
      %v228 = vld [vmem:[%s1 + $0xd0] sm:$0xff]
      %v229 = vld [vmem:[%s1 + $0xd8] sm:$0xff]
      %v230 = vld [vmem:[%s1 + $0xe0] sm:$0xff]
      %v231 = vld [vmem:[%s1 + $0xe8] sm:$0xff]
      %v232 = vld [vmem:[%s1 + $0xf0] sm:$0xff]
      %v233 = vld [vmem:[%s1 + $0xf8] sm:$0xff]
      %v266 = vunpack.c.l.b16 %v202
      %v267 = vunpack.c.h.b16 %v202
      %v268 = vunpack.c.l.b16 %v203
      %v269 = vunpack.c.h.b16 %v203
      %v270 = vunpack.c.l.b16 %v204
      %v271 = vunpack.c.h.b16 %v204
      %v272 = vunpack.c.l.b16 %v205
      %v273 = vunpack.c.h.b16 %v205
      %v274 = vunpack.c.l.b16 %v206
      %v275 = vunpack.c.h.b16 %v206
      %v276 = vunpack.c.l.b16 %v207
      %v277 = vunpack.c.h.b16 %v207
      %v278 = vunpack.c.l.b16 %v208
      %v279 = vunpack.c.h.b16 %v208
      %v280 = vunpack.c.l.b16 %v209
      %v281 = vunpack.c.h.b16 %v209
      %v282 = vunpack.c.l.b16 %v210
      %v283 = vunpack.c.h.b16 %v210
      %v284 = vunpack.c.l.b16 %v211
      %v285 = vunpack.c.h.b16 %v211
      %v286 = vunpack.c.l.b16 %v212
      %v287 = vunpack.c.h.b16 %v212
      %v288 = vunpack.c.l.b16 %v213
      %v289 = vunpack.c.h.b16 %v213
      %v290 = vunpack.c.l.b16 %v214
      %v291 = vunpack.c.h.b16 %v214
      %v292 = vunpack.c.l.b16 %v215
      %v293 = vunpack.c.h.b16 %v215
      %v294 = vunpack.c.l.b16 %v216
      %v295 = vunpack.c.h.b16 %v216
      %v296 = vunpack.c.l.b16 %v217
      %v297 = vunpack.c.h.b16 %v217
      %v298 = vunpack.c.l.b16 %v218
      %v299 = vunpack.c.h.b16 %v218
      %v300 = vunpack.c.l.b16 %v219
      %v301 = vunpack.c.h.b16 %v219
      %v302 = vunpack.c.l.b16 %v220
      %v303 = vunpack.c.h.b16 %v220
      %v304 = vunpack.c.l.b16 %v221
      %v305 = vunpack.c.h.b16 %v221
      %v306 = vunpack.c.l.b16 %v222
      %v307 = vunpack.c.h.b16 %v222
      %v308 = vunpack.c.l.b16 %v223
      %v309 = vunpack.c.h.b16 %v223
      %v310 = vunpack.c.l.b16 %v224
      %v311 = vunpack.c.h.b16 %v224
      %v312 = vunpack.c.l.b16 %v225
      %v313 = vunpack.c.h.b16 %v225
      %v314 = vunpack.c.l.b16 %v226
      %v315 = vunpack.c.h.b16 %v226
      %v316 = vunpack.c.l.b16 %v227
      %v317 = vunpack.c.h.b16 %v227
      %v318 = vunpack.c.l.b16 %v228
      %v319 = vunpack.c.h.b16 %v228
      %v320 = vunpack.c.l.b16 %v229
      %v321 = vunpack.c.h.b16 %v229
      %v322 = vunpack.c.l.b16 %v230
      %v323 = vunpack.c.h.b16 %v230
      %v324 = vunpack.c.l.b16 %v231
      %v325 = vunpack.c.h.b16 %v231
      %v326 = vunpack.c.l.b16 %v232
      %v327 = vunpack.c.h.b16 %v232
      %v328 = vunpack.c.l.b16 %v233
      %v329 = vunpack.c.h.b16 %v233
      %v330 = vpack.c.b16 %v268, %v266
      %v331 = vpack.c.b16 %v269, %v267
      %v332 = vpack.c.b16 %v272, %v270
      %v333 = vpack.c.b16 %v273, %v271
      %v334 = vpack.c.b16 %v276, %v274
      %v335 = vpack.c.b16 %v277, %v275
      %v336 = vpack.c.b16 %v280, %v278
      %v337 = vpack.c.b16 %v281, %v279
      %v338 = vpack.c.b16 %v284, %v282
      %v339 = vpack.c.b16 %v285, %v283
      %v340 = vpack.c.b16 %v288, %v286
      %v341 = vpack.c.b16 %v289, %v287
      %v342 = vpack.c.b16 %v292, %v290
      %v343 = vpack.c.b16 %v293, %v291
      %v344 = vpack.c.b16 %v296, %v294
      %v345 = vpack.c.b16 %v297, %v295
      %v346 = vpack.c.b16 %v300, %v298
      %v347 = vpack.c.b16 %v301, %v299
      %v348 = vpack.c.b16 %v304, %v302
      %v349 = vpack.c.b16 %v305, %v303
      %v350 = vpack.c.b16 %v308, %v306
      %v351 = vpack.c.b16 %v309, %v307
      %v352 = vpack.c.b16 %v312, %v310
      %v353 = vpack.c.b16 %v313, %v311
      %v354 = vpack.c.b16 %v316, %v314
      %v355 = vpack.c.b16 %v317, %v315
      %v356 = vpack.c.b16 %v320, %v318
      %v357 = vpack.c.b16 %v321, %v319
      %v358 = vpack.c.b16 %v324, %v322
      %v359 = vpack.c.b16 %v325, %v323
      %v360 = vpack.c.b16 %v328, %v326
      %v361 = vpack.c.b16 %v329, %v327
      %394 = vmatprep.subr.bf16.mxu0 %v345
      %395 = vmatpush1.bf16.msra.mxu0 %v344
      %396 = vmatprep.subr.bf16.mxu0 %v343
      %397 = vmatpush1.bf16.msra.mxu0 %v342
      %398 = vmatprep.subr.bf16.mxu0 %v341
      %399 = vmatpush1.bf16.msra.mxu0 %v340
      %400 = vmatprep.subr.bf16.mxu0 %v339
      %401 = vmatpush1.bf16.msra.mxu0 %v338
      %402 = vmatprep.subr.bf16.mxu0 %v337
      %403 = vmatpush1.bf16.msra.mxu0 %v336
      %404 = vmatprep.subr.bf16.mxu0 %v335
      %405 = vmatpush1.bf16.msra.mxu0 %v334
      %406 = vmatprep.subr.bf16.mxu0 %v333
      %407 = vmatpush1.bf16.msra.mxu0 %v332
      %408 = vmatprep.subr.bf16.mxu0 %v331
      %409 = vmatpush1.bf16.msra.mxu0 %v330
      %410 = vmatprep.subr.bf16.mxu0 %v361
      %411 = vmatpush2.bf16.msra.mxu0 %v360
      %412 = vmatprep.subr.bf16.mxu0 %v359
      %413 = vmatpush2.bf16.msra.mxu0 %v358
      %414 = vmatprep.subr.bf16.mxu0 %v357
      %415 = vmatpush2.bf16.msra.mxu0 %v356
      %416 = vmatprep.subr.bf16.mxu0 %v355
      %417 = vmatpush2.bf16.msra.mxu0 %v354
      %418 = vmatprep.subr.bf16.mxu0 %v353
      %419 = vmatpush2.bf16.msra.mxu0 %v352
      %420 = vmatprep.subr.bf16.mxu0 %v351
      %421 = vmatpush2.bf16.msra.mxu0 %v350
      %422 = vmatprep.subr.bf16.mxu0 %v349
      %423 = vmatpush2.bf16.msra.mxu0 %v348
      %424 = vmatprep.subr.bf16.mxu0 %v347
      %425 = vmatpush2.bf16.msra.mxu0 %v346
      %426 = vmatprep.mubr.bf16.mxu0 %v201
      %427 = vmatmul.mubr.bf16.gmra.mxu0 %v200
      %v428 = vpop.f32.mrf.mxu0
      %v429 = vadd.f32 0.0, %v428
      %v430 = vpop.f32.mrf.mxu0
      %v431 = vadd.f32 0.0, %v430
      %v432 = vpop.f32.mrf.mxu0
      %v433 = vadd.f32 0.0, %v432
      %v434 = vpop.f32.mrf.mxu0
      %v435 = vadd.f32 0.0, %v434
      %436 = vdwg.mxu0
      %v437 = vld [vmem:[%s2] sm:$0x3]
      %v439 = vlaneseq
      %v440 = vshrl.u32 %v439, 7
      %v441 = vsub.s32 0, %v440
      %v442 = vrot.slane %v437, %v441
      %v443 = vlaneseq
      %v444 = vshrl.u32 %v443, 7
      %v445 = vsub.s32 1, %v444
      %v446 = vrot.slane %v437, %v445
      %v449 = vmul.f32 %v429, %v442
      %v450 = vmul.f32 %v431, %v446
      %v451 = vmul.f32 %v433, %v442
      %v452 = vmul.f32 %v435, %v446
      %v453 = vld [vmem:[%s3] sm:$0x3]
      %v455 = vlaneseq
      %v456 = vshrl.u32 %v455, 7
      %v457 = vsub.s32 0, %v456
      %v458 = vrot.slane %v453, %v457
      %v459 = vlaneseq
      %v460 = vshrl.u32 %v459, 7
      %v461 = vsub.s32 1, %v460
      %v462 = vrot.slane %v453, %v461
      %v465 = vadd.f32 %v449, %v458
      %v466 = vadd.f32 %v450, %v462
      %v467 = vadd.f32 %v451, %v458
      %v468 = vadd.f32 %v452, %v462
      %v469 = vadd.f32 %v465, %v467
      %v470 = vrot.slane %v469, 4
      %v471 = vadd.f32 %v469, %v470
      %v472 = vrot.slane %v471, 2
      %v473 = vadd.f32 %v471, %v472
      %v474 = vrot.slane %v473, 1
      %v475 = vadd.f32 %v473, %v474
      %v476 = vadd.f32 %v466, %v468
      %v477 = vrot.slane %v476, 4
      %v478 = vadd.f32 %v476, %v477
      %v479 = vrot.slane %v478, 2
      %v480 = vadd.f32 %v478, %v479
      %v481 = vrot.slane %v480, 1
      %v482 = vadd.f32 %v480, %v481
      %v483 = vrcp.pop 16.0
      %v484 = vmul.f32 %v475, %v483
      %v485 = vmul.f32 %v482, %v483
      %v488 = vcombine.low %v484, %v485
      %v490 = vunpack.c.l.s4 1966171168
      %v491 = vunpack.c.0.s8 %v490
      %v492 = vlaneseq
      %v493 = vshrl.u32 %v492, 7
      %v494 = vsub.s32 %v491, %v493
      %v495 = vrot.slane %v488, %v494
      %v497 = vunpack.c.l.s4 1966171168
      %v498 = vunpack.c.0.s8 %v497
      %v499 = vlaneseq
      %v500 = vshrl.u32 %v499, 7
      %v501 = vsub.s32 %v498, %v500
      %v502 = vrot.slane %v495, %v501
      %v504 = vlaneseq
      %vm505 = vcmp.ge.s32.totalorder %v504, 0
      %vm506 = vcmp.lt.s32.totalorder %v504, 256
      %vm507 = vmand %vm505, %vm506
      %508 = vst.msk [vmem:[%s195] sm:$0x3] %vm507, %v502
      %p509 = scmp.lt.s32.totalorder %s15, 3
      %s510 = scalar_select %p509, %s15, 3
      %s511 = smul.addr %s510, 2
      %s512 = scalar_lea.vmem %s4, %s511
      // Predicated region
      $region37: #{_lambda_.5} parent=35 // pred_check
        %p513 = pneg %p122
      $region38: #{_lambda_.5} parent=35 // pred_check_branch
        %515 = sbr.rel (%p513) target = $region40
      $region39: #{_lambda_.5} parent=35 // pred_region
        _
      $region40: #{_lambda_.5} parent=35 // pred_fallthru
        _
    $region36: #{_lambda_.5} parent=5 // pred_fallthru
      _
    %p516 = scmp.le.s32.totalorder 2, %s10
    // Predicated region
    $region41: #{_lambda_.5} parent=5 // pred_check
      %p517 = pneg %p516
    $region42: #{_lambda_.5} parent=5 // pred_check_branch
      %519 = sbr.rel (%p517) target = $region44
    $region43: #{_lambda_.5} parent=5 // pred_region
      %s520 = ssub.s32 %s10, 2
      // Predicated region
      $region45: #{_lambda_.5} parent=43 // pred_check
        %p521 = pneg %p128
      $region46: #{_lambda_.5} parent=43 // pred_check_branch
        %523 = sbr.rel (%p521) target = $region48
      $region47: #{_lambda_.5} parent=43 // pred_region
        %p524 = scmp.lt.s32.totalorder %s16, 3
        %s525 = scalar_select %p524, %s16, 3
        %s526 = smul.addr %s525, 2
        %s527 = scalar_lea.vmem %s4, %s526
      $region48: #{_lambda_.5} parent=43 // pred_fallthru
        _
    $region44: #{_lambda_.5} parent=5 // pred_fallthru
      _
  $region6: #{_lambda_.5} parent=0 // loop_footer
    %s14 = sadd.s32 1, %s10
  $region7: #{_lambda_.5} parent=0 // loop_footer_branch
    %9 = sbr.rel target = $region3
  $region8: #{_lambda_.5} parent=0 // loop_exit
    _

// kernel: _lambda_.3
$region0: #{_lambda_.3}
  #allocation0 [shape = 'u32[]', space=smem, size = 0x4, offset = 0x4, fixed_abs, tag = 'smem constant byte address 0x4 - core index']
  #allocation1 [shape = 'u32[144,128]{1,0:T(1,128)}', space=vmem, size = 0x12000, scoped, tag = 'internal scratch']
  #allocation2 [shape = 'f32[24,32]{1,0:T(8,128)}', space=vmem, size = 0x3000, scoped, tag = 'scratch operand']
  #allocation3 [shape = 'f32[24,64]{1,0:T(8,128)}', space=vmem, size = 0x3000, scoped, tag = 'scratch operand']
  %s0 = inlined_call_operand.vmem [shape: f32[4,16,32], index: 0, kind: input, shape index: {}]
  %s1 = inlined_call_operand.hbm [shape: f32[1,32], index: 1, kind: input, shape index: {}]
  %s2 = inlined_call_operand.hbm [shape: f32[1,32], index: 2, kind: input, shape index: {}]
  %s3 = inlined_call_operand.hbm [shape: bf16[32,128], index: 3, kind: input, shape index: {}]
  %s4 = inlined_call_operand.vmem [shape: bf16[9,32,64], index: 4, kind: input, shape index: {}]
  %s5 = inlined_call_operand.hbm [shape: f32[1,64], index: 5, kind: input, shape index: {}]
  %s6 = inlined_call_operand.hbm [shape: f32[1,64], index: 6, kind: input, shape index: {}]
  %s7 = inlined_call_operand.hbm [shape: bf16[64,64], index: 7, kind: input, shape index: {}]
  %s8 = inlined_call_operand.hbm [shape: bf16[64,64], index: 8, kind: input, shape index: {}]
  %s9 = inlined_call_operand.vmem [shape: f32[1,64], index: 9, kind: input, shape index: {}]
  %s10 = inlined_call_operand.vmem [shape: f32[1,64], index: 10, kind: input, shape index: {}]
  %s11 = inlined_call_operand.vmem [shape: bf16[9,64,128], index: 11, kind: input, shape index: {}]
  %s12 = inlined_call_operand.vmem [shape: f32[1,128], index: 12, kind: input, shape index: {}]
  %s13 = inlined_call_operand.vmem [shape: f32[1,128], index: 13, kind: input, shape index: {}]
  %s14 = inlined_call_operand.vmem [shape: f32[1,128], index: 14, kind: input, shape index: {}]
  %s15 = inlined_call_operand.vmem [shape: f32[4,16,128], index: 15, kind: output, shape index: {}]
  %s16 = sld [smem:[#allocation0]]
  $region121: #{_lambda_.3} parent=0
    _
  %s18 = ssub.s32 1, %s16
  %s19 = scalar_select 0, %s18, %s16
  $region1: #{_lambda_.3} parent=0
    #allocation4 [shape = 'u8[512]{0}', space=vmem, size = 0x400, scoped, tag = 'input window, operand 1, single buffered']
    #allocation5 [shape = 's32[2]{0}', space=sflag, size = 0x8, scoped, tag = 'scoped memory for _lambda_.3']
    #allocation6 [shape = 'u8[512]{0}', space=vmem, size = 0x400, scoped, tag = 'input window, operand 2, single buffered']
    #allocation7 [shape = 's32[1]{0}', space=sflag, size = 0x4, scoped, tag = 'scoped memory for _lambda_.3']
    #allocation8 [shape = 'u8[8192]{0}', space=vmem, size = 0x2000, scoped, tag = 'input window, operand 3, single buffered']
    #allocation9 [shape = 'u8[512]{0}', space=vmem, size = 0x400, scoped, tag = 'input window, operand 5, single buffered']
    #allocation10 [shape = 's32[1]{0}', space=sflag, size = 0x4, scoped, tag = 'scoped memory for _lambda_.3']
    #allocation11 [shape = 'u8[512]{0}', space=vmem, size = 0x400, scoped, tag = 'input window, operand 6, single buffered']
    #allocation12 [shape = 'u8[16384]{0}', space=vmem, size = 0x4000, scoped, tag = 'input window, operand 7, single buffered']
    #allocation13 [shape = 's32[1]{0}', space=sflag, size = 0x4, scoped, tag = 'scoped memory for _lambda_.3']
    #allocation14 [shape = 'u8[16384]{0}', space=vmem, size = 0x4000, scoped, tag = 'input window, operand 8, single buffered']
    %20 = vsyncpa [#allocation5], 0
    %21 = vsyncpa [#allocation7], 0
    %22 = vsyncpa [#allocation10], 0
    %23 = vsyncpa [#allocation13], 0
    loop: start=0, step=1, limit=6
    $region2: #{_lambda_.3} parent=1 // loop_pre_header
      _
    $region3: #{_lambda_.3} parent=1 // loop_header
      %s25 = sphi 0, %s29
      %p26 = scmp.ge.s32.totalorder %s25, 6
      %s35 = sphi 0, %s37
      %s38 = sphi 0, %s35
      %s39 = sphi 0, %s38
      %s55 = sphi 0, %s39
      %s59 = sphi 0, %s59
      %s61 = sphi 0, %s59
      %s62 = sphi 0, %s61
      %s76 = sphi 0, %s62
      %s80 = sphi 0, %s80
      %s82 = sphi 0, %s80
      %s83 = sphi 0, %s82
      %s97 = sphi 0, %s83
      %s101 = sphi 0, %s101
      %s103 = sphi 0, %s101
      %s104 = sphi 0, %s103
      %s118 = sphi 0, %s104
      %s122 = sphi 0, %s122
      %s124 = sphi 0, %s122
      %s125 = sphi 0, %s124
      %s139 = sphi 0, %s125
      %s143 = sphi 0, %s143
      %s145 = sphi 0, %s143
      %s146 = sphi 0, %s145
      %s160 = sphi 0, %s146
      %s164 = sphi 0, %s164
      %s166 = sphi 0, %s164
      %s167 = sphi 0, %s166
      %s181 = sphi 0, %s167
      %s185 = sphi 0, %s185
      %s187 = sphi 0, %s185
      %s188 = sphi 0, %s187
      %s202 = sphi 0, %s188
      %s206 = sphi 0, %s206
      %s208 = sphi 0, %s206
      %s209 = sphi 0, %s208
      %s223 = sphi 0, %s209
      %s227 = sphi 0, %s227
      %s229 = sphi 0, %s227
      %s230 = sphi 0, %s229
      %s244 = sphi 0, %s230
      %s248 = sphi 0, %s248
      %s250 = sphi 0, %s248
      %s251 = sphi 0, %s250
      %s265 = sphi 0, %s251
      %s269 = sphi 0, %s269
      %s271 = sphi 0, %s269
      %s272 = sphi 0, %s271
      %s286 = sphi 0, %s272
      %s290 = sphi 0, %s290
      %s292 = sphi 0, %s290
      %s293 = sphi 0, %s292
      %s307 = sphi 0, %s293
      %s311 = sphi 0, %s311
      %s313 = sphi 0, %s311
      %s314 = sphi 0, %s313
      %s328 = sphi 0, %s314
      %s332 = sphi 0, %s332
      %s334 = sphi 0, %s332
      %s335 = sphi 0, %s334
      %s349 = sphi 0, %s335
      %s355 = sphi 0, %s357
      %s358 = sphi 0, %s355
      %s359 = sphi 0, %s358
      %s375 = sphi 0, %s359
    $region4: #{_lambda_.3} parent=1 // loop_header_branch
      %28 = sbr.rel (%p26) target = $region8
    $region5: #{_lambda_.3} parent=1 // loop_body
      %s30 = ssub.s32 %s25, 1
      %s31 = ssub.s32 %s25, 2
      %s32 = sadd.s32 %s25, 1
      %s33 = ssub.s32 %s25, %s32
      %p34 = scmp.eq.s32.totalorder %s33, 0
      %s36 = sadd.s32 %s35, 1
      %s37 = scalar_select %p34, %s35, %s36
      %p40 = pneg %p34
      %p41 = scmp.eq.s32.totalorder %s25, 3
      %p42 = por %p40, %p41
      %p43 = scmp.ne.s32.totalorder %s35, %s38
      %p44 = scmp.eq.s32.totalorder %s25, 0
      %p45 = por %p43, %p44
      %p46 = scmp.ne.s32.totalorder %s35, %s38
      %p47 = scmp.eq.s32.totalorder %s30, 3
      %p48 = por %p46, %p47
      %p49 = scmp.ne.s32.totalorder %s38, %s39
      %p50 = scmp.eq.s32.totalorder %s30, 0
      %p51 = por %p49, %p50
      %p52 = scmp.ne.s32.totalorder %s38, %s39
      %p53 = scmp.eq.s32.totalorder %s31, 3
      %p54 = por %p52, %p53
      %p56 = scmp.ne.s32.totalorder %s39, %s55
      %p57 = scmp.eq.s32.totalorder %s31, 0
      %p58 = por %p56, %p57
      %s60 = sadd.s32 %s59, 1
      %p63 = scmp.eq.s32.totalorder %s25, 3
      %p64 = scmp.ne.s32.totalorder %s59, %s61
      %p65 = scmp.eq.s32.totalorder %s25, 0
      %p66 = por %p64, %p65
      %p67 = scmp.ne.s32.totalorder %s59, %s61
      %p68 = scmp.eq.s32.totalorder %s30, 3
      %p69 = por %p67, %p68
      %p70 = scmp.ne.s32.totalorder %s61, %s62
      %p71 = scmp.eq.s32.totalorder %s30, 0
      %p72 = por %p70, %p71
      %p73 = scmp.ne.s32.totalorder %s61, %s62
      %p74 = scmp.eq.s32.totalorder %s31, 3
      %p75 = por %p73, %p74
      %p77 = scmp.ne.s32.totalorder %s62, %s76
      %p78 = scmp.eq.s32.totalorder %s31, 0
      %p79 = por %p77, %p78
      %s81 = sadd.s32 %s80, 1
      %p84 = scmp.eq.s32.totalorder %s25, 3
      %p85 = scmp.ne.s32.totalorder %s80, %s82
      %p86 = scmp.eq.s32.totalorder %s25, 0
      %p87 = por %p85, %p86
      %p88 = scmp.ne.s32.totalorder %s80, %s82
      %p89 = scmp.eq.s32.totalorder %s30, 3
      %p90 = por %p88, %p89
      %p91 = scmp.ne.s32.totalorder %s82, %s83
      %p92 = scmp.eq.s32.totalorder %s30, 0
      %p93 = por %p91, %p92
      %p94 = scmp.ne.s32.totalorder %s82, %s83
      %p95 = scmp.eq.s32.totalorder %s31, 3
      %p96 = por %p94, %p95
      %p98 = scmp.ne.s32.totalorder %s83, %s97
      %p99 = scmp.eq.s32.totalorder %s31, 0
      %p100 = por %p98, %p99
      %s102 = sadd.s32 %s101, 1
      %p105 = scmp.eq.s32.totalorder %s25, 3
      %p106 = scmp.ne.s32.totalorder %s101, %s103
      %p107 = scmp.eq.s32.totalorder %s25, 0
      %p108 = por %p106, %p107
      %p109 = scmp.ne.s32.totalorder %s101, %s103
      %p110 = scmp.eq.s32.totalorder %s30, 3
      %p111 = por %p109, %p110
      %p112 = scmp.ne.s32.totalorder %s103, %s104
      %p113 = scmp.eq.s32.totalorder %s30, 0
      %p114 = por %p112, %p113
      %p115 = scmp.ne.s32.totalorder %s103, %s104
      %p116 = scmp.eq.s32.totalorder %s31, 3
      %p117 = por %p115, %p116
      %p119 = scmp.ne.s32.totalorder %s104, %s118
      %p120 = scmp.eq.s32.totalorder %s31, 0
      %p121 = por %p119, %p120
      %s123 = sadd.s32 %s122, 1
      %p126 = scmp.eq.s32.totalorder %s25, 3
      %p127 = scmp.ne.s32.totalorder %s122, %s124
      %p128 = scmp.eq.s32.totalorder %s25, 0
      %p129 = por %p127, %p128
      %p130 = scmp.ne.s32.totalorder %s122, %s124
      %p131 = scmp.eq.s32.totalorder %s30, 3
      %p132 = por %p130, %p131
      %p133 = scmp.ne.s32.totalorder %s124, %s125
      %p134 = scmp.eq.s32.totalorder %s30, 0
      %p135 = por %p133, %p134
      %p136 = scmp.ne.s32.totalorder %s124, %s125
      %p137 = scmp.eq.s32.totalorder %s31, 3
      %p138 = por %p136, %p137
      %p140 = scmp.ne.s32.totalorder %s125, %s139
      %p141 = scmp.eq.s32.totalorder %s31, 0
      %p142 = por %p140, %p141
      %s144 = sadd.s32 %s143, 1
      %p147 = scmp.eq.s32.totalorder %s25, 3
      %p148 = scmp.ne.s32.totalorder %s143, %s145
      %p149 = scmp.eq.s32.totalorder %s25, 0
      %p150 = por %p148, %p149
      %p151 = scmp.ne.s32.totalorder %s143, %s145
      %p152 = scmp.eq.s32.totalorder %s30, 3
      %p153 = por %p151, %p152
      %p154 = scmp.ne.s32.totalorder %s145, %s146
      %p155 = scmp.eq.s32.totalorder %s30, 0
      %p156 = por %p154, %p155
      %p157 = scmp.ne.s32.totalorder %s145, %s146
      %p158 = scmp.eq.s32.totalorder %s31, 3
      %p159 = por %p157, %p158
      %p161 = scmp.ne.s32.totalorder %s146, %s160
      %p162 = scmp.eq.s32.totalorder %s31, 0
      %p163 = por %p161, %p162
      %s165 = sadd.s32 %s164, 1
      %p168 = scmp.eq.s32.totalorder %s25, 3
      %p169 = scmp.ne.s32.totalorder %s164, %s166
      %p170 = scmp.eq.s32.totalorder %s25, 0
      %p171 = por %p169, %p170
      %p172 = scmp.ne.s32.totalorder %s164, %s166
      %p173 = scmp.eq.s32.totalorder %s30, 3
      %p174 = por %p172, %p173
      %p175 = scmp.ne.s32.totalorder %s166, %s167
      %p176 = scmp.eq.s32.totalorder %s30, 0
      %p177 = por %p175, %p176
      %p178 = scmp.ne.s32.totalorder %s166, %s167
      %p179 = scmp.eq.s32.totalorder %s31, 3
      %p180 = por %p178, %p179
      %p182 = scmp.ne.s32.totalorder %s167, %s181
      %p183 = scmp.eq.s32.totalorder %s31, 0
      %p184 = por %p182, %p183
      %s186 = sadd.s32 %s185, 1
      %p189 = scmp.eq.s32.totalorder %s25, 3
      %p190 = scmp.ne.s32.totalorder %s185, %s187
      %p191 = scmp.eq.s32.totalorder %s25, 0
      %p192 = por %p190, %p191
      %p193 = scmp.ne.s32.totalorder %s185, %s187
      %p194 = scmp.eq.s32.totalorder %s30, 3
      %p195 = por %p193, %p194
      %p196 = scmp.ne.s32.totalorder %s187, %s188
      %p197 = scmp.eq.s32.totalorder %s30, 0
      %p198 = por %p196, %p197
      %p199 = scmp.ne.s32.totalorder %s187, %s188
      %p200 = scmp.eq.s32.totalorder %s31, 3
      %p201 = por %p199, %p200
      %p203 = scmp.ne.s32.totalorder %s188, %s202
      %p204 = scmp.eq.s32.totalorder %s31, 0
      %p205 = por %p203, %p204
      %s207 = sadd.s32 %s206, 1
      %p210 = scmp.eq.s32.totalorder %s25, 3
      %p211 = scmp.ne.s32.totalorder %s206, %s208
      %p212 = scmp.eq.s32.totalorder %s25, 0
      %p213 = por %p211, %p212
      %p214 = scmp.ne.s32.totalorder %s206, %s208
      %p215 = scmp.eq.s32.totalorder %s30, 3
      %p216 = por %p214, %p215
      %p217 = scmp.ne.s32.totalorder %s208, %s209
      %p218 = scmp.eq.s32.totalorder %s30, 0
      %p219 = por %p217, %p218
      %p220 = scmp.ne.s32.totalorder %s208, %s209
      %p221 = scmp.eq.s32.totalorder %s31, 3
      %p222 = por %p220, %p221
      %p224 = scmp.ne.s32.totalorder %s209, %s223
      %p225 = scmp.eq.s32.totalorder %s31, 0
      %p226 = por %p224, %p225
      %s228 = sadd.s32 %s227, 1
      %p231 = scmp.eq.s32.totalorder %s25, 3
      %p232 = scmp.ne.s32.totalorder %s227, %s229
      %p233 = scmp.eq.s32.totalorder %s25, 0
      %p234 = por %p232, %p233
      %p235 = scmp.ne.s32.totalorder %s227, %s229
      %p236 = scmp.eq.s32.totalorder %s30, 3
      %p237 = por %p235, %p236
      %p238 = scmp.ne.s32.totalorder %s229, %s230
      %p239 = scmp.eq.s32.totalorder %s30, 0
      %p240 = por %p238, %p239
      %p241 = scmp.ne.s32.totalorder %s229, %s230
      %p242 = scmp.eq.s32.totalorder %s31, 3
      %p243 = por %p241, %p242
      %p245 = scmp.ne.s32.totalorder %s230, %s244
      %p246 = scmp.eq.s32.totalorder %s31, 0
      %p247 = por %p245, %p246
      %s249 = sadd.s32 %s248, 1
      %p252 = scmp.eq.s32.totalorder %s25, 3
      %p253 = scmp.ne.s32.totalorder %s248, %s250
      %p254 = scmp.eq.s32.totalorder %s25, 0
      %p255 = por %p253, %p254
      %p256 = scmp.ne.s32.totalorder %s248, %s250
      %p257 = scmp.eq.s32.totalorder %s30, 3
      %p258 = por %p256, %p257
      %p259 = scmp.ne.s32.totalorder %s250, %s251
      %p260 = scmp.eq.s32.totalorder %s30, 0
      %p261 = por %p259, %p260
      %p262 = scmp.ne.s32.totalorder %s250, %s251
      %p263 = scmp.eq.s32.totalorder %s31, 3
      %p264 = por %p262, %p263
      %p266 = scmp.ne.s32.totalorder %s251, %s265
      %p267 = scmp.eq.s32.totalorder %s31, 0
      %p268 = por %p266, %p267
      %s270 = sadd.s32 %s269, 1
      %p273 = scmp.eq.s32.totalorder %s25, 3
      %p274 = scmp.ne.s32.totalorder %s269, %s271
      %p275 = scmp.eq.s32.totalorder %s25, 0
      %p276 = por %p274, %p275
      %p277 = scmp.ne.s32.totalorder %s269, %s271
      %p278 = scmp.eq.s32.totalorder %s30, 3
      %p279 = por %p277, %p278
      %p280 = scmp.ne.s32.totalorder %s271, %s272
      %p281 = scmp.eq.s32.totalorder %s30, 0
      %p282 = por %p280, %p281
      %p283 = scmp.ne.s32.totalorder %s271, %s272
      %p284 = scmp.eq.s32.totalorder %s31, 3
      %p285 = por %p283, %p284
      %p287 = scmp.ne.s32.totalorder %s272, %s286
      %p288 = scmp.eq.s32.totalorder %s31, 0
      %p289 = por %p287, %p288
      %s291 = sadd.s32 %s290, 1
      %p294 = scmp.eq.s32.totalorder %s25, 3
      %p295 = scmp.ne.s32.totalorder %s290, %s292
      %p296 = scmp.eq.s32.totalorder %s25, 0
      %p297 = por %p295, %p296
      %p298 = scmp.ne.s32.totalorder %s290, %s292
      %p299 = scmp.eq.s32.totalorder %s30, 3
      %p300 = por %p298, %p299
      %p301 = scmp.ne.s32.totalorder %s292, %s293
      %p302 = scmp.eq.s32.totalorder %s30, 0
      %p303 = por %p301, %p302
      %p304 = scmp.ne.s32.totalorder %s292, %s293
      %p305 = scmp.eq.s32.totalorder %s31, 3
      %p306 = por %p304, %p305
      %p308 = scmp.ne.s32.totalorder %s293, %s307
      %p309 = scmp.eq.s32.totalorder %s31, 0
      %p310 = por %p308, %p309
      %s312 = sadd.s32 %s311, 1
      %p315 = scmp.eq.s32.totalorder %s25, 3
      %p316 = scmp.ne.s32.totalorder %s311, %s313
      %p317 = scmp.eq.s32.totalorder %s25, 0
      %p318 = por %p316, %p317
      %p319 = scmp.ne.s32.totalorder %s311, %s313
      %p320 = scmp.eq.s32.totalorder %s30, 3
      %p321 = por %p319, %p320
      %p322 = scmp.ne.s32.totalorder %s313, %s314
      %p323 = scmp.eq.s32.totalorder %s30, 0
      %p324 = por %p322, %p323
      %p325 = scmp.ne.s32.totalorder %s313, %s314
      %p326 = scmp.eq.s32.totalorder %s31, 3
      %p327 = por %p325, %p326
      %p329 = scmp.ne.s32.totalorder %s314, %s328
      %p330 = scmp.eq.s32.totalorder %s31, 0
      %p331 = por %p329, %p330
      %s333 = sadd.s32 %s332, 1
      %p336 = scmp.eq.s32.totalorder %s25, 3
      %p337 = scmp.ne.s32.totalorder %s332, %s334
      %p338 = scmp.eq.s32.totalorder %s25, 0
      %p339 = por %p337, %p338
      %p340 = scmp.ne.s32.totalorder %s332, %s334
      %p341 = scmp.eq.s32.totalorder %s30, 3
      %p342 = por %p340, %p341
      %p343 = scmp.ne.s32.totalorder %s334, %s335
      %p344 = scmp.eq.s32.totalorder %s30, 0
      %p345 = por %p343, %p344
      %p346 = scmp.ne.s32.totalorder %s334, %s335
      %p347 = scmp.eq.s32.totalorder %s31, 3
      %p348 = por %p346, %p347
      %p350 = scmp.ne.s32.totalorder %s335, %s349
      %p351 = scmp.eq.s32.totalorder %s31, 0
      %p352 = por %p350, %p351
      %s353 = ssub.s32 %s25, %s32
      %p354 = scmp.eq.s32.totalorder %s353, 0
      %s356 = sadd.s32 %s355, 1
      %s357 = scalar_select %p354, %s355, %s356
      %p360 = pneg %p354
      %p361 = scmp.eq.s32.totalorder %s25, 3
      %p362 = por %p360, %p361
      %p363 = scmp.ne.s32.totalorder %s355, %s358
      %p364 = scmp.eq.s32.totalorder %s25, 0
      %p365 = por %p363, %p364
      %p366 = scmp.ne.s32.totalorder %s355, %s358
      %p367 = scmp.eq.s32.totalorder %s30, 3
      %p368 = por %p366, %p367
      %p369 = scmp.ne.s32.totalorder %s358, %s359
      %p370 = scmp.eq.s32.totalorder %s30, 0
      %p371 = por %p369, %p370
      %p372 = scmp.ne.s32.totalorder %s358, %s359
      %p373 = scmp.eq.s32.totalorder %s31, 3
      %p374 = por %p372, %p373
      %p376 = scmp.ne.s32.totalorder %s359, %s375
      %p377 = scmp.eq.s32.totalorder %s31, 0
      %p378 = por %p376, %p377
      %p379 = scmp.le.s32.totalorder 1, %s25
      %p380 = scmp.lt.s32.totalorder %s25, 5
      %p381 = pnand %p379, %p380
      %p382 = pneg %p381
      // Predicated region
      $region9: #{_lambda_.3} parent=5 // pred_check
        _
      $region10: #{_lambda_.3} parent=5 // pred_check_branch
        %384 = sbr.rel (%p381) target = $region12
      $region11: #{_lambda_.3} parent=5 // pred_region
        %s385 = ssub.s32 %s25, 1
        // Predicated region
        $region13: #{_lambda_.3} parent=11 // pred_check
          %p386 = pneg %p72
        $region14: #{_lambda_.3} parent=11 // pred_check_branch
          %388 = sbr.rel (%p386) target = $region16
        $region15: #{_lambda_.3} parent=11 // pred_region
          %s390 = ssub.s32 16, 16
          %391 = vsyncadd [#allocation5], %s390
          %s393 = sshll.u32 [#allocation4], 4
          %s394 = int_to_ptr.vmem [resolvable:$true] %s393
          %396 = dma.hbm_to_vmem [thread:$0]  %s1, 16, %s394, [#allocation5]
        $region16: #{_lambda_.3} parent=11 // pred_fallthru
          _
        // Predicated region
        $region17: #{_lambda_.3} parent=11 // pred_check
          %p397 = pneg %p93
        $region18: #{_lambda_.3} parent=11 // pred_check_branch
          %399 = sbr.rel (%p397) target = $region20
        $region19: #{_lambda_.3} parent=11 // pred_region
          %s401 = ssub.s32 16, 16
          %402 = vsyncadd [#allocation7], %s401
          %s404 = sshll.u32 [#allocation6], 4
          %s405 = int_to_ptr.vmem [resolvable:$true] %s404
          %407 = dma.hbm_to_vmem [thread:$0]  %s2, 16, %s405, [#allocation7]
        $region20: #{_lambda_.3} parent=11 // pred_fallthru
          _
        // Predicated region
        $region21: #{_lambda_.3} parent=11 // pred_check
          %p408 = pneg %p114
        $region22: #{_lambda_.3} parent=11 // pred_check_branch
          %410 = sbr.rel (%p408) target = $region24
        $region23: #{_lambda_.3} parent=11 // pred_region
          %s412 = ssub.s32 256, 256
          %413 = vsyncadd [#allocation7], %s412
          %s414 = sshll.u32 [#allocation8], 4
          %s415 = int_to_ptr.vmem [resolvable:$true] %s414
          %420 = dma.hbm_to_vmem [thread:$0]  %s3, 256, %s415, [#allocation7], 64, 64, 4
        $region24: #{_lambda_.3} parent=11 // pred_fallthru
          _
        // Predicated region
        $region25: #{_lambda_.3} parent=11 // pred_check
          %p421 = pneg %p135
        $region26: #{_lambda_.3} parent=11 // pred_check_branch
          %423 = sbr.rel (%p421) target = $region28
        $region27: #{_lambda_.3} parent=11 // pred_region
          _
        $region28: #{_lambda_.3} parent=11 // pred_fallthru
          _
        // Predicated region
        $region29: #{_lambda_.3} parent=11 // pred_check
          %p424 = pneg %p156
        $region30: #{_lambda_.3} parent=11 // pred_check_branch
          %426 = sbr.rel (%p424) target = $region32
        $region31: #{_lambda_.3} parent=11 // pred_region
          %s428 = ssub.s32 16, 16
          %429 = vsyncadd [#allocation10], %s428
          %s431 = sshll.u32 [#allocation9], 4
          %s432 = int_to_ptr.vmem [resolvable:$true] %s431
          %434 = dma.hbm_to_vmem [thread:$0]  %s5, 16, %s432, [#allocation10]
        $region32: #{_lambda_.3} parent=11 // pred_fallthru
          _
        // Predicated region
        $region33: #{_lambda_.3} parent=11 // pred_check
          %p435 = pneg %p177
        $region34: #{_lambda_.3} parent=11 // pred_check_branch
          %437 = sbr.rel (%p435) target = $region36
        $region35: #{_lambda_.3} parent=11 // pred_region
          %s439 = ssub.s32 16, 16
          %440 = vsyncadd [#allocation10], %s439
          %s442 = sshll.u32 [#allocation11], 4
          %s443 = int_to_ptr.vmem [resolvable:$true] %s442
          %445 = dma.hbm_to_vmem [thread:$0]  %s6, 16, %s443, [#allocation10]
        $region36: #{_lambda_.3} parent=11 // pred_fallthru
          _
        // Predicated region
        $region37: #{_lambda_.3} parent=11 // pred_check
          %p446 = pneg %p198
        $region38: #{_lambda_.3} parent=11 // pred_check_branch
          %448 = sbr.rel (%p446) target = $region40
        $region39: #{_lambda_.3} parent=11 // pred_region
          %s450 = ssub.s32 512, 512
          %451 = vsyncadd [#allocation13], %s450
          %s452 = sshll.u32 [#allocation12], 4
          %s453 = int_to_ptr.vmem [resolvable:$true] %s452
          %458 = dma.hbm_to_vmem [thread:$0]  %s7, 512, %s453, [#allocation13], 64, 64, 4
        $region40: #{_lambda_.3} parent=11 // pred_fallthru
          _
        // Predicated region
        $region41: #{_lambda_.3} parent=11 // pred_check
          %p459 = pneg %p219
        $region42: #{_lambda_.3} parent=11 // pred_check_branch
          %461 = sbr.rel (%p459) target = $region44
        $region43: #{_lambda_.3} parent=11 // pred_region
          %s463 = ssub.s32 512, 512
          %464 = vsyncadd [#allocation13], %s463
          %s465 = sshll.u32 [#allocation14], 4
          %s466 = int_to_ptr.vmem [resolvable:$true] %s465
          %471 = dma.hbm_to_vmem [thread:$0]  %s8, 512, %s466, [#allocation13], 64, 64, 4
        $region44: #{_lambda_.3} parent=11 // pred_fallthru
          _
        // Predicated region
        $region45: #{_lambda_.3} parent=11 // pred_check
          %p472 = pneg %p240
        $region46: #{_lambda_.3} parent=11 // pred_check_branch
          %474 = sbr.rel (%p472) target = $region48
        $region47: #{_lambda_.3} parent=11 // pred_region
          _
        $region48: #{_lambda_.3} parent=11 // pred_fallthru
          _
        // Predicated region
        $region49: #{_lambda_.3} parent=11 // pred_check
          %p475 = pneg %p261
        $region50: #{_lambda_.3} parent=11 // pred_check_branch
          %477 = sbr.rel (%p475) target = $region52
        $region51: #{_lambda_.3} parent=11 // pred_region
          _
        $region52: #{_lambda_.3} parent=11 // pred_fallthru
          _
        // Predicated region
        $region53: #{_lambda_.3} parent=11 // pred_check
          %p478 = pneg %p282
        $region54: #{_lambda_.3} parent=11 // pred_check_branch
          %480 = sbr.rel (%p478) target = $region56
        $region55: #{_lambda_.3} parent=11 // pred_region
          _
        $region56: #{_lambda_.3} parent=11 // pred_fallthru
          _
        // Predicated region
        $region57: #{_lambda_.3} parent=11 // pred_check
          %p481 = pneg %p303
        $region58: #{_lambda_.3} parent=11 // pred_check_branch
          %483 = sbr.rel (%p481) target = $region60
        $region59: #{_lambda_.3} parent=11 // pred_region
          _
        $region60: #{_lambda_.3} parent=11 // pred_fallthru
          _
        // Predicated region
        $region61: #{_lambda_.3} parent=11 // pred_check
          %p484 = pneg %p324
        $region62: #{_lambda_.3} parent=11 // pred_check_branch
          %486 = sbr.rel (%p484) target = $region64
        $region63: #{_lambda_.3} parent=11 // pred_region
          _
        $region64: #{_lambda_.3} parent=11 // pred_fallthru
          _
        // Predicated region
        $region65: #{_lambda_.3} parent=11 // pred_check
          %p487 = pneg %p345
        $region66: #{_lambda_.3} parent=11 // pred_check_branch
          %489 = sbr.rel (%p487) target = $region68
        $region67: #{_lambda_.3} parent=11 // pred_region
          _
        $region68: #{_lambda_.3} parent=11 // pred_fallthru
          _
      $region12: #{_lambda_.3} parent=5 // pred_fallthru
        _
      %p490 = scmp.lt.s32.totalorder %s25, 4
      // Predicated region
      $region69: #{_lambda_.3} parent=5 // pred_check
        %p491 = pneg %p490
      $region70: #{_lambda_.3} parent=5 // pred_check_branch
        %493 = sbr.rel (%p491) target = $region72
      $region71: #{_lambda_.3} parent=5 // pred_region
        // Predicated region
        $region73: #{_lambda_.3} parent=71 // pred_check
          %p494 = pneg %p45
        $region74: #{_lambda_.3} parent=71 // pred_check_branch
          %496 = sbr.rel (%p494) target = $region76
        $region75: #{_lambda_.3} parent=71 // pred_region
          %p497 = scmp.lt.s32.totalorder %s25, 3
          %s498 = scalar_select %p497, %s25, 3
          %s499 = smul.addr %s498, 2
          %s500 = smul.addr %s499, 8
          %s501 = scalar_lea.vmem %s0, %s500
        $region76: #{_lambda_.3} parent=71 // pred_fallthru
          _
      $region72: #{_lambda_.3} parent=5 // pred_fallthru
        _
      %p502 = scmp.le.s32.totalorder 1, %s25
      %p503 = scmp.lt.s32.totalorder %s25, 5
      %p504 = pnand %p502, %p503
      %p505 = pneg %p504
      // Predicated region
      $region77: #{_lambda_.3} parent=5 // pred_check
        _
      $region78: #{_lambda_.3} parent=5 // pred_check_branch
        %507 = sbr.rel (%p504) target = $region80
      $region79: #{_lambda_.3} parent=5 // pred_region
        %s508 = ssub.s32 %s25, 1
        // Predicated region
        $region81: #{_lambda_.3} parent=79 // pred_check
          %p509 = pneg %p72
        $region82: #{_lambda_.3} parent=79 // pred_check_branch
          %511 = sbr.rel (%p509) target = $region84
        $region83: #{_lambda_.3} parent=79 // pred_region
          %512 = dma.done [#allocation5], 16
        $region84: #{_lambda_.3} parent=79 // pred_fallthru
          _
        // Predicated region
        $region85: #{_lambda_.3} parent=79 // pred_check
          %p513 = pneg %p93
        $region86: #{_lambda_.3} parent=79 // pred_check_branch
          %515 = sbr.rel (%p513) target = $region88
        $region87: #{_lambda_.3} parent=79 // pred_region
          %516 = dma.done [#allocation7], 16
        $region88: #{_lambda_.3} parent=79 // pred_fallthru
          _
        // Predicated region
        $region89: #{_lambda_.3} parent=79 // pred_check
          %p517 = pneg %p114
        $region90: #{_lambda_.3} parent=79 // pred_check_branch
          %519 = sbr.rel (%p517) target = $region92
        $region91: #{_lambda_.3} parent=79 // pred_region
          %520 = dma.done [#allocation7], 256
        $region92: #{_lambda_.3} parent=79 // pred_fallthru
          _
        // Predicated region
        $region93: #{_lambda_.3} parent=79 // pred_check
          %p521 = pneg %p156
        $region94: #{_lambda_.3} parent=79 // pred_check_branch
          %523 = sbr.rel (%p521) target = $region96
        $region95: #{_lambda_.3} parent=79 // pred_region
          %524 = dma.done [#allocation10], 16
        $region96: #{_lambda_.3} parent=79 // pred_fallthru
          _
        // Predicated region
        $region97: #{_lambda_.3} parent=79 // pred_check
          %p525 = pneg %p177
        $region98: #{_lambda_.3} parent=79 // pred_check_branch
          %527 = sbr.rel (%p525) target = $region100
        $region99: #{_lambda_.3} parent=79 // pred_region
          %528 = dma.done [#allocation10], 16
        $region100: #{_lambda_.3} parent=79 // pred_fallthru
          _
        // Predicated region
        $region101: #{_lambda_.3} parent=79 // pred_check
          %p529 = pneg %p198
        $region102: #{_lambda_.3} parent=79 // pred_check_branch
          %531 = sbr.rel (%p529) target = $region104
        $region103: #{_lambda_.3} parent=79 // pred_region
          %532 = dma.done [#allocation13], 512
        $region104: #{_lambda_.3} parent=79 // pred_fallthru
          _
        // Predicated region
        $region105: #{_lambda_.3} parent=79 // pred_check
          %p533 = pneg %p219
        $region106: #{_lambda_.3} parent=79 // pred_check_branch
          %535 = sbr.rel (%p533) target = $region108
        $region107: #{_lambda_.3} parent=79 // pred_region
          %536 = dma.done [#allocation13], 512
        $region108: #{_lambda_.3} parent=79 // pred_fallthru
          _
        %p537 = scmp.lt.s32.totalorder %s30, 3
        %s538 = scalar_select %p537, %s30, 3
        %s539 = smul.addr %s538, 2
        %s540 = smul.addr %s539, 8
        %s541 = scalar_lea.vmem %s0, %s540
        %p542 = pneg %p51
        %p543 = pneg %p48
        %p544 = pneg %p72
        %p545 = pneg %p69
        %p546 = pneg %p93
        %p547 = pneg %p90
        %p548 = pneg %p114
        %p549 = pneg %p111
        %p550 = pneg %p135
        %p551 = pneg %p132
        %p552 = pneg %p156
        %p553 = pneg %p153
        %p554 = pneg %p177
        %p555 = pneg %p174
        %p556 = pneg %p198
        %p557 = pneg %p195
        %p558 = pneg %p219
        %p559 = pneg %p216
        %p560 = pneg %p240
        %p561 = pneg %p237
        %p562 = pneg %p261
        %p563 = pneg %p258
        %p564 = pneg %p282
        %p565 = pneg %p279
        %p566 = pneg %p303
        %p567 = pneg %p300
        %p568 = pneg %p324
        %p569 = pneg %p321
        %p570 = pneg %p345
        %p571 = pneg %p342
        %p572 = pneg %p371
        %p573 = pneg %p368
        %p574 = scmp.lt.s32.totalorder %s30, 3
        %s575 = scalar_select %p574, %s30, 3
        %s576 = smul.addr %s575, 2
        %s577 = smul.addr %s576, 8
        %s578 = scalar_lea.vmem %s15, %s577
        %p579 = scmp.lt.s32.totalorder %s30, 3
        %s580 = scalar_select %p579, %s30, 3
        %s581 = smul.addr %s580, 2
        %s582 = smul.addr %s581, 8
        %s583 = scalar_lea.vmem %s0, %s582
        %p584 = scmp.lt.s32.totalorder %s30, 3
        %s585 = scalar_select %p584, %s30, 3
        %s586 = smul.addr %s585, 2
        %s587 = smul.addr %s586, 8
        %s588 = scalar_lea.vmem %s15, %s587
        %v590 = vld [vmem:[%s583] sm:$0xff]
        %v591 = vld [vmem:[%s583 + $0x8] sm:$0xff]
        %v592 = vld [vmem:[#allocation4] sm:$0x1]
        %v594 = vlaneseq
        %v595 = vshrl.u32 %v594, 7
        %v596 = vsub.s32 0, %v595
        %v597 = vrot.slane %v592, %v596
        %v599 = vmul.f32 %v590, %v597
        %v600 = vmul.f32 %v591, %v597
        %v601 = vld [vmem:[#allocation6] sm:$0x1]
        %v603 = vlaneseq
        %v604 = vshrl.u32 %v603, 7
        %v605 = vsub.s32 0, %v604
        %v606 = vrot.slane %v601, %v605
        %v608 = vadd.f32 %v599, %v606
        %v609 = vadd.f32 %v600, %v606
        %vm610 = vcmp.ge.f32.partialorder %v608, 0.0
        %vm611 = vcmp.ge.f32.partialorder %v609, 0.0
        %v612 = vmul.f32 %v608, 0.01
        %v613 = vmul.f32 %v609, 0.01
        %v614 = vsel %vm610, %v608, %v612
        %v615 = vsel %vm611, %v609, %v613
        %v616 = vpack.c.bf16 %v615, %v614
        %v617 = vld [vmem:[#allocation8] sm:$0xf]
        %v618 = vld [vmem:[#allocation8 + $0x4] sm:$0xf]
        %v619 = vld [vmem:[#allocation8 + $0x8] sm:$0xf]
        %v620 = vld [vmem:[#allocation8 + $0xc] sm:$0xf]
        %v625 = vunpack.c.l.b16 %v617
        %v626 = vunpack.c.l.b16 %v618
        %v627 = vunpack.c.l.b16 %v619
        %v628 = vunpack.c.l.b16 %v620
        %v629 = vpack.c.b16 %v626, %v625
        %v630 = vpack.c.b16 %v628, %v627
        %vm633 = vcmask 261120
        %v635 = vsel %vm633, %v616, 0
        %637 = vmatprep.subr.bf16.mxu0 0
        %638 = vmatpush1.bf16.msra.mxu0 0
        %639 = vmatprep.subr.bf16.mxu0 0
        %640 = vmatpush1.bf16.msra.mxu0 0
        %641 = vmatprep.subr.bf16.mxu0 0
        %642 = vmatpush1.bf16.msra.mxu0 0
        %643 = vmatprep.subr.bf16.mxu0 0
        %644 = vmatpush1.bf16.msra.mxu0 0
        %645 = vmatprep.subr.bf16.mxu0 0
        %646 = vmatpush1.bf16.msra.mxu0 0
        %647 = vmatprep.subr.bf16.mxu0 0
        %648 = vmatpush1.bf16.msra.mxu0 0
        %649 = vmatprep.subr.bf16.mxu0 0
        %650 = vmatpush1.bf16.msra.mxu0 %v630
        %651 = vmatprep.subr.bf16.mxu0 0
        %652 = vmatpush1.bf16.msra.mxu0 %v629
        %653 = vmatprep.subr.bf16.mxu0 0
        %654 = vmatpush2.bf16.msra.mxu0 0
        %655 = vmatprep.subr.bf16.mxu0 0
        %656 = vmatpush2.bf16.msra.mxu0 0
        %657 = vmatprep.subr.bf16.mxu0 0
        %658 = vmatpush2.bf16.msra.mxu0 0
        %659 = vmatprep.subr.bf16.mxu0 0
        %660 = vmatpush2.bf16.msra.mxu0 0
        %661 = vmatprep.subr.bf16.mxu0 0
        %662 = vmatpush2.bf16.msra.mxu0 0
        %663 = vmatprep.subr.bf16.mxu0 0
        %664 = vmatpush2.bf16.msra.mxu0 0
        %665 = vmatprep.subr.bf16.mxu0 0
        %666 = vmatpush2.bf16.msra.mxu0 0
        %667 = vmatprep.subr.bf16.mxu0 0
        %668 = vmatpush2.bf16.msra.mxu0 0
        %669 = vmatprep.mubr.bf16.mxu0 0
        %670 = vmatmul.mubr.bf16.gmra.mxu0 %v635
        %v671 = vpop.f32.mrf.mxu0
        %v672 = vadd.f32 0.0, %v671
        %v673 = vpop.f32.mrf.mxu0
        %v674 = vpop.f32.mrf.mxu0
        %v675 = vadd.f32 0.0, %v674
        %v676 = vpop.f32.mrf.mxu0
        %677 = vdwg.mxu0
        %678 = vst.msk [vmem:[#allocation2] sm:$0xff] %vm633, 0.0
        %679 = vst.msk [vmem:[#allocation2 + $0x8] sm:$0xff] %vm633, 0.0
        %680 = vst.msk [vmem:[#allocation2 + $0x10] sm:$0xff] %vm633, 0.0
        %681 = vst.msk [vmem:[#allocation2 + $0x4] sm:$0xff] %vm633, %v614
        %682 = vst.msk [vmem:[#allocation2 + $0xc] sm:$0xff] %vm633, %v615
        %v683 = vld [vmem:[#allocation2] sm:$0xff]
        %v684 = vld [vmem:[#allocation2 + $0x8] sm:$0xff]
        %v685 = vpack.c.bf16 %v684, %v683
        %v686 = vld [vmem:[%s4] sm:$0xf]
        %v687 = vld [vmem:[%s4 + $0x4] sm:$0xf]
        %v688 = vld [vmem:[%s4 + $0x8] sm:$0xf]
        %v689 = vld [vmem:[%s4 + $0xc] sm:$0xf]
        %v690 = vld [vmem:[#allocation2 + $0x1] sm:$0xff]
        %v691 = vld [vmem:[#allocation2 + $0x9] sm:$0xff]
        %v692 = vpack.c.bf16 %v691, %v690
        %s693 = scalar_lea.vmem %s4, 16
        %v694 = vld [vmem:[%s693] sm:$0xf]
        %v695 = vld [vmem:[%s693 + $0x4] sm:$0xf]
        %v696 = vld [vmem:[%s693 + $0x8] sm:$0xf]
        %v697 = vld [vmem:[%s693 + $0xc] sm:$0xf]
        %v702 = vunpack.c.l.b16 %v694
        %v703 = vunpack.c.l.b16 %v695
        %v704 = vunpack.c.l.b16 %v696
        %v705 = vunpack.c.l.b16 %v697
        %v706 = vpack.c.b16 %v703, %v702
        %v707 = vpack.c.b16 %v705, %v704
        %v711 = vsel %vm633, %v692, 0
        %713 = vmatprep.subr.bf16.mxu0 0
        %714 = vmatpush1.bf16.msra.mxu0 0
        %715 = vmatprep.subr.bf16.mxu0 0
        %716 = vmatpush1.bf16.msra.mxu0 0
        %717 = vmatprep.subr.bf16.mxu0 0
        %718 = vmatpush1.bf16.msra.mxu0 0
        %719 = vmatprep.subr.bf16.mxu0 0
        %720 = vmatpush1.bf16.msra.mxu0 0
        %721 = vmatprep.subr.bf16.mxu0 0
        %722 = vmatpush1.bf16.msra.mxu0 0
        %723 = vmatprep.subr.bf16.mxu0 0
        %724 = vmatpush1.bf16.msra.mxu0 0
        %725 = vmatprep.subr.bf16.mxu0 0
        %726 = vmatpush1.bf16.msra.mxu0 %v707
        %727 = vmatprep.subr.bf16.mxu0 0
        %728 = vmatpush1.bf16.msra.mxu0 %v706
        %729 = vmatprep.subr.bf16.mxu0 0
        %730 = vmatpush2.bf16.msra.mxu0 0
        %731 = vmatprep.subr.bf16.mxu0 0
        %732 = vmatpush2.bf16.msra.mxu0 0
        %733 = vmatprep.subr.bf16.mxu0 0
        %734 = vmatpush2.bf16.msra.mxu0 0
        %735 = vmatprep.subr.bf16.mxu0 0
        %736 = vmatpush2.bf16.msra.mxu0 0
        %737 = vmatprep.subr.bf16.mxu0 0
        %738 = vmatpush2.bf16.msra.mxu0 0
        %739 = vmatprep.subr.bf16.mxu0 0
        %740 = vmatpush2.bf16.msra.mxu0 0
        %741 = vmatprep.subr.bf16.mxu0 0
        %742 = vmatpush2.bf16.msra.mxu0 0
        %743 = vmatprep.subr.bf16.mxu0 0
        %744 = vmatpush2.bf16.msra.mxu0 0
        %745 = vmatprep.mubr.bf16.mxu0 0
        %746 = vmatmul.mubr.bf16.gmra.mxu0 %v711
        %v747 = vpop.f32.mrf.mxu0
        %v748 = vadd.f32 0.0, %v747
        %v749 = vpop.f32.mrf.mxu0
        %v750 = vpop.f32.mrf.mxu0
        %v751 = vadd.f32 0.0, %v750
        %v752 = vpop.f32.mrf.mxu0
        %753 = vdwg.mxu0
        %v758 = vunpack.c.l.b16 %v686
        %v759 = vunpack.c.l.b16 %v687
        %v760 = vunpack.c.l.b16 %v688
        %v761 = vunpack.c.l.b16 %v689
        %v762 = vpack.c.b16 %v759, %v758
        %v763 = vpack.c.b16 %v761, %v760
        %v767 = vsel %vm633, %v685, 0
        %769 = vmatprep.subr.bf16.mxu0 0
        %770 = vmatpush1.bf16.msra.mxu0 0
        %771 = vmatprep.subr.bf16.mxu0 0
        %772 = vmatpush1.bf16.msra.mxu0 0
        %773 = vmatprep.subr.bf16.mxu0 0
        %774 = vmatpush1.bf16.msra.mxu0 0
        %775 = vmatprep.subr.bf16.mxu0 0
        %776 = vmatpush1.bf16.msra.mxu0 0
        %777 = vmatprep.subr.bf16.mxu0 0
        %778 = vmatpush1.bf16.msra.mxu0 0
        %779 = vmatprep.subr.bf16.mxu0 0
        %780 = vmatpush1.bf16.msra.mxu0 0
        %781 = vmatprep.subr.bf16.mxu0 0
        %782 = vmatpush1.bf16.msra.mxu0 %v763
        %783 = vmatprep.subr.bf16.mxu0 0
        %784 = vmatpush1.bf16.msra.mxu0 %v762
        %785 = vmatprep.subr.bf16.mxu0 0
        %786 = vmatpush2.bf16.msra.mxu0 0
        %787 = vmatprep.subr.bf16.mxu0 0
        %788 = vmatpush2.bf16.msra.mxu0 0
        %789 = vmatprep.subr.bf16.mxu0 0
        %790 = vmatpush2.bf16.msra.mxu0 0
        %791 = vmatprep.subr.bf16.mxu0 0
        %792 = vmatpush2.bf16.msra.mxu0 0
        %793 = vmatprep.subr.bf16.mxu0 0
        %794 = vmatpush2.bf16.msra.mxu0 0
        %795 = vmatprep.subr.bf16.mxu0 0
        %796 = vmatpush2.bf16.msra.mxu0 0
        %797 = vmatprep.subr.bf16.mxu0 0
        %798 = vmatpush2.bf16.msra.mxu0 0
        %799 = vmatprep.subr.bf16.mxu0 0
        %800 = vmatpush2.bf16.msra.mxu0 0
        %801 = vmatprep.mubr.bf16.mxu0 0
        %802 = vmatmul.mubr.bf16.gmra.mxu0 %v767
        %v803 = vpop.f32.mrf.mxu0
        %v804 = vadd.f32 %v748, %v803
        %v805 = vpop.f32.mrf.mxu0
        %v806 = vpop.f32.mrf.mxu0
        %v807 = vadd.f32 %v751, %v806
        %v808 = vpop.f32.mrf.mxu0
        %809 = vdwg.mxu0
        %v810 = vld [vmem:[#allocation2 + $0x2] sm:$0xff]
        %v811 = vld [vmem:[#allocation2 + $0xa] sm:$0xff]
        %v812 = vpack.c.bf16 %v811, %v810
        %s813 = scalar_lea.vmem %s4, 32
        %v814 = vld [vmem:[%s813] sm:$0xf]
        %v815 = vld [vmem:[%s813 + $0x4] sm:$0xf]
        %v816 = vld [vmem:[%s813 + $0x8] sm:$0xf]
        %v817 = vld [vmem:[%s813 + $0xc] sm:$0xf]
        %v822 = vunpack.c.l.b16 %v814
        %v823 = vunpack.c.l.b16 %v815
        %v824 = vunpack.c.l.b16 %v816
        %v825 = vunpack.c.l.b16 %v817
        %v826 = vpack.c.b16 %v823, %v822
        %v827 = vpack.c.b16 %v825, %v824
        %v831 = vsel %vm633, %v812, 0
        %833 = vmatprep.subr.bf16.mxu0 0
        %834 = vmatpush1.bf16.msra.mxu0 0
        %835 = vmatprep.subr.bf16.mxu0 0
        %836 = vmatpush1.bf16.msra.mxu0 0
        %837 = vmatprep.subr.bf16.mxu0 0
        %838 = vmatpush1.bf16.msra.mxu0 0
        %839 = vmatprep.subr.bf16.mxu0 0
        %840 = vmatpush1.bf16.msra.mxu0 0
        %841 = vmatprep.subr.bf16.mxu0 0
        %842 = vmatpush1.bf16.msra.mxu0 0
        %843 = vmatprep.subr.bf16.mxu0 0
        %844 = vmatpush1.bf16.msra.mxu0 0
        %845 = vmatprep.subr.bf16.mxu0 0
        %846 = vmatpush1.bf16.msra.mxu0 %v827
        %847 = vmatprep.subr.bf16.mxu0 0
        %848 = vmatpush1.bf16.msra.mxu0 %v826
        %849 = vmatprep.subr.bf16.mxu0 0
        %850 = vmatpush2.bf16.msra.mxu0 0
        %851 = vmatprep.subr.bf16.mxu0 0
        %852 = vmatpush2.bf16.msra.mxu0 0
        %853 = vmatprep.subr.bf16.mxu0 0
        %854 = vmatpush2.bf16.msra.mxu0 0
        %855 = vmatprep.subr.bf16.mxu0 0
        %856 = vmatpush2.bf16.msra.mxu0 0
        %857 = vmatprep.subr.bf16.mxu0 0
        %858 = vmatpush2.bf16.msra.mxu0 0
        %859 = vmatprep.subr.bf16.mxu0 0
        %860 = vmatpush2.bf16.msra.mxu0 0
        %861 = vmatprep.subr.bf16.mxu0 0
        %862 = vmatpush2.bf16.msra.mxu0 0
        %863 = vmatprep.subr.bf16.mxu0 0
        %864 = vmatpush2.bf16.msra.mxu0 0
        %865 = vmatprep.mubr.bf16.mxu0 0
        %866 = vmatmul.mubr.bf16.gmra.mxu0 %v831
        %v867 = vpop.f32.mrf.mxu0
        %v868 = vadd.f32 0.0, %v867
        %v869 = vpop.f32.mrf.mxu0
        %v870 = vpop.f32.mrf.mxu0
        %v871 = vadd.f32 0.0, %v870
        %v872 = vpop.f32.mrf.mxu0
        %873 = vdwg.mxu0
        %v874 = vadd.f32 %v804, %v868
        %v875 = vadd.f32 %v807, %v871
        %v876 = vld [vmem:[#allocation2 + $0x3] sm:$0xff]
        %v877 = vld [vmem:[#allocation2 + $0xb] sm:$0xff]
        %v878 = vpack.c.bf16 %v877, %v876
        %s879 = scalar_lea.vmem %s4, 48
        %v880 = vld [vmem:[%s879] sm:$0xf]
        %v881 = vld [vmem:[%s879 + $0x4] sm:$0xf]
        %v882 = vld [vmem:[%s879 + $0x8] sm:$0xf]
        %v883 = vld [vmem:[%s879 + $0xc] sm:$0xf]
        %v888 = vunpack.c.l.b16 %v880
        %v889 = vunpack.c.l.b16 %v881
        %v890 = vunpack.c.l.b16 %v882
        %v891 = vunpack.c.l.b16 %v883
        %v892 = vpack.c.b16 %v889, %v888
        %v893 = vpack.c.b16 %v891, %v890
        %v897 = vsel %vm633, %v878, 0
        %899 = vmatprep.subr.bf16.mxu0 0
        %900 = vmatpush1.bf16.msra.mxu0 0
        %901 = vmatprep.subr.bf16.mxu0 0
        %902 = vmatpush1.bf16.msra.mxu0 0
        %903 = vmatprep.subr.bf16.mxu0 0
        %904 = vmatpush1.bf16.msra.mxu0 0
        %905 = vmatprep.subr.bf16.mxu0 0
        %906 = vmatpush1.bf16.msra.mxu0 0
        %907 = vmatprep.subr.bf16.mxu0 0
        %908 = vmatpush1.bf16.msra.mxu0 0
        %909 = vmatprep.subr.bf16.mxu0 0
        %910 = vmatpush1.bf16.msra.mxu0 0
        %911 = vmatprep.subr.bf16.mxu0 0
        %912 = vmatpush1.bf16.msra.mxu0 %v893
        %913 = vmatprep.subr.bf16.mxu0 0
        %914 = vmatpush1.bf16.msra.mxu0 %v892
        %915 = vmatprep.subr.bf16.mxu0 0
        %916 = vmatpush2.bf16.msra.mxu0 0
        %917 = vmatprep.subr.bf16.mxu0 0
        %918 = vmatpush2.bf16.msra.mxu0 0
        %919 = vmatprep.subr.bf16.mxu0 0
        %920 = vmatpush2.bf16.msra.mxu0 0
        %921 = vmatprep.subr.bf16.mxu0 0
        %922 = vmatpush2.bf16.msra.mxu0 0
        %923 = vmatprep.subr.bf16.mxu0 0
        %924 = vmatpush2.bf16.msra.mxu0 0
        %925 = vmatprep.subr.bf16.mxu0 0
        %926 = vmatpush2.bf16.msra.mxu0 0
        %927 = vmatprep.subr.bf16.mxu0 0
        %928 = vmatpush2.bf16.msra.mxu0 0
        %929 = vmatprep.subr.bf16.mxu0 0
        %930 = vmatpush2.bf16.msra.mxu0 0
        %931 = vmatprep.mubr.bf16.mxu0 0
        %932 = vmatmul.mubr.bf16.gmra.mxu0 %v897
        %v933 = vpop.f32.mrf.mxu0
        %v934 = vadd.f32 0.0, %v933
        %v935 = vpop.f32.mrf.mxu0
        %v936 = vpop.f32.mrf.mxu0
        %v937 = vadd.f32 0.0, %v936
        %v938 = vpop.f32.mrf.mxu0
        %939 = vdwg.mxu0
        %v940 = vadd.f32 %v874, %v934
        %v941 = vadd.f32 %v875, %v937
        %v942 = vld [vmem:[#allocation2 + $0x4] sm:$0xff]
        %v943 = vld [vmem:[#allocation2 + $0xc] sm:$0xff]
        %v944 = vpack.c.bf16 %v943, %v942
        %s945 = scalar_lea.vmem %s4, 64
        %v946 = vld [vmem:[%s945] sm:$0xf]
        %v947 = vld [vmem:[%s945 + $0x4] sm:$0xf]
        %v948 = vld [vmem:[%s945 + $0x8] sm:$0xf]
        %v949 = vld [vmem:[%s945 + $0xc] sm:$0xf]
        %v954 = vunpack.c.l.b16 %v946
        %v955 = vunpack.c.l.b16 %v947
        %v956 = vunpack.c.l.b16 %v948
        %v957 = vunpack.c.l.b16 %v949
        %v958 = vpack.c.b16 %v955, %v954
        %v959 = vpack.c.b16 %v957, %v956
        %v963 = vsel %vm633, %v944, 0
        %965 = vmatprep.subr.bf16.mxu0 0
        %966 = vmatpush1.bf16.msra.mxu0 0
        %967 = vmatprep.subr.bf16.mxu0 0
        %968 = vmatpush1.bf16.msra.mxu0 0
        %969 = vmatprep.subr.bf16.mxu0 0
        %970 = vmatpush1.bf16.msra.mxu0 0
        %971 = vmatprep.subr.bf16.mxu0 0
        %972 = vmatpush1.bf16.msra.mxu0 0
        %973 = vmatprep.subr.bf16.mxu0 0
        %974 = vmatpush1.bf16.msra.mxu0 0
        %975 = vmatprep.subr.bf16.mxu0 0
        %976 = vmatpush1.bf16.msra.mxu0 0
        %977 = vmatprep.subr.bf16.mxu0 0
        %978 = vmatpush1.bf16.msra.mxu0 %v959
        %979 = vmatprep.subr.bf16.mxu0 0
        %980 = vmatpush1.bf16.msra.mxu0 %v958
        %981 = vmatprep.subr.bf16.mxu0 0
        %982 = vmatpush2.bf16.msra.mxu0 0
        %983 = vmatprep.subr.bf16.mxu0 0
        %984 = vmatpush2.bf16.msra.mxu0 0
        %985 = vmatprep.subr.bf16.mxu0 0
        %986 = vmatpush2.bf16.msra.mxu0 0
        %987 = vmatprep.subr.bf16.mxu0 0
        %988 = vmatpush2.bf16.msra.mxu0 0
        %989 = vmatprep.subr.bf16.mxu0 0
        %990 = vmatpush2.bf16.msra.mxu0 0
        %991 = vmatprep.subr.bf16.mxu0 0
        %992 = vmatpush2.bf16.msra.mxu0 0
        %993 = vmatprep.subr.bf16.mxu0 0
        %994 = vmatpush2.bf16.msra.mxu0 0
        %995 = vmatprep.subr.bf16.mxu0 0
        %996 = vmatpush2.bf16.msra.mxu0 0
        %997 = vmatprep.mubr.bf16.mxu0 0
        %998 = vmatmul.mubr.bf16.gmra.mxu0 %v963
        %v999 = vpop.f32.mrf.mxu0
        %v1000 = vadd.f32 0.0, %v999
        %v1001 = vpop.f32.mrf.mxu0
        %v1002 = vpop.f32.mrf.mxu0
        %v1003 = vadd.f32 0.0, %v1002
        %v1004 = vpop.f32.mrf.mxu0
        %1005 = vdwg.mxu0
        %v1006 = vadd.f32 %v940, %v1000
        %v1007 = vadd.f32 %v941, %v1003
        %v1008 = vld [vmem:[#allocation2 + $0x5] sm:$0xff]
        %v1009 = vld [vmem:[#allocation2 + $0xd] sm:$0xff]
        %v1010 = vpack.c.bf16 %v1009, %v1008
        %s1011 = scalar_lea.vmem %s4, 80
        %v1012 = vld [vmem:[%s1011] sm:$0xf]
        %v1013 = vld [vmem:[%s1011 + $0x4] sm:$0xf]
        %v1014 = vld [vmem:[%s1011 + $0x8] sm:$0xf]
        %v1015 = vld [vmem:[%s1011 + $0xc] sm:$0xf]
        %v1020 = vunpack.c.l.b16 %v1012
        %v1021 = vunpack.c.l.b16 %v1013
        %v1022 = vunpack.c.l.b16 %v1014
        %v1023 = vunpack.c.l.b16 %v1015
        %v1024 = vpack.c.b16 %v1021, %v1020
        %v1025 = vpack.c.b16 %v1023, %v1022
        %v1029 = vsel %vm633, %v1010, 0
        %1031 = vmatprep.subr.bf16.mxu0 0
        %1032 = vmatpush1.bf16.msra.mxu0 0
        %1033 = vmatprep.subr.bf16.mxu0 0
        %1034 = vmatpush1.bf16.msra.mxu0 0
        %1035 = vmatprep.subr.bf16.mxu0 0
        %1036 = vmatpush1.bf16.msra.mxu0 0
        %1037 = vmatprep.subr.bf16.mxu0 0
        %1038 = vmatpush1.bf16.msra.mxu0 0
        %1039 = vmatprep.subr.bf16.mxu0 0
        %1040 = vmatpush1.bf16.msra.mxu0 0
        %1041 = vmatprep.subr.bf16.mxu0 0
        %1042 = vmatpush1.bf16.msra.mxu0 0
        %1043 = vmatprep.subr.bf16.mxu0 0
        %1044 = vmatpush1.bf16.msra.mxu0 %v1025
        %1045 = vmatprep.subr.bf16.mxu0 0
        %1046 = vmatpush1.bf16.msra.mxu0 %v1024
        %1047 = vmatprep.subr.bf16.mxu0 0
        %1048 = vmatpush2.bf16.msra.mxu0 0
        %1049 = vmatprep.subr.bf16.mxu0 0
        %1050 = vmatpush2.bf16.msra.mxu0 0
        %1051 = vmatprep.subr.bf16.mxu0 0
        %1052 = vmatpush2.bf16.msra.mxu0 0
        %1053 = vmatprep.subr.bf16.mxu0 0
        %1054 = vmatpush2.bf16.msra.mxu0 0
        %1055 = vmatprep.subr.bf16.mxu0 0
        %1056 = vmatpush2.bf16.msra.mxu0 0
        %1057 = vmatprep.subr.bf16.mxu0 0
        %1058 = vmatpush2.bf16.msra.mxu0 0
        %1059 = vmatprep.subr.bf16.mxu0 0
        %1060 = vmatpush2.bf16.msra.mxu0 0
        %1061 = vmatprep.subr.bf16.mxu0 0
        %1062 = vmatpush2.bf16.msra.mxu0 0
        %1063 = vmatprep.mubr.bf16.mxu0 0
        %1064 = vmatmul.mubr.bf16.gmra.mxu0 %v1029
        %v1065 = vpop.f32.mrf.mxu0
        %v1066 = vadd.f32 0.0, %v1065
        %v1067 = vpop.f32.mrf.mxu0
        %v1068 = vpop.f32.mrf.mxu0
        %v1069 = vadd.f32 0.0, %v1068
        %v1070 = vpop.f32.mrf.mxu0
        %1071 = vdwg.mxu0
        %v1072 = vadd.f32 %v1006, %v1066
        %v1073 = vadd.f32 %v1007, %v1069
        %v1074 = vld [vmem:[#allocation2 + $0x6] sm:$0xff]
        %v1075 = vld [vmem:[#allocation2 + $0xe] sm:$0xff]
        %v1076 = vpack.c.bf16 %v1075, %v1074
        %s1077 = scalar_lea.vmem %s4, 96
        %v1078 = vld [vmem:[%s1077] sm:$0xf]
        %v1079 = vld [vmem:[%s1077 + $0x4] sm:$0xf]
        %v1080 = vld [vmem:[%s1077 + $0x8] sm:$0xf]
        %v1081 = vld [vmem:[%s1077 + $0xc] sm:$0xf]
        %v1086 = vunpack.c.l.b16 %v1078
        %v1087 = vunpack.c.l.b16 %v1079
        %v1088 = vunpack.c.l.b16 %v1080
        %v1089 = vunpack.c.l.b16 %v1081
        %v1090 = vpack.c.b16 %v1087, %v1086
        %v1091 = vpack.c.b16 %v1089, %v1088
        %v1095 = vsel %vm633, %v1076, 0
        %1097 = vmatprep.subr.bf16.mxu0 0
        %1098 = vmatpush1.bf16.msra.mxu0 0
        %1099 = vmatprep.subr.bf16.mxu0 0
        %1100 = vmatpush1.bf16.msra.mxu0 0
        %1101 = vmatprep.subr.bf16.mxu0 0
        %1102 = vmatpush1.bf16.msra.mxu0 0
        %1103 = vmatprep.subr.bf16.mxu0 0
        %1104 = vmatpush1.bf16.msra.mxu0 0
        %1105 = vmatprep.subr.bf16.mxu0 0
        %1106 = vmatpush1.bf16.msra.mxu0 0
        %1107 = vmatprep.subr.bf16.mxu0 0
        %1108 = vmatpush1.bf16.msra.mxu0 0
        %1109 = vmatprep.subr.bf16.mxu0 0
        %1110 = vmatpush1.bf16.msra.mxu0 %v1091
        %1111 = vmatprep.subr.bf16.mxu0 0
        %1112 = vmatpush1.bf16.msra.mxu0 %v1090
        %1113 = vmatprep.subr.bf16.mxu0 0
        %1114 = vmatpush2.bf16.msra.mxu0 0
        %1115 = vmatprep.subr.bf16.mxu0 0
        %1116 = vmatpush2.bf16.msra.mxu0 0
        %1117 = vmatprep.subr.bf16.mxu0 0
        %1118 = vmatpush2.bf16.msra.mxu0 0
        %1119 = vmatprep.subr.bf16.mxu0 0
        %1120 = vmatpush2.bf16.msra.mxu0 0
        %1121 = vmatprep.subr.bf16.mxu0 0
        %1122 = vmatpush2.bf16.msra.mxu0 0
        %1123 = vmatprep.subr.bf16.mxu0 0
        %1124 = vmatpush2.bf16.msra.mxu0 0
        %1125 = vmatprep.subr.bf16.mxu0 0
        %1126 = vmatpush2.bf16.msra.mxu0 0
        %1127 = vmatprep.subr.bf16.mxu0 0
        %1128 = vmatpush2.bf16.msra.mxu0 0
        %1129 = vmatprep.mubr.bf16.mxu0 0
        %1130 = vmatmul.mubr.bf16.gmra.mxu0 %v1095
        %v1131 = vpop.f32.mrf.mxu0
        %v1132 = vadd.f32 0.0, %v1131
        %v1133 = vpop.f32.mrf.mxu0
        %v1134 = vpop.f32.mrf.mxu0
        %v1135 = vadd.f32 0.0, %v1134
        %v1136 = vpop.f32.mrf.mxu0
        %1137 = vdwg.mxu0
        %v1138 = vadd.f32 %v1072, %v1132
        %v1139 = vadd.f32 %v1073, %v1135
        %v1140 = vld [vmem:[#allocation2 + $0x7] sm:$0xff]
        %v1141 = vld [vmem:[#allocation2 + $0xf] sm:$0xff]
        %v1142 = vpack.c.bf16 %v1141, %v1140
        %s1143 = scalar_lea.vmem %s4, 112
        %v1144 = vld [vmem:[%s1143] sm:$0xf]
        %v1145 = vld [vmem:[%s1143 + $0x4] sm:$0xf]
        %v1146 = vld [vmem:[%s1143 + $0x8] sm:$0xf]
        %v1147 = vld [vmem:[%s1143 + $0xc] sm:$0xf]
        %v1152 = vunpack.c.l.b16 %v1144
        %v1153 = vunpack.c.l.b16 %v1145
        %v1154 = vunpack.c.l.b16 %v1146
        %v1155 = vunpack.c.l.b16 %v1147
        %v1156 = vpack.c.b16 %v1153, %v1152
        %v1157 = vpack.c.b16 %v1155, %v1154
        %v1161 = vsel %vm633, %v1142, 0
        %1163 = vmatprep.subr.bf16.mxu0 0
        %1164 = vmatpush1.bf16.msra.mxu0 0
        %1165 = vmatprep.subr.bf16.mxu0 0
        %1166 = vmatpush1.bf16.msra.mxu0 0
        %1167 = vmatprep.subr.bf16.mxu0 0
        %1168 = vmatpush1.bf16.msra.mxu0 0
        %1169 = vmatprep.subr.bf16.mxu0 0
        %1170 = vmatpush1.bf16.msra.mxu0 0
        %1171 = vmatprep.subr.bf16.mxu0 0
        %1172 = vmatpush1.bf16.msra.mxu0 0
        %1173 = vmatprep.subr.bf16.mxu0 0
        %1174 = vmatpush1.bf16.msra.mxu0 0
        %1175 = vmatprep.subr.bf16.mxu0 0
        %1176 = vmatpush1.bf16.msra.mxu0 %v1157
        %1177 = vmatprep.subr.bf16.mxu0 0
        %1178 = vmatpush1.bf16.msra.mxu0 %v1156
        %1179 = vmatprep.subr.bf16.mxu0 0
        %1180 = vmatpush2.bf16.msra.mxu0 0
        %1181 = vmatprep.subr.bf16.mxu0 0
        %1182 = vmatpush2.bf16.msra.mxu0 0
        %1183 = vmatprep.subr.bf16.mxu0 0
        %1184 = vmatpush2.bf16.msra.mxu0 0
        %1185 = vmatprep.subr.bf16.mxu0 0
        %1186 = vmatpush2.bf16.msra.mxu0 0
        %1187 = vmatprep.subr.bf16.mxu0 0
        %1188 = vmatpush2.bf16.msra.mxu0 0
        %1189 = vmatprep.subr.bf16.mxu0 0
        %1190 = vmatpush2.bf16.msra.mxu0 0
        %1191 = vmatprep.subr.bf16.mxu0 0
        %1192 = vmatpush2.bf16.msra.mxu0 0
        %1193 = vmatprep.subr.bf16.mxu0 0
        %1194 = vmatpush2.bf16.msra.mxu0 0
        %1195 = vmatprep.mubr.bf16.mxu0 0
        %1196 = vmatmul.mubr.bf16.gmra.mxu0 %v1161
        %v1197 = vpop.f32.mrf.mxu0
        %v1198 = vadd.f32 0.0, %v1197
        %v1199 = vpop.f32.mrf.mxu0
        %v1200 = vpop.f32.mrf.mxu0
        %v1201 = vadd.f32 0.0, %v1200
        %v1202 = vpop.f32.mrf.mxu0
        %1203 = vdwg.mxu0
        %v1204 = vadd.f32 %v1138, %v1198
        %v1205 = vadd.f32 %v1139, %v1201
        %v1206 = vld [vmem:[#allocation2 + $0x8] sm:$0xff]
        %v1207 = vld [vmem:[#allocation2 + $0x10] sm:$0xff]
        %v1208 = vpack.c.bf16 %v1207, %v1206
        %s1209 = scalar_lea.vmem %s4, 128
        %v1210 = vld [vmem:[%s1209] sm:$0xf]
        %v1211 = vld [vmem:[%s1209 + $0x4] sm:$0xf]
        %v1212 = vld [vmem:[%s1209 + $0x8] sm:$0xf]
        %v1213 = vld [vmem:[%s1209 + $0xc] sm:$0xf]
        %v1218 = vunpack.c.l.b16 %v1210
        %v1219 = vunpack.c.l.b16 %v1211
        %v1220 = vunpack.c.l.b16 %v1212
        %v1221 = vunpack.c.l.b16 %v1213
        %v1222 = vpack.c.b16 %v1219, %v1218
        %v1223 = vpack.c.b16 %v1221, %v1220
        %v1227 = vsel %vm633, %v1208, 0
        %1229 = vmatprep.subr.bf16.mxu0 0
        %1230 = vmatpush1.bf16.msra.mxu0 0
        %1231 = vmatprep.subr.bf16.mxu0 0
        %1232 = vmatpush1.bf16.msra.mxu0 0
        %1233 = vmatprep.subr.bf16.mxu0 0
        %1234 = vmatpush1.bf16.msra.mxu0 0
        %1235 = vmatprep.subr.bf16.mxu0 0
        %1236 = vmatpush1.bf16.msra.mxu0 0
        %1237 = vmatprep.subr.bf16.mxu0 0
        %1238 = vmatpush1.bf16.msra.mxu0 0
        %1239 = vmatprep.subr.bf16.mxu0 0
        %1240 = vmatpush1.bf16.msra.mxu0 0
        %1241 = vmatprep.subr.bf16.mxu0 0
        %1242 = vmatpush1.bf16.msra.mxu0 %v1223
        %1243 = vmatprep.subr.bf16.mxu0 0
        %1244 = vmatpush1.bf16.msra.mxu0 %v1222
        %1245 = vmatprep.subr.bf16.mxu0 0
        %1246 = vmatpush2.bf16.msra.mxu0 0
        %1247 = vmatprep.subr.bf16.mxu0 0
        %1248 = vmatpush2.bf16.msra.mxu0 0
        %1249 = vmatprep.subr.bf16.mxu0 0
        %1250 = vmatpush2.bf16.msra.mxu0 0
        %1251 = vmatprep.subr.bf16.mxu0 0
        %1252 = vmatpush2.bf16.msra.mxu0 0
        %1253 = vmatprep.subr.bf16.mxu0 0
        %1254 = vmatpush2.bf16.msra.mxu0 0
        %1255 = vmatprep.subr.bf16.mxu0 0
        %1256 = vmatpush2.bf16.msra.mxu0 0
        %1257 = vmatprep.subr.bf16.mxu0 0
        %1258 = vmatpush2.bf16.msra.mxu0 0
        %1259 = vmatprep.subr.bf16.mxu0 0
        %1260 = vmatpush2.bf16.msra.mxu0 0
        %1261 = vmatprep.mubr.bf16.mxu0 0
        %1262 = vmatmul.mubr.bf16.gmra.mxu0 %v1227
        %v1263 = vpop.f32.mrf.mxu0
        %v1264 = vadd.f32 0.0, %v1263
        %v1265 = vpop.f32.mrf.mxu0
        %v1266 = vpop.f32.mrf.mxu0
        %v1267 = vadd.f32 0.0, %v1266
        %v1268 = vpop.f32.mrf.mxu0
        %1269 = vdwg.mxu0
        %v1270 = vadd.f32 %v1204, %v1264
        %v1271 = vadd.f32 %v1205, %v1267
        %v1272 = vld [vmem:[#allocation9] sm:$0x1]
        %v1274 = vlaneseq
        %v1275 = vshrl.u32 %v1274, 7
        %v1276 = vsub.s32 0, %v1275
        %v1277 = vrot.slane %v1272, %v1276
        %v1279 = vmul.f32 %v1270, %v1277
        %v1280 = vmul.f32 %v1271, %v1277
        %v1281 = vld [vmem:[#allocation11] sm:$0x1]
        %v1283 = vlaneseq
        %v1284 = vshrl.u32 %v1283, 7
        %v1285 = vsub.s32 0, %v1284
        %v1286 = vrot.slane %v1281, %v1285
        %v1288 = vadd.f32 %v1279, %v1286
        %v1289 = vadd.f32 %v1280, %v1286
        %vm1290 = vcmp.ge.f32.partialorder %v1288, 0.0
        %vm1291 = vcmp.ge.f32.partialorder %v1289, 0.0
        %v1292 = vmul.f32 %v1288, 0.01
        %v1293 = vmul.f32 %v1289, 0.01
        %v1294 = vsel %vm1290, %v1288, %v1292
        %v1295 = vsel %vm1291, %v1289, %v1293
        %v1296 = vpack.c.bf16 %v1295, %v1294
        %v1297 = vld [vmem:[#allocation12] sm:$0xf]
        %v1298 = vld [vmem:[#allocation12 + $0x4] sm:$0xf]
        %v1299 = vld [vmem:[#allocation12 + $0x8] sm:$0xf]
        %v1300 = vld [vmem:[#allocation12 + $0xc] sm:$0xf]
        %v1301 = vld [vmem:[#allocation12 + $0x10] sm:$0xf]
        %v1302 = vld [vmem:[#allocation12 + $0x14] sm:$0xf]
        %v1303 = vld [vmem:[#allocation12 + $0x18] sm:$0xf]
        %v1304 = vld [vmem:[#allocation12 + $0x1c] sm:$0xf]
        %v1313 = vunpack.c.l.b16 %v1297
        %v1314 = vunpack.c.l.b16 %v1298
        %v1315 = vunpack.c.l.b16 %v1299
        %v1316 = vunpack.c.l.b16 %v1300
        %v1317 = vunpack.c.l.b16 %v1301
        %v1318 = vunpack.c.l.b16 %v1302
        %v1319 = vunpack.c.l.b16 %v1303
        %v1320 = vunpack.c.l.b16 %v1304
        %v1321 = vpack.c.b16 %v1314, %v1313
        %v1322 = vpack.c.b16 %v1316, %v1315
        %v1323 = vpack.c.b16 %v1318, %v1317
        %v1324 = vpack.c.b16 %v1320, %v1319
        %vm1329 = vcmask 523264
        %v1331 = vsel %vm1329, %v1296, 0
        %1333 = vmatprep.subr.bf16.mxu0 0
        %1334 = vmatpush1.bf16.msra.mxu0 0
        %1335 = vmatprep.subr.bf16.mxu0 0
        %1336 = vmatpush1.bf16.msra.mxu0 0
        %1337 = vmatprep.subr.bf16.mxu0 0
        %1338 = vmatpush1.bf16.msra.mxu0 0
        %1339 = vmatprep.subr.bf16.mxu0 0
        %1340 = vmatpush1.bf16.msra.mxu0 0
        %1341 = vmatprep.subr.bf16.mxu0 0
        %1342 = vmatpush1.bf16.msra.mxu0 %v1324
        %1343 = vmatprep.subr.bf16.mxu0 0
        %1344 = vmatpush1.bf16.msra.mxu0 %v1323
        %1345 = vmatprep.subr.bf16.mxu0 0
        %1346 = vmatpush1.bf16.msra.mxu0 %v1322
        %1347 = vmatprep.subr.bf16.mxu0 0
        %1348 = vmatpush1.bf16.msra.mxu0 %v1321
        %1349 = vmatprep.subr.bf16.mxu0 0
        %1350 = vmatpush2.bf16.msra.mxu0 0
        %1351 = vmatprep.subr.bf16.mxu0 0
        %1352 = vmatpush2.bf16.msra.mxu0 0
        %1353 = vmatprep.subr.bf16.mxu0 0
        %1354 = vmatpush2.bf16.msra.mxu0 0
        %1355 = vmatprep.subr.bf16.mxu0 0
        %1356 = vmatpush2.bf16.msra.mxu0 0
        %1357 = vmatprep.subr.bf16.mxu0 0
        %1358 = vmatpush2.bf16.msra.mxu0 0
        %1359 = vmatprep.subr.bf16.mxu0 0
        %1360 = vmatpush2.bf16.msra.mxu0 0
        %1361 = vmatprep.subr.bf16.mxu0 0
        %1362 = vmatpush2.bf16.msra.mxu0 0
        %1363 = vmatprep.subr.bf16.mxu0 0
        %1364 = vmatpush2.bf16.msra.mxu0 0
        %1365 = vmatprep.mubr.bf16.mxu0 0
        %1366 = vmatmul.mubr.bf16.gmra.mxu0 %v1331
        %v1367 = vpop.f32.mrf.mxu0
        %v1368 = vadd.f32 0.0, %v1367
        %v1369 = vpop.f32.mrf.mxu0
        %v1370 = vpop.f32.mrf.mxu0
        %v1371 = vadd.f32 0.0, %v1370
        %v1372 = vpop.f32.mrf.mxu0
        %1373 = vdwg.mxu0
        %v1374 = vpack.c.bf16 %v1371, %v1368
        %v1375 = vld [vmem:[#allocation14] sm:$0xf]
        %v1376 = vld [vmem:[#allocation14 + $0x4] sm:$0xf]
        %v1377 = vld [vmem:[#allocation14 + $0x8] sm:$0xf]
        %v1378 = vld [vmem:[#allocation14 + $0xc] sm:$0xf]
        %v1379 = vld [vmem:[#allocation14 + $0x10] sm:$0xf]
        %v1380 = vld [vmem:[#allocation14 + $0x14] sm:$0xf]
        %v1381 = vld [vmem:[#allocation14 + $0x18] sm:$0xf]
        %v1382 = vld [vmem:[#allocation14 + $0x1c] sm:$0xf]
        %v1391 = vunpack.c.l.b16 %v1375
        %v1392 = vunpack.c.l.b16 %v1376
        %v1393 = vunpack.c.l.b16 %v1377
        %v1394 = vunpack.c.l.b16 %v1378
        %v1395 = vunpack.c.l.b16 %v1379
        %v1396 = vunpack.c.l.b16 %v1380
        %v1397 = vunpack.c.l.b16 %v1381
        %v1398 = vunpack.c.l.b16 %v1382
        %v1399 = vpack.c.b16 %v1392, %v1391
        %v1400 = vpack.c.b16 %v1394, %v1393
        %v1401 = vpack.c.b16 %v1396, %v1395
        %v1402 = vpack.c.b16 %v1398, %v1397
        %v1408 = vsel %vm1329, %v1374, 0
        %1410 = vmatprep.subr.bf16.mxu0 0
        %1411 = vmatpush1.bf16.msra.mxu0 0
        %1412 = vmatprep.subr.bf16.mxu0 0
        %1413 = vmatpush1.bf16.msra.mxu0 0
        %1414 = vmatprep.subr.bf16.mxu0 0
        %1415 = vmatpush1.bf16.msra.mxu0 0
        %1416 = vmatprep.subr.bf16.mxu0 0
        %1417 = vmatpush1.bf16.msra.mxu0 0
        %1418 = vmatprep.subr.bf16.mxu0 0
        %1419 = vmatpush1.bf16.msra.mxu0 %v1402
        %1420 = vmatprep.subr.bf16.mxu0 0
        %1421 = vmatpush1.bf16.msra.mxu0 %v1401
        %1422 = vmatprep.subr.bf16.mxu0 0
        %1423 = vmatpush1.bf16.msra.mxu0 %v1400
        %1424 = vmatprep.subr.bf16.mxu0 0
        %1425 = vmatpush1.bf16.msra.mxu0 %v1399
        %1426 = vmatprep.subr.bf16.mxu0 0
        %1427 = vmatpush2.bf16.msra.mxu0 0
        %1428 = vmatprep.subr.bf16.mxu0 0
        %1429 = vmatpush2.bf16.msra.mxu0 0
        %1430 = vmatprep.subr.bf16.mxu0 0
        %1431 = vmatpush2.bf16.msra.mxu0 0
        %1432 = vmatprep.subr.bf16.mxu0 0
        %1433 = vmatpush2.bf16.msra.mxu0 0
        %1434 = vmatprep.subr.bf16.mxu0 0
        %1435 = vmatpush2.bf16.msra.mxu0 0
        %1436 = vmatprep.subr.bf16.mxu0 0
        %1437 = vmatpush2.bf16.msra.mxu0 0
        %1438 = vmatprep.subr.bf16.mxu0 0
        %1439 = vmatpush2.bf16.msra.mxu0 0
        %1440 = vmatprep.subr.bf16.mxu0 0
        %1441 = vmatpush2.bf16.msra.mxu0 0
        %1442 = vmatprep.mubr.bf16.mxu0 0
        %1443 = vmatmul.mubr.bf16.gmra.mxu0 %v1408
        %v1444 = vpop.f32.mrf.mxu0
        %v1445 = vadd.f32 0.0, %v1444
        %v1446 = vpop.f32.mrf.mxu0
        %v1447 = vpop.f32.mrf.mxu0
        %v1448 = vadd.f32 0.0, %v1447
        %v1449 = vpop.f32.mrf.mxu0
        %1450 = vdwg.mxu0
        %v1451 = vld [vmem:[%s9] sm:$0x1]
        %v1453 = vlaneseq
        %v1454 = vshrl.u32 %v1453, 7
        %v1455 = vsub.s32 0, %v1454
        %v1456 = vrot.slane %v1451, %v1455
        %v1458 = vmul.f32 %v1445, %v1456
        %v1459 = vmul.f32 %v1448, %v1456
        %v1460 = vld [vmem:[%s10] sm:$0x1]
        %v1462 = vlaneseq
        %v1463 = vshrl.u32 %v1462, 7
        %v1464 = vsub.s32 0, %v1463
        %v1465 = vrot.slane %v1460, %v1464
        %v1467 = vadd.f32 %v1458, %v1465
        %v1468 = vadd.f32 %v1459, %v1465
        %vm1469 = vcmp.ge.f32.partialorder %v1467, 0.0
        %vm1470 = vcmp.ge.f32.partialorder %v1468, 0.0
        %v1471 = vmul.f32 %v1467, 0.01
        %v1472 = vmul.f32 %v1468, 0.01
        %v1473 = vsel %vm1469, %v1467, %v1471
        %v1474 = vsel %vm1470, %v1468, %v1472
        %1475 = vst.msk [vmem:[#allocation3] sm:$0xff] %vm1329, 0.0
        %1476 = vst.msk [vmem:[#allocation3 + $0x8] sm:$0xff] %vm1329, 0.0
        %1477 = vst.msk [vmem:[#allocation3 + $0x10] sm:$0xff] %vm1329, 0.0
        %1478 = vst.msk [vmem:[#allocation3 + $0x4] sm:$0xff] %vm1329, %v1473
        %1479 = vst.msk [vmem:[#allocation3 + $0xc] sm:$0xff] %vm1329, %v1474
        %v1480 = vld [vmem:[#allocation3] sm:$0xff]
        %v1481 = vld [vmem:[#allocation3 + $0x8] sm:$0xff]
        %v1482 = vpack.c.bf16 %v1481, %v1480
        %v1483 = vld [vmem:[%s11] sm:$0xf]
        %v1484 = vld [vmem:[%s11 + $0x4] sm:$0xf]
        %v1485 = vld [vmem:[%s11 + $0x8] sm:$0xf]
        %v1486 = vld [vmem:[%s11 + $0xc] sm:$0xf]
        %v1487 = vld [vmem:[%s11 + $0x10] sm:$0xf]
        %v1488 = vld [vmem:[%s11 + $0x14] sm:$0xf]
        %v1489 = vld [vmem:[%s11 + $0x18] sm:$0xf]
        %v1490 = vld [vmem:[%s11 + $0x1c] sm:$0xf]
        %v1491 = vld [vmem:[#allocation3 + $0x1] sm:$0xff]
        %v1492 = vld [vmem:[#allocation3 + $0x9] sm:$0xff]
        %v1493 = vpack.c.bf16 %v1492, %v1491
        %s1494 = scalar_lea.vmem %s11, 32
        %v1495 = vld [vmem:[%s1494] sm:$0xf]
        %v1496 = vld [vmem:[%s1494 + $0x4] sm:$0xf]
        %v1497 = vld [vmem:[%s1494 + $0x8] sm:$0xf]
        %v1498 = vld [vmem:[%s1494 + $0xc] sm:$0xf]
        %v1499 = vld [vmem:[%s1494 + $0x10] sm:$0xf]
        %v1500 = vld [vmem:[%s1494 + $0x14] sm:$0xf]
        %v1501 = vld [vmem:[%s1494 + $0x18] sm:$0xf]
        %v1502 = vld [vmem:[%s1494 + $0x1c] sm:$0xf]
        %v1511 = vunpack.c.l.b16 %v1495
        %v1512 = vunpack.c.l.b16 %v1496
        %v1513 = vunpack.c.l.b16 %v1497
        %v1514 = vunpack.c.l.b16 %v1498
        %v1515 = vunpack.c.l.b16 %v1499
        %v1516 = vunpack.c.l.b16 %v1500
        %v1517 = vunpack.c.l.b16 %v1501
        %v1518 = vunpack.c.l.b16 %v1502
        %v1519 = vpack.c.b16 %v1512, %v1511
        %v1520 = vpack.c.b16 %v1514, %v1513
        %v1521 = vpack.c.b16 %v1516, %v1515
        %v1522 = vpack.c.b16 %v1518, %v1517
        %v1528 = vsel %vm1329, %v1493, 0
        %1530 = vmatprep.subr.bf16.mxu0 0
        %1531 = vmatpush1.bf16.msra.mxu0 0
        %1532 = vmatprep.subr.bf16.mxu0 0
        %1533 = vmatpush1.bf16.msra.mxu0 0
        %1534 = vmatprep.subr.bf16.mxu0 0
        %1535 = vmatpush1.bf16.msra.mxu0 0
        %1536 = vmatprep.subr.bf16.mxu0 0
        %1537 = vmatpush1.bf16.msra.mxu0 0
        %1538 = vmatprep.subr.bf16.mxu0 0
        %1539 = vmatpush1.bf16.msra.mxu0 %v1522
        %1540 = vmatprep.subr.bf16.mxu0 0
        %1541 = vmatpush1.bf16.msra.mxu0 %v1521
        %1542 = vmatprep.subr.bf16.mxu0 0
        %1543 = vmatpush1.bf16.msra.mxu0 %v1520
        %1544 = vmatprep.subr.bf16.mxu0 0
        %1545 = vmatpush1.bf16.msra.mxu0 %v1519
        %1546 = vmatprep.subr.bf16.mxu0 0
        %1547 = vmatpush2.bf16.msra.mxu0 0
        %1548 = vmatprep.subr.bf16.mxu0 0
        %1549 = vmatpush2.bf16.msra.mxu0 0
        %1550 = vmatprep.subr.bf16.mxu0 0
        %1551 = vmatpush2.bf16.msra.mxu0 0
        %1552 = vmatprep.subr.bf16.mxu0 0
        %1553 = vmatpush2.bf16.msra.mxu0 0
        %1554 = vmatprep.subr.bf16.mxu0 0
        %1555 = vmatpush2.bf16.msra.mxu0 0
        %1556 = vmatprep.subr.bf16.mxu0 0
        %1557 = vmatpush2.bf16.msra.mxu0 0
        %1558 = vmatprep.subr.bf16.mxu0 0
        %1559 = vmatpush2.bf16.msra.mxu0 0
        %1560 = vmatprep.subr.bf16.mxu0 0
        %1561 = vmatpush2.bf16.msra.mxu0 0
        %1562 = vmatprep.mubr.bf16.mxu0 0
        %1563 = vmatmul.mubr.bf16.gmra.mxu0 %v1528
        %v1564 = vpop.f32.mrf.mxu0
        %v1565 = vadd.f32 0.0, %v1564
        %v1566 = vpop.f32.mrf.mxu0
        %v1567 = vpop.f32.mrf.mxu0
        %v1568 = vadd.f32 0.0, %v1567
        %v1569 = vpop.f32.mrf.mxu0
        %1570 = vdwg.mxu0
        %v1579 = vunpack.c.l.b16 %v1483
        %v1580 = vunpack.c.l.b16 %v1484
        %v1581 = vunpack.c.l.b16 %v1485
        %v1582 = vunpack.c.l.b16 %v1486
        %v1583 = vunpack.c.l.b16 %v1487
        %v1584 = vunpack.c.l.b16 %v1488
        %v1585 = vunpack.c.l.b16 %v1489
        %v1586 = vunpack.c.l.b16 %v1490
        %v1587 = vpack.c.b16 %v1580, %v1579
        %v1588 = vpack.c.b16 %v1582, %v1581
        %v1589 = vpack.c.b16 %v1584, %v1583
        %v1590 = vpack.c.b16 %v1586, %v1585
        %v1596 = vsel %vm1329, %v1482, 0
        %1598 = vmatprep.subr.bf16.mxu0 0
        %1599 = vmatpush1.bf16.msra.mxu0 0
        %1600 = vmatprep.subr.bf16.mxu0 0
        %1601 = vmatpush1.bf16.msra.mxu0 0
        %1602 = vmatprep.subr.bf16.mxu0 0
        %1603 = vmatpush1.bf16.msra.mxu0 0
        %1604 = vmatprep.subr.bf16.mxu0 0
        %1605 = vmatpush1.bf16.msra.mxu0 0
        %1606 = vmatprep.subr.bf16.mxu0 0
        %1607 = vmatpush1.bf16.msra.mxu0 %v1590
        %1608 = vmatprep.subr.bf16.mxu0 0
        %1609 = vmatpush1.bf16.msra.mxu0 %v1589
        %1610 = vmatprep.subr.bf16.mxu0 0
        %1611 = vmatpush1.bf16.msra.mxu0 %v1588
        %1612 = vmatprep.subr.bf16.mxu0 0
        %1613 = vmatpush1.bf16.msra.mxu0 %v1587
        %1614 = vmatprep.subr.bf16.mxu0 0
        %1615 = vmatpush2.bf16.msra.mxu0 0
        %1616 = vmatprep.subr.bf16.mxu0 0
        %1617 = vmatpush2.bf16.msra.mxu0 0
        %1618 = vmatprep.subr.bf16.mxu0 0
        %1619 = vmatpush2.bf16.msra.mxu0 0
        %1620 = vmatprep.subr.bf16.mxu0 0
        %1621 = vmatpush2.bf16.msra.mxu0 0
        %1622 = vmatprep.subr.bf16.mxu0 0
        %1623 = vmatpush2.bf16.msra.mxu0 0
        %1624 = vmatprep.subr.bf16.mxu0 0
        %1625 = vmatpush2.bf16.msra.mxu0 0
        %1626 = vmatprep.subr.bf16.mxu0 0
        %1627 = vmatpush2.bf16.msra.mxu0 0
        %1628 = vmatprep.subr.bf16.mxu0 0
        %1629 = vmatpush2.bf16.msra.mxu0 0
        %1630 = vmatprep.mubr.bf16.mxu0 0
        %1631 = vmatmul.mubr.bf16.gmra.mxu0 %v1596
        %v1632 = vpop.f32.mrf.mxu0
        %v1633 = vadd.f32 %v1565, %v1632
        %v1634 = vpop.f32.mrf.mxu0
        %v1635 = vpop.f32.mrf.mxu0
        %v1636 = vadd.f32 %v1568, %v1635
        %v1637 = vpop.f32.mrf.mxu0
        %1638 = vdwg.mxu0
        %v1639 = vld [vmem:[#allocation3 + $0x2] sm:$0xff]
        %v1640 = vld [vmem:[#allocation3 + $0xa] sm:$0xff]
        %v1641 = vpack.c.bf16 %v1640, %v1639
        %s1642 = scalar_lea.vmem %s11, 64
        %v1643 = vld [vmem:[%s1642] sm:$0xf]
        %v1644 = vld [vmem:[%s1642 + $0x4] sm:$0xf]
        %v1645 = vld [vmem:[%s1642 + $0x8] sm:$0xf]
        %v1646 = vld [vmem:[%s1642 + $0xc] sm:$0xf]
        %v1647 = vld [vmem:[%s1642 + $0x10] sm:$0xf]
        %v1648 = vld [vmem:[%s1642 + $0x14] sm:$0xf]
        %v1649 = vld [vmem:[%s1642 + $0x18] sm:$0xf]
        %v1650 = vld [vmem:[%s1642 + $0x1c] sm:$0xf]
        %v1659 = vunpack.c.l.b16 %v1643
        %v1660 = vunpack.c.l.b16 %v1644
        %v1661 = vunpack.c.l.b16 %v1645
        %v1662 = vunpack.c.l.b16 %v1646
        %v1663 = vunpack.c.l.b16 %v1647
        %v1664 = vunpack.c.l.b16 %v1648
        %v1665 = vunpack.c.l.b16 %v1649
        %v1666 = vunpack.c.l.b16 %v1650
        %v1667 = vpack.c.b16 %v1660, %v1659
        %v1668 = vpack.c.b16 %v1662, %v1661
        %v1669 = vpack.c.b16 %v1664, %v1663
        %v1670 = vpack.c.b16 %v1666, %v1665
        %v1676 = vsel %vm1329, %v1641, 0
        %1678 = vmatprep.subr.bf16.mxu0 0
        %1679 = vmatpush1.bf16.msra.mxu0 0
        %1680 = vmatprep.subr.bf16.mxu0 0
        %1681 = vmatpush1.bf16.msra.mxu0 0
        %1682 = vmatprep.subr.bf16.mxu0 0
        %1683 = vmatpush1.bf16.msra.mxu0 0
        %1684 = vmatprep.subr.bf16.mxu0 0
        %1685 = vmatpush1.bf16.msra.mxu0 0
        %1686 = vmatprep.subr.bf16.mxu0 0
        %1687 = vmatpush1.bf16.msra.mxu0 %v1670
        %1688 = vmatprep.subr.bf16.mxu0 0
        %1689 = vmatpush1.bf16.msra.mxu0 %v1669
        %1690 = vmatprep.subr.bf16.mxu0 0
        %1691 = vmatpush1.bf16.msra.mxu0 %v1668
        %1692 = vmatprep.subr.bf16.mxu0 0
        %1693 = vmatpush1.bf16.msra.mxu0 %v1667
        %1694 = vmatprep.subr.bf16.mxu0 0
        %1695 = vmatpush2.bf16.msra.mxu0 0
        %1696 = vmatprep.subr.bf16.mxu0 0
        %1697 = vmatpush2.bf16.msra.mxu0 0
        %1698 = vmatprep.subr.bf16.mxu0 0
        %1699 = vmatpush2.bf16.msra.mxu0 0
        %1700 = vmatprep.subr.bf16.mxu0 0
        %1701 = vmatpush2.bf16.msra.mxu0 0
        %1702 = vmatprep.subr.bf16.mxu0 0
        %1703 = vmatpush2.bf16.msra.mxu0 0
        %1704 = vmatprep.subr.bf16.mxu0 0
        %1705 = vmatpush2.bf16.msra.mxu0 0
        %1706 = vmatprep.subr.bf16.mxu0 0
        %1707 = vmatpush2.bf16.msra.mxu0 0
        %1708 = vmatprep.subr.bf16.mxu0 0
        %1709 = vmatpush2.bf16.msra.mxu0 0
        %1710 = vmatprep.mubr.bf16.mxu0 0
        %1711 = vmatmul.mubr.bf16.gmra.mxu0 %v1676
        %v1712 = vpop.f32.mrf.mxu0
        %v1713 = vadd.f32 0.0, %v1712
        %v1714 = vpop.f32.mrf.mxu0
        %v1715 = vpop.f32.mrf.mxu0
        %v1716 = vadd.f32 0.0, %v1715
        %v1717 = vpop.f32.mrf.mxu0
        %1718 = vdwg.mxu0
        %v1719 = vadd.f32 %v1633, %v1713
        %v1720 = vadd.f32 %v1636, %v1716
        %v1721 = vld [vmem:[#allocation3 + $0x3] sm:$0xff]
        %v1722 = vld [vmem:[#allocation3 + $0xb] sm:$0xff]
        %v1723 = vpack.c.bf16 %v1722, %v1721
        %s1724 = scalar_lea.vmem %s11, 96
        %v1725 = vld [vmem:[%s1724] sm:$0xf]
        %v1726 = vld [vmem:[%s1724 + $0x4] sm:$0xf]
        %v1727 = vld [vmem:[%s1724 + $0x8] sm:$0xf]
        %v1728 = vld [vmem:[%s1724 + $0xc] sm:$0xf]
        %v1729 = vld [vmem:[%s1724 + $0x10] sm:$0xf]
        %v1730 = vld [vmem:[%s1724 + $0x14] sm:$0xf]
        %v1731 = vld [vmem:[%s1724 + $0x18] sm:$0xf]
        %v1732 = vld [vmem:[%s1724 + $0x1c] sm:$0xf]
        %v1741 = vunpack.c.l.b16 %v1725
        %v1742 = vunpack.c.l.b16 %v1726
        %v1743 = vunpack.c.l.b16 %v1727
        %v1744 = vunpack.c.l.b16 %v1728
        %v1745 = vunpack.c.l.b16 %v1729
        %v1746 = vunpack.c.l.b16 %v1730
        %v1747 = vunpack.c.l.b16 %v1731
        %v1748 = vunpack.c.l.b16 %v1732
        %v1749 = vpack.c.b16 %v1742, %v1741
        %v1750 = vpack.c.b16 %v1744, %v1743
        %v1751 = vpack.c.b16 %v1746, %v1745
        %v1752 = vpack.c.b16 %v1748, %v1747
        %v1758 = vsel %vm1329, %v1723, 0
        %1760 = vmatprep.subr.bf16.mxu0 0
        %1761 = vmatpush1.bf16.msra.mxu0 0
        %1762 = vmatprep.subr.bf16.mxu0 0
        %1763 = vmatpush1.bf16.msra.mxu0 0
        %1764 = vmatprep.subr.bf16.mxu0 0
        %1765 = vmatpush1.bf16.msra.mxu0 0
        %1766 = vmatprep.subr.bf16.mxu0 0
        %1767 = vmatpush1.bf16.msra.mxu0 0
        %1768 = vmatprep.subr.bf16.mxu0 0
        %1769 = vmatpush1.bf16.msra.mxu0 %v1752
        %1770 = vmatprep.subr.bf16.mxu0 0
        %1771 = vmatpush1.bf16.msra.mxu0 %v1751
        %1772 = vmatprep.subr.bf16.mxu0 0
        %1773 = vmatpush1.bf16.msra.mxu0 %v1750
        %1774 = vmatprep.subr.bf16.mxu0 0
        %1775 = vmatpush1.bf16.msra.mxu0 %v1749
        %1776 = vmatprep.subr.bf16.mxu0 0
        %1777 = vmatpush2.bf16.msra.mxu0 0
        %1778 = vmatprep.subr.bf16.mxu0 0
        %1779 = vmatpush2.bf16.msra.mxu0 0
        %1780 = vmatprep.subr.bf16.mxu0 0
        %1781 = vmatpush2.bf16.msra.mxu0 0
        %1782 = vmatprep.subr.bf16.mxu0 0
        %1783 = vmatpush2.bf16.msra.mxu0 0
        %1784 = vmatprep.subr.bf16.mxu0 0
        %1785 = vmatpush2.bf16.msra.mxu0 0
        %1786 = vmatprep.subr.bf16.mxu0 0
        %1787 = vmatpush2.bf16.msra.mxu0 0
        %1788 = vmatprep.subr.bf16.mxu0 0
        %1789 = vmatpush2.bf16.msra.mxu0 0
        %1790 = vmatprep.subr.bf16.mxu0 0
        %1791 = vmatpush2.bf16.msra.mxu0 0
        %1792 = vmatprep.mubr.bf16.mxu0 0
        %1793 = vmatmul.mubr.bf16.gmra.mxu0 %v1758
        %v1794 = vpop.f32.mrf.mxu0
        %v1795 = vadd.f32 0.0, %v1794
        %v1796 = vpop.f32.mrf.mxu0
        %v1797 = vpop.f32.mrf.mxu0
        %v1798 = vadd.f32 0.0, %v1797
        %v1799 = vpop.f32.mrf.mxu0
        %1800 = vdwg.mxu0
        %v1801 = vadd.f32 %v1719, %v1795
        %v1802 = vadd.f32 %v1720, %v1798
        %v1803 = vld [vmem:[#allocation3 + $0x4] sm:$0xff]
        %v1804 = vld [vmem:[#allocation3 + $0xc] sm:$0xff]
        %v1805 = vpack.c.bf16 %v1804, %v1803
        %s1806 = scalar_lea.vmem %s11, 128
        %v1807 = vld [vmem:[%s1806] sm:$0xf]
        %v1808 = vld [vmem:[%s1806 + $0x4] sm:$0xf]
        %v1809 = vld [vmem:[%s1806 + $0x8] sm:$0xf]
        %v1810 = vld [vmem:[%s1806 + $0xc] sm:$0xf]
        %v1811 = vld [vmem:[%s1806 + $0x10] sm:$0xf]
        %v1812 = vld [vmem:[%s1806 + $0x14] sm:$0xf]
        %v1813 = vld [vmem:[%s1806 + $0x18] sm:$0xf]
        %v1814 = vld [vmem:[%s1806 + $0x1c] sm:$0xf]
        %v1823 = vunpack.c.l.b16 %v1807
        %v1824 = vunpack.c.l.b16 %v1808
        %v1825 = vunpack.c.l.b16 %v1809
        %v1826 = vunpack.c.l.b16 %v1810
        %v1827 = vunpack.c.l.b16 %v1811
        %v1828 = vunpack.c.l.b16 %v1812
        %v1829 = vunpack.c.l.b16 %v1813
        %v1830 = vunpack.c.l.b16 %v1814
        %v1831 = vpack.c.b16 %v1824, %v1823
        %v1832 = vpack.c.b16 %v1826, %v1825
        %v1833 = vpack.c.b16 %v1828, %v1827
        %v1834 = vpack.c.b16 %v1830, %v1829
        %v1840 = vsel %vm1329, %v1805, 0
        %1842 = vmatprep.subr.bf16.mxu0 0
        %1843 = vmatpush1.bf16.msra.mxu0 0
        %1844 = vmatprep.subr.bf16.mxu0 0
        %1845 = vmatpush1.bf16.msra.mxu0 0
        %1846 = vmatprep.subr.bf16.mxu0 0
        %1847 = vmatpush1.bf16.msra.mxu0 0
        %1848 = vmatprep.subr.bf16.mxu0 0
        %1849 = vmatpush1.bf16.msra.mxu0 0
        %1850 = vmatprep.subr.bf16.mxu0 0
        %1851 = vmatpush1.bf16.msra.mxu0 %v1834
        %1852 = vmatprep.subr.bf16.mxu0 0
        %1853 = vmatpush1.bf16.msra.mxu0 %v1833
        %1854 = vmatprep.subr.bf16.mxu0 0
        %1855 = vmatpush1.bf16.msra.mxu0 %v1832
        %1856 = vmatprep.subr.bf16.mxu0 0
        %1857 = vmatpush1.bf16.msra.mxu0 %v1831
        %1858 = vmatprep.subr.bf16.mxu0 0
        %1859 = vmatpush2.bf16.msra.mxu0 0
        %1860 = vmatprep.subr.bf16.mxu0 0
        %1861 = vmatpush2.bf16.msra.mxu0 0
        %1862 = vmatprep.subr.bf16.mxu0 0
        %1863 = vmatpush2.bf16.msra.mxu0 0
        %1864 = vmatprep.subr.bf16.mxu0 0
        %1865 = vmatpush2.bf16.msra.mxu0 0
        %1866 = vmatprep.subr.bf16.mxu0 0
        %1867 = vmatpush2.bf16.msra.mxu0 0
        %1868 = vmatprep.subr.bf16.mxu0 0
        %1869 = vmatpush2.bf16.msra.mxu0 0
        %1870 = vmatprep.subr.bf16.mxu0 0
        %1871 = vmatpush2.bf16.msra.mxu0 0
        %1872 = vmatprep.subr.bf16.mxu0 0
        %1873 = vmatpush2.bf16.msra.mxu0 0
        %1874 = vmatprep.mubr.bf16.mxu0 0
        %1875 = vmatmul.mubr.bf16.gmra.mxu0 %v1840
        %v1876 = vpop.f32.mrf.mxu0
        %v1877 = vadd.f32 0.0, %v1876
        %v1878 = vpop.f32.mrf.mxu0
        %v1879 = vpop.f32.mrf.mxu0
        %v1880 = vadd.f32 0.0, %v1879
        %v1881 = vpop.f32.mrf.mxu0
        %1882 = vdwg.mxu0
        %v1883 = vadd.f32 %v1801, %v1877
        %v1884 = vadd.f32 %v1802, %v1880
        %v1885 = vld [vmem:[#allocation3 + $0x5] sm:$0xff]
        %v1886 = vld [vmem:[#allocation3 + $0xd] sm:$0xff]
        %v1887 = vpack.c.bf16 %v1886, %v1885
        %s1888 = scalar_lea.vmem %s11, 160
        %v1889 = vld [vmem:[%s1888] sm:$0xf]
        %v1890 = vld [vmem:[%s1888 + $0x4] sm:$0xf]
        %v1891 = vld [vmem:[%s1888 + $0x8] sm:$0xf]
        %v1892 = vld [vmem:[%s1888 + $0xc] sm:$0xf]
        %v1893 = vld [vmem:[%s1888 + $0x10] sm:$0xf]
        %v1894 = vld [vmem:[%s1888 + $0x14] sm:$0xf]
        %v1895 = vld [vmem:[%s1888 + $0x18] sm:$0xf]
        %v1896 = vld [vmem:[%s1888 + $0x1c] sm:$0xf]
        %v1905 = vunpack.c.l.b16 %v1889
        %v1906 = vunpack.c.l.b16 %v1890
        %v1907 = vunpack.c.l.b16 %v1891
        %v1908 = vunpack.c.l.b16 %v1892
        %v1909 = vunpack.c.l.b16 %v1893
        %v1910 = vunpack.c.l.b16 %v1894
        %v1911 = vunpack.c.l.b16 %v1895
        %v1912 = vunpack.c.l.b16 %v1896
        %v1913 = vpack.c.b16 %v1906, %v1905
        %v1914 = vpack.c.b16 %v1908, %v1907
        %v1915 = vpack.c.b16 %v1910, %v1909
        %v1916 = vpack.c.b16 %v1912, %v1911
        %v1922 = vsel %vm1329, %v1887, 0
        %1924 = vmatprep.subr.bf16.mxu0 0
        %1925 = vmatpush1.bf16.msra.mxu0 0
        %1926 = vmatprep.subr.bf16.mxu0 0
        %1927 = vmatpush1.bf16.msra.mxu0 0
        %1928 = vmatprep.subr.bf16.mxu0 0
        %1929 = vmatpush1.bf16.msra.mxu0 0
        %1930 = vmatprep.subr.bf16.mxu0 0
        %1931 = vmatpush1.bf16.msra.mxu0 0
        %1932 = vmatprep.subr.bf16.mxu0 0
        %1933 = vmatpush1.bf16.msra.mxu0 %v1916
        %1934 = vmatprep.subr.bf16.mxu0 0
        %1935 = vmatpush1.bf16.msra.mxu0 %v1915
        %1936 = vmatprep.subr.bf16.mxu0 0
        %1937 = vmatpush1.bf16.msra.mxu0 %v1914
        %1938 = vmatprep.subr.bf16.mxu0 0
        %1939 = vmatpush1.bf16.msra.mxu0 %v1913
        %1940 = vmatprep.subr.bf16.mxu0 0
        %1941 = vmatpush2.bf16.msra.mxu0 0
        %1942 = vmatprep.subr.bf16.mxu0 0
        %1943 = vmatpush2.bf16.msra.mxu0 0
        %1944 = vmatprep.subr.bf16.mxu0 0
        %1945 = vmatpush2.bf16.msra.mxu0 0
        %1946 = vmatprep.subr.bf16.mxu0 0
        %1947 = vmatpush2.bf16.msra.mxu0 0
        %1948 = vmatprep.subr.bf16.mxu0 0
        %1949 = vmatpush2.bf16.msra.mxu0 0
        %1950 = vmatprep.subr.bf16.mxu0 0
        %1951 = vmatpush2.bf16.msra.mxu0 0
        %1952 = vmatprep.subr.bf16.mxu0 0
        %1953 = vmatpush2.bf16.msra.mxu0 0
        %1954 = vmatprep.subr.bf16.mxu0 0
        %1955 = vmatpush2.bf16.msra.mxu0 0
        %1956 = vmatprep.mubr.bf16.mxu0 0
        %1957 = vmatmul.mubr.bf16.gmra.mxu0 %v1922
        %v1958 = vpop.f32.mrf.mxu0
        %v1959 = vadd.f32 0.0, %v1958
        %v1960 = vpop.f32.mrf.mxu0
        %v1961 = vpop.f32.mrf.mxu0
        %v1962 = vadd.f32 0.0, %v1961
        %v1963 = vpop.f32.mrf.mxu0
        %1964 = vdwg.mxu0
        %v1965 = vadd.f32 %v1883, %v1959
        %v1966 = vadd.f32 %v1884, %v1962
        %v1967 = vld [vmem:[#allocation3 + $0x6] sm:$0xff]
        %v1968 = vld [vmem:[#allocation3 + $0xe] sm:$0xff]
        %v1969 = vpack.c.bf16 %v1968, %v1967
        %s1970 = scalar_lea.vmem %s11, 192
        %v1971 = vld [vmem:[%s1970] sm:$0xf]
        %v1972 = vld [vmem:[%s1970 + $0x4] sm:$0xf]
        %v1973 = vld [vmem:[%s1970 + $0x8] sm:$0xf]
        %v1974 = vld [vmem:[%s1970 + $0xc] sm:$0xf]
        %v1975 = vld [vmem:[%s1970 + $0x10] sm:$0xf]
        %v1976 = vld [vmem:[%s1970 + $0x14] sm:$0xf]
        %v1977 = vld [vmem:[%s1970 + $0x18] sm:$0xf]
        %v1978 = vld [vmem:[%s1970 + $0x1c] sm:$0xf]
        %v1987 = vunpack.c.l.b16 %v1971
        %v1988 = vunpack.c.l.b16 %v1972
        %v1989 = vunpack.c.l.b16 %v1973
        %v1990 = vunpack.c.l.b16 %v1974
        %v1991 = vunpack.c.l.b16 %v1975
        %v1992 = vunpack.c.l.b16 %v1976
        %v1993 = vunpack.c.l.b16 %v1977
        %v1994 = vunpack.c.l.b16 %v1978
        %v1995 = vpack.c.b16 %v1988, %v1987
        %v1996 = vpack.c.b16 %v1990, %v1989
        %v1997 = vpack.c.b16 %v1992, %v1991
        %v1998 = vpack.c.b16 %v1994, %v1993
        %v2004 = vsel %vm1329, %v1969, 0
        %2006 = vmatprep.subr.bf16.mxu0 0
        %2007 = vmatpush1.bf16.msra.mxu0 0
        %2008 = vmatprep.subr.bf16.mxu0 0
        %2009 = vmatpush1.bf16.msra.mxu0 0
        %2010 = vmatprep.subr.bf16.mxu0 0
        %2011 = vmatpush1.bf16.msra.mxu0 0
        %2012 = vmatprep.subr.bf16.mxu0 0
        %2013 = vmatpush1.bf16.msra.mxu0 0
        %2014 = vmatprep.subr.bf16.mxu0 0
        %2015 = vmatpush1.bf16.msra.mxu0 %v1998
        %2016 = vmatprep.subr.bf16.mxu0 0
        %2017 = vmatpush1.bf16.msra.mxu0 %v1997
        %2018 = vmatprep.subr.bf16.mxu0 0
        %2019 = vmatpush1.bf16.msra.mxu0 %v1996
        %2020 = vmatprep.subr.bf16.mxu0 0
        %2021 = vmatpush1.bf16.msra.mxu0 %v1995
        %2022 = vmatprep.subr.bf16.mxu0 0
        %2023 = vmatpush2.bf16.msra.mxu0 0
        %2024 = vmatprep.subr.bf16.mxu0 0
        %2025 = vmatpush2.bf16.msra.mxu0 0
        %2026 = vmatprep.subr.bf16.mxu0 0
        %2027 = vmatpush2.bf16.msra.mxu0 0
        %2028 = vmatprep.subr.bf16.mxu0 0
        %2029 = vmatpush2.bf16.msra.mxu0 0
        %2030 = vmatprep.subr.bf16.mxu0 0
        %2031 = vmatpush2.bf16.msra.mxu0 0
        %2032 = vmatprep.subr.bf16.mxu0 0
        %2033 = vmatpush2.bf16.msra.mxu0 0
        %2034 = vmatprep.subr.bf16.mxu0 0
        %2035 = vmatpush2.bf16.msra.mxu0 0
        %2036 = vmatprep.subr.bf16.mxu0 0
        %2037 = vmatpush2.bf16.msra.mxu0 0
        %2038 = vmatprep.mubr.bf16.mxu0 0
        %2039 = vmatmul.mubr.bf16.gmra.mxu0 %v2004
        %v2040 = vpop.f32.mrf.mxu0
        %v2041 = vadd.f32 0.0, %v2040
        %v2042 = vpop.f32.mrf.mxu0
        %v2043 = vpop.f32.mrf.mxu0
        %v2044 = vadd.f32 0.0, %v2043
        %v2045 = vpop.f32.mrf.mxu0
        %2046 = vdwg.mxu0
        %v2047 = vadd.f32 %v1965, %v2041
        %v2048 = vadd.f32 %v1966, %v2044
        %v2049 = vld [vmem:[#allocation3 + $0x7] sm:$0xff]
        %v2050 = vld [vmem:[#allocation3 + $0xf] sm:$0xff]
        %v2051 = vpack.c.bf16 %v2050, %v2049
        %s2052 = scalar_lea.vmem %s11, 224
        %v2053 = vld [vmem:[%s2052] sm:$0xf]
        %v2054 = vld [vmem:[%s2052 + $0x4] sm:$0xf]
        %v2055 = vld [vmem:[%s2052 + $0x8] sm:$0xf]
        %v2056 = vld [vmem:[%s2052 + $0xc] sm:$0xf]
        %v2057 = vld [vmem:[%s2052 + $0x10] sm:$0xf]
        %v2058 = vld [vmem:[%s2052 + $0x14] sm:$0xf]
        %v2059 = vld [vmem:[%s2052 + $0x18] sm:$0xf]
        %v2060 = vld [vmem:[%s2052 + $0x1c] sm:$0xf]
        %v2069 = vunpack.c.l.b16 %v2053
        %v2070 = vunpack.c.l.b16 %v2054
        %v2071 = vunpack.c.l.b16 %v2055
        %v2072 = vunpack.c.l.b16 %v2056
        %v2073 = vunpack.c.l.b16 %v2057
        %v2074 = vunpack.c.l.b16 %v2058
        %v2075 = vunpack.c.l.b16 %v2059
        %v2076 = vunpack.c.l.b16 %v2060
        %v2077 = vpack.c.b16 %v2070, %v2069
        %v2078 = vpack.c.b16 %v2072, %v2071
        %v2079 = vpack.c.b16 %v2074, %v2073
        %v2080 = vpack.c.b16 %v2076, %v2075
        %v2086 = vsel %vm1329, %v2051, 0
        %2088 = vmatprep.subr.bf16.mxu0 0
        %2089 = vmatpush1.bf16.msra.mxu0 0
        %2090 = vmatprep.subr.bf16.mxu0 0
        %2091 = vmatpush1.bf16.msra.mxu0 0
        %2092 = vmatprep.subr.bf16.mxu0 0
        %2093 = vmatpush1.bf16.msra.mxu0 0
        %2094 = vmatprep.subr.bf16.mxu0 0
        %2095 = vmatpush1.bf16.msra.mxu0 0
        %2096 = vmatprep.subr.bf16.mxu0 0
        %2097 = vmatpush1.bf16.msra.mxu0 %v2080
        %2098 = vmatprep.subr.bf16.mxu0 0
        %2099 = vmatpush1.bf16.msra.mxu0 %v2079
        %2100 = vmatprep.subr.bf16.mxu0 0
        %2101 = vmatpush1.bf16.msra.mxu0 %v2078
        %2102 = vmatprep.subr.bf16.mxu0 0
        %2103 = vmatpush1.bf16.msra.mxu0 %v2077
        %2104 = vmatprep.subr.bf16.mxu0 0
        %2105 = vmatpush2.bf16.msra.mxu0 0
        %2106 = vmatprep.subr.bf16.mxu0 0
        %2107 = vmatpush2.bf16.msra.mxu0 0
        %2108 = vmatprep.subr.bf16.mxu0 0
        %2109 = vmatpush2.bf16.msra.mxu0 0
        %2110 = vmatprep.subr.bf16.mxu0 0
        %2111 = vmatpush2.bf16.msra.mxu0 0
        %2112 = vmatprep.subr.bf16.mxu0 0
        %2113 = vmatpush2.bf16.msra.mxu0 0
        %2114 = vmatprep.subr.bf16.mxu0 0
        %2115 = vmatpush2.bf16.msra.mxu0 0
        %2116 = vmatprep.subr.bf16.mxu0 0
        %2117 = vmatpush2.bf16.msra.mxu0 0
        %2118 = vmatprep.subr.bf16.mxu0 0
        %2119 = vmatpush2.bf16.msra.mxu0 0
        %2120 = vmatprep.mubr.bf16.mxu0 0
        %2121 = vmatmul.mubr.bf16.gmra.mxu0 %v2086
        %v2122 = vpop.f32.mrf.mxu0
        %v2123 = vadd.f32 0.0, %v2122
        %v2124 = vpop.f32.mrf.mxu0
        %v2125 = vpop.f32.mrf.mxu0
        %v2126 = vadd.f32 0.0, %v2125
        %v2127 = vpop.f32.mrf.mxu0
        %2128 = vdwg.mxu0
        %v2129 = vadd.f32 %v2047, %v2123
        %v2130 = vadd.f32 %v2048, %v2126
        %v2131 = vld [vmem:[#allocation3 + $0x8] sm:$0xff]
        %v2132 = vld [vmem:[#allocation3 + $0x10] sm:$0xff]
        %v2133 = vpack.c.bf16 %v2132, %v2131
        %s2134 = scalar_lea.vmem %s11, 256
        %v2135 = vld [vmem:[%s2134] sm:$0xf]
        %v2136 = vld [vmem:[%s2134 + $0x4] sm:$0xf]
        %v2137 = vld [vmem:[%s2134 + $0x8] sm:$0xf]
        %v2138 = vld [vmem:[%s2134 + $0xc] sm:$0xf]
        %v2139 = vld [vmem:[%s2134 + $0x10] sm:$0xf]
        %v2140 = vld [vmem:[%s2134 + $0x14] sm:$0xf]
        %v2141 = vld [vmem:[%s2134 + $0x18] sm:$0xf]
        %v2142 = vld [vmem:[%s2134 + $0x1c] sm:$0xf]
        %v2151 = vunpack.c.l.b16 %v2135
        %v2152 = vunpack.c.l.b16 %v2136
        %v2153 = vunpack.c.l.b16 %v2137
        %v2154 = vunpack.c.l.b16 %v2138
        %v2155 = vunpack.c.l.b16 %v2139
        %v2156 = vunpack.c.l.b16 %v2140
        %v2157 = vunpack.c.l.b16 %v2141
        %v2158 = vunpack.c.l.b16 %v2142
        %v2159 = vpack.c.b16 %v2152, %v2151
        %v2160 = vpack.c.b16 %v2154, %v2153
        %v2161 = vpack.c.b16 %v2156, %v2155
        %v2162 = vpack.c.b16 %v2158, %v2157
        %v2168 = vsel %vm1329, %v2133, 0
        %2170 = vmatprep.subr.bf16.mxu0 0
        %2171 = vmatpush1.bf16.msra.mxu0 0
        %2172 = vmatprep.subr.bf16.mxu0 0
        %2173 = vmatpush1.bf16.msra.mxu0 0
        %2174 = vmatprep.subr.bf16.mxu0 0
        %2175 = vmatpush1.bf16.msra.mxu0 0
        %2176 = vmatprep.subr.bf16.mxu0 0
        %2177 = vmatpush1.bf16.msra.mxu0 0
        %2178 = vmatprep.subr.bf16.mxu0 0
        %2179 = vmatpush1.bf16.msra.mxu0 %v2162
        %2180 = vmatprep.subr.bf16.mxu0 0
        %2181 = vmatpush1.bf16.msra.mxu0 %v2161
        %2182 = vmatprep.subr.bf16.mxu0 0
        %2183 = vmatpush1.bf16.msra.mxu0 %v2160
        %2184 = vmatprep.subr.bf16.mxu0 0
        %2185 = vmatpush1.bf16.msra.mxu0 %v2159
        %2186 = vmatprep.subr.bf16.mxu0 0
        %2187 = vmatpush2.bf16.msra.mxu0 0
        %2188 = vmatprep.subr.bf16.mxu0 0
        %2189 = vmatpush2.bf16.msra.mxu0 0
        %2190 = vmatprep.subr.bf16.mxu0 0
        %2191 = vmatpush2.bf16.msra.mxu0 0
        %2192 = vmatprep.subr.bf16.mxu0 0
        %2193 = vmatpush2.bf16.msra.mxu0 0
        %2194 = vmatprep.subr.bf16.mxu0 0
        %2195 = vmatpush2.bf16.msra.mxu0 0
        %2196 = vmatprep.subr.bf16.mxu0 0
        %2197 = vmatpush2.bf16.msra.mxu0 0
        %2198 = vmatprep.subr.bf16.mxu0 0
        %2199 = vmatpush2.bf16.msra.mxu0 0
        %2200 = vmatprep.subr.bf16.mxu0 0
        %2201 = vmatpush2.bf16.msra.mxu0 0
        %2202 = vmatprep.mubr.bf16.mxu0 0
        %2203 = vmatmul.mubr.bf16.gmra.mxu0 %v2168
        %v2204 = vpop.f32.mrf.mxu0
        %v2205 = vadd.f32 0.0, %v2204
        %v2206 = vpop.f32.mrf.mxu0
        %v2207 = vpop.f32.mrf.mxu0
        %v2208 = vadd.f32 0.0, %v2207
        %v2209 = vpop.f32.mrf.mxu0
        %2210 = vdwg.mxu0
        %v2211 = vadd.f32 %v2129, %v2205
        %v2212 = vadd.f32 %v2130, %v2208
        %v2213 = vld [vmem:[%s12] sm:$0x1]
        %v2215 = vlaneseq
        %v2216 = vshrl.u32 %v2215, 7
        %v2217 = vsub.s32 0, %v2216
        %v2218 = vrot.slane %v2213, %v2217
        %v2220 = vadd.f32 %v2211, %v2218
        %v2221 = vadd.f32 %v2212, %v2218
        %vm2222 = vcmp.ge.f32.partialorder %v2220, 0.0
        %vm2223 = vcmp.ge.f32.partialorder %v2221, 0.0
        %v2224 = vmul.f32 %v2220, 0.01
        %v2225 = vmul.f32 %v2221, 0.01
        %v2226 = vsel %vm2222, %v2220, %v2224
        %v2227 = vsel %vm2223, %v2221, %v2225
        %v2228 = vadd.f32 %v2226, %v672
        %v2229 = vadd.f32 %v2227, %v675
        %v2230 = vld [vmem:[%s13] sm:$0x1]
        %v2232 = vlaneseq
        %v2233 = vshrl.u32 %v2232, 7
        %v2234 = vsub.s32 0, %v2233
        %v2235 = vrot.slane %v2230, %v2234
        %v2237 = vmul.f32 %v2228, %v2235
        %v2238 = vmul.f32 %v2229, %v2235
        %v2239 = vld [vmem:[%s14] sm:$0x1]
        %v2241 = vlaneseq
        %v2242 = vshrl.u32 %v2241, 7
        %v2243 = vsub.s32 0, %v2242
        %v2244 = vrot.slane %v2239, %v2243
        %v2246 = vadd.f32 %v2237, %v2244
        %v2247 = vadd.f32 %v2238, %v2244
        %vm2248 = vcmp.ge.f32.partialorder %v2246, 0.0
        %vm2249 = vcmp.ge.f32.partialorder %v2247, 0.0
        %v2250 = vmul.f32 %v2246, 0.01
        %v2251 = vmul.f32 %v2247, 0.01
        %v2252 = vsel %vm2248, %v2246, %v2250
        %v2253 = vsel %vm2249, %v2247, %v2251
        %2254 = vst [vmem:[%s588] sm:$0xff] %v2252
        %2255 = vst [vmem:[%s588 + $0x8] sm:$0xff] %v2253
        %p2256 = scmp.lt.s32.totalorder %s30, 3
        %s2257 = scalar_select %p2256, %s30, 3
        %s2258 = smul.addr %s2257, 2
        %s2259 = smul.addr %s2258, 8
        %s2260 = scalar_lea.vmem %s15, %s2259
        // Predicated region
        $region109: #{_lambda_.3} parent=79 // pred_check
          %p2261 = pneg %p368
        $region110: #{_lambda_.3} parent=79 // pred_check_branch
          %2263 = sbr.rel (%p2261) target = $region112
        $region111: #{_lambda_.3} parent=79 // pred_region
          _
        $region112: #{_lambda_.3} parent=79 // pred_fallthru
          _
      $region80: #{_lambda_.3} parent=5 // pred_fallthru
        _
      %p2264 = scmp.le.s32.totalorder 2, %s25
      // Predicated region
      $region113: #{_lambda_.3} parent=5 // pred_check
        %p2265 = pneg %p2264
      $region114: #{_lambda_.3} parent=5 // pred_check_branch
        %2267 = sbr.rel (%p2265) target = $region116
      $region115: #{_lambda_.3} parent=5 // pred_region
        %s2268 = ssub.s32 %s25, 2
        // Predicated region
        $region117: #{_lambda_.3} parent=115 // pred_check
          %p2269 = pneg %p374
        $region118: #{_lambda_.3} parent=115 // pred_check_branch
          %2271 = sbr.rel (%p2269) target = $region120
        $region119: #{_lambda_.3} parent=115 // pred_region
          %p2272 = scmp.lt.s32.totalorder %s31, 3
          %s2273 = scalar_select %p2272, %s31, 3
          %s2274 = smul.addr %s2273, 2
          %s2275 = smul.addr %s2274, 8
          %s2276 = scalar_lea.vmem %s15, %s2275
        $region120: #{_lambda_.3} parent=115 // pred_fallthru
          _
      $region116: #{_lambda_.3} parent=5 // pred_fallthru
        _
    $region6: #{_lambda_.3} parent=1 // loop_footer
      %s29 = sadd.s32 1, %s25
    $region7: #{_lambda_.3} parent=1 // loop_footer_branch
      %24 = sbr.rel target = $region3
    $region8: #{_lambda_.3} parent=1 // loop_exit
      _
    %2277 = vsyncpa [#allocation5], 1
    %s2278 = scalar_lea.sflag [#allocation5], 1
    %2279 = vsyncpa %s2278, 1
    %2280 = vsyncpa [#allocation7], 1
    %2281 = vsyncpa [#allocation10], 1
    %2282 = vsyncpa [#allocation13], 1

// kernel: _lambda_.4
$region0: #{_lambda_.4}
  #allocation0 [shape = 'u32[]', space=smem, size = 0x4, offset = 0x4, fixed_abs, tag = 'smem constant byte address 0x4 - core index']
  #allocation1 [shape = 'u32[144,128]{1,0:T(1,128)}', space=vmem, size = 0x12000, scoped, tag = 'internal scratch']
  #allocation2 [shape = 'f32[24,128]{1,0:T(8,128)}', space=vmem, size = 0x3000, scoped, tag = 'scratch operand']
  #allocation3 [shape = 'f32[24,128]{1,0:T(8,128)}', space=vmem, size = 0x3000, scoped, tag = 'scratch operand']
  %s0 = inlined_call_operand.vmem [shape: f32[4,16,128], index: 0, kind: input, shape index: {}]
  %s1 = inlined_call_operand.vmem [shape: bf16[128,256], index: 1, kind: input, shape index: {}]
  %s2 = inlined_call_operand.vmem [shape: bf16[9,128,128], index: 2, kind: input, shape index: {}]
  %s3 = inlined_call_operand.vmem [shape: f32[1,128], index: 3, kind: input, shape index: {}]
  %s4 = inlined_call_operand.vmem [shape: f32[1,128], index: 4, kind: input, shape index: {}]
  %s5 = inlined_call_operand.hbm [shape: bf16[128,128], index: 5, kind: input, shape index: {}]
  %s6 = inlined_call_operand.hbm [shape: bf16[128,128], index: 6, kind: input, shape index: {}]
  %s7 = inlined_call_operand.vmem [shape: f32[1,128], index: 7, kind: input, shape index: {}]
  %s8 = inlined_call_operand.vmem [shape: f32[1,128], index: 8, kind: input, shape index: {}]
  %s9 = inlined_call_operand.hbm [shape: bf16[9,128,256], index: 9, kind: input, shape index: {}]
  %s10 = inlined_call_operand.vmem [shape: f32[1,256], index: 10, kind: input, shape index: {}]
  %s11 = inlined_call_operand.vmem [shape: f32[1,256], index: 11, kind: input, shape index: {}]
  %s12 = inlined_call_operand.vmem [shape: f32[1,256], index: 12, kind: input, shape index: {}]
  %s13 = inlined_call_operand.vmem [shape: f32[4,16,256], index: 13, kind: output, shape index: {}]
  %s14 = sld [smem:[#allocation0]]
  $region97: #{_lambda_.4} parent=0
    _
  %s16 = ssub.s32 1, %s14
  %s17 = scalar_select 0, %s16, %s14
  $region1: #{_lambda_.4} parent=0
    #allocation4 [shape = 'u8[32768]{0}', space=vmem, size = 0x8000, scoped, tag = 'input window, operand 5, single buffered']
    #allocation5 [shape = 's32[2]{0}', space=sflag, size = 0x8, scoped, tag = 'scoped memory for _lambda_.4']
    #allocation6 [shape = 'u8[32768]{0}', space=vmem, size = 0x8000, scoped, tag = 'input window, operand 6, single buffered']
    #allocation7 [shape = 's32[1]{0}', space=sflag, size = 0x4, scoped, tag = 'scoped memory for _lambda_.4']
    #allocation8 [shape = 'u8[589824]{0}', space=vmem, size = 0x90000, scoped, tag = 'input window, operand 9, single buffered']
    %18 = vsyncpa [#allocation5], 0
    %19 = vsyncpa [#allocation7], 0
    loop: start=0, step=1, limit=6
    $region2: #{_lambda_.4} parent=1 // loop_pre_header
      _
    $region3: #{_lambda_.4} parent=1 // loop_header
      %s21 = sphi 0, %s25
      %p22 = scmp.ge.s32.totalorder %s21, 6
      %s31 = sphi 0, %s33
      %s34 = sphi 0, %s31
      %s35 = sphi 0, %s34
      %s51 = sphi 0, %s35
      %s55 = sphi 0, %s55
      %s57 = sphi 0, %s55
      %s58 = sphi 0, %s57
      %s72 = sphi 0, %s58
      %s76 = sphi 0, %s76
      %s78 = sphi 0, %s76
      %s79 = sphi 0, %s78
      %s93 = sphi 0, %s79
      %s97 = sphi 0, %s97
      %s99 = sphi 0, %s97
      %s100 = sphi 0, %s99
      %s114 = sphi 0, %s100
      %s118 = sphi 0, %s118
      %s120 = sphi 0, %s118
      %s121 = sphi 0, %s120
      %s135 = sphi 0, %s121
      %s139 = sphi 0, %s139
      %s141 = sphi 0, %s139
      %s142 = sphi 0, %s141
      %s156 = sphi 0, %s142
      %s160 = sphi 0, %s160
      %s162 = sphi 0, %s160
      %s163 = sphi 0, %s162
      %s177 = sphi 0, %s163
      %s181 = sphi 0, %s181
      %s183 = sphi 0, %s181
      %s184 = sphi 0, %s183
      %s198 = sphi 0, %s184
      %s202 = sphi 0, %s202
      %s204 = sphi 0, %s202
      %s205 = sphi 0, %s204
      %s219 = sphi 0, %s205
      %s223 = sphi 0, %s223
      %s225 = sphi 0, %s223
      %s226 = sphi 0, %s225
      %s240 = sphi 0, %s226
      %s244 = sphi 0, %s244
      %s246 = sphi 0, %s244
      %s247 = sphi 0, %s246
      %s261 = sphi 0, %s247
      %s265 = sphi 0, %s265
      %s267 = sphi 0, %s265
      %s268 = sphi 0, %s267
      %s282 = sphi 0, %s268
      %s286 = sphi 0, %s286
      %s288 = sphi 0, %s286
      %s289 = sphi 0, %s288
      %s303 = sphi 0, %s289
      %s309 = sphi 0, %s311
      %s312 = sphi 0, %s309
      %s313 = sphi 0, %s312
      %s329 = sphi 0, %s313
    $region4: #{_lambda_.4} parent=1 // loop_header_branch
      %24 = sbr.rel (%p22) target = $region8
    $region5: #{_lambda_.4} parent=1 // loop_body
      %s26 = ssub.s32 %s21, 1
      %s27 = ssub.s32 %s21, 2
      %s28 = sadd.s32 %s21, 1
      %s29 = ssub.s32 %s21, %s28
      %p30 = scmp.eq.s32.totalorder %s29, 0
      %s32 = sadd.s32 %s31, 1
      %s33 = scalar_select %p30, %s31, %s32
      %p36 = pneg %p30
      %p37 = scmp.eq.s32.totalorder %s21, 3
      %p38 = por %p36, %p37
      %p39 = scmp.ne.s32.totalorder %s31, %s34
      %p40 = scmp.eq.s32.totalorder %s21, 0
      %p41 = por %p39, %p40
      %p42 = scmp.ne.s32.totalorder %s31, %s34
      %p43 = scmp.eq.s32.totalorder %s26, 3
      %p44 = por %p42, %p43
      %p45 = scmp.ne.s32.totalorder %s34, %s35
      %p46 = scmp.eq.s32.totalorder %s26, 0
      %p47 = por %p45, %p46
      %p48 = scmp.ne.s32.totalorder %s34, %s35
      %p49 = scmp.eq.s32.totalorder %s27, 3
      %p50 = por %p48, %p49
      %p52 = scmp.ne.s32.totalorder %s35, %s51
      %p53 = scmp.eq.s32.totalorder %s27, 0
      %p54 = por %p52, %p53
      %s56 = sadd.s32 %s55, 1
      %p59 = scmp.eq.s32.totalorder %s21, 3
      %p60 = scmp.ne.s32.totalorder %s55, %s57
      %p61 = scmp.eq.s32.totalorder %s21, 0
      %p62 = por %p60, %p61
      %p63 = scmp.ne.s32.totalorder %s55, %s57
      %p64 = scmp.eq.s32.totalorder %s26, 3
      %p65 = por %p63, %p64
      %p66 = scmp.ne.s32.totalorder %s57, %s58
      %p67 = scmp.eq.s32.totalorder %s26, 0
      %p68 = por %p66, %p67
      %p69 = scmp.ne.s32.totalorder %s57, %s58
      %p70 = scmp.eq.s32.totalorder %s27, 3
      %p71 = por %p69, %p70
      %p73 = scmp.ne.s32.totalorder %s58, %s72
      %p74 = scmp.eq.s32.totalorder %s27, 0
      %p75 = por %p73, %p74
      %s77 = sadd.s32 %s76, 1
      %p80 = scmp.eq.s32.totalorder %s21, 3
      %p81 = scmp.ne.s32.totalorder %s76, %s78
      %p82 = scmp.eq.s32.totalorder %s21, 0
      %p83 = por %p81, %p82
      %p84 = scmp.ne.s32.totalorder %s76, %s78
      %p85 = scmp.eq.s32.totalorder %s26, 3
      %p86 = por %p84, %p85
      %p87 = scmp.ne.s32.totalorder %s78, %s79
      %p88 = scmp.eq.s32.totalorder %s26, 0
      %p89 = por %p87, %p88
      %p90 = scmp.ne.s32.totalorder %s78, %s79
      %p91 = scmp.eq.s32.totalorder %s27, 3
      %p92 = por %p90, %p91
      %p94 = scmp.ne.s32.totalorder %s79, %s93
      %p95 = scmp.eq.s32.totalorder %s27, 0
      %p96 = por %p94, %p95
      %s98 = sadd.s32 %s97, 1
      %p101 = scmp.eq.s32.totalorder %s21, 3
      %p102 = scmp.ne.s32.totalorder %s97, %s99
      %p103 = scmp.eq.s32.totalorder %s21, 0
      %p104 = por %p102, %p103
      %p105 = scmp.ne.s32.totalorder %s97, %s99
      %p106 = scmp.eq.s32.totalorder %s26, 3
      %p107 = por %p105, %p106
      %p108 = scmp.ne.s32.totalorder %s99, %s100
      %p109 = scmp.eq.s32.totalorder %s26, 0
      %p110 = por %p108, %p109
      %p111 = scmp.ne.s32.totalorder %s99, %s100
      %p112 = scmp.eq.s32.totalorder %s27, 3
      %p113 = por %p111, %p112
      %p115 = scmp.ne.s32.totalorder %s100, %s114
      %p116 = scmp.eq.s32.totalorder %s27, 0
      %p117 = por %p115, %p116
      %s119 = sadd.s32 %s118, 1
      %p122 = scmp.eq.s32.totalorder %s21, 3
      %p123 = scmp.ne.s32.totalorder %s118, %s120
      %p124 = scmp.eq.s32.totalorder %s21, 0
      %p125 = por %p123, %p124
      %p126 = scmp.ne.s32.totalorder %s118, %s120
      %p127 = scmp.eq.s32.totalorder %s26, 3
      %p128 = por %p126, %p127
      %p129 = scmp.ne.s32.totalorder %s120, %s121
      %p130 = scmp.eq.s32.totalorder %s26, 0
      %p131 = por %p129, %p130
      %p132 = scmp.ne.s32.totalorder %s120, %s121
      %p133 = scmp.eq.s32.totalorder %s27, 3
      %p134 = por %p132, %p133
      %p136 = scmp.ne.s32.totalorder %s121, %s135
      %p137 = scmp.eq.s32.totalorder %s27, 0
      %p138 = por %p136, %p137
      %s140 = sadd.s32 %s139, 1
      %p143 = scmp.eq.s32.totalorder %s21, 3
      %p144 = scmp.ne.s32.totalorder %s139, %s141
      %p145 = scmp.eq.s32.totalorder %s21, 0
      %p146 = por %p144, %p145
      %p147 = scmp.ne.s32.totalorder %s139, %s141
      %p148 = scmp.eq.s32.totalorder %s26, 3
      %p149 = por %p147, %p148
      %p150 = scmp.ne.s32.totalorder %s141, %s142
      %p151 = scmp.eq.s32.totalorder %s26, 0
      %p152 = por %p150, %p151
      %p153 = scmp.ne.s32.totalorder %s141, %s142
      %p154 = scmp.eq.s32.totalorder %s27, 3
      %p155 = por %p153, %p154
      %p157 = scmp.ne.s32.totalorder %s142, %s156
      %p158 = scmp.eq.s32.totalorder %s27, 0
      %p159 = por %p157, %p158
      %s161 = sadd.s32 %s160, 1
      %p164 = scmp.eq.s32.totalorder %s21, 3
      %p165 = scmp.ne.s32.totalorder %s160, %s162
      %p166 = scmp.eq.s32.totalorder %s21, 0
      %p167 = por %p165, %p166
      %p168 = scmp.ne.s32.totalorder %s160, %s162
      %p169 = scmp.eq.s32.totalorder %s26, 3
      %p170 = por %p168, %p169
      %p171 = scmp.ne.s32.totalorder %s162, %s163
      %p172 = scmp.eq.s32.totalorder %s26, 0
      %p173 = por %p171, %p172
      %p174 = scmp.ne.s32.totalorder %s162, %s163
      %p175 = scmp.eq.s32.totalorder %s27, 3
      %p176 = por %p174, %p175
      %p178 = scmp.ne.s32.totalorder %s163, %s177
      %p179 = scmp.eq.s32.totalorder %s27, 0
      %p180 = por %p178, %p179
      %s182 = sadd.s32 %s181, 1
      %p185 = scmp.eq.s32.totalorder %s21, 3
      %p186 = scmp.ne.s32.totalorder %s181, %s183
      %p187 = scmp.eq.s32.totalorder %s21, 0
      %p188 = por %p186, %p187
      %p189 = scmp.ne.s32.totalorder %s181, %s183
      %p190 = scmp.eq.s32.totalorder %s26, 3
      %p191 = por %p189, %p190
      %p192 = scmp.ne.s32.totalorder %s183, %s184
      %p193 = scmp.eq.s32.totalorder %s26, 0
      %p194 = por %p192, %p193
      %p195 = scmp.ne.s32.totalorder %s183, %s184
      %p196 = scmp.eq.s32.totalorder %s27, 3
      %p197 = por %p195, %p196
      %p199 = scmp.ne.s32.totalorder %s184, %s198
      %p200 = scmp.eq.s32.totalorder %s27, 0
      %p201 = por %p199, %p200
      %s203 = sadd.s32 %s202, 1
      %p206 = scmp.eq.s32.totalorder %s21, 3
      %p207 = scmp.ne.s32.totalorder %s202, %s204
      %p208 = scmp.eq.s32.totalorder %s21, 0
      %p209 = por %p207, %p208
      %p210 = scmp.ne.s32.totalorder %s202, %s204
      %p211 = scmp.eq.s32.totalorder %s26, 3
      %p212 = por %p210, %p211
      %p213 = scmp.ne.s32.totalorder %s204, %s205
      %p214 = scmp.eq.s32.totalorder %s26, 0
      %p215 = por %p213, %p214
      %p216 = scmp.ne.s32.totalorder %s204, %s205
      %p217 = scmp.eq.s32.totalorder %s27, 3
      %p218 = por %p216, %p217
      %p220 = scmp.ne.s32.totalorder %s205, %s219
      %p221 = scmp.eq.s32.totalorder %s27, 0
      %p222 = por %p220, %p221
      %s224 = sadd.s32 %s223, 1
      %p227 = scmp.eq.s32.totalorder %s21, 3
      %p228 = scmp.ne.s32.totalorder %s223, %s225
      %p229 = scmp.eq.s32.totalorder %s21, 0
      %p230 = por %p228, %p229
      %p231 = scmp.ne.s32.totalorder %s223, %s225
      %p232 = scmp.eq.s32.totalorder %s26, 3
      %p233 = por %p231, %p232
      %p234 = scmp.ne.s32.totalorder %s225, %s226
      %p235 = scmp.eq.s32.totalorder %s26, 0
      %p236 = por %p234, %p235
      %p237 = scmp.ne.s32.totalorder %s225, %s226
      %p238 = scmp.eq.s32.totalorder %s27, 3
      %p239 = por %p237, %p238
      %p241 = scmp.ne.s32.totalorder %s226, %s240
      %p242 = scmp.eq.s32.totalorder %s27, 0
      %p243 = por %p241, %p242
      %s245 = sadd.s32 %s244, 1
      %p248 = scmp.eq.s32.totalorder %s21, 3
      %p249 = scmp.ne.s32.totalorder %s244, %s246
      %p250 = scmp.eq.s32.totalorder %s21, 0
      %p251 = por %p249, %p250
      %p252 = scmp.ne.s32.totalorder %s244, %s246
      %p253 = scmp.eq.s32.totalorder %s26, 3
      %p254 = por %p252, %p253
      %p255 = scmp.ne.s32.totalorder %s246, %s247
      %p256 = scmp.eq.s32.totalorder %s26, 0
      %p257 = por %p255, %p256
      %p258 = scmp.ne.s32.totalorder %s246, %s247
      %p259 = scmp.eq.s32.totalorder %s27, 3
      %p260 = por %p258, %p259
      %p262 = scmp.ne.s32.totalorder %s247, %s261
      %p263 = scmp.eq.s32.totalorder %s27, 0
      %p264 = por %p262, %p263
      %s266 = sadd.s32 %s265, 1
      %p269 = scmp.eq.s32.totalorder %s21, 3
      %p270 = scmp.ne.s32.totalorder %s265, %s267
      %p271 = scmp.eq.s32.totalorder %s21, 0
      %p272 = por %p270, %p271
      %p273 = scmp.ne.s32.totalorder %s265, %s267
      %p274 = scmp.eq.s32.totalorder %s26, 3
      %p275 = por %p273, %p274
      %p276 = scmp.ne.s32.totalorder %s267, %s268
      %p277 = scmp.eq.s32.totalorder %s26, 0
      %p278 = por %p276, %p277
      %p279 = scmp.ne.s32.totalorder %s267, %s268
      %p280 = scmp.eq.s32.totalorder %s27, 3
      %p281 = por %p279, %p280
      %p283 = scmp.ne.s32.totalorder %s268, %s282
      %p284 = scmp.eq.s32.totalorder %s27, 0
      %p285 = por %p283, %p284
      %s287 = sadd.s32 %s286, 1
      %p290 = scmp.eq.s32.totalorder %s21, 3
      %p291 = scmp.ne.s32.totalorder %s286, %s288
      %p292 = scmp.eq.s32.totalorder %s21, 0
      %p293 = por %p291, %p292
      %p294 = scmp.ne.s32.totalorder %s286, %s288
      %p295 = scmp.eq.s32.totalorder %s26, 3
      %p296 = por %p294, %p295
      %p297 = scmp.ne.s32.totalorder %s288, %s289
      %p298 = scmp.eq.s32.totalorder %s26, 0
      %p299 = por %p297, %p298
      %p300 = scmp.ne.s32.totalorder %s288, %s289
      %p301 = scmp.eq.s32.totalorder %s27, 3
      %p302 = por %p300, %p301
      %p304 = scmp.ne.s32.totalorder %s289, %s303
      %p305 = scmp.eq.s32.totalorder %s27, 0
      %p306 = por %p304, %p305
      %s307 = ssub.s32 %s21, %s28
      %p308 = scmp.eq.s32.totalorder %s307, 0
      %s310 = sadd.s32 %s309, 1
      %s311 = scalar_select %p308, %s309, %s310
      %p314 = pneg %p308
      %p315 = scmp.eq.s32.totalorder %s21, 3
      %p316 = por %p314, %p315
      %p317 = scmp.ne.s32.totalorder %s309, %s312
      %p318 = scmp.eq.s32.totalorder %s21, 0
      %p319 = por %p317, %p318
      %p320 = scmp.ne.s32.totalorder %s309, %s312
      %p321 = scmp.eq.s32.totalorder %s26, 3
      %p322 = por %p320, %p321
      %p323 = scmp.ne.s32.totalorder %s312, %s313
      %p324 = scmp.eq.s32.totalorder %s26, 0
      %p325 = por %p323, %p324
      %p326 = scmp.ne.s32.totalorder %s312, %s313
      %p327 = scmp.eq.s32.totalorder %s27, 3
      %p328 = por %p326, %p327
      %p330 = scmp.ne.s32.totalorder %s313, %s329
      %p331 = scmp.eq.s32.totalorder %s27, 0
      %p332 = por %p330, %p331
      %p333 = scmp.le.s32.totalorder 1, %s21
      %p334 = scmp.lt.s32.totalorder %s21, 5
      %p335 = pnand %p333, %p334
      %p336 = pneg %p335
      // Predicated region
      $region9: #{_lambda_.4} parent=5 // pred_check
        _
      $region10: #{_lambda_.4} parent=5 // pred_check_branch
        %338 = sbr.rel (%p335) target = $region12
      $region11: #{_lambda_.4} parent=5 // pred_region
        %s339 = ssub.s32 %s21, 1
        // Predicated region
        $region13: #{_lambda_.4} parent=11 // pred_check
          %p340 = pneg %p68
        $region14: #{_lambda_.4} parent=11 // pred_check_branch
          %342 = sbr.rel (%p340) target = $region16
        $region15: #{_lambda_.4} parent=11 // pred_region
          _
        $region16: #{_lambda_.4} parent=11 // pred_fallthru
          _
        // Predicated region
        $region17: #{_lambda_.4} parent=11 // pred_check
          %p343 = pneg %p89
        $region18: #{_lambda_.4} parent=11 // pred_check_branch
          %345 = sbr.rel (%p343) target = $region20
        $region19: #{_lambda_.4} parent=11 // pred_region
          _
        $region20: #{_lambda_.4} parent=11 // pred_fallthru
          _
        // Predicated region
        $region21: #{_lambda_.4} parent=11 // pred_check
          %p346 = pneg %p110
        $region22: #{_lambda_.4} parent=11 // pred_check_branch
          %348 = sbr.rel (%p346) target = $region24
        $region23: #{_lambda_.4} parent=11 // pred_region
          _
        $region24: #{_lambda_.4} parent=11 // pred_fallthru
          _
        // Predicated region
        $region25: #{_lambda_.4} parent=11 // pred_check
          %p349 = pneg %p131
        $region26: #{_lambda_.4} parent=11 // pred_check_branch
          %351 = sbr.rel (%p349) target = $region28
        $region27: #{_lambda_.4} parent=11 // pred_region
          _
        $region28: #{_lambda_.4} parent=11 // pred_fallthru
          _
        // Predicated region
        $region29: #{_lambda_.4} parent=11 // pred_check
          %p352 = pneg %p152
        $region30: #{_lambda_.4} parent=11 // pred_check_branch
          %354 = sbr.rel (%p352) target = $region32
        $region31: #{_lambda_.4} parent=11 // pred_region
          %s356 = ssub.s32 1024, 1024
          %357 = vsyncadd [#allocation5], %s356
          %s358 = sshll.u32 [#allocation4], 4
          %s359 = int_to_ptr.vmem [resolvable:$true] %s358
          %364 = dma.hbm_to_vmem [thread:$0]  %s5, 1024, %s359, [#allocation5], 64, 64, 4
        $region32: #{_lambda_.4} parent=11 // pred_fallthru
          _
        // Predicated region
        $region33: #{_lambda_.4} parent=11 // pred_check
          %p365 = pneg %p173
        $region34: #{_lambda_.4} parent=11 // pred_check_branch
          %367 = sbr.rel (%p365) target = $region36
        $region35: #{_lambda_.4} parent=11 // pred_region
          %s369 = ssub.s32 1024, 1024
          %370 = vsyncadd [#allocation7], %s369
          %s371 = sshll.u32 [#allocation6], 4
          %s372 = int_to_ptr.vmem [resolvable:$true] %s371
          %377 = dma.hbm_to_vmem [thread:$0]  %s6, 1024, %s372, [#allocation7], 64, 64, 4
        $region36: #{_lambda_.4} parent=11 // pred_fallthru
          _
        // Predicated region
        $region37: #{_lambda_.4} parent=11 // pred_check
          %p378 = pneg %p194
        $region38: #{_lambda_.4} parent=11 // pred_check_branch
          %380 = sbr.rel (%p378) target = $region40
        $region39: #{_lambda_.4} parent=11 // pred_region
          _
        $region40: #{_lambda_.4} parent=11 // pred_fallthru
          _
        // Predicated region
        $region41: #{_lambda_.4} parent=11 // pred_check
          %p381 = pneg %p215
        $region42: #{_lambda_.4} parent=11 // pred_check_branch
          %383 = sbr.rel (%p381) target = $region44
        $region43: #{_lambda_.4} parent=11 // pred_region
          _
        $region44: #{_lambda_.4} parent=11 // pred_fallthru
          _
        // Predicated region
        $region45: #{_lambda_.4} parent=11 // pred_check
          %p384 = pneg %p236
        $region46: #{_lambda_.4} parent=11 // pred_check_branch
          %386 = sbr.rel (%p384) target = $region48
        $region47: #{_lambda_.4} parent=11 // pred_region
          %s388 = ssub.s32 18432, 18432
          %389 = vsyncadd [#allocation7], %s388
          %s390 = sshll.u32 [#allocation8], 4
          %s391 = int_to_ptr.vmem [resolvable:$true] %s390
          %396 = dma.hbm_to_vmem [thread:$0]  %s9, 18432, %s391, [#allocation7], 128, 128, 8
        $region48: #{_lambda_.4} parent=11 // pred_fallthru
          _
        // Predicated region
        $region49: #{_lambda_.4} parent=11 // pred_check
          %p397 = pneg %p257
        $region50: #{_lambda_.4} parent=11 // pred_check_branch
          %399 = sbr.rel (%p397) target = $region52
        $region51: #{_lambda_.4} parent=11 // pred_region
          _
        $region52: #{_lambda_.4} parent=11 // pred_fallthru
          _
        // Predicated region
        $region53: #{_lambda_.4} parent=11 // pred_check
          %p400 = pneg %p278
        $region54: #{_lambda_.4} parent=11 // pred_check_branch
          %402 = sbr.rel (%p400) target = $region56
        $region55: #{_lambda_.4} parent=11 // pred_region
          _
        $region56: #{_lambda_.4} parent=11 // pred_fallthru
          _
        // Predicated region
        $region57: #{_lambda_.4} parent=11 // pred_check
          %p403 = pneg %p299
        $region58: #{_lambda_.4} parent=11 // pred_check_branch
          %405 = sbr.rel (%p403) target = $region60
        $region59: #{_lambda_.4} parent=11 // pred_region
          _
        $region60: #{_lambda_.4} parent=11 // pred_fallthru
          _
      $region12: #{_lambda_.4} parent=5 // pred_fallthru
        _
      %p406 = scmp.lt.s32.totalorder %s21, 4
      // Predicated region
      $region61: #{_lambda_.4} parent=5 // pred_check
        %p407 = pneg %p406
      $region62: #{_lambda_.4} parent=5 // pred_check_branch
        %409 = sbr.rel (%p407) target = $region64
      $region63: #{_lambda_.4} parent=5 // pred_region
        // Predicated region
        $region65: #{_lambda_.4} parent=63 // pred_check
          %p410 = pneg %p41
        $region66: #{_lambda_.4} parent=63 // pred_check_branch
          %412 = sbr.rel (%p410) target = $region68
        $region67: #{_lambda_.4} parent=63 // pred_region
          %p413 = scmp.lt.s32.totalorder %s21, 3
          %s414 = scalar_select %p413, %s21, 3
          %s415 = smul.addr %s414, 2
          %s416 = smul.addr %s415, 8
          %s417 = scalar_lea.vmem %s0, %s416
        $region68: #{_lambda_.4} parent=63 // pred_fallthru
          _
      $region64: #{_lambda_.4} parent=5 // pred_fallthru
        _
      %p418 = scmp.le.s32.totalorder 1, %s21
      %p419 = scmp.lt.s32.totalorder %s21, 5
      %p420 = pnand %p418, %p419
      %p421 = pneg %p420
      // Predicated region
      $region69: #{_lambda_.4} parent=5 // pred_check
        _
      $region70: #{_lambda_.4} parent=5 // pred_check_branch
        %423 = sbr.rel (%p420) target = $region72
      $region71: #{_lambda_.4} parent=5 // pred_region
        %s424 = ssub.s32 %s21, 1
        // Predicated region
        $region73: #{_lambda_.4} parent=71 // pred_check
          %p425 = pneg %p152
        $region74: #{_lambda_.4} parent=71 // pred_check_branch
          %427 = sbr.rel (%p425) target = $region76
        $region75: #{_lambda_.4} parent=71 // pred_region
          %428 = dma.done [#allocation5], 1024
        $region76: #{_lambda_.4} parent=71 // pred_fallthru
          _
        // Predicated region
        $region77: #{_lambda_.4} parent=71 // pred_check
          %p429 = pneg %p173
        $region78: #{_lambda_.4} parent=71 // pred_check_branch
          %431 = sbr.rel (%p429) target = $region80
        $region79: #{_lambda_.4} parent=71 // pred_region
          %432 = dma.done [#allocation7], 1024
        $region80: #{_lambda_.4} parent=71 // pred_fallthru
          _
        // Predicated region
        $region81: #{_lambda_.4} parent=71 // pred_check
          %p433 = pneg %p236
        $region82: #{_lambda_.4} parent=71 // pred_check_branch
          %435 = sbr.rel (%p433) target = $region84
        $region83: #{_lambda_.4} parent=71 // pred_region
          %436 = dma.done [#allocation7], 18432
        $region84: #{_lambda_.4} parent=71 // pred_fallthru
          _
        %p437 = scmp.lt.s32.totalorder %s26, 3
        %s438 = scalar_select %p437, %s26, 3
        %s439 = smul.addr %s438, 2
        %s440 = smul.addr %s439, 8
        %s441 = scalar_lea.vmem %s0, %s440
        %p442 = pneg %p47
        %p443 = pneg %p44
        %p444 = pneg %p68
        %p445 = pneg %p65
        %p446 = pneg %p89
        %p447 = pneg %p86
        %p448 = pneg %p110
        %p449 = pneg %p107
        %p450 = pneg %p131
        %p451 = pneg %p128
        %p452 = pneg %p152
        %p453 = pneg %p149
        %p454 = pneg %p173
        %p455 = pneg %p170
        %p456 = pneg %p194
        %p457 = pneg %p191
        %p458 = pneg %p215
        %p459 = pneg %p212
        %p460 = pneg %p236
        %p461 = pneg %p233
        %p462 = pneg %p257
        %p463 = pneg %p254
        %p464 = pneg %p278
        %p465 = pneg %p275
        %p466 = pneg %p299
        %p467 = pneg %p296
        %p468 = pneg %p325
        %p469 = pneg %p322
        %p470 = scmp.lt.s32.totalorder %s26, 3
        %s471 = scalar_select %p470, %s26, 3
        %s472 = smul.addr %s471, 4
        %s473 = smul.addr %s472, 8
        %s474 = scalar_lea.vmem %s13, %s473
        %p475 = scmp.lt.s32.totalorder %s26, 3
        %s476 = scalar_select %p475, %s26, 3
        %s477 = smul.addr %s476, 2
        %s478 = smul.addr %s477, 8
        %s479 = scalar_lea.vmem %s0, %s478
        %p480 = scmp.lt.s32.totalorder %s26, 3
        %s481 = scalar_select %p480, %s26, 3
        %s482 = smul.addr %s481, 4
        %s483 = smul.addr %s482, 8
        %s484 = scalar_lea.vmem %s13, %s483
        %v486 = vld [vmem:[%s479] sm:$0xff]
        %v487 = vld [vmem:[%s479 + $0x8] sm:$0xff]
        %v488 = vpack.c.bf16 %v487, %v486
        %v489 = vld [vmem:[%s1] sm:$0xff]
        %v490 = vld [vmem:[%s1 + $0x8] sm:$0xff]
        %v491 = vld [vmem:[%s1 + $0x10] sm:$0xff]
        %v492 = vld [vmem:[%s1 + $0x18] sm:$0xff]
        %v493 = vld [vmem:[%s1 + $0x20] sm:$0xff]
        %v494 = vld [vmem:[%s1 + $0x28] sm:$0xff]
        %v495 = vld [vmem:[%s1 + $0x30] sm:$0xff]
        %v496 = vld [vmem:[%s1 + $0x38] sm:$0xff]
        %v497 = vld [vmem:[%s1 + $0x40] sm:$0xff]
        %v498 = vld [vmem:[%s1 + $0x48] sm:$0xff]
        %v499 = vld [vmem:[%s1 + $0x50] sm:$0xff]
        %v500 = vld [vmem:[%s1 + $0x58] sm:$0xff]
        %v501 = vld [vmem:[%s1 + $0x60] sm:$0xff]
        %v502 = vld [vmem:[%s1 + $0x68] sm:$0xff]
        %v503 = vld [vmem:[%s1 + $0x70] sm:$0xff]
        %v504 = vld [vmem:[%s1 + $0x78] sm:$0xff]
        %v521 = vunpack.c.l.b16 %v489
        %v522 = vunpack.c.h.b16 %v489
        %v523 = vunpack.c.l.b16 %v490
        %v524 = vunpack.c.h.b16 %v490
        %v525 = vunpack.c.l.b16 %v491
        %v526 = vunpack.c.h.b16 %v491
        %v527 = vunpack.c.l.b16 %v492
        %v528 = vunpack.c.h.b16 %v492
        %v529 = vunpack.c.l.b16 %v493
        %v530 = vunpack.c.h.b16 %v493
        %v531 = vunpack.c.l.b16 %v494
        %v532 = vunpack.c.h.b16 %v494
        %v533 = vunpack.c.l.b16 %v495
        %v534 = vunpack.c.h.b16 %v495
        %v535 = vunpack.c.l.b16 %v496
        %v536 = vunpack.c.h.b16 %v496
        %v537 = vunpack.c.l.b16 %v497
        %v538 = vunpack.c.h.b16 %v497
        %v539 = vunpack.c.l.b16 %v498
        %v540 = vunpack.c.h.b16 %v498
        %v541 = vunpack.c.l.b16 %v499
        %v542 = vunpack.c.h.b16 %v499
        %v543 = vunpack.c.l.b16 %v500
        %v544 = vunpack.c.h.b16 %v500
        %v545 = vunpack.c.l.b16 %v501
        %v546 = vunpack.c.h.b16 %v501
        %v547 = vunpack.c.l.b16 %v502
        %v548 = vunpack.c.h.b16 %v502
        %v549 = vunpack.c.l.b16 %v503
        %v550 = vunpack.c.h.b16 %v503
        %v551 = vunpack.c.l.b16 %v504
        %v552 = vunpack.c.h.b16 %v504
        %v553 = vpack.c.b16 %v523, %v521
        %v554 = vpack.c.b16 %v524, %v522
        %v555 = vpack.c.b16 %v527, %v525
        %v556 = vpack.c.b16 %v528, %v526
        %v557 = vpack.c.b16 %v531, %v529
        %v558 = vpack.c.b16 %v532, %v530
        %v559 = vpack.c.b16 %v535, %v533
        %v560 = vpack.c.b16 %v536, %v534
        %v561 = vpack.c.b16 %v539, %v537
        %v562 = vpack.c.b16 %v540, %v538
        %v563 = vpack.c.b16 %v543, %v541
        %v564 = vpack.c.b16 %v544, %v542
        %v565 = vpack.c.b16 %v547, %v545
        %v566 = vpack.c.b16 %v548, %v546
        %v567 = vpack.c.b16 %v551, %v549
        %v568 = vpack.c.b16 %v552, %v550
        %585 = vmatprep.subr.bf16.mxu0 %v568
        %586 = vmatpush1.bf16.msra.mxu0 %v567
        %587 = vmatprep.subr.bf16.mxu0 %v566
        %588 = vmatpush1.bf16.msra.mxu0 %v565
        %589 = vmatprep.subr.bf16.mxu0 %v564
        %590 = vmatpush1.bf16.msra.mxu0 %v563
        %591 = vmatprep.subr.bf16.mxu0 %v562
        %592 = vmatpush1.bf16.msra.mxu0 %v561
        %593 = vmatprep.subr.bf16.mxu0 %v560
        %594 = vmatpush1.bf16.msra.mxu0 %v559
        %595 = vmatprep.subr.bf16.mxu0 %v558
        %596 = vmatpush1.bf16.msra.mxu0 %v557
        %597 = vmatprep.subr.bf16.mxu0 %v556
        %598 = vmatpush1.bf16.msra.mxu0 %v555
        %599 = vmatprep.subr.bf16.mxu0 %v554
        %600 = vmatpush1.bf16.msra.mxu0 %v553
        %601 = vmatprep.subr.bf16.mxu0 0
        %602 = vmatpush2.bf16.msra.mxu0 0
        %603 = vmatprep.subr.bf16.mxu0 0
        %604 = vmatpush2.bf16.msra.mxu0 0
        %605 = vmatprep.subr.bf16.mxu0 0
        %606 = vmatpush2.bf16.msra.mxu0 0
        %607 = vmatprep.subr.bf16.mxu0 0
        %608 = vmatpush2.bf16.msra.mxu0 0
        %609 = vmatprep.subr.bf16.mxu0 0
        %610 = vmatpush2.bf16.msra.mxu0 0
        %611 = vmatprep.subr.bf16.mxu0 0
        %612 = vmatpush2.bf16.msra.mxu0 0
        %613 = vmatprep.subr.bf16.mxu0 0
        %614 = vmatpush2.bf16.msra.mxu0 0
        %615 = vmatprep.subr.bf16.mxu0 0
        %616 = vmatpush2.bf16.msra.mxu0 0
        %617 = vmatprep.mubr.bf16.mxu0 0
        %618 = vmatmul.mubr.bf16.gmra.mxu0 %v488
        %v619 = vpop.f32.mrf.mxu0
        %v620 = vadd.f32 0.0, %v619
        %v621 = vpop.f32.mrf.mxu0
        %v622 = vadd.f32 0.0, %v621
        %v623 = vpop.f32.mrf.mxu0
        %v624 = vadd.f32 0.0, %v623
        %v625 = vpop.f32.mrf.mxu0
        %v626 = vadd.f32 0.0, %v625
        %627 = vdwg.mxu0
        %628 = vst [vmem:[#allocation2] sm:$0xff] 0.0
        %629 = vst [vmem:[#allocation2 + $0x8] sm:$0xff] 0.0
        %630 = vst [vmem:[#allocation2 + $0x10] sm:$0xff] 0.0
        %631 = vst [vmem:[#allocation2 + $0x4] sm:$0xff] %v486
        %632 = vst [vmem:[#allocation2 + $0xc] sm:$0xff] %v487
        %v633 = vld [vmem:[#allocation2] sm:$0xff]
        %v634 = vld [vmem:[#allocation2 + $0x8] sm:$0xff]
        %v635 = vpack.c.bf16 %v634, %v633
        %v636 = vld [vmem:[%s2] sm:$0xf]
        %v637 = vld [vmem:[%s2 + $0x4] sm:$0xf]
        %v638 = vld [vmem:[%s2 + $0x8] sm:$0xf]
        %v639 = vld [vmem:[%s2 + $0xc] sm:$0xf]
        %v640 = vld [vmem:[%s2 + $0x10] sm:$0xf]
        %v641 = vld [vmem:[%s2 + $0x14] sm:$0xf]
        %v642 = vld [vmem:[%s2 + $0x18] sm:$0xf]
        %v643 = vld [vmem:[%s2 + $0x1c] sm:$0xf]
        %v644 = vld [vmem:[%s2 + $0x20] sm:$0xf]
        %v645 = vld [vmem:[%s2 + $0x24] sm:$0xf]
        %v646 = vld [vmem:[%s2 + $0x28] sm:$0xf]
        %v647 = vld [vmem:[%s2 + $0x2c] sm:$0xf]
        %v648 = vld [vmem:[%s2 + $0x30] sm:$0xf]
        %v649 = vld [vmem:[%s2 + $0x34] sm:$0xf]
        %v650 = vld [vmem:[%s2 + $0x38] sm:$0xf]
        %v651 = vld [vmem:[%s2 + $0x3c] sm:$0xf]
        %v652 = vld [vmem:[#allocation2 + $0x1] sm:$0xff]
        %v653 = vld [vmem:[#allocation2 + $0x9] sm:$0xff]
        %v654 = vpack.c.bf16 %v653, %v652
        %s655 = scalar_lea.vmem %s2, 64
        %v656 = vld [vmem:[%s655] sm:$0xf]
        %v657 = vld [vmem:[%s655 + $0x4] sm:$0xf]
        %v658 = vld [vmem:[%s655 + $0x8] sm:$0xf]
        %v659 = vld [vmem:[%s655 + $0xc] sm:$0xf]
        %v660 = vld [vmem:[%s655 + $0x10] sm:$0xf]
        %v661 = vld [vmem:[%s655 + $0x14] sm:$0xf]
        %v662 = vld [vmem:[%s655 + $0x18] sm:$0xf]
        %v663 = vld [vmem:[%s655 + $0x1c] sm:$0xf]
        %v664 = vld [vmem:[%s655 + $0x20] sm:$0xf]
        %v665 = vld [vmem:[%s655 + $0x24] sm:$0xf]
        %v666 = vld [vmem:[%s655 + $0x28] sm:$0xf]
        %v667 = vld [vmem:[%s655 + $0x2c] sm:$0xf]
        %v668 = vld [vmem:[%s655 + $0x30] sm:$0xf]
        %v669 = vld [vmem:[%s655 + $0x34] sm:$0xf]
        %v670 = vld [vmem:[%s655 + $0x38] sm:$0xf]
        %v671 = vld [vmem:[%s655 + $0x3c] sm:$0xf]
        %v688 = vunpack.c.l.b16 %v656
        %v689 = vunpack.c.l.b16 %v657
        %v690 = vunpack.c.l.b16 %v658
        %v691 = vunpack.c.l.b16 %v659
        %v692 = vunpack.c.l.b16 %v660
        %v693 = vunpack.c.l.b16 %v661
        %v694 = vunpack.c.l.b16 %v662
        %v695 = vunpack.c.l.b16 %v663
        %v696 = vunpack.c.l.b16 %v664
        %v697 = vunpack.c.l.b16 %v665
        %v698 = vunpack.c.l.b16 %v666
        %v699 = vunpack.c.l.b16 %v667
        %v700 = vunpack.c.l.b16 %v668
        %v701 = vunpack.c.l.b16 %v669
        %v702 = vunpack.c.l.b16 %v670
        %v703 = vunpack.c.l.b16 %v671
        %v704 = vpack.c.b16 %v689, %v688
        %v705 = vpack.c.b16 %v691, %v690
        %v706 = vpack.c.b16 %v693, %v692
        %v707 = vpack.c.b16 %v695, %v694
        %v708 = vpack.c.b16 %v697, %v696
        %v709 = vpack.c.b16 %v699, %v698
        %v710 = vpack.c.b16 %v701, %v700
        %v711 = vpack.c.b16 %v703, %v702
        %720 = vmatprep.subr.bf16.mxu0 0
        %721 = vmatpush1.bf16.msra.mxu0 %v711
        %722 = vmatprep.subr.bf16.mxu0 0
        %723 = vmatpush1.bf16.msra.mxu0 %v710
        %724 = vmatprep.subr.bf16.mxu0 0
        %725 = vmatpush1.bf16.msra.mxu0 %v709
        %726 = vmatprep.subr.bf16.mxu0 0
        %727 = vmatpush1.bf16.msra.mxu0 %v708
        %728 = vmatprep.subr.bf16.mxu0 0
        %729 = vmatpush1.bf16.msra.mxu0 %v707
        %730 = vmatprep.subr.bf16.mxu0 0
        %731 = vmatpush1.bf16.msra.mxu0 %v706
        %732 = vmatprep.subr.bf16.mxu0 0
        %733 = vmatpush1.bf16.msra.mxu0 %v705
        %734 = vmatprep.subr.bf16.mxu0 0
        %735 = vmatpush1.bf16.msra.mxu0 %v704
        %736 = vmatprep.subr.bf16.mxu0 0
        %737 = vmatpush2.bf16.msra.mxu0 0
        %738 = vmatprep.subr.bf16.mxu0 0
        %739 = vmatpush2.bf16.msra.mxu0 0
        %740 = vmatprep.subr.bf16.mxu0 0
        %741 = vmatpush2.bf16.msra.mxu0 0
        %742 = vmatprep.subr.bf16.mxu0 0
        %743 = vmatpush2.bf16.msra.mxu0 0
        %744 = vmatprep.subr.bf16.mxu0 0
        %745 = vmatpush2.bf16.msra.mxu0 0
        %746 = vmatprep.subr.bf16.mxu0 0
        %747 = vmatpush2.bf16.msra.mxu0 0
        %748 = vmatprep.subr.bf16.mxu0 0
        %749 = vmatpush2.bf16.msra.mxu0 0
        %750 = vmatprep.subr.bf16.mxu0 0
        %751 = vmatpush2.bf16.msra.mxu0 0
        %752 = vmatprep.mubr.bf16.mxu0 0
        %753 = vmatmul.mubr.bf16.gmra.mxu0 %v654
        %v754 = vpop.f32.mrf.mxu0
        %v755 = vadd.f32 0.0, %v754
        %v756 = vpop.f32.mrf.mxu0
        %v757 = vpop.f32.mrf.mxu0
        %v758 = vadd.f32 0.0, %v757
        %v759 = vpop.f32.mrf.mxu0
        %760 = vdwg.mxu0
        %v777 = vunpack.c.l.b16 %v636
        %v778 = vunpack.c.l.b16 %v637
        %v779 = vunpack.c.l.b16 %v638
        %v780 = vunpack.c.l.b16 %v639
        %v781 = vunpack.c.l.b16 %v640
        %v782 = vunpack.c.l.b16 %v641
        %v783 = vunpack.c.l.b16 %v642
        %v784 = vunpack.c.l.b16 %v643
        %v785 = vunpack.c.l.b16 %v644
        %v786 = vunpack.c.l.b16 %v645
        %v787 = vunpack.c.l.b16 %v646
        %v788 = vunpack.c.l.b16 %v647
        %v789 = vunpack.c.l.b16 %v648
        %v790 = vunpack.c.l.b16 %v649
        %v791 = vunpack.c.l.b16 %v650
        %v792 = vunpack.c.l.b16 %v651
        %v793 = vpack.c.b16 %v778, %v777
        %v794 = vpack.c.b16 %v780, %v779
        %v795 = vpack.c.b16 %v782, %v781
        %v796 = vpack.c.b16 %v784, %v783
        %v797 = vpack.c.b16 %v786, %v785
        %v798 = vpack.c.b16 %v788, %v787
        %v799 = vpack.c.b16 %v790, %v789
        %v800 = vpack.c.b16 %v792, %v791
        %809 = vmatprep.subr.bf16.mxu0 0
        %810 = vmatpush1.bf16.msra.mxu0 %v800
        %811 = vmatprep.subr.bf16.mxu0 0
        %812 = vmatpush1.bf16.msra.mxu0 %v799
        %813 = vmatprep.subr.bf16.mxu0 0
        %814 = vmatpush1.bf16.msra.mxu0 %v798
        %815 = vmatprep.subr.bf16.mxu0 0
        %816 = vmatpush1.bf16.msra.mxu0 %v797
        %817 = vmatprep.subr.bf16.mxu0 0
        %818 = vmatpush1.bf16.msra.mxu0 %v796
        %819 = vmatprep.subr.bf16.mxu0 0
        %820 = vmatpush1.bf16.msra.mxu0 %v795
        %821 = vmatprep.subr.bf16.mxu0 0
        %822 = vmatpush1.bf16.msra.mxu0 %v794
        %823 = vmatprep.subr.bf16.mxu0 0
        %824 = vmatpush1.bf16.msra.mxu0 %v793
        %825 = vmatprep.subr.bf16.mxu0 0
        %826 = vmatpush2.bf16.msra.mxu0 0
        %827 = vmatprep.subr.bf16.mxu0 0
        %828 = vmatpush2.bf16.msra.mxu0 0
        %829 = vmatprep.subr.bf16.mxu0 0
        %830 = vmatpush2.bf16.msra.mxu0 0
        %831 = vmatprep.subr.bf16.mxu0 0
        %832 = vmatpush2.bf16.msra.mxu0 0
        %833 = vmatprep.subr.bf16.mxu0 0
        %834 = vmatpush2.bf16.msra.mxu0 0
        %835 = vmatprep.subr.bf16.mxu0 0
        %836 = vmatpush2.bf16.msra.mxu0 0
        %837 = vmatprep.subr.bf16.mxu0 0
        %838 = vmatpush2.bf16.msra.mxu0 0
        %839 = vmatprep.subr.bf16.mxu0 0
        %840 = vmatpush2.bf16.msra.mxu0 0
        %841 = vmatprep.mubr.bf16.mxu0 0
        %842 = vmatmul.mubr.bf16.gmra.mxu0 %v635
        %v843 = vpop.f32.mrf.mxu0
        %v844 = vadd.f32 %v755, %v843
        %v845 = vpop.f32.mrf.mxu0
        %v846 = vpop.f32.mrf.mxu0
        %v847 = vadd.f32 %v758, %v846
        %v848 = vpop.f32.mrf.mxu0
        %849 = vdwg.mxu0
        %v850 = vld [vmem:[#allocation2 + $0x2] sm:$0xff]
        %v851 = vld [vmem:[#allocation2 + $0xa] sm:$0xff]
        %v852 = vpack.c.bf16 %v851, %v850
        %s853 = scalar_lea.vmem %s2, 128
        %v854 = vld [vmem:[%s853] sm:$0xf]
        %v855 = vld [vmem:[%s853 + $0x4] sm:$0xf]
        %v856 = vld [vmem:[%s853 + $0x8] sm:$0xf]
        %v857 = vld [vmem:[%s853 + $0xc] sm:$0xf]
        %v858 = vld [vmem:[%s853 + $0x10] sm:$0xf]
        %v859 = vld [vmem:[%s853 + $0x14] sm:$0xf]
        %v860 = vld [vmem:[%s853 + $0x18] sm:$0xf]
        %v861 = vld [vmem:[%s853 + $0x1c] sm:$0xf]
        %v862 = vld [vmem:[%s853 + $0x20] sm:$0xf]
        %v863 = vld [vmem:[%s853 + $0x24] sm:$0xf]
        %v864 = vld [vmem:[%s853 + $0x28] sm:$0xf]
        %v865 = vld [vmem:[%s853 + $0x2c] sm:$0xf]
        %v866 = vld [vmem:[%s853 + $0x30] sm:$0xf]
        %v867 = vld [vmem:[%s853 + $0x34] sm:$0xf]
        %v868 = vld [vmem:[%s853 + $0x38] sm:$0xf]
        %v869 = vld [vmem:[%s853 + $0x3c] sm:$0xf]
        %v886 = vunpack.c.l.b16 %v854
        %v887 = vunpack.c.l.b16 %v855
        %v888 = vunpack.c.l.b16 %v856
        %v889 = vunpack.c.l.b16 %v857
        %v890 = vunpack.c.l.b16 %v858
        %v891 = vunpack.c.l.b16 %v859
        %v892 = vunpack.c.l.b16 %v860
        %v893 = vunpack.c.l.b16 %v861
        %v894 = vunpack.c.l.b16 %v862
        %v895 = vunpack.c.l.b16 %v863
        %v896 = vunpack.c.l.b16 %v864
        %v897 = vunpack.c.l.b16 %v865
        %v898 = vunpack.c.l.b16 %v866
        %v899 = vunpack.c.l.b16 %v867
        %v900 = vunpack.c.l.b16 %v868
        %v901 = vunpack.c.l.b16 %v869
        %v902 = vpack.c.b16 %v887, %v886
        %v903 = vpack.c.b16 %v889, %v888
        %v904 = vpack.c.b16 %v891, %v890
        %v905 = vpack.c.b16 %v893, %v892
        %v906 = vpack.c.b16 %v895, %v894
        %v907 = vpack.c.b16 %v897, %v896
        %v908 = vpack.c.b16 %v899, %v898
        %v909 = vpack.c.b16 %v901, %v900
        %918 = vmatprep.subr.bf16.mxu0 0
        %919 = vmatpush1.bf16.msra.mxu0 %v909
        %920 = vmatprep.subr.bf16.mxu0 0
        %921 = vmatpush1.bf16.msra.mxu0 %v908
        %922 = vmatprep.subr.bf16.mxu0 0
        %923 = vmatpush1.bf16.msra.mxu0 %v907
        %924 = vmatprep.subr.bf16.mxu0 0
        %925 = vmatpush1.bf16.msra.mxu0 %v906
        %926 = vmatprep.subr.bf16.mxu0 0
        %927 = vmatpush1.bf16.msra.mxu0 %v905
        %928 = vmatprep.subr.bf16.mxu0 0
        %929 = vmatpush1.bf16.msra.mxu0 %v904
        %930 = vmatprep.subr.bf16.mxu0 0
        %931 = vmatpush1.bf16.msra.mxu0 %v903
        %932 = vmatprep.subr.bf16.mxu0 0
        %933 = vmatpush1.bf16.msra.mxu0 %v902
        %934 = vmatprep.subr.bf16.mxu0 0
        %935 = vmatpush2.bf16.msra.mxu0 0
        %936 = vmatprep.subr.bf16.mxu0 0
        %937 = vmatpush2.bf16.msra.mxu0 0
        %938 = vmatprep.subr.bf16.mxu0 0
        %939 = vmatpush2.bf16.msra.mxu0 0
        %940 = vmatprep.subr.bf16.mxu0 0
        %941 = vmatpush2.bf16.msra.mxu0 0
        %942 = vmatprep.subr.bf16.mxu0 0
        %943 = vmatpush2.bf16.msra.mxu0 0
        %944 = vmatprep.subr.bf16.mxu0 0
        %945 = vmatpush2.bf16.msra.mxu0 0
        %946 = vmatprep.subr.bf16.mxu0 0
        %947 = vmatpush2.bf16.msra.mxu0 0
        %948 = vmatprep.subr.bf16.mxu0 0
        %949 = vmatpush2.bf16.msra.mxu0 0
        %950 = vmatprep.mubr.bf16.mxu0 0
        %951 = vmatmul.mubr.bf16.gmra.mxu0 %v852
        %v952 = vpop.f32.mrf.mxu0
        %v953 = vadd.f32 0.0, %v952
        %v954 = vpop.f32.mrf.mxu0
        %v955 = vpop.f32.mrf.mxu0
        %v956 = vadd.f32 0.0, %v955
        %v957 = vpop.f32.mrf.mxu0
        %958 = vdwg.mxu0
        %v959 = vadd.f32 %v844, %v953
        %v960 = vadd.f32 %v847, %v956
        %v961 = vld [vmem:[#allocation2 + $0x3] sm:$0xff]
        %v962 = vld [vmem:[#allocation2 + $0xb] sm:$0xff]
        %v963 = vpack.c.bf16 %v962, %v961
        %s964 = scalar_lea.vmem %s2, 192
        %v965 = vld [vmem:[%s964] sm:$0xf]
        %v966 = vld [vmem:[%s964 + $0x4] sm:$0xf]
        %v967 = vld [vmem:[%s964 + $0x8] sm:$0xf]
        %v968 = vld [vmem:[%s964 + $0xc] sm:$0xf]
        %v969 = vld [vmem:[%s964 + $0x10] sm:$0xf]
        %v970 = vld [vmem:[%s964 + $0x14] sm:$0xf]
        %v971 = vld [vmem:[%s964 + $0x18] sm:$0xf]
        %v972 = vld [vmem:[%s964 + $0x1c] sm:$0xf]
        %v973 = vld [vmem:[%s964 + $0x20] sm:$0xf]
        %v974 = vld [vmem:[%s964 + $0x24] sm:$0xf]
        %v975 = vld [vmem:[%s964 + $0x28] sm:$0xf]
        %v976 = vld [vmem:[%s964 + $0x2c] sm:$0xf]
        %v977 = vld [vmem:[%s964 + $0x30] sm:$0xf]
        %v978 = vld [vmem:[%s964 + $0x34] sm:$0xf]
        %v979 = vld [vmem:[%s964 + $0x38] sm:$0xf]
        %v980 = vld [vmem:[%s964 + $0x3c] sm:$0xf]
        %v997 = vunpack.c.l.b16 %v965
        %v998 = vunpack.c.l.b16 %v966
        %v999 = vunpack.c.l.b16 %v967
        %v1000 = vunpack.c.l.b16 %v968
        %v1001 = vunpack.c.l.b16 %v969
        %v1002 = vunpack.c.l.b16 %v970
        %v1003 = vunpack.c.l.b16 %v971
        %v1004 = vunpack.c.l.b16 %v972
        %v1005 = vunpack.c.l.b16 %v973
        %v1006 = vunpack.c.l.b16 %v974
        %v1007 = vunpack.c.l.b16 %v975
        %v1008 = vunpack.c.l.b16 %v976
        %v1009 = vunpack.c.l.b16 %v977
        %v1010 = vunpack.c.l.b16 %v978
        %v1011 = vunpack.c.l.b16 %v979
        %v1012 = vunpack.c.l.b16 %v980
        %v1013 = vpack.c.b16 %v998, %v997
        %v1014 = vpack.c.b16 %v1000, %v999
        %v1015 = vpack.c.b16 %v1002, %v1001
        %v1016 = vpack.c.b16 %v1004, %v1003
        %v1017 = vpack.c.b16 %v1006, %v1005
        %v1018 = vpack.c.b16 %v1008, %v1007
        %v1019 = vpack.c.b16 %v1010, %v1009
        %v1020 = vpack.c.b16 %v1012, %v1011
        %1029 = vmatprep.subr.bf16.mxu0 0
        %1030 = vmatpush1.bf16.msra.mxu0 %v1020
        %1031 = vmatprep.subr.bf16.mxu0 0
        %1032 = vmatpush1.bf16.msra.mxu0 %v1019
        %1033 = vmatprep.subr.bf16.mxu0 0
        %1034 = vmatpush1.bf16.msra.mxu0 %v1018
        %1035 = vmatprep.subr.bf16.mxu0 0
        %1036 = vmatpush1.bf16.msra.mxu0 %v1017
        %1037 = vmatprep.subr.bf16.mxu0 0
        %1038 = vmatpush1.bf16.msra.mxu0 %v1016
        %1039 = vmatprep.subr.bf16.mxu0 0
        %1040 = vmatpush1.bf16.msra.mxu0 %v1015
        %1041 = vmatprep.subr.bf16.mxu0 0
        %1042 = vmatpush1.bf16.msra.mxu0 %v1014
        %1043 = vmatprep.subr.bf16.mxu0 0
        %1044 = vmatpush1.bf16.msra.mxu0 %v1013
        %1045 = vmatprep.subr.bf16.mxu0 0
        %1046 = vmatpush2.bf16.msra.mxu0 0
        %1047 = vmatprep.subr.bf16.mxu0 0
        %1048 = vmatpush2.bf16.msra.mxu0 0
        %1049 = vmatprep.subr.bf16.mxu0 0
        %1050 = vmatpush2.bf16.msra.mxu0 0
        %1051 = vmatprep.subr.bf16.mxu0 0
        %1052 = vmatpush2.bf16.msra.mxu0 0
        %1053 = vmatprep.subr.bf16.mxu0 0
        %1054 = vmatpush2.bf16.msra.mxu0 0
        %1055 = vmatprep.subr.bf16.mxu0 0
        %1056 = vmatpush2.bf16.msra.mxu0 0
        %1057 = vmatprep.subr.bf16.mxu0 0
        %1058 = vmatpush2.bf16.msra.mxu0 0
        %1059 = vmatprep.subr.bf16.mxu0 0
        %1060 = vmatpush2.bf16.msra.mxu0 0
        %1061 = vmatprep.mubr.bf16.mxu0 0
        %1062 = vmatmul.mubr.bf16.gmra.mxu0 %v963
        %v1063 = vpop.f32.mrf.mxu0
        %v1064 = vadd.f32 0.0, %v1063
        %v1065 = vpop.f32.mrf.mxu0
        %v1066 = vpop.f32.mrf.mxu0
        %v1067 = vadd.f32 0.0, %v1066
        %v1068 = vpop.f32.mrf.mxu0
        %1069 = vdwg.mxu0
        %v1070 = vadd.f32 %v959, %v1064
        %v1071 = vadd.f32 %v960, %v1067
        %v1072 = vld [vmem:[#allocation2 + $0x4] sm:$0xff]
        %v1073 = vld [vmem:[#allocation2 + $0xc] sm:$0xff]
        %v1074 = vpack.c.bf16 %v1073, %v1072
        %s1075 = scalar_lea.vmem %s2, 256
        %v1076 = vld [vmem:[%s1075] sm:$0xf]
        %v1077 = vld [vmem:[%s1075 + $0x4] sm:$0xf]
        %v1078 = vld [vmem:[%s1075 + $0x8] sm:$0xf]
        %v1079 = vld [vmem:[%s1075 + $0xc] sm:$0xf]
        %v1080 = vld [vmem:[%s1075 + $0x10] sm:$0xf]
        %v1081 = vld [vmem:[%s1075 + $0x14] sm:$0xf]
        %v1082 = vld [vmem:[%s1075 + $0x18] sm:$0xf]
        %v1083 = vld [vmem:[%s1075 + $0x1c] sm:$0xf]
        %v1084 = vld [vmem:[%s1075 + $0x20] sm:$0xf]
        %v1085 = vld [vmem:[%s1075 + $0x24] sm:$0xf]
        %v1086 = vld [vmem:[%s1075 + $0x28] sm:$0xf]
        %v1087 = vld [vmem:[%s1075 + $0x2c] sm:$0xf]
        %v1088 = vld [vmem:[%s1075 + $0x30] sm:$0xf]
        %v1089 = vld [vmem:[%s1075 + $0x34] sm:$0xf]
        %v1090 = vld [vmem:[%s1075 + $0x38] sm:$0xf]
        %v1091 = vld [vmem:[%s1075 + $0x3c] sm:$0xf]
        %v1108 = vunpack.c.l.b16 %v1076
        %v1109 = vunpack.c.l.b16 %v1077
        %v1110 = vunpack.c.l.b16 %v1078
        %v1111 = vunpack.c.l.b16 %v1079
        %v1112 = vunpack.c.l.b16 %v1080
        %v1113 = vunpack.c.l.b16 %v1081
        %v1114 = vunpack.c.l.b16 %v1082
        %v1115 = vunpack.c.l.b16 %v1083
        %v1116 = vunpack.c.l.b16 %v1084
        %v1117 = vunpack.c.l.b16 %v1085
        %v1118 = vunpack.c.l.b16 %v1086
        %v1119 = vunpack.c.l.b16 %v1087
        %v1120 = vunpack.c.l.b16 %v1088
        %v1121 = vunpack.c.l.b16 %v1089
        %v1122 = vunpack.c.l.b16 %v1090
        %v1123 = vunpack.c.l.b16 %v1091
        %v1124 = vpack.c.b16 %v1109, %v1108
        %v1125 = vpack.c.b16 %v1111, %v1110
        %v1126 = vpack.c.b16 %v1113, %v1112
        %v1127 = vpack.c.b16 %v1115, %v1114
        %v1128 = vpack.c.b16 %v1117, %v1116
        %v1129 = vpack.c.b16 %v1119, %v1118
        %v1130 = vpack.c.b16 %v1121, %v1120
        %v1131 = vpack.c.b16 %v1123, %v1122
        %1140 = vmatprep.subr.bf16.mxu0 0
        %1141 = vmatpush1.bf16.msra.mxu0 %v1131
        %1142 = vmatprep.subr.bf16.mxu0 0
        %1143 = vmatpush1.bf16.msra.mxu0 %v1130
        %1144 = vmatprep.subr.bf16.mxu0 0
        %1145 = vmatpush1.bf16.msra.mxu0 %v1129
        %1146 = vmatprep.subr.bf16.mxu0 0
        %1147 = vmatpush1.bf16.msra.mxu0 %v1128
        %1148 = vmatprep.subr.bf16.mxu0 0
        %1149 = vmatpush1.bf16.msra.mxu0 %v1127
        %1150 = vmatprep.subr.bf16.mxu0 0
        %1151 = vmatpush1.bf16.msra.mxu0 %v1126
        %1152 = vmatprep.subr.bf16.mxu0 0
        %1153 = vmatpush1.bf16.msra.mxu0 %v1125
        %1154 = vmatprep.subr.bf16.mxu0 0
        %1155 = vmatpush1.bf16.msra.mxu0 %v1124
        %1156 = vmatprep.subr.bf16.mxu0 0
        %1157 = vmatpush2.bf16.msra.mxu0 0
        %1158 = vmatprep.subr.bf16.mxu0 0
        %1159 = vmatpush2.bf16.msra.mxu0 0
        %1160 = vmatprep.subr.bf16.mxu0 0
        %1161 = vmatpush2.bf16.msra.mxu0 0
        %1162 = vmatprep.subr.bf16.mxu0 0
        %1163 = vmatpush2.bf16.msra.mxu0 0
        %1164 = vmatprep.subr.bf16.mxu0 0
        %1165 = vmatpush2.bf16.msra.mxu0 0
        %1166 = vmatprep.subr.bf16.mxu0 0
        %1167 = vmatpush2.bf16.msra.mxu0 0
        %1168 = vmatprep.subr.bf16.mxu0 0
        %1169 = vmatpush2.bf16.msra.mxu0 0
        %1170 = vmatprep.subr.bf16.mxu0 0
        %1171 = vmatpush2.bf16.msra.mxu0 0
        %1172 = vmatprep.mubr.bf16.mxu0 0
        %1173 = vmatmul.mubr.bf16.gmra.mxu0 %v1074
        %v1174 = vpop.f32.mrf.mxu0
        %v1175 = vadd.f32 0.0, %v1174
        %v1176 = vpop.f32.mrf.mxu0
        %v1177 = vpop.f32.mrf.mxu0
        %v1178 = vadd.f32 0.0, %v1177
        %v1179 = vpop.f32.mrf.mxu0
        %1180 = vdwg.mxu0
        %v1181 = vadd.f32 %v1070, %v1175
        %v1182 = vadd.f32 %v1071, %v1178
        %v1183 = vld [vmem:[#allocation2 + $0x5] sm:$0xff]
        %v1184 = vld [vmem:[#allocation2 + $0xd] sm:$0xff]
        %v1185 = vpack.c.bf16 %v1184, %v1183
        %s1186 = scalar_lea.vmem %s2, 320
        %v1187 = vld [vmem:[%s1186] sm:$0xf]
        %v1188 = vld [vmem:[%s1186 + $0x4] sm:$0xf]
        %v1189 = vld [vmem:[%s1186 + $0x8] sm:$0xf]
        %v1190 = vld [vmem:[%s1186 + $0xc] sm:$0xf]
        %v1191 = vld [vmem:[%s1186 + $0x10] sm:$0xf]
        %v1192 = vld [vmem:[%s1186 + $0x14] sm:$0xf]
        %v1193 = vld [vmem:[%s1186 + $0x18] sm:$0xf]
        %v1194 = vld [vmem:[%s1186 + $0x1c] sm:$0xf]
        %v1195 = vld [vmem:[%s1186 + $0x20] sm:$0xf]
        %v1196 = vld [vmem:[%s1186 + $0x24] sm:$0xf]
        %v1197 = vld [vmem:[%s1186 + $0x28] sm:$0xf]
        %v1198 = vld [vmem:[%s1186 + $0x2c] sm:$0xf]
        %v1199 = vld [vmem:[%s1186 + $0x30] sm:$0xf]
        %v1200 = vld [vmem:[%s1186 + $0x34] sm:$0xf]
        %v1201 = vld [vmem:[%s1186 + $0x38] sm:$0xf]
        %v1202 = vld [vmem:[%s1186 + $0x3c] sm:$0xf]
        %v1219 = vunpack.c.l.b16 %v1187
        %v1220 = vunpack.c.l.b16 %v1188
        %v1221 = vunpack.c.l.b16 %v1189
        %v1222 = vunpack.c.l.b16 %v1190
        %v1223 = vunpack.c.l.b16 %v1191
        %v1224 = vunpack.c.l.b16 %v1192
        %v1225 = vunpack.c.l.b16 %v1193
        %v1226 = vunpack.c.l.b16 %v1194
        %v1227 = vunpack.c.l.b16 %v1195
        %v1228 = vunpack.c.l.b16 %v1196
        %v1229 = vunpack.c.l.b16 %v1197
        %v1230 = vunpack.c.l.b16 %v1198
        %v1231 = vunpack.c.l.b16 %v1199
        %v1232 = vunpack.c.l.b16 %v1200
        %v1233 = vunpack.c.l.b16 %v1201
        %v1234 = vunpack.c.l.b16 %v1202
        %v1235 = vpack.c.b16 %v1220, %v1219
        %v1236 = vpack.c.b16 %v1222, %v1221
        %v1237 = vpack.c.b16 %v1224, %v1223
        %v1238 = vpack.c.b16 %v1226, %v1225
        %v1239 = vpack.c.b16 %v1228, %v1227
        %v1240 = vpack.c.b16 %v1230, %v1229
        %v1241 = vpack.c.b16 %v1232, %v1231
        %v1242 = vpack.c.b16 %v1234, %v1233
        %1251 = vmatprep.subr.bf16.mxu0 0
        %1252 = vmatpush1.bf16.msra.mxu0 %v1242
        %1253 = vmatprep.subr.bf16.mxu0 0
        %1254 = vmatpush1.bf16.msra.mxu0 %v1241
        %1255 = vmatprep.subr.bf16.mxu0 0
        %1256 = vmatpush1.bf16.msra.mxu0 %v1240
        %1257 = vmatprep.subr.bf16.mxu0 0
        %1258 = vmatpush1.bf16.msra.mxu0 %v1239
        %1259 = vmatprep.subr.bf16.mxu0 0
        %1260 = vmatpush1.bf16.msra.mxu0 %v1238
        %1261 = vmatprep.subr.bf16.mxu0 0
        %1262 = vmatpush1.bf16.msra.mxu0 %v1237
        %1263 = vmatprep.subr.bf16.mxu0 0
        %1264 = vmatpush1.bf16.msra.mxu0 %v1236
        %1265 = vmatprep.subr.bf16.mxu0 0
        %1266 = vmatpush1.bf16.msra.mxu0 %v1235
        %1267 = vmatprep.subr.bf16.mxu0 0
        %1268 = vmatpush2.bf16.msra.mxu0 0
        %1269 = vmatprep.subr.bf16.mxu0 0
        %1270 = vmatpush2.bf16.msra.mxu0 0
        %1271 = vmatprep.subr.bf16.mxu0 0
        %1272 = vmatpush2.bf16.msra.mxu0 0
        %1273 = vmatprep.subr.bf16.mxu0 0
        %1274 = vmatpush2.bf16.msra.mxu0 0
        %1275 = vmatprep.subr.bf16.mxu0 0
        %1276 = vmatpush2.bf16.msra.mxu0 0
        %1277 = vmatprep.subr.bf16.mxu0 0
        %1278 = vmatpush2.bf16.msra.mxu0 0
        %1279 = vmatprep.subr.bf16.mxu0 0
        %1280 = vmatpush2.bf16.msra.mxu0 0
        %1281 = vmatprep.subr.bf16.mxu0 0
        %1282 = vmatpush2.bf16.msra.mxu0 0
        %1283 = vmatprep.mubr.bf16.mxu0 0
        %1284 = vmatmul.mubr.bf16.gmra.mxu0 %v1185
        %v1285 = vpop.f32.mrf.mxu0
        %v1286 = vadd.f32 0.0, %v1285
        %v1287 = vpop.f32.mrf.mxu0
        %v1288 = vpop.f32.mrf.mxu0
        %v1289 = vadd.f32 0.0, %v1288
        %v1290 = vpop.f32.mrf.mxu0
        %1291 = vdwg.mxu0
        %v1292 = vadd.f32 %v1181, %v1286
        %v1293 = vadd.f32 %v1182, %v1289
        %v1294 = vld [vmem:[#allocation2 + $0x6] sm:$0xff]
        %v1295 = vld [vmem:[#allocation2 + $0xe] sm:$0xff]
        %v1296 = vpack.c.bf16 %v1295, %v1294
        %s1297 = scalar_lea.vmem %s2, 384
        %v1298 = vld [vmem:[%s1297] sm:$0xf]
        %v1299 = vld [vmem:[%s1297 + $0x4] sm:$0xf]
        %v1300 = vld [vmem:[%s1297 + $0x8] sm:$0xf]
        %v1301 = vld [vmem:[%s1297 + $0xc] sm:$0xf]
        %v1302 = vld [vmem:[%s1297 + $0x10] sm:$0xf]
        %v1303 = vld [vmem:[%s1297 + $0x14] sm:$0xf]
        %v1304 = vld [vmem:[%s1297 + $0x18] sm:$0xf]
        %v1305 = vld [vmem:[%s1297 + $0x1c] sm:$0xf]
        %v1306 = vld [vmem:[%s1297 + $0x20] sm:$0xf]
        %v1307 = vld [vmem:[%s1297 + $0x24] sm:$0xf]
        %v1308 = vld [vmem:[%s1297 + $0x28] sm:$0xf]
        %v1309 = vld [vmem:[%s1297 + $0x2c] sm:$0xf]
        %v1310 = vld [vmem:[%s1297 + $0x30] sm:$0xf]
        %v1311 = vld [vmem:[%s1297 + $0x34] sm:$0xf]
        %v1312 = vld [vmem:[%s1297 + $0x38] sm:$0xf]
        %v1313 = vld [vmem:[%s1297 + $0x3c] sm:$0xf]
        %v1330 = vunpack.c.l.b16 %v1298
        %v1331 = vunpack.c.l.b16 %v1299
        %v1332 = vunpack.c.l.b16 %v1300
        %v1333 = vunpack.c.l.b16 %v1301
        %v1334 = vunpack.c.l.b16 %v1302
        %v1335 = vunpack.c.l.b16 %v1303
        %v1336 = vunpack.c.l.b16 %v1304
        %v1337 = vunpack.c.l.b16 %v1305
        %v1338 = vunpack.c.l.b16 %v1306
        %v1339 = vunpack.c.l.b16 %v1307
        %v1340 = vunpack.c.l.b16 %v1308
        %v1341 = vunpack.c.l.b16 %v1309
        %v1342 = vunpack.c.l.b16 %v1310
        %v1343 = vunpack.c.l.b16 %v1311
        %v1344 = vunpack.c.l.b16 %v1312
        %v1345 = vunpack.c.l.b16 %v1313
        %v1346 = vpack.c.b16 %v1331, %v1330
        %v1347 = vpack.c.b16 %v1333, %v1332
        %v1348 = vpack.c.b16 %v1335, %v1334
        %v1349 = vpack.c.b16 %v1337, %v1336
        %v1350 = vpack.c.b16 %v1339, %v1338
        %v1351 = vpack.c.b16 %v1341, %v1340
        %v1352 = vpack.c.b16 %v1343, %v1342
        %v1353 = vpack.c.b16 %v1345, %v1344
        %1362 = vmatprep.subr.bf16.mxu0 0
        %1363 = vmatpush1.bf16.msra.mxu0 %v1353
        %1364 = vmatprep.subr.bf16.mxu0 0
        %1365 = vmatpush1.bf16.msra.mxu0 %v1352
        %1366 = vmatprep.subr.bf16.mxu0 0
        %1367 = vmatpush1.bf16.msra.mxu0 %v1351
        %1368 = vmatprep.subr.bf16.mxu0 0
        %1369 = vmatpush1.bf16.msra.mxu0 %v1350
        %1370 = vmatprep.subr.bf16.mxu0 0
        %1371 = vmatpush1.bf16.msra.mxu0 %v1349
        %1372 = vmatprep.subr.bf16.mxu0 0
        %1373 = vmatpush1.bf16.msra.mxu0 %v1348
        %1374 = vmatprep.subr.bf16.mxu0 0
        %1375 = vmatpush1.bf16.msra.mxu0 %v1347
        %1376 = vmatprep.subr.bf16.mxu0 0
        %1377 = vmatpush1.bf16.msra.mxu0 %v1346
        %1378 = vmatprep.subr.bf16.mxu0 0
        %1379 = vmatpush2.bf16.msra.mxu0 0
        %1380 = vmatprep.subr.bf16.mxu0 0
        %1381 = vmatpush2.bf16.msra.mxu0 0
        %1382 = vmatprep.subr.bf16.mxu0 0
        %1383 = vmatpush2.bf16.msra.mxu0 0
        %1384 = vmatprep.subr.bf16.mxu0 0
        %1385 = vmatpush2.bf16.msra.mxu0 0
        %1386 = vmatprep.subr.bf16.mxu0 0
        %1387 = vmatpush2.bf16.msra.mxu0 0
        %1388 = vmatprep.subr.bf16.mxu0 0
        %1389 = vmatpush2.bf16.msra.mxu0 0
        %1390 = vmatprep.subr.bf16.mxu0 0
        %1391 = vmatpush2.bf16.msra.mxu0 0
        %1392 = vmatprep.subr.bf16.mxu0 0
        %1393 = vmatpush2.bf16.msra.mxu0 0
        %1394 = vmatprep.mubr.bf16.mxu0 0
        %1395 = vmatmul.mubr.bf16.gmra.mxu0 %v1296
        %v1396 = vpop.f32.mrf.mxu0
        %v1397 = vadd.f32 0.0, %v1396
        %v1398 = vpop.f32.mrf.mxu0
        %v1399 = vpop.f32.mrf.mxu0
        %v1400 = vadd.f32 0.0, %v1399
        %v1401 = vpop.f32.mrf.mxu0
        %1402 = vdwg.mxu0
        %v1403 = vadd.f32 %v1292, %v1397
        %v1404 = vadd.f32 %v1293, %v1400
        %v1405 = vld [vmem:[#allocation2 + $0x7] sm:$0xff]
        %v1406 = vld [vmem:[#allocation2 + $0xf] sm:$0xff]
        %v1407 = vpack.c.bf16 %v1406, %v1405
        %s1408 = scalar_lea.vmem %s2, 448
        %v1409 = vld [vmem:[%s1408] sm:$0xf]
        %v1410 = vld [vmem:[%s1408 + $0x4] sm:$0xf]
        %v1411 = vld [vmem:[%s1408 + $0x8] sm:$0xf]
        %v1412 = vld [vmem:[%s1408 + $0xc] sm:$0xf]
        %v1413 = vld [vmem:[%s1408 + $0x10] sm:$0xf]
        %v1414 = vld [vmem:[%s1408 + $0x14] sm:$0xf]
        %v1415 = vld [vmem:[%s1408 + $0x18] sm:$0xf]
        %v1416 = vld [vmem:[%s1408 + $0x1c] sm:$0xf]
        %v1417 = vld [vmem:[%s1408 + $0x20] sm:$0xf]
        %v1418 = vld [vmem:[%s1408 + $0x24] sm:$0xf]
        %v1419 = vld [vmem:[%s1408 + $0x28] sm:$0xf]
        %v1420 = vld [vmem:[%s1408 + $0x2c] sm:$0xf]
        %v1421 = vld [vmem:[%s1408 + $0x30] sm:$0xf]
        %v1422 = vld [vmem:[%s1408 + $0x34] sm:$0xf]
        %v1423 = vld [vmem:[%s1408 + $0x38] sm:$0xf]
        %v1424 = vld [vmem:[%s1408 + $0x3c] sm:$0xf]
        %v1441 = vunpack.c.l.b16 %v1409
        %v1442 = vunpack.c.l.b16 %v1410
        %v1443 = vunpack.c.l.b16 %v1411
        %v1444 = vunpack.c.l.b16 %v1412
        %v1445 = vunpack.c.l.b16 %v1413
        %v1446 = vunpack.c.l.b16 %v1414
        %v1447 = vunpack.c.l.b16 %v1415
        %v1448 = vunpack.c.l.b16 %v1416
        %v1449 = vunpack.c.l.b16 %v1417
        %v1450 = vunpack.c.l.b16 %v1418
        %v1451 = vunpack.c.l.b16 %v1419
        %v1452 = vunpack.c.l.b16 %v1420
        %v1453 = vunpack.c.l.b16 %v1421
        %v1454 = vunpack.c.l.b16 %v1422
        %v1455 = vunpack.c.l.b16 %v1423
        %v1456 = vunpack.c.l.b16 %v1424
        %v1457 = vpack.c.b16 %v1442, %v1441
        %v1458 = vpack.c.b16 %v1444, %v1443
        %v1459 = vpack.c.b16 %v1446, %v1445
        %v1460 = vpack.c.b16 %v1448, %v1447
        %v1461 = vpack.c.b16 %v1450, %v1449
        %v1462 = vpack.c.b16 %v1452, %v1451
        %v1463 = vpack.c.b16 %v1454, %v1453
        %v1464 = vpack.c.b16 %v1456, %v1455
        %1473 = vmatprep.subr.bf16.mxu0 0
        %1474 = vmatpush1.bf16.msra.mxu0 %v1464
        %1475 = vmatprep.subr.bf16.mxu0 0
        %1476 = vmatpush1.bf16.msra.mxu0 %v1463
        %1477 = vmatprep.subr.bf16.mxu0 0
        %1478 = vmatpush1.bf16.msra.mxu0 %v1462
        %1479 = vmatprep.subr.bf16.mxu0 0
        %1480 = vmatpush1.bf16.msra.mxu0 %v1461
        %1481 = vmatprep.subr.bf16.mxu0 0
        %1482 = vmatpush1.bf16.msra.mxu0 %v1460
        %1483 = vmatprep.subr.bf16.mxu0 0
        %1484 = vmatpush1.bf16.msra.mxu0 %v1459
        %1485 = vmatprep.subr.bf16.mxu0 0
        %1486 = vmatpush1.bf16.msra.mxu0 %v1458
        %1487 = vmatprep.subr.bf16.mxu0 0
        %1488 = vmatpush1.bf16.msra.mxu0 %v1457
        %1489 = vmatprep.subr.bf16.mxu0 0
        %1490 = vmatpush2.bf16.msra.mxu0 0
        %1491 = vmatprep.subr.bf16.mxu0 0
        %1492 = vmatpush2.bf16.msra.mxu0 0
        %1493 = vmatprep.subr.bf16.mxu0 0
        %1494 = vmatpush2.bf16.msra.mxu0 0
        %1495 = vmatprep.subr.bf16.mxu0 0
        %1496 = vmatpush2.bf16.msra.mxu0 0
        %1497 = vmatprep.subr.bf16.mxu0 0
        %1498 = vmatpush2.bf16.msra.mxu0 0
        %1499 = vmatprep.subr.bf16.mxu0 0
        %1500 = vmatpush2.bf16.msra.mxu0 0
        %1501 = vmatprep.subr.bf16.mxu0 0
        %1502 = vmatpush2.bf16.msra.mxu0 0
        %1503 = vmatprep.subr.bf16.mxu0 0
        %1504 = vmatpush2.bf16.msra.mxu0 0
        %1505 = vmatprep.mubr.bf16.mxu0 0
        %1506 = vmatmul.mubr.bf16.gmra.mxu0 %v1407
        %v1507 = vpop.f32.mrf.mxu0
        %v1508 = vadd.f32 0.0, %v1507
        %v1509 = vpop.f32.mrf.mxu0
        %v1510 = vpop.f32.mrf.mxu0
        %v1511 = vadd.f32 0.0, %v1510
        %v1512 = vpop.f32.mrf.mxu0
        %1513 = vdwg.mxu0
        %v1514 = vadd.f32 %v1403, %v1508
        %v1515 = vadd.f32 %v1404, %v1511
        %v1516 = vld [vmem:[#allocation2 + $0x8] sm:$0xff]
        %v1517 = vld [vmem:[#allocation2 + $0x10] sm:$0xff]
        %v1518 = vpack.c.bf16 %v1517, %v1516
        %s1519 = scalar_lea.vmem %s2, 512
        %v1520 = vld [vmem:[%s1519] sm:$0xf]
        %v1521 = vld [vmem:[%s1519 + $0x4] sm:$0xf]
        %v1522 = vld [vmem:[%s1519 + $0x8] sm:$0xf]
        %v1523 = vld [vmem:[%s1519 + $0xc] sm:$0xf]
        %v1524 = vld [vmem:[%s1519 + $0x10] sm:$0xf]
        %v1525 = vld [vmem:[%s1519 + $0x14] sm:$0xf]
        %v1526 = vld [vmem:[%s1519 + $0x18] sm:$0xf]
        %v1527 = vld [vmem:[%s1519 + $0x1c] sm:$0xf]
        %v1528 = vld [vmem:[%s1519 + $0x20] sm:$0xf]
        %v1529 = vld [vmem:[%s1519 + $0x24] sm:$0xf]
        %v1530 = vld [vmem:[%s1519 + $0x28] sm:$0xf]
        %v1531 = vld [vmem:[%s1519 + $0x2c] sm:$0xf]
        %v1532 = vld [vmem:[%s1519 + $0x30] sm:$0xf]
        %v1533 = vld [vmem:[%s1519 + $0x34] sm:$0xf]
        %v1534 = vld [vmem:[%s1519 + $0x38] sm:$0xf]
        %v1535 = vld [vmem:[%s1519 + $0x3c] sm:$0xf]
        %v1552 = vunpack.c.l.b16 %v1520
        %v1553 = vunpack.c.l.b16 %v1521
        %v1554 = vunpack.c.l.b16 %v1522
        %v1555 = vunpack.c.l.b16 %v1523
        %v1556 = vunpack.c.l.b16 %v1524
        %v1557 = vunpack.c.l.b16 %v1525
        %v1558 = vunpack.c.l.b16 %v1526
        %v1559 = vunpack.c.l.b16 %v1527
        %v1560 = vunpack.c.l.b16 %v1528
        %v1561 = vunpack.c.l.b16 %v1529
        %v1562 = vunpack.c.l.b16 %v1530
        %v1563 = vunpack.c.l.b16 %v1531
        %v1564 = vunpack.c.l.b16 %v1532
        %v1565 = vunpack.c.l.b16 %v1533
        %v1566 = vunpack.c.l.b16 %v1534
        %v1567 = vunpack.c.l.b16 %v1535
        %v1568 = vpack.c.b16 %v1553, %v1552
        %v1569 = vpack.c.b16 %v1555, %v1554
        %v1570 = vpack.c.b16 %v1557, %v1556
        %v1571 = vpack.c.b16 %v1559, %v1558
        %v1572 = vpack.c.b16 %v1561, %v1560
        %v1573 = vpack.c.b16 %v1563, %v1562
        %v1574 = vpack.c.b16 %v1565, %v1564
        %v1575 = vpack.c.b16 %v1567, %v1566
        %1584 = vmatprep.subr.bf16.mxu0 0
        %1585 = vmatpush1.bf16.msra.mxu0 %v1575
        %1586 = vmatprep.subr.bf16.mxu0 0
        %1587 = vmatpush1.bf16.msra.mxu0 %v1574
        %1588 = vmatprep.subr.bf16.mxu0 0
        %1589 = vmatpush1.bf16.msra.mxu0 %v1573
        %1590 = vmatprep.subr.bf16.mxu0 0
        %1591 = vmatpush1.bf16.msra.mxu0 %v1572
        %1592 = vmatprep.subr.bf16.mxu0 0
        %1593 = vmatpush1.bf16.msra.mxu0 %v1571
        %1594 = vmatprep.subr.bf16.mxu0 0
        %1595 = vmatpush1.bf16.msra.mxu0 %v1570
        %1596 = vmatprep.subr.bf16.mxu0 0
        %1597 = vmatpush1.bf16.msra.mxu0 %v1569
        %1598 = vmatprep.subr.bf16.mxu0 0
        %1599 = vmatpush1.bf16.msra.mxu0 %v1568
        %1600 = vmatprep.subr.bf16.mxu0 0
        %1601 = vmatpush2.bf16.msra.mxu0 0
        %1602 = vmatprep.subr.bf16.mxu0 0
        %1603 = vmatpush2.bf16.msra.mxu0 0
        %1604 = vmatprep.subr.bf16.mxu0 0
        %1605 = vmatpush2.bf16.msra.mxu0 0
        %1606 = vmatprep.subr.bf16.mxu0 0
        %1607 = vmatpush2.bf16.msra.mxu0 0
        %1608 = vmatprep.subr.bf16.mxu0 0
        %1609 = vmatpush2.bf16.msra.mxu0 0
        %1610 = vmatprep.subr.bf16.mxu0 0
        %1611 = vmatpush2.bf16.msra.mxu0 0
        %1612 = vmatprep.subr.bf16.mxu0 0
        %1613 = vmatpush2.bf16.msra.mxu0 0
        %1614 = vmatprep.subr.bf16.mxu0 0
        %1615 = vmatpush2.bf16.msra.mxu0 0
        %1616 = vmatprep.mubr.bf16.mxu0 0
        %1617 = vmatmul.mubr.bf16.gmra.mxu0 %v1518
        %v1618 = vpop.f32.mrf.mxu0
        %v1619 = vadd.f32 0.0, %v1618
        %v1620 = vpop.f32.mrf.mxu0
        %v1621 = vpop.f32.mrf.mxu0
        %v1622 = vadd.f32 0.0, %v1621
        %v1623 = vpop.f32.mrf.mxu0
        %1624 = vdwg.mxu0
        %v1625 = vadd.f32 %v1514, %v1619
        %v1626 = vadd.f32 %v1515, %v1622
        %v1627 = vld [vmem:[%s3] sm:$0x1]
        %v1629 = vlaneseq
        %v1630 = vshrl.u32 %v1629, 7
        %v1631 = vsub.s32 0, %v1630
        %v1632 = vrot.slane %v1627, %v1631
        %v1634 = vmul.f32 %v1625, %v1632
        %v1635 = vmul.f32 %v1626, %v1632
        %v1636 = vld [vmem:[%s4] sm:$0x1]
        %v1638 = vlaneseq
        %v1639 = vshrl.u32 %v1638, 7
        %v1640 = vsub.s32 0, %v1639
        %v1641 = vrot.slane %v1636, %v1640
        %v1643 = vadd.f32 %v1634, %v1641
        %v1644 = vadd.f32 %v1635, %v1641
        %vm1645 = vcmp.ge.f32.partialorder %v1643, 0.0
        %vm1646 = vcmp.ge.f32.partialorder %v1644, 0.0
        %v1647 = vmul.f32 %v1643, 0.01
        %v1648 = vmul.f32 %v1644, 0.01
        %v1649 = vsel %vm1645, %v1643, %v1647
        %v1650 = vsel %vm1646, %v1644, %v1648
        %v1651 = vpack.c.bf16 %v1650, %v1649
        %v1652 = vld [vmem:[#allocation4] sm:$0xf]
        %v1653 = vld [vmem:[#allocation4 + $0x4] sm:$0xf]
        %v1654 = vld [vmem:[#allocation4 + $0x8] sm:$0xf]
        %v1655 = vld [vmem:[#allocation4 + $0xc] sm:$0xf]
        %v1656 = vld [vmem:[#allocation4 + $0x10] sm:$0xf]
        %v1657 = vld [vmem:[#allocation4 + $0x14] sm:$0xf]
        %v1658 = vld [vmem:[#allocation4 + $0x18] sm:$0xf]
        %v1659 = vld [vmem:[#allocation4 + $0x1c] sm:$0xf]
        %v1660 = vld [vmem:[#allocation4 + $0x20] sm:$0xf]
        %v1661 = vld [vmem:[#allocation4 + $0x24] sm:$0xf]
        %v1662 = vld [vmem:[#allocation4 + $0x28] sm:$0xf]
        %v1663 = vld [vmem:[#allocation4 + $0x2c] sm:$0xf]
        %v1664 = vld [vmem:[#allocation4 + $0x30] sm:$0xf]
        %v1665 = vld [vmem:[#allocation4 + $0x34] sm:$0xf]
        %v1666 = vld [vmem:[#allocation4 + $0x38] sm:$0xf]
        %v1667 = vld [vmem:[#allocation4 + $0x3c] sm:$0xf]
        %v1684 = vunpack.c.l.b16 %v1652
        %v1685 = vunpack.c.l.b16 %v1653
        %v1686 = vunpack.c.l.b16 %v1654
        %v1687 = vunpack.c.l.b16 %v1655
        %v1688 = vunpack.c.l.b16 %v1656
        %v1689 = vunpack.c.l.b16 %v1657
        %v1690 = vunpack.c.l.b16 %v1658
        %v1691 = vunpack.c.l.b16 %v1659
        %v1692 = vunpack.c.l.b16 %v1660
        %v1693 = vunpack.c.l.b16 %v1661
        %v1694 = vunpack.c.l.b16 %v1662
        %v1695 = vunpack.c.l.b16 %v1663
        %v1696 = vunpack.c.l.b16 %v1664
        %v1697 = vunpack.c.l.b16 %v1665
        %v1698 = vunpack.c.l.b16 %v1666
        %v1699 = vunpack.c.l.b16 %v1667
        %v1700 = vpack.c.b16 %v1685, %v1684
        %v1701 = vpack.c.b16 %v1687, %v1686
        %v1702 = vpack.c.b16 %v1689, %v1688
        %v1703 = vpack.c.b16 %v1691, %v1690
        %v1704 = vpack.c.b16 %v1693, %v1692
        %v1705 = vpack.c.b16 %v1695, %v1694
        %v1706 = vpack.c.b16 %v1697, %v1696
        %v1707 = vpack.c.b16 %v1699, %v1698
        %1716 = vmatprep.subr.bf16.mxu0 0
        %1717 = vmatpush1.bf16.msra.mxu0 %v1707
        %1718 = vmatprep.subr.bf16.mxu0 0
        %1719 = vmatpush1.bf16.msra.mxu0 %v1706
        %1720 = vmatprep.subr.bf16.mxu0 0
        %1721 = vmatpush1.bf16.msra.mxu0 %v1705
        %1722 = vmatprep.subr.bf16.mxu0 0
        %1723 = vmatpush1.bf16.msra.mxu0 %v1704
        %1724 = vmatprep.subr.bf16.mxu0 0
        %1725 = vmatpush1.bf16.msra.mxu0 %v1703
        %1726 = vmatprep.subr.bf16.mxu0 0
        %1727 = vmatpush1.bf16.msra.mxu0 %v1702
        %1728 = vmatprep.subr.bf16.mxu0 0
        %1729 = vmatpush1.bf16.msra.mxu0 %v1701
        %1730 = vmatprep.subr.bf16.mxu0 0
        %1731 = vmatpush1.bf16.msra.mxu0 %v1700
        %1732 = vmatprep.subr.bf16.mxu0 0
        %1733 = vmatpush2.bf16.msra.mxu0 0
        %1734 = vmatprep.subr.bf16.mxu0 0
        %1735 = vmatpush2.bf16.msra.mxu0 0
        %1736 = vmatprep.subr.bf16.mxu0 0
        %1737 = vmatpush2.bf16.msra.mxu0 0
        %1738 = vmatprep.subr.bf16.mxu0 0
        %1739 = vmatpush2.bf16.msra.mxu0 0
        %1740 = vmatprep.subr.bf16.mxu0 0
        %1741 = vmatpush2.bf16.msra.mxu0 0
        %1742 = vmatprep.subr.bf16.mxu0 0
        %1743 = vmatpush2.bf16.msra.mxu0 0
        %1744 = vmatprep.subr.bf16.mxu0 0
        %1745 = vmatpush2.bf16.msra.mxu0 0
        %1746 = vmatprep.subr.bf16.mxu0 0
        %1747 = vmatpush2.bf16.msra.mxu0 0
        %1748 = vmatprep.mubr.bf16.mxu0 0
        %1749 = vmatmul.mubr.bf16.gmra.mxu0 %v1651
        %v1750 = vpop.f32.mrf.mxu0
        %v1751 = vadd.f32 0.0, %v1750
        %v1752 = vpop.f32.mrf.mxu0
        %v1753 = vpop.f32.mrf.mxu0
        %v1754 = vadd.f32 0.0, %v1753
        %v1755 = vpop.f32.mrf.mxu0
        %1756 = vdwg.mxu0
        %v1757 = vpack.c.bf16 %v1754, %v1751
        %v1758 = vld [vmem:[#allocation6] sm:$0xf]
        %v1759 = vld [vmem:[#allocation6 + $0x4] sm:$0xf]
        %v1760 = vld [vmem:[#allocation6 + $0x8] sm:$0xf]
        %v1761 = vld [vmem:[#allocation6 + $0xc] sm:$0xf]
        %v1762 = vld [vmem:[#allocation6 + $0x10] sm:$0xf]
        %v1763 = vld [vmem:[#allocation6 + $0x14] sm:$0xf]
        %v1764 = vld [vmem:[#allocation6 + $0x18] sm:$0xf]
        %v1765 = vld [vmem:[#allocation6 + $0x1c] sm:$0xf]
        %v1766 = vld [vmem:[#allocation6 + $0x20] sm:$0xf]
        %v1767 = vld [vmem:[#allocation6 + $0x24] sm:$0xf]
        %v1768 = vld [vmem:[#allocation6 + $0x28] sm:$0xf]
        %v1769 = vld [vmem:[#allocation6 + $0x2c] sm:$0xf]
        %v1770 = vld [vmem:[#allocation6 + $0x30] sm:$0xf]
        %v1771 = vld [vmem:[#allocation6 + $0x34] sm:$0xf]
        %v1772 = vld [vmem:[#allocation6 + $0x38] sm:$0xf]
        %v1773 = vld [vmem:[#allocation6 + $0x3c] sm:$0xf]
        %v1790 = vunpack.c.l.b16 %v1758
        %v1791 = vunpack.c.l.b16 %v1759
        %v1792 = vunpack.c.l.b16 %v1760
        %v1793 = vunpack.c.l.b16 %v1761
        %v1794 = vunpack.c.l.b16 %v1762
        %v1795 = vunpack.c.l.b16 %v1763
        %v1796 = vunpack.c.l.b16 %v1764
        %v1797 = vunpack.c.l.b16 %v1765
        %v1798 = vunpack.c.l.b16 %v1766
        %v1799 = vunpack.c.l.b16 %v1767
        %v1800 = vunpack.c.l.b16 %v1768
        %v1801 = vunpack.c.l.b16 %v1769
        %v1802 = vunpack.c.l.b16 %v1770
        %v1803 = vunpack.c.l.b16 %v1771
        %v1804 = vunpack.c.l.b16 %v1772
        %v1805 = vunpack.c.l.b16 %v1773
        %v1806 = vpack.c.b16 %v1791, %v1790
        %v1807 = vpack.c.b16 %v1793, %v1792
        %v1808 = vpack.c.b16 %v1795, %v1794
        %v1809 = vpack.c.b16 %v1797, %v1796
        %v1810 = vpack.c.b16 %v1799, %v1798
        %v1811 = vpack.c.b16 %v1801, %v1800
        %v1812 = vpack.c.b16 %v1803, %v1802
        %v1813 = vpack.c.b16 %v1805, %v1804
        %1822 = vmatprep.subr.bf16.mxu0 0
        %1823 = vmatpush1.bf16.msra.mxu0 %v1813
        %1824 = vmatprep.subr.bf16.mxu0 0
        %1825 = vmatpush1.bf16.msra.mxu0 %v1812
        %1826 = vmatprep.subr.bf16.mxu0 0
        %1827 = vmatpush1.bf16.msra.mxu0 %v1811
        %1828 = vmatprep.subr.bf16.mxu0 0
        %1829 = vmatpush1.bf16.msra.mxu0 %v1810
        %1830 = vmatprep.subr.bf16.mxu0 0
        %1831 = vmatpush1.bf16.msra.mxu0 %v1809
        %1832 = vmatprep.subr.bf16.mxu0 0
        %1833 = vmatpush1.bf16.msra.mxu0 %v1808
        %1834 = vmatprep.subr.bf16.mxu0 0
        %1835 = vmatpush1.bf16.msra.mxu0 %v1807
        %1836 = vmatprep.subr.bf16.mxu0 0
        %1837 = vmatpush1.bf16.msra.mxu0 %v1806
        %1838 = vmatprep.subr.bf16.mxu0 0
        %1839 = vmatpush2.bf16.msra.mxu0 0
        %1840 = vmatprep.subr.bf16.mxu0 0
        %1841 = vmatpush2.bf16.msra.mxu0 0
        %1842 = vmatprep.subr.bf16.mxu0 0
        %1843 = vmatpush2.bf16.msra.mxu0 0
        %1844 = vmatprep.subr.bf16.mxu0 0
        %1845 = vmatpush2.bf16.msra.mxu0 0
        %1846 = vmatprep.subr.bf16.mxu0 0
        %1847 = vmatpush2.bf16.msra.mxu0 0
        %1848 = vmatprep.subr.bf16.mxu0 0
        %1849 = vmatpush2.bf16.msra.mxu0 0
        %1850 = vmatprep.subr.bf16.mxu0 0
        %1851 = vmatpush2.bf16.msra.mxu0 0
        %1852 = vmatprep.subr.bf16.mxu0 0
        %1853 = vmatpush2.bf16.msra.mxu0 0
        %1854 = vmatprep.mubr.bf16.mxu0 0
        %1855 = vmatmul.mubr.bf16.gmra.mxu0 %v1757
        %v1856 = vpop.f32.mrf.mxu0
        %v1857 = vadd.f32 0.0, %v1856
        %v1858 = vpop.f32.mrf.mxu0
        %v1859 = vpop.f32.mrf.mxu0
        %v1860 = vadd.f32 0.0, %v1859
        %v1861 = vpop.f32.mrf.mxu0
        %1862 = vdwg.mxu0
        %v1863 = vld [vmem:[%s7] sm:$0x1]
        %v1865 = vlaneseq
        %v1866 = vshrl.u32 %v1865, 7
        %v1867 = vsub.s32 0, %v1866
        %v1868 = vrot.slane %v1863, %v1867
        %v1870 = vmul.f32 %v1857, %v1868
        %v1871 = vmul.f32 %v1860, %v1868
        %v1872 = vld [vmem:[%s8] sm:$0x1]
        %v1874 = vlaneseq
        %v1875 = vshrl.u32 %v1874, 7
        %v1876 = vsub.s32 0, %v1875
        %v1877 = vrot.slane %v1872, %v1876
        %v1879 = vadd.f32 %v1870, %v1877
        %v1880 = vadd.f32 %v1871, %v1877
        %vm1881 = vcmp.ge.f32.partialorder %v1879, 0.0
        %vm1882 = vcmp.ge.f32.partialorder %v1880, 0.0
        %v1883 = vmul.f32 %v1879, 0.01
        %v1884 = vmul.f32 %v1880, 0.01
        %v1885 = vsel %vm1881, %v1879, %v1883
        %v1886 = vsel %vm1882, %v1880, %v1884
        %1887 = vst [vmem:[#allocation3] sm:$0xff] 0.0
        %1888 = vst [vmem:[#allocation3 + $0x8] sm:$0xff] 0.0
        %1889 = vst [vmem:[#allocation3 + $0x10] sm:$0xff] 0.0
        %1890 = vst [vmem:[#allocation3 + $0x4] sm:$0xff] %v1885
        %1891 = vst [vmem:[#allocation3 + $0xc] sm:$0xff] %v1886
        %v1892 = vld [vmem:[#allocation3] sm:$0xff]
        %v1893 = vld [vmem:[#allocation3 + $0x8] sm:$0xff]
        %v1894 = vpack.c.bf16 %v1893, %v1892
        %v1895 = vld [vmem:[#allocation8] sm:$0xff]
        %v1896 = vld [vmem:[#allocation8 + $0x8] sm:$0xff]
        %v1897 = vld [vmem:[#allocation8 + $0x10] sm:$0xff]
        %v1898 = vld [vmem:[#allocation8 + $0x18] sm:$0xff]
        %v1899 = vld [vmem:[#allocation8 + $0x20] sm:$0xff]
        %v1900 = vld [vmem:[#allocation8 + $0x28] sm:$0xff]
        %v1901 = vld [vmem:[#allocation8 + $0x30] sm:$0xff]
        %v1902 = vld [vmem:[#allocation8 + $0x38] sm:$0xff]
        %v1903 = vld [vmem:[#allocation8 + $0x40] sm:$0xff]
        %v1904 = vld [vmem:[#allocation8 + $0x48] sm:$0xff]
        %v1905 = vld [vmem:[#allocation8 + $0x50] sm:$0xff]
        %v1906 = vld [vmem:[#allocation8 + $0x58] sm:$0xff]
        %v1907 = vld [vmem:[#allocation8 + $0x60] sm:$0xff]
        %v1908 = vld [vmem:[#allocation8 + $0x68] sm:$0xff]
        %v1909 = vld [vmem:[#allocation8 + $0x70] sm:$0xff]
        %v1910 = vld [vmem:[#allocation8 + $0x78] sm:$0xff]
        %v1911 = vld [vmem:[#allocation3 + $0x1] sm:$0xff]
        %v1912 = vld [vmem:[#allocation3 + $0x9] sm:$0xff]
        %v1913 = vpack.c.bf16 %v1912, %v1911
        %s1914 = scalar_lea.vmem [#allocation8], 128
        %v1915 = vld [vmem:[%s1914] sm:$0xff]
        %v1916 = vld [vmem:[%s1914 + $0x8] sm:$0xff]
        %v1917 = vld [vmem:[%s1914 + $0x10] sm:$0xff]
        %v1918 = vld [vmem:[%s1914 + $0x18] sm:$0xff]
        %v1919 = vld [vmem:[%s1914 + $0x20] sm:$0xff]
        %v1920 = vld [vmem:[%s1914 + $0x28] sm:$0xff]
        %v1921 = vld [vmem:[%s1914 + $0x30] sm:$0xff]
        %v1922 = vld [vmem:[%s1914 + $0x38] sm:$0xff]
        %v1923 = vld [vmem:[%s1914 + $0x40] sm:$0xff]
        %v1924 = vld [vmem:[%s1914 + $0x48] sm:$0xff]
        %v1925 = vld [vmem:[%s1914 + $0x50] sm:$0xff]
        %v1926 = vld [vmem:[%s1914 + $0x58] sm:$0xff]
        %v1927 = vld [vmem:[%s1914 + $0x60] sm:$0xff]
        %v1928 = vld [vmem:[%s1914 + $0x68] sm:$0xff]
        %v1929 = vld [vmem:[%s1914 + $0x70] sm:$0xff]
        %v1930 = vld [vmem:[%s1914 + $0x78] sm:$0xff]
        %v1947 = vunpack.c.l.b16 %v1915
        %v1948 = vunpack.c.h.b16 %v1915
        %v1949 = vunpack.c.l.b16 %v1916
        %v1950 = vunpack.c.h.b16 %v1916
        %v1951 = vunpack.c.l.b16 %v1917
        %v1952 = vunpack.c.h.b16 %v1917
        %v1953 = vunpack.c.l.b16 %v1918
        %v1954 = vunpack.c.h.b16 %v1918
        %v1955 = vunpack.c.l.b16 %v1919
        %v1956 = vunpack.c.h.b16 %v1919
        %v1957 = vunpack.c.l.b16 %v1920
        %v1958 = vunpack.c.h.b16 %v1920
        %v1959 = vunpack.c.l.b16 %v1921
        %v1960 = vunpack.c.h.b16 %v1921
        %v1961 = vunpack.c.l.b16 %v1922
        %v1962 = vunpack.c.h.b16 %v1922
        %v1963 = vunpack.c.l.b16 %v1923
        %v1964 = vunpack.c.h.b16 %v1923
        %v1965 = vunpack.c.l.b16 %v1924
        %v1966 = vunpack.c.h.b16 %v1924
        %v1967 = vunpack.c.l.b16 %v1925
        %v1968 = vunpack.c.h.b16 %v1925
        %v1969 = vunpack.c.l.b16 %v1926
        %v1970 = vunpack.c.h.b16 %v1926
        %v1971 = vunpack.c.l.b16 %v1927
        %v1972 = vunpack.c.h.b16 %v1927
        %v1973 = vunpack.c.l.b16 %v1928
        %v1974 = vunpack.c.h.b16 %v1928
        %v1975 = vunpack.c.l.b16 %v1929
        %v1976 = vunpack.c.h.b16 %v1929
        %v1977 = vunpack.c.l.b16 %v1930
        %v1978 = vunpack.c.h.b16 %v1930
        %v1979 = vpack.c.b16 %v1949, %v1947
        %v1980 = vpack.c.b16 %v1950, %v1948
        %v1981 = vpack.c.b16 %v1953, %v1951
        %v1982 = vpack.c.b16 %v1954, %v1952
        %v1983 = vpack.c.b16 %v1957, %v1955
        %v1984 = vpack.c.b16 %v1958, %v1956
        %v1985 = vpack.c.b16 %v1961, %v1959
        %v1986 = vpack.c.b16 %v1962, %v1960
        %v1987 = vpack.c.b16 %v1965, %v1963
        %v1988 = vpack.c.b16 %v1966, %v1964
        %v1989 = vpack.c.b16 %v1969, %v1967
        %v1990 = vpack.c.b16 %v1970, %v1968
        %v1991 = vpack.c.b16 %v1973, %v1971
        %v1992 = vpack.c.b16 %v1974, %v1972
        %v1993 = vpack.c.b16 %v1977, %v1975
        %v1994 = vpack.c.b16 %v1978, %v1976
        %2011 = vmatprep.subr.bf16.mxu0 %v1994
        %2012 = vmatpush1.bf16.msra.mxu0 %v1993
        %2013 = vmatprep.subr.bf16.mxu0 %v1992
        %2014 = vmatpush1.bf16.msra.mxu0 %v1991
        %2015 = vmatprep.subr.bf16.mxu0 %v1990
        %2016 = vmatpush1.bf16.msra.mxu0 %v1989
        %2017 = vmatprep.subr.bf16.mxu0 %v1988
        %2018 = vmatpush1.bf16.msra.mxu0 %v1987
        %2019 = vmatprep.subr.bf16.mxu0 %v1986
        %2020 = vmatpush1.bf16.msra.mxu0 %v1985
        %2021 = vmatprep.subr.bf16.mxu0 %v1984
        %2022 = vmatpush1.bf16.msra.mxu0 %v1983
        %2023 = vmatprep.subr.bf16.mxu0 %v1982
        %2024 = vmatpush1.bf16.msra.mxu0 %v1981
        %2025 = vmatprep.subr.bf16.mxu0 %v1980
        %2026 = vmatpush1.bf16.msra.mxu0 %v1979
        %2027 = vmatprep.subr.bf16.mxu0 0
        %2028 = vmatpush2.bf16.msra.mxu0 0
        %2029 = vmatprep.subr.bf16.mxu0 0
        %2030 = vmatpush2.bf16.msra.mxu0 0
        %2031 = vmatprep.subr.bf16.mxu0 0
        %2032 = vmatpush2.bf16.msra.mxu0 0
        %2033 = vmatprep.subr.bf16.mxu0 0
        %2034 = vmatpush2.bf16.msra.mxu0 0
        %2035 = vmatprep.subr.bf16.mxu0 0
        %2036 = vmatpush2.bf16.msra.mxu0 0
        %2037 = vmatprep.subr.bf16.mxu0 0
        %2038 = vmatpush2.bf16.msra.mxu0 0
        %2039 = vmatprep.subr.bf16.mxu0 0
        %2040 = vmatpush2.bf16.msra.mxu0 0
        %2041 = vmatprep.subr.bf16.mxu0 0
        %2042 = vmatpush2.bf16.msra.mxu0 0
        %2043 = vmatprep.mubr.bf16.mxu0 0
        %2044 = vmatmul.mubr.bf16.gmra.mxu0 %v1913
        %v2045 = vpop.f32.mrf.mxu0
        %v2046 = vadd.f32 0.0, %v2045
        %v2047 = vpop.f32.mrf.mxu0
        %v2048 = vadd.f32 0.0, %v2047
        %v2049 = vpop.f32.mrf.mxu0
        %v2050 = vadd.f32 0.0, %v2049
        %v2051 = vpop.f32.mrf.mxu0
        %v2052 = vadd.f32 0.0, %v2051
        %2053 = vdwg.mxu0
        %v2070 = vunpack.c.l.b16 %v1895
        %v2071 = vunpack.c.h.b16 %v1895
        %v2072 = vunpack.c.l.b16 %v1896
        %v2073 = vunpack.c.h.b16 %v1896
        %v2074 = vunpack.c.l.b16 %v1897
        %v2075 = vunpack.c.h.b16 %v1897
        %v2076 = vunpack.c.l.b16 %v1898
        %v2077 = vunpack.c.h.b16 %v1898
        %v2078 = vunpack.c.l.b16 %v1899
        %v2079 = vunpack.c.h.b16 %v1899
        %v2080 = vunpack.c.l.b16 %v1900
        %v2081 = vunpack.c.h.b16 %v1900
        %v2082 = vunpack.c.l.b16 %v1901
        %v2083 = vunpack.c.h.b16 %v1901
        %v2084 = vunpack.c.l.b16 %v1902
        %v2085 = vunpack.c.h.b16 %v1902
        %v2086 = vunpack.c.l.b16 %v1903
        %v2087 = vunpack.c.h.b16 %v1903
        %v2088 = vunpack.c.l.b16 %v1904
        %v2089 = vunpack.c.h.b16 %v1904
        %v2090 = vunpack.c.l.b16 %v1905
        %v2091 = vunpack.c.h.b16 %v1905
        %v2092 = vunpack.c.l.b16 %v1906
        %v2093 = vunpack.c.h.b16 %v1906
        %v2094 = vunpack.c.l.b16 %v1907
        %v2095 = vunpack.c.h.b16 %v1907
        %v2096 = vunpack.c.l.b16 %v1908
        %v2097 = vunpack.c.h.b16 %v1908
        %v2098 = vunpack.c.l.b16 %v1909
        %v2099 = vunpack.c.h.b16 %v1909
        %v2100 = vunpack.c.l.b16 %v1910
        %v2101 = vunpack.c.h.b16 %v1910
        %v2102 = vpack.c.b16 %v2072, %v2070
        %v2103 = vpack.c.b16 %v2073, %v2071
        %v2104 = vpack.c.b16 %v2076, %v2074
        %v2105 = vpack.c.b16 %v2077, %v2075
        %v2106 = vpack.c.b16 %v2080, %v2078
        %v2107 = vpack.c.b16 %v2081, %v2079
        %v2108 = vpack.c.b16 %v2084, %v2082
        %v2109 = vpack.c.b16 %v2085, %v2083
        %v2110 = vpack.c.b16 %v2088, %v2086
        %v2111 = vpack.c.b16 %v2089, %v2087
        %v2112 = vpack.c.b16 %v2092, %v2090
        %v2113 = vpack.c.b16 %v2093, %v2091
        %v2114 = vpack.c.b16 %v2096, %v2094
        %v2115 = vpack.c.b16 %v2097, %v2095
        %v2116 = vpack.c.b16 %v2100, %v2098
        %v2117 = vpack.c.b16 %v2101, %v2099
        %2134 = vmatprep.subr.bf16.mxu0 %v2117
        %2135 = vmatpush1.bf16.msra.mxu0 %v2116
        %2136 = vmatprep.subr.bf16.mxu0 %v2115
        %2137 = vmatpush1.bf16.msra.mxu0 %v2114
        %2138 = vmatprep.subr.bf16.mxu0 %v2113
        %2139 = vmatpush1.bf16.msra.mxu0 %v2112
        %2140 = vmatprep.subr.bf16.mxu0 %v2111
        %2141 = vmatpush1.bf16.msra.mxu0 %v2110
        %2142 = vmatprep.subr.bf16.mxu0 %v2109
        %2143 = vmatpush1.bf16.msra.mxu0 %v2108
        %2144 = vmatprep.subr.bf16.mxu0 %v2107
        %2145 = vmatpush1.bf16.msra.mxu0 %v2106
        %2146 = vmatprep.subr.bf16.mxu0 %v2105
        %2147 = vmatpush1.bf16.msra.mxu0 %v2104
        %2148 = vmatprep.subr.bf16.mxu0 %v2103
        %2149 = vmatpush1.bf16.msra.mxu0 %v2102
        %2150 = vmatprep.subr.bf16.mxu0 0
        %2151 = vmatpush2.bf16.msra.mxu0 0
        %2152 = vmatprep.subr.bf16.mxu0 0
        %2153 = vmatpush2.bf16.msra.mxu0 0
        %2154 = vmatprep.subr.bf16.mxu0 0
        %2155 = vmatpush2.bf16.msra.mxu0 0
        %2156 = vmatprep.subr.bf16.mxu0 0
        %2157 = vmatpush2.bf16.msra.mxu0 0
        %2158 = vmatprep.subr.bf16.mxu0 0
        %2159 = vmatpush2.bf16.msra.mxu0 0
        %2160 = vmatprep.subr.bf16.mxu0 0
        %2161 = vmatpush2.bf16.msra.mxu0 0
        %2162 = vmatprep.subr.bf16.mxu0 0
        %2163 = vmatpush2.bf16.msra.mxu0 0
        %2164 = vmatprep.subr.bf16.mxu0 0
        %2165 = vmatpush2.bf16.msra.mxu0 0
        %2166 = vmatprep.mubr.bf16.mxu0 0
        %2167 = vmatmul.mubr.bf16.gmra.mxu0 %v1894
        %v2168 = vpop.f32.mrf.mxu0
        %v2169 = vadd.f32 %v2046, %v2168
        %v2170 = vpop.f32.mrf.mxu0
        %v2171 = vadd.f32 %v2048, %v2170
        %v2172 = vpop.f32.mrf.mxu0
        %v2173 = vadd.f32 %v2050, %v2172
        %v2174 = vpop.f32.mrf.mxu0
        %v2175 = vadd.f32 %v2052, %v2174
        %2176 = vdwg.mxu0
        %v2177 = vld [vmem:[#allocation3 + $0x2] sm:$0xff]
        %v2178 = vld [vmem:[#allocation3 + $0xa] sm:$0xff]
        %v2179 = vpack.c.bf16 %v2178, %v2177
        %s2180 = scalar_lea.vmem [#allocation8], 256
        %v2181 = vld [vmem:[%s2180] sm:$0xff]
        %v2182 = vld [vmem:[%s2180 + $0x8] sm:$0xff]
        %v2183 = vld [vmem:[%s2180 + $0x10] sm:$0xff]
        %v2184 = vld [vmem:[%s2180 + $0x18] sm:$0xff]
        %v2185 = vld [vmem:[%s2180 + $0x20] sm:$0xff]
        %v2186 = vld [vmem:[%s2180 + $0x28] sm:$0xff]
        %v2187 = vld [vmem:[%s2180 + $0x30] sm:$0xff]
        %v2188 = vld [vmem:[%s2180 + $0x38] sm:$0xff]
        %v2189 = vld [vmem:[%s2180 + $0x40] sm:$0xff]
        %v2190 = vld [vmem:[%s2180 + $0x48] sm:$0xff]
        %v2191 = vld [vmem:[%s2180 + $0x50] sm:$0xff]
        %v2192 = vld [vmem:[%s2180 + $0x58] sm:$0xff]
        %v2193 = vld [vmem:[%s2180 + $0x60] sm:$0xff]
        %v2194 = vld [vmem:[%s2180 + $0x68] sm:$0xff]
        %v2195 = vld [vmem:[%s2180 + $0x70] sm:$0xff]
        %v2196 = vld [vmem:[%s2180 + $0x78] sm:$0xff]
        %v2213 = vunpack.c.l.b16 %v2181
        %v2214 = vunpack.c.h.b16 %v2181
        %v2215 = vunpack.c.l.b16 %v2182
        %v2216 = vunpack.c.h.b16 %v2182
        %v2217 = vunpack.c.l.b16 %v2183
        %v2218 = vunpack.c.h.b16 %v2183
        %v2219 = vunpack.c.l.b16 %v2184
        %v2220 = vunpack.c.h.b16 %v2184
        %v2221 = vunpack.c.l.b16 %v2185
        %v2222 = vunpack.c.h.b16 %v2185
        %v2223 = vunpack.c.l.b16 %v2186
        %v2224 = vunpack.c.h.b16 %v2186
        %v2225 = vunpack.c.l.b16 %v2187
        %v2226 = vunpack.c.h.b16 %v2187
        %v2227 = vunpack.c.l.b16 %v2188
        %v2228 = vunpack.c.h.b16 %v2188
        %v2229 = vunpack.c.l.b16 %v2189
        %v2230 = vunpack.c.h.b16 %v2189
        %v2231 = vunpack.c.l.b16 %v2190
        %v2232 = vunpack.c.h.b16 %v2190
        %v2233 = vunpack.c.l.b16 %v2191
        %v2234 = vunpack.c.h.b16 %v2191
        %v2235 = vunpack.c.l.b16 %v2192
        %v2236 = vunpack.c.h.b16 %v2192
        %v2237 = vunpack.c.l.b16 %v2193
        %v2238 = vunpack.c.h.b16 %v2193
        %v2239 = vunpack.c.l.b16 %v2194
        %v2240 = vunpack.c.h.b16 %v2194
        %v2241 = vunpack.c.l.b16 %v2195
        %v2242 = vunpack.c.h.b16 %v2195
        %v2243 = vunpack.c.l.b16 %v2196
        %v2244 = vunpack.c.h.b16 %v2196
        %v2245 = vpack.c.b16 %v2215, %v2213
        %v2246 = vpack.c.b16 %v2216, %v2214
        %v2247 = vpack.c.b16 %v2219, %v2217
        %v2248 = vpack.c.b16 %v2220, %v2218
        %v2249 = vpack.c.b16 %v2223, %v2221
        %v2250 = vpack.c.b16 %v2224, %v2222
        %v2251 = vpack.c.b16 %v2227, %v2225
        %v2252 = vpack.c.b16 %v2228, %v2226
        %v2253 = vpack.c.b16 %v2231, %v2229
        %v2254 = vpack.c.b16 %v2232, %v2230
        %v2255 = vpack.c.b16 %v2235, %v2233
        %v2256 = vpack.c.b16 %v2236, %v2234
        %v2257 = vpack.c.b16 %v2239, %v2237
        %v2258 = vpack.c.b16 %v2240, %v2238
        %v2259 = vpack.c.b16 %v2243, %v2241
        %v2260 = vpack.c.b16 %v2244, %v2242
        %2277 = vmatprep.subr.bf16.mxu0 %v2260
        %2278 = vmatpush1.bf16.msra.mxu0 %v2259
        %2279 = vmatprep.subr.bf16.mxu0 %v2258
        %2280 = vmatpush1.bf16.msra.mxu0 %v2257
        %2281 = vmatprep.subr.bf16.mxu0 %v2256
        %2282 = vmatpush1.bf16.msra.mxu0 %v2255
        %2283 = vmatprep.subr.bf16.mxu0 %v2254
        %2284 = vmatpush1.bf16.msra.mxu0 %v2253
        %2285 = vmatprep.subr.bf16.mxu0 %v2252
        %2286 = vmatpush1.bf16.msra.mxu0 %v2251
        %2287 = vmatprep.subr.bf16.mxu0 %v2250
        %2288 = vmatpush1.bf16.msra.mxu0 %v2249
        %2289 = vmatprep.subr.bf16.mxu0 %v2248
        %2290 = vmatpush1.bf16.msra.mxu0 %v2247
        %2291 = vmatprep.subr.bf16.mxu0 %v2246
        %2292 = vmatpush1.bf16.msra.mxu0 %v2245
        %2293 = vmatprep.subr.bf16.mxu0 0
        %2294 = vmatpush2.bf16.msra.mxu0 0
        %2295 = vmatprep.subr.bf16.mxu0 0
        %2296 = vmatpush2.bf16.msra.mxu0 0
        %2297 = vmatprep.subr.bf16.mxu0 0
        %2298 = vmatpush2.bf16.msra.mxu0 0
        %2299 = vmatprep.subr.bf16.mxu0 0
        %2300 = vmatpush2.bf16.msra.mxu0 0
        %2301 = vmatprep.subr.bf16.mxu0 0
        %2302 = vmatpush2.bf16.msra.mxu0 0
        %2303 = vmatprep.subr.bf16.mxu0 0
        %2304 = vmatpush2.bf16.msra.mxu0 0
        %2305 = vmatprep.subr.bf16.mxu0 0
        %2306 = vmatpush2.bf16.msra.mxu0 0
        %2307 = vmatprep.subr.bf16.mxu0 0
        %2308 = vmatpush2.bf16.msra.mxu0 0
        %2309 = vmatprep.mubr.bf16.mxu0 0
        %2310 = vmatmul.mubr.bf16.gmra.mxu0 %v2179
        %v2311 = vpop.f32.mrf.mxu0
        %v2312 = vadd.f32 0.0, %v2311
        %v2313 = vpop.f32.mrf.mxu0
        %v2314 = vadd.f32 0.0, %v2313
        %v2315 = vpop.f32.mrf.mxu0
        %v2316 = vadd.f32 0.0, %v2315
        %v2317 = vpop.f32.mrf.mxu0
        %v2318 = vadd.f32 0.0, %v2317
        %2319 = vdwg.mxu0
        %v2320 = vadd.f32 %v2169, %v2312
        %v2321 = vadd.f32 %v2171, %v2314
        %v2322 = vadd.f32 %v2173, %v2316
        %v2323 = vadd.f32 %v2175, %v2318
        %v2324 = vld [vmem:[#allocation3 + $0x3] sm:$0xff]
        %v2325 = vld [vmem:[#allocation3 + $0xb] sm:$0xff]
        %v2326 = vpack.c.bf16 %v2325, %v2324
        %s2327 = scalar_lea.vmem [#allocation8], 384
        %v2328 = vld [vmem:[%s2327] sm:$0xff]
        %v2329 = vld [vmem:[%s2327 + $0x8] sm:$0xff]
        %v2330 = vld [vmem:[%s2327 + $0x10] sm:$0xff]
        %v2331 = vld [vmem:[%s2327 + $0x18] sm:$0xff]
        %v2332 = vld [vmem:[%s2327 + $0x20] sm:$0xff]
        %v2333 = vld [vmem:[%s2327 + $0x28] sm:$0xff]
        %v2334 = vld [vmem:[%s2327 + $0x30] sm:$0xff]
        %v2335 = vld [vmem:[%s2327 + $0x38] sm:$0xff]
        %v2336 = vld [vmem:[%s2327 + $0x40] sm:$0xff]
        %v2337 = vld [vmem:[%s2327 + $0x48] sm:$0xff]
        %v2338 = vld [vmem:[%s2327 + $0x50] sm:$0xff]
        %v2339 = vld [vmem:[%s2327 + $0x58] sm:$0xff]
        %v2340 = vld [vmem:[%s2327 + $0x60] sm:$0xff]
        %v2341 = vld [vmem:[%s2327 + $0x68] sm:$0xff]
        %v2342 = vld [vmem:[%s2327 + $0x70] sm:$0xff]
        %v2343 = vld [vmem:[%s2327 + $0x78] sm:$0xff]
        %v2360 = vunpack.c.l.b16 %v2328
        %v2361 = vunpack.c.h.b16 %v2328
        %v2362 = vunpack.c.l.b16 %v2329
        %v2363 = vunpack.c.h.b16 %v2329
        %v2364 = vunpack.c.l.b16 %v2330
        %v2365 = vunpack.c.h.b16 %v2330
        %v2366 = vunpack.c.l.b16 %v2331
        %v2367 = vunpack.c.h.b16 %v2331
        %v2368 = vunpack.c.l.b16 %v2332
        %v2369 = vunpack.c.h.b16 %v2332
        %v2370 = vunpack.c.l.b16 %v2333
        %v2371 = vunpack.c.h.b16 %v2333
        %v2372 = vunpack.c.l.b16 %v2334
        %v2373 = vunpack.c.h.b16 %v2334
        %v2374 = vunpack.c.l.b16 %v2335
        %v2375 = vunpack.c.h.b16 %v2335
        %v2376 = vunpack.c.l.b16 %v2336
        %v2377 = vunpack.c.h.b16 %v2336
        %v2378 = vunpack.c.l.b16 %v2337
        %v2379 = vunpack.c.h.b16 %v2337
        %v2380 = vunpack.c.l.b16 %v2338
        %v2381 = vunpack.c.h.b16 %v2338
        %v2382 = vunpack.c.l.b16 %v2339
        %v2383 = vunpack.c.h.b16 %v2339
        %v2384 = vunpack.c.l.b16 %v2340
        %v2385 = vunpack.c.h.b16 %v2340
        %v2386 = vunpack.c.l.b16 %v2341
        %v2387 = vunpack.c.h.b16 %v2341
        %v2388 = vunpack.c.l.b16 %v2342
        %v2389 = vunpack.c.h.b16 %v2342
        %v2390 = vunpack.c.l.b16 %v2343
        %v2391 = vunpack.c.h.b16 %v2343
        %v2392 = vpack.c.b16 %v2362, %v2360
        %v2393 = vpack.c.b16 %v2363, %v2361
        %v2394 = vpack.c.b16 %v2366, %v2364
        %v2395 = vpack.c.b16 %v2367, %v2365
        %v2396 = vpack.c.b16 %v2370, %v2368
        %v2397 = vpack.c.b16 %v2371, %v2369
        %v2398 = vpack.c.b16 %v2374, %v2372
        %v2399 = vpack.c.b16 %v2375, %v2373
        %v2400 = vpack.c.b16 %v2378, %v2376
        %v2401 = vpack.c.b16 %v2379, %v2377
        %v2402 = vpack.c.b16 %v2382, %v2380
        %v2403 = vpack.c.b16 %v2383, %v2381
        %v2404 = vpack.c.b16 %v2386, %v2384
        %v2405 = vpack.c.b16 %v2387, %v2385
        %v2406 = vpack.c.b16 %v2390, %v2388
        %v2407 = vpack.c.b16 %v2391, %v2389
        %2424 = vmatprep.subr.bf16.mxu0 %v2407
        %2425 = vmatpush1.bf16.msra.mxu0 %v2406
        %2426 = vmatprep.subr.bf16.mxu0 %v2405
        %2427 = vmatpush1.bf16.msra.mxu0 %v2404
        %2428 = vmatprep.subr.bf16.mxu0 %v2403
        %2429 = vmatpush1.bf16.msra.mxu0 %v2402
        %2430 = vmatprep.subr.bf16.mxu0 %v2401
        %2431 = vmatpush1.bf16.msra.mxu0 %v2400
        %2432 = vmatprep.subr.bf16.mxu0 %v2399
        %2433 = vmatpush1.bf16.msra.mxu0 %v2398
        %2434 = vmatprep.subr.bf16.mxu0 %v2397
        %2435 = vmatpush1.bf16.msra.mxu0 %v2396
        %2436 = vmatprep.subr.bf16.mxu0 %v2395
        %2437 = vmatpush1.bf16.msra.mxu0 %v2394
        %2438 = vmatprep.subr.bf16.mxu0 %v2393
        %2439 = vmatpush1.bf16.msra.mxu0 %v2392
        %2440 = vmatprep.subr.bf16.mxu0 0
        %2441 = vmatpush2.bf16.msra.mxu0 0
        %2442 = vmatprep.subr.bf16.mxu0 0
        %2443 = vmatpush2.bf16.msra.mxu0 0
        %2444 = vmatprep.subr.bf16.mxu0 0
        %2445 = vmatpush2.bf16.msra.mxu0 0
        %2446 = vmatprep.subr.bf16.mxu0 0
        %2447 = vmatpush2.bf16.msra.mxu0 0
        %2448 = vmatprep.subr.bf16.mxu0 0
        %2449 = vmatpush2.bf16.msra.mxu0 0
        %2450 = vmatprep.subr.bf16.mxu0 0
        %2451 = vmatpush2.bf16.msra.mxu0 0
        %2452 = vmatprep.subr.bf16.mxu0 0
        %2453 = vmatpush2.bf16.msra.mxu0 0
        %2454 = vmatprep.subr.bf16.mxu0 0
        %2455 = vmatpush2.bf16.msra.mxu0 0
        %2456 = vmatprep.mubr.bf16.mxu0 0
        %2457 = vmatmul.mubr.bf16.gmra.mxu0 %v2326
        %v2458 = vpop.f32.mrf.mxu0
        %v2459 = vadd.f32 0.0, %v2458
        %v2460 = vpop.f32.mrf.mxu0
        %v2461 = vadd.f32 0.0, %v2460
        %v2462 = vpop.f32.mrf.mxu0
        %v2463 = vadd.f32 0.0, %v2462
        %v2464 = vpop.f32.mrf.mxu0
        %v2465 = vadd.f32 0.0, %v2464
        %2466 = vdwg.mxu0
        %v2467 = vadd.f32 %v2320, %v2459
        %v2468 = vadd.f32 %v2321, %v2461
        %v2469 = vadd.f32 %v2322, %v2463
        %v2470 = vadd.f32 %v2323, %v2465
        %v2471 = vld [vmem:[#allocation3 + $0x4] sm:$0xff]
        %v2472 = vld [vmem:[#allocation3 + $0xc] sm:$0xff]
        %v2473 = vpack.c.bf16 %v2472, %v2471
        %s2474 = scalar_lea.vmem [#allocation8], 512
        %v2475 = vld [vmem:[%s2474] sm:$0xff]
        %v2476 = vld [vmem:[%s2474 + $0x8] sm:$0xff]
        %v2477 = vld [vmem:[%s2474 + $0x10] sm:$0xff]
        %v2478 = vld [vmem:[%s2474 + $0x18] sm:$0xff]
        %v2479 = vld [vmem:[%s2474 + $0x20] sm:$0xff]
        %v2480 = vld [vmem:[%s2474 + $0x28] sm:$0xff]
        %v2481 = vld [vmem:[%s2474 + $0x30] sm:$0xff]
        %v2482 = vld [vmem:[%s2474 + $0x38] sm:$0xff]
        %v2483 = vld [vmem:[%s2474 + $0x40] sm:$0xff]
        %v2484 = vld [vmem:[%s2474 + $0x48] sm:$0xff]
        %v2485 = vld [vmem:[%s2474 + $0x50] sm:$0xff]
        %v2486 = vld [vmem:[%s2474 + $0x58] sm:$0xff]
        %v2487 = vld [vmem:[%s2474 + $0x60] sm:$0xff]
        %v2488 = vld [vmem:[%s2474 + $0x68] sm:$0xff]
        %v2489 = vld [vmem:[%s2474 + $0x70] sm:$0xff]
        %v2490 = vld [vmem:[%s2474 + $0x78] sm:$0xff]
        %v2507 = vunpack.c.l.b16 %v2475
        %v2508 = vunpack.c.h.b16 %v2475
        %v2509 = vunpack.c.l.b16 %v2476
        %v2510 = vunpack.c.h.b16 %v2476
        %v2511 = vunpack.c.l.b16 %v2477
        %v2512 = vunpack.c.h.b16 %v2477
        %v2513 = vunpack.c.l.b16 %v2478
        %v2514 = vunpack.c.h.b16 %v2478
        %v2515 = vunpack.c.l.b16 %v2479
        %v2516 = vunpack.c.h.b16 %v2479
        %v2517 = vunpack.c.l.b16 %v2480
        %v2518 = vunpack.c.h.b16 %v2480
        %v2519 = vunpack.c.l.b16 %v2481
        %v2520 = vunpack.c.h.b16 %v2481
        %v2521 = vunpack.c.l.b16 %v2482
        %v2522 = vunpack.c.h.b16 %v2482
        %v2523 = vunpack.c.l.b16 %v2483
        %v2524 = vunpack.c.h.b16 %v2483
        %v2525 = vunpack.c.l.b16 %v2484
        %v2526 = vunpack.c.h.b16 %v2484
        %v2527 = vunpack.c.l.b16 %v2485
        %v2528 = vunpack.c.h.b16 %v2485
        %v2529 = vunpack.c.l.b16 %v2486
        %v2530 = vunpack.c.h.b16 %v2486
        %v2531 = vunpack.c.l.b16 %v2487
        %v2532 = vunpack.c.h.b16 %v2487
        %v2533 = vunpack.c.l.b16 %v2488
        %v2534 = vunpack.c.h.b16 %v2488
        %v2535 = vunpack.c.l.b16 %v2489
        %v2536 = vunpack.c.h.b16 %v2489
        %v2537 = vunpack.c.l.b16 %v2490
        %v2538 = vunpack.c.h.b16 %v2490
        %v2539 = vpack.c.b16 %v2509, %v2507
        %v2540 = vpack.c.b16 %v2510, %v2508
        %v2541 = vpack.c.b16 %v2513, %v2511
        %v2542 = vpack.c.b16 %v2514, %v2512
        %v2543 = vpack.c.b16 %v2517, %v2515
        %v2544 = vpack.c.b16 %v2518, %v2516
        %v2545 = vpack.c.b16 %v2521, %v2519
        %v2546 = vpack.c.b16 %v2522, %v2520
        %v2547 = vpack.c.b16 %v2525, %v2523
        %v2548 = vpack.c.b16 %v2526, %v2524
        %v2549 = vpack.c.b16 %v2529, %v2527
        %v2550 = vpack.c.b16 %v2530, %v2528
        %v2551 = vpack.c.b16 %v2533, %v2531
        %v2552 = vpack.c.b16 %v2534, %v2532
        %v2553 = vpack.c.b16 %v2537, %v2535
        %v2554 = vpack.c.b16 %v2538, %v2536
        %2571 = vmatprep.subr.bf16.mxu0 %v2554
        %2572 = vmatpush1.bf16.msra.mxu0 %v2553
        %2573 = vmatprep.subr.bf16.mxu0 %v2552
        %2574 = vmatpush1.bf16.msra.mxu0 %v2551
        %2575 = vmatprep.subr.bf16.mxu0 %v2550
        %2576 = vmatpush1.bf16.msra.mxu0 %v2549
        %2577 = vmatprep.subr.bf16.mxu0 %v2548
        %2578 = vmatpush1.bf16.msra.mxu0 %v2547
        %2579 = vmatprep.subr.bf16.mxu0 %v2546
        %2580 = vmatpush1.bf16.msra.mxu0 %v2545
        %2581 = vmatprep.subr.bf16.mxu0 %v2544
        %2582 = vmatpush1.bf16.msra.mxu0 %v2543
        %2583 = vmatprep.subr.bf16.mxu0 %v2542
        %2584 = vmatpush1.bf16.msra.mxu0 %v2541
        %2585 = vmatprep.subr.bf16.mxu0 %v2540
        %2586 = vmatpush1.bf16.msra.mxu0 %v2539
        %2587 = vmatprep.subr.bf16.mxu0 0
        %2588 = vmatpush2.bf16.msra.mxu0 0
        %2589 = vmatprep.subr.bf16.mxu0 0
        %2590 = vmatpush2.bf16.msra.mxu0 0
        %2591 = vmatprep.subr.bf16.mxu0 0
        %2592 = vmatpush2.bf16.msra.mxu0 0
        %2593 = vmatprep.subr.bf16.mxu0 0
        %2594 = vmatpush2.bf16.msra.mxu0 0
        %2595 = vmatprep.subr.bf16.mxu0 0
        %2596 = vmatpush2.bf16.msra.mxu0 0
        %2597 = vmatprep.subr.bf16.mxu0 0
        %2598 = vmatpush2.bf16.msra.mxu0 0
        %2599 = vmatprep.subr.bf16.mxu0 0
        %2600 = vmatpush2.bf16.msra.mxu0 0
        %2601 = vmatprep.subr.bf16.mxu0 0
        %2602 = vmatpush2.bf16.msra.mxu0 0
        %2603 = vmatprep.mubr.bf16.mxu0 0
        %2604 = vmatmul.mubr.bf16.gmra.mxu0 %v2473
        %v2605 = vpop.f32.mrf.mxu0
        %v2606 = vadd.f32 0.0, %v2605
        %v2607 = vpop.f32.mrf.mxu0
        %v2608 = vadd.f32 0.0, %v2607
        %v2609 = vpop.f32.mrf.mxu0
        %v2610 = vadd.f32 0.0, %v2609
        %v2611 = vpop.f32.mrf.mxu0
        %v2612 = vadd.f32 0.0, %v2611
        %2613 = vdwg.mxu0
        %v2614 = vadd.f32 %v2467, %v2606
        %v2615 = vadd.f32 %v2468, %v2608
        %v2616 = vadd.f32 %v2469, %v2610
        %v2617 = vadd.f32 %v2470, %v2612
        %v2618 = vld [vmem:[#allocation3 + $0x5] sm:$0xff]
        %v2619 = vld [vmem:[#allocation3 + $0xd] sm:$0xff]
        %v2620 = vpack.c.bf16 %v2619, %v2618
        %s2621 = scalar_lea.vmem [#allocation8], 640
        %v2622 = vld [vmem:[%s2621] sm:$0xff]
        %v2623 = vld [vmem:[%s2621 + $0x8] sm:$0xff]
        %v2624 = vld [vmem:[%s2621 + $0x10] sm:$0xff]
        %v2625 = vld [vmem:[%s2621 + $0x18] sm:$0xff]
        %v2626 = vld [vmem:[%s2621 + $0x20] sm:$0xff]
        %v2627 = vld [vmem:[%s2621 + $0x28] sm:$0xff]
        %v2628 = vld [vmem:[%s2621 + $0x30] sm:$0xff]
        %v2629 = vld [vmem:[%s2621 + $0x38] sm:$0xff]
        %v2630 = vld [vmem:[%s2621 + $0x40] sm:$0xff]
        %v2631 = vld [vmem:[%s2621 + $0x48] sm:$0xff]
        %v2632 = vld [vmem:[%s2621 + $0x50] sm:$0xff]
        %v2633 = vld [vmem:[%s2621 + $0x58] sm:$0xff]
        %v2634 = vld [vmem:[%s2621 + $0x60] sm:$0xff]
        %v2635 = vld [vmem:[%s2621 + $0x68] sm:$0xff]
        %v2636 = vld [vmem:[%s2621 + $0x70] sm:$0xff]
        %v2637 = vld [vmem:[%s2621 + $0x78] sm:$0xff]
        %v2654 = vunpack.c.l.b16 %v2622
        %v2655 = vunpack.c.h.b16 %v2622
        %v2656 = vunpack.c.l.b16 %v2623
        %v2657 = vunpack.c.h.b16 %v2623
        %v2658 = vunpack.c.l.b16 %v2624
        %v2659 = vunpack.c.h.b16 %v2624
        %v2660 = vunpack.c.l.b16 %v2625
        %v2661 = vunpack.c.h.b16 %v2625
        %v2662 = vunpack.c.l.b16 %v2626
        %v2663 = vunpack.c.h.b16 %v2626
        %v2664 = vunpack.c.l.b16 %v2627
        %v2665 = vunpack.c.h.b16 %v2627
        %v2666 = vunpack.c.l.b16 %v2628
        %v2667 = vunpack.c.h.b16 %v2628
        %v2668 = vunpack.c.l.b16 %v2629
        %v2669 = vunpack.c.h.b16 %v2629
        %v2670 = vunpack.c.l.b16 %v2630
        %v2671 = vunpack.c.h.b16 %v2630
        %v2672 = vunpack.c.l.b16 %v2631
        %v2673 = vunpack.c.h.b16 %v2631
        %v2674 = vunpack.c.l.b16 %v2632
        %v2675 = vunpack.c.h.b16 %v2632
        %v2676 = vunpack.c.l.b16 %v2633
        %v2677 = vunpack.c.h.b16 %v2633
        %v2678 = vunpack.c.l.b16 %v2634
        %v2679 = vunpack.c.h.b16 %v2634
        %v2680 = vunpack.c.l.b16 %v2635
        %v2681 = vunpack.c.h.b16 %v2635
        %v2682 = vunpack.c.l.b16 %v2636
        %v2683 = vunpack.c.h.b16 %v2636
        %v2684 = vunpack.c.l.b16 %v2637
        %v2685 = vunpack.c.h.b16 %v2637
        %v2686 = vpack.c.b16 %v2656, %v2654
        %v2687 = vpack.c.b16 %v2657, %v2655
        %v2688 = vpack.c.b16 %v2660, %v2658
        %v2689 = vpack.c.b16 %v2661, %v2659
        %v2690 = vpack.c.b16 %v2664, %v2662
        %v2691 = vpack.c.b16 %v2665, %v2663
        %v2692 = vpack.c.b16 %v2668, %v2666
        %v2693 = vpack.c.b16 %v2669, %v2667
        %v2694 = vpack.c.b16 %v2672, %v2670
        %v2695 = vpack.c.b16 %v2673, %v2671
        %v2696 = vpack.c.b16 %v2676, %v2674
        %v2697 = vpack.c.b16 %v2677, %v2675
        %v2698 = vpack.c.b16 %v2680, %v2678
        %v2699 = vpack.c.b16 %v2681, %v2679
        %v2700 = vpack.c.b16 %v2684, %v2682
        %v2701 = vpack.c.b16 %v2685, %v2683
        %2718 = vmatprep.subr.bf16.mxu0 %v2701
        %2719 = vmatpush1.bf16.msra.mxu0 %v2700
        %2720 = vmatprep.subr.bf16.mxu0 %v2699
        %2721 = vmatpush1.bf16.msra.mxu0 %v2698
        %2722 = vmatprep.subr.bf16.mxu0 %v2697
        %2723 = vmatpush1.bf16.msra.mxu0 %v2696
        %2724 = vmatprep.subr.bf16.mxu0 %v2695
        %2725 = vmatpush1.bf16.msra.mxu0 %v2694
        %2726 = vmatprep.subr.bf16.mxu0 %v2693
        %2727 = vmatpush1.bf16.msra.mxu0 %v2692
        %2728 = vmatprep.subr.bf16.mxu0 %v2691
        %2729 = vmatpush1.bf16.msra.mxu0 %v2690
        %2730 = vmatprep.subr.bf16.mxu0 %v2689
        %2731 = vmatpush1.bf16.msra.mxu0 %v2688
        %2732 = vmatprep.subr.bf16.mxu0 %v2687
        %2733 = vmatpush1.bf16.msra.mxu0 %v2686
        %2734 = vmatprep.subr.bf16.mxu0 0
        %2735 = vmatpush2.bf16.msra.mxu0 0
        %2736 = vmatprep.subr.bf16.mxu0 0
        %2737 = vmatpush2.bf16.msra.mxu0 0
        %2738 = vmatprep.subr.bf16.mxu0 0
        %2739 = vmatpush2.bf16.msra.mxu0 0
        %2740 = vmatprep.subr.bf16.mxu0 0
        %2741 = vmatpush2.bf16.msra.mxu0 0
        %2742 = vmatprep.subr.bf16.mxu0 0
        %2743 = vmatpush2.bf16.msra.mxu0 0
        %2744 = vmatprep.subr.bf16.mxu0 0
        %2745 = vmatpush2.bf16.msra.mxu0 0
        %2746 = vmatprep.subr.bf16.mxu0 0
        %2747 = vmatpush2.bf16.msra.mxu0 0
        %2748 = vmatprep.subr.bf16.mxu0 0
        %2749 = vmatpush2.bf16.msra.mxu0 0
        %2750 = vmatprep.mubr.bf16.mxu0 0
        %2751 = vmatmul.mubr.bf16.gmra.mxu0 %v2620
        %v2752 = vpop.f32.mrf.mxu0
        %v2753 = vadd.f32 0.0, %v2752
        %v2754 = vpop.f32.mrf.mxu0
        %v2755 = vadd.f32 0.0, %v2754
        %v2756 = vpop.f32.mrf.mxu0
        %v2757 = vadd.f32 0.0, %v2756
        %v2758 = vpop.f32.mrf.mxu0
        %v2759 = vadd.f32 0.0, %v2758
        %2760 = vdwg.mxu0
        %v2761 = vadd.f32 %v2614, %v2753
        %v2762 = vadd.f32 %v2615, %v2755
        %v2763 = vadd.f32 %v2616, %v2757
        %v2764 = vadd.f32 %v2617, %v2759
        %v2765 = vld [vmem:[#allocation3 + $0x6] sm:$0xff]
        %v2766 = vld [vmem:[#allocation3 + $0xe] sm:$0xff]
        %v2767 = vpack.c.bf16 %v2766, %v2765
        %s2768 = scalar_lea.vmem [#allocation8], 768
        %v2769 = vld [vmem:[%s2768] sm:$0xff]
        %v2770 = vld [vmem:[%s2768 + $0x8] sm:$0xff]
        %v2771 = vld [vmem:[%s2768 + $0x10] sm:$0xff]
        %v2772 = vld [vmem:[%s2768 + $0x18] sm:$0xff]
        %v2773 = vld [vmem:[%s2768 + $0x20] sm:$0xff]
        %v2774 = vld [vmem:[%s2768 + $0x28] sm:$0xff]
        %v2775 = vld [vmem:[%s2768 + $0x30] sm:$0xff]
        %v2776 = vld [vmem:[%s2768 + $0x38] sm:$0xff]
        %v2777 = vld [vmem:[%s2768 + $0x40] sm:$0xff]
        %v2778 = vld [vmem:[%s2768 + $0x48] sm:$0xff]
        %v2779 = vld [vmem:[%s2768 + $0x50] sm:$0xff]
        %v2780 = vld [vmem:[%s2768 + $0x58] sm:$0xff]
        %v2781 = vld [vmem:[%s2768 + $0x60] sm:$0xff]
        %v2782 = vld [vmem:[%s2768 + $0x68] sm:$0xff]
        %v2783 = vld [vmem:[%s2768 + $0x70] sm:$0xff]
        %v2784 = vld [vmem:[%s2768 + $0x78] sm:$0xff]
        %v2801 = vunpack.c.l.b16 %v2769
        %v2802 = vunpack.c.h.b16 %v2769
        %v2803 = vunpack.c.l.b16 %v2770
        %v2804 = vunpack.c.h.b16 %v2770
        %v2805 = vunpack.c.l.b16 %v2771
        %v2806 = vunpack.c.h.b16 %v2771
        %v2807 = vunpack.c.l.b16 %v2772
        %v2808 = vunpack.c.h.b16 %v2772
        %v2809 = vunpack.c.l.b16 %v2773
        %v2810 = vunpack.c.h.b16 %v2773
        %v2811 = vunpack.c.l.b16 %v2774
        %v2812 = vunpack.c.h.b16 %v2774
        %v2813 = vunpack.c.l.b16 %v2775
        %v2814 = vunpack.c.h.b16 %v2775
        %v2815 = vunpack.c.l.b16 %v2776
        %v2816 = vunpack.c.h.b16 %v2776
        %v2817 = vunpack.c.l.b16 %v2777
        %v2818 = vunpack.c.h.b16 %v2777
        %v2819 = vunpack.c.l.b16 %v2778
        %v2820 = vunpack.c.h.b16 %v2778
        %v2821 = vunpack.c.l.b16 %v2779
        %v2822 = vunpack.c.h.b16 %v2779
        %v2823 = vunpack.c.l.b16 %v2780
        %v2824 = vunpack.c.h.b16 %v2780
        %v2825 = vunpack.c.l.b16 %v2781
        %v2826 = vunpack.c.h.b16 %v2781
        %v2827 = vunpack.c.l.b16 %v2782
        %v2828 = vunpack.c.h.b16 %v2782
        %v2829 = vunpack.c.l.b16 %v2783
        %v2830 = vunpack.c.h.b16 %v2783
        %v2831 = vunpack.c.l.b16 %v2784
        %v2832 = vunpack.c.h.b16 %v2784
        %v2833 = vpack.c.b16 %v2803, %v2801
        %v2834 = vpack.c.b16 %v2804, %v2802
        %v2835 = vpack.c.b16 %v2807, %v2805
        %v2836 = vpack.c.b16 %v2808, %v2806
        %v2837 = vpack.c.b16 %v2811, %v2809
        %v2838 = vpack.c.b16 %v2812, %v2810
        %v2839 = vpack.c.b16 %v2815, %v2813
        %v2840 = vpack.c.b16 %v2816, %v2814
        %v2841 = vpack.c.b16 %v2819, %v2817
        %v2842 = vpack.c.b16 %v2820, %v2818
        %v2843 = vpack.c.b16 %v2823, %v2821
        %v2844 = vpack.c.b16 %v2824, %v2822
        %v2845 = vpack.c.b16 %v2827, %v2825
        %v2846 = vpack.c.b16 %v2828, %v2826
        %v2847 = vpack.c.b16 %v2831, %v2829
        %v2848 = vpack.c.b16 %v2832, %v2830
        %2865 = vmatprep.subr.bf16.mxu0 %v2848
        %2866 = vmatpush1.bf16.msra.mxu0 %v2847
        %2867 = vmatprep.subr.bf16.mxu0 %v2846
        %2868 = vmatpush1.bf16.msra.mxu0 %v2845
        %2869 = vmatprep.subr.bf16.mxu0 %v2844
        %2870 = vmatpush1.bf16.msra.mxu0 %v2843
        %2871 = vmatprep.subr.bf16.mxu0 %v2842
        %2872 = vmatpush1.bf16.msra.mxu0 %v2841
        %2873 = vmatprep.subr.bf16.mxu0 %v2840
        %2874 = vmatpush1.bf16.msra.mxu0 %v2839
        %2875 = vmatprep.subr.bf16.mxu0 %v2838
        %2876 = vmatpush1.bf16.msra.mxu0 %v2837
        %2877 = vmatprep.subr.bf16.mxu0 %v2836
        %2878 = vmatpush1.bf16.msra.mxu0 %v2835
        %2879 = vmatprep.subr.bf16.mxu0 %v2834
        %2880 = vmatpush1.bf16.msra.mxu0 %v2833
        %2881 = vmatprep.subr.bf16.mxu0 0
        %2882 = vmatpush2.bf16.msra.mxu0 0
        %2883 = vmatprep.subr.bf16.mxu0 0
        %2884 = vmatpush2.bf16.msra.mxu0 0
        %2885 = vmatprep.subr.bf16.mxu0 0
        %2886 = vmatpush2.bf16.msra.mxu0 0
        %2887 = vmatprep.subr.bf16.mxu0 0
        %2888 = vmatpush2.bf16.msra.mxu0 0
        %2889 = vmatprep.subr.bf16.mxu0 0
        %2890 = vmatpush2.bf16.msra.mxu0 0
        %2891 = vmatprep.subr.bf16.mxu0 0
        %2892 = vmatpush2.bf16.msra.mxu0 0
        %2893 = vmatprep.subr.bf16.mxu0 0
        %2894 = vmatpush2.bf16.msra.mxu0 0
        %2895 = vmatprep.subr.bf16.mxu0 0
        %2896 = vmatpush2.bf16.msra.mxu0 0
        %2897 = vmatprep.mubr.bf16.mxu0 0
        %2898 = vmatmul.mubr.bf16.gmra.mxu0 %v2767
        %v2899 = vpop.f32.mrf.mxu0
        %v2900 = vadd.f32 0.0, %v2899
        %v2901 = vpop.f32.mrf.mxu0
        %v2902 = vadd.f32 0.0, %v2901
        %v2903 = vpop.f32.mrf.mxu0
        %v2904 = vadd.f32 0.0, %v2903
        %v2905 = vpop.f32.mrf.mxu0
        %v2906 = vadd.f32 0.0, %v2905
        %2907 = vdwg.mxu0
        %v2908 = vadd.f32 %v2761, %v2900
        %v2909 = vadd.f32 %v2762, %v2902
        %v2910 = vadd.f32 %v2763, %v2904
        %v2911 = vadd.f32 %v2764, %v2906
        %v2912 = vld [vmem:[#allocation3 + $0x7] sm:$0xff]
        %v2913 = vld [vmem:[#allocation3 + $0xf] sm:$0xff]
        %v2914 = vpack.c.bf16 %v2913, %v2912
        %s2915 = scalar_lea.vmem [#allocation8], 896
        %v2916 = vld [vmem:[%s2915] sm:$0xff]
        %v2917 = vld [vmem:[%s2915 + $0x8] sm:$0xff]
        %v2918 = vld [vmem:[%s2915 + $0x10] sm:$0xff]
        %v2919 = vld [vmem:[%s2915 + $0x18] sm:$0xff]
        %v2920 = vld [vmem:[%s2915 + $0x20] sm:$0xff]
        %v2921 = vld [vmem:[%s2915 + $0x28] sm:$0xff]
        %v2922 = vld [vmem:[%s2915 + $0x30] sm:$0xff]
        %v2923 = vld [vmem:[%s2915 + $0x38] sm:$0xff]
        %v2924 = vld [vmem:[%s2915 + $0x40] sm:$0xff]
        %v2925 = vld [vmem:[%s2915 + $0x48] sm:$0xff]
        %v2926 = vld [vmem:[%s2915 + $0x50] sm:$0xff]
        %v2927 = vld [vmem:[%s2915 + $0x58] sm:$0xff]
        %v2928 = vld [vmem:[%s2915 + $0x60] sm:$0xff]
        %v2929 = vld [vmem:[%s2915 + $0x68] sm:$0xff]
        %v2930 = vld [vmem:[%s2915 + $0x70] sm:$0xff]
        %v2931 = vld [vmem:[%s2915 + $0x78] sm:$0xff]
        %v2948 = vunpack.c.l.b16 %v2916
        %v2949 = vunpack.c.h.b16 %v2916
        %v2950 = vunpack.c.l.b16 %v2917
        %v2951 = vunpack.c.h.b16 %v2917
        %v2952 = vunpack.c.l.b16 %v2918
        %v2953 = vunpack.c.h.b16 %v2918
        %v2954 = vunpack.c.l.b16 %v2919
        %v2955 = vunpack.c.h.b16 %v2919
        %v2956 = vunpack.c.l.b16 %v2920
        %v2957 = vunpack.c.h.b16 %v2920
        %v2958 = vunpack.c.l.b16 %v2921
        %v2959 = vunpack.c.h.b16 %v2921
        %v2960 = vunpack.c.l.b16 %v2922
        %v2961 = vunpack.c.h.b16 %v2922
        %v2962 = vunpack.c.l.b16 %v2923
        %v2963 = vunpack.c.h.b16 %v2923
        %v2964 = vunpack.c.l.b16 %v2924
        %v2965 = vunpack.c.h.b16 %v2924
        %v2966 = vunpack.c.l.b16 %v2925
        %v2967 = vunpack.c.h.b16 %v2925
        %v2968 = vunpack.c.l.b16 %v2926
        %v2969 = vunpack.c.h.b16 %v2926
        %v2970 = vunpack.c.l.b16 %v2927
        %v2971 = vunpack.c.h.b16 %v2927
        %v2972 = vunpack.c.l.b16 %v2928
        %v2973 = vunpack.c.h.b16 %v2928
        %v2974 = vunpack.c.l.b16 %v2929
        %v2975 = vunpack.c.h.b16 %v2929
        %v2976 = vunpack.c.l.b16 %v2930
        %v2977 = vunpack.c.h.b16 %v2930
        %v2978 = vunpack.c.l.b16 %v2931
        %v2979 = vunpack.c.h.b16 %v2931
        %v2980 = vpack.c.b16 %v2950, %v2948
        %v2981 = vpack.c.b16 %v2951, %v2949
        %v2982 = vpack.c.b16 %v2954, %v2952
        %v2983 = vpack.c.b16 %v2955, %v2953
        %v2984 = vpack.c.b16 %v2958, %v2956
        %v2985 = vpack.c.b16 %v2959, %v2957
        %v2986 = vpack.c.b16 %v2962, %v2960
        %v2987 = vpack.c.b16 %v2963, %v2961
        %v2988 = vpack.c.b16 %v2966, %v2964
        %v2989 = vpack.c.b16 %v2967, %v2965
        %v2990 = vpack.c.b16 %v2970, %v2968
        %v2991 = vpack.c.b16 %v2971, %v2969
        %v2992 = vpack.c.b16 %v2974, %v2972
        %v2993 = vpack.c.b16 %v2975, %v2973
        %v2994 = vpack.c.b16 %v2978, %v2976
        %v2995 = vpack.c.b16 %v2979, %v2977
        %3012 = vmatprep.subr.bf16.mxu0 %v2995
        %3013 = vmatpush1.bf16.msra.mxu0 %v2994
        %3014 = vmatprep.subr.bf16.mxu0 %v2993
        %3015 = vmatpush1.bf16.msra.mxu0 %v2992
        %3016 = vmatprep.subr.bf16.mxu0 %v2991
        %3017 = vmatpush1.bf16.msra.mxu0 %v2990
        %3018 = vmatprep.subr.bf16.mxu0 %v2989
        %3019 = vmatpush1.bf16.msra.mxu0 %v2988
        %3020 = vmatprep.subr.bf16.mxu0 %v2987
        %3021 = vmatpush1.bf16.msra.mxu0 %v2986
        %3022 = vmatprep.subr.bf16.mxu0 %v2985
        %3023 = vmatpush1.bf16.msra.mxu0 %v2984
        %3024 = vmatprep.subr.bf16.mxu0 %v2983
        %3025 = vmatpush1.bf16.msra.mxu0 %v2982
        %3026 = vmatprep.subr.bf16.mxu0 %v2981
        %3027 = vmatpush1.bf16.msra.mxu0 %v2980
        %3028 = vmatprep.subr.bf16.mxu0 0
        %3029 = vmatpush2.bf16.msra.mxu0 0
        %3030 = vmatprep.subr.bf16.mxu0 0
        %3031 = vmatpush2.bf16.msra.mxu0 0
        %3032 = vmatprep.subr.bf16.mxu0 0
        %3033 = vmatpush2.bf16.msra.mxu0 0
        %3034 = vmatprep.subr.bf16.mxu0 0
        %3035 = vmatpush2.bf16.msra.mxu0 0
        %3036 = vmatprep.subr.bf16.mxu0 0
        %3037 = vmatpush2.bf16.msra.mxu0 0
        %3038 = vmatprep.subr.bf16.mxu0 0
        %3039 = vmatpush2.bf16.msra.mxu0 0
        %3040 = vmatprep.subr.bf16.mxu0 0
        %3041 = vmatpush2.bf16.msra.mxu0 0
        %3042 = vmatprep.subr.bf16.mxu0 0
        %3043 = vmatpush2.bf16.msra.mxu0 0
        %3044 = vmatprep.mubr.bf16.mxu0 0
        %3045 = vmatmul.mubr.bf16.gmra.mxu0 %v2914
        %v3046 = vpop.f32.mrf.mxu0
        %v3047 = vadd.f32 0.0, %v3046
        %v3048 = vpop.f32.mrf.mxu0
        %v3049 = vadd.f32 0.0, %v3048
        %v3050 = vpop.f32.mrf.mxu0
        %v3051 = vadd.f32 0.0, %v3050
        %v3052 = vpop.f32.mrf.mxu0
        %v3053 = vadd.f32 0.0, %v3052
        %3054 = vdwg.mxu0
        %v3055 = vadd.f32 %v2908, %v3047
        %v3056 = vadd.f32 %v2909, %v3049
        %v3057 = vadd.f32 %v2910, %v3051
        %v3058 = vadd.f32 %v2911, %v3053
        %v3059 = vld [vmem:[#allocation3 + $0x8] sm:$0xff]
        %v3060 = vld [vmem:[#allocation3 + $0x10] sm:$0xff]
        %v3061 = vpack.c.bf16 %v3060, %v3059
        %s3062 = scalar_lea.vmem [#allocation8], 1024
        %v3063 = vld [vmem:[%s3062] sm:$0xff]
        %v3064 = vld [vmem:[%s3062 + $0x8] sm:$0xff]
        %v3065 = vld [vmem:[%s3062 + $0x10] sm:$0xff]
        %v3066 = vld [vmem:[%s3062 + $0x18] sm:$0xff]
        %v3067 = vld [vmem:[%s3062 + $0x20] sm:$0xff]
        %v3068 = vld [vmem:[%s3062 + $0x28] sm:$0xff]
        %v3069 = vld [vmem:[%s3062 + $0x30] sm:$0xff]
        %v3070 = vld [vmem:[%s3062 + $0x38] sm:$0xff]
        %v3071 = vld [vmem:[%s3062 + $0x40] sm:$0xff]
        %v3072 = vld [vmem:[%s3062 + $0x48] sm:$0xff]
        %v3073 = vld [vmem:[%s3062 + $0x50] sm:$0xff]
        %v3074 = vld [vmem:[%s3062 + $0x58] sm:$0xff]
        %v3075 = vld [vmem:[%s3062 + $0x60] sm:$0xff]
        %v3076 = vld [vmem:[%s3062 + $0x68] sm:$0xff]
        %v3077 = vld [vmem:[%s3062 + $0x70] sm:$0xff]
        %v3078 = vld [vmem:[%s3062 + $0x78] sm:$0xff]
        %v3095 = vunpack.c.l.b16 %v3063
        %v3096 = vunpack.c.h.b16 %v3063
        %v3097 = vunpack.c.l.b16 %v3064
        %v3098 = vunpack.c.h.b16 %v3064
        %v3099 = vunpack.c.l.b16 %v3065
        %v3100 = vunpack.c.h.b16 %v3065
        %v3101 = vunpack.c.l.b16 %v3066
        %v3102 = vunpack.c.h.b16 %v3066
        %v3103 = vunpack.c.l.b16 %v3067
        %v3104 = vunpack.c.h.b16 %v3067
        %v3105 = vunpack.c.l.b16 %v3068
        %v3106 = vunpack.c.h.b16 %v3068
        %v3107 = vunpack.c.l.b16 %v3069
        %v3108 = vunpack.c.h.b16 %v3069
        %v3109 = vunpack.c.l.b16 %v3070
        %v3110 = vunpack.c.h.b16 %v3070
        %v3111 = vunpack.c.l.b16 %v3071
        %v3112 = vunpack.c.h.b16 %v3071
        %v3113 = vunpack.c.l.b16 %v3072
        %v3114 = vunpack.c.h.b16 %v3072
        %v3115 = vunpack.c.l.b16 %v3073
        %v3116 = vunpack.c.h.b16 %v3073
        %v3117 = vunpack.c.l.b16 %v3074
        %v3118 = vunpack.c.h.b16 %v3074
        %v3119 = vunpack.c.l.b16 %v3075
        %v3120 = vunpack.c.h.b16 %v3075
        %v3121 = vunpack.c.l.b16 %v3076
        %v3122 = vunpack.c.h.b16 %v3076
        %v3123 = vunpack.c.l.b16 %v3077
        %v3124 = vunpack.c.h.b16 %v3077
        %v3125 = vunpack.c.l.b16 %v3078
        %v3126 = vunpack.c.h.b16 %v3078
        %v3127 = vpack.c.b16 %v3097, %v3095
        %v3128 = vpack.c.b16 %v3098, %v3096
        %v3129 = vpack.c.b16 %v3101, %v3099
        %v3130 = vpack.c.b16 %v3102, %v3100
        %v3131 = vpack.c.b16 %v3105, %v3103
        %v3132 = vpack.c.b16 %v3106, %v3104
        %v3133 = vpack.c.b16 %v3109, %v3107
        %v3134 = vpack.c.b16 %v3110, %v3108
        %v3135 = vpack.c.b16 %v3113, %v3111
        %v3136 = vpack.c.b16 %v3114, %v3112
        %v3137 = vpack.c.b16 %v3117, %v3115
        %v3138 = vpack.c.b16 %v3118, %v3116
        %v3139 = vpack.c.b16 %v3121, %v3119
        %v3140 = vpack.c.b16 %v3122, %v3120
        %v3141 = vpack.c.b16 %v3125, %v3123
        %v3142 = vpack.c.b16 %v3126, %v3124
        %3159 = vmatprep.subr.bf16.mxu0 %v3142
        %3160 = vmatpush1.bf16.msra.mxu0 %v3141
        %3161 = vmatprep.subr.bf16.mxu0 %v3140
        %3162 = vmatpush1.bf16.msra.mxu0 %v3139
        %3163 = vmatprep.subr.bf16.mxu0 %v3138
        %3164 = vmatpush1.bf16.msra.mxu0 %v3137
        %3165 = vmatprep.subr.bf16.mxu0 %v3136
        %3166 = vmatpush1.bf16.msra.mxu0 %v3135
        %3167 = vmatprep.subr.bf16.mxu0 %v3134
        %3168 = vmatpush1.bf16.msra.mxu0 %v3133
        %3169 = vmatprep.subr.bf16.mxu0 %v3132
        %3170 = vmatpush1.bf16.msra.mxu0 %v3131
        %3171 = vmatprep.subr.bf16.mxu0 %v3130
        %3172 = vmatpush1.bf16.msra.mxu0 %v3129
        %3173 = vmatprep.subr.bf16.mxu0 %v3128
        %3174 = vmatpush1.bf16.msra.mxu0 %v3127
        %3175 = vmatprep.subr.bf16.mxu0 0
        %3176 = vmatpush2.bf16.msra.mxu0 0
        %3177 = vmatprep.subr.bf16.mxu0 0
        %3178 = vmatpush2.bf16.msra.mxu0 0
        %3179 = vmatprep.subr.bf16.mxu0 0
        %3180 = vmatpush2.bf16.msra.mxu0 0
        %3181 = vmatprep.subr.bf16.mxu0 0
        %3182 = vmatpush2.bf16.msra.mxu0 0
        %3183 = vmatprep.subr.bf16.mxu0 0
        %3184 = vmatpush2.bf16.msra.mxu0 0
        %3185 = vmatprep.subr.bf16.mxu0 0
        %3186 = vmatpush2.bf16.msra.mxu0 0
        %3187 = vmatprep.subr.bf16.mxu0 0
        %3188 = vmatpush2.bf16.msra.mxu0 0
        %3189 = vmatprep.subr.bf16.mxu0 0
        %3190 = vmatpush2.bf16.msra.mxu0 0
        %3191 = vmatprep.mubr.bf16.mxu0 0
        %3192 = vmatmul.mubr.bf16.gmra.mxu0 %v3061
        %v3193 = vpop.f32.mrf.mxu0
        %v3194 = vadd.f32 0.0, %v3193
        %v3195 = vpop.f32.mrf.mxu0
        %v3196 = vadd.f32 0.0, %v3195
        %v3197 = vpop.f32.mrf.mxu0
        %v3198 = vadd.f32 0.0, %v3197
        %v3199 = vpop.f32.mrf.mxu0
        %v3200 = vadd.f32 0.0, %v3199
        %3201 = vdwg.mxu0
        %v3202 = vadd.f32 %v3055, %v3194
        %v3203 = vadd.f32 %v3056, %v3196
        %v3204 = vadd.f32 %v3057, %v3198
        %v3205 = vadd.f32 %v3058, %v3200
        %v3206 = vld [vmem:[%s10] sm:$0x3]
        %v3208 = vlaneseq
        %v3209 = vshrl.u32 %v3208, 7
        %v3210 = vsub.s32 0, %v3209
        %v3211 = vrot.slane %v3206, %v3210
        %v3212 = vlaneseq
        %v3213 = vshrl.u32 %v3212, 7
        %v3214 = vsub.s32 1, %v3213
        %v3215 = vrot.slane %v3206, %v3214
        %v3218 = vadd.f32 %v3202, %v3211
        %v3219 = vadd.f32 %v3203, %v3215
        %v3220 = vadd.f32 %v3204, %v3211
        %v3221 = vadd.f32 %v3205, %v3215
        %vm3222 = vcmp.ge.f32.partialorder %v3218, 0.0
        %vm3223 = vcmp.ge.f32.partialorder %v3219, 0.0
        %vm3224 = vcmp.ge.f32.partialorder %v3220, 0.0
        %vm3225 = vcmp.ge.f32.partialorder %v3221, 0.0
        %v3226 = vmul.f32 %v3218, 0.01
        %v3227 = vmul.f32 %v3219, 0.01
        %v3228 = vmul.f32 %v3220, 0.01
        %v3229 = vmul.f32 %v3221, 0.01
        %v3230 = vsel %vm3222, %v3218, %v3226
        %v3231 = vsel %vm3223, %v3219, %v3227
        %v3232 = vsel %vm3224, %v3220, %v3228
        %v3233 = vsel %vm3225, %v3221, %v3229
        %v3234 = vadd.f32 %v3230, %v620
        %v3235 = vadd.f32 %v3231, %v622
        %v3236 = vadd.f32 %v3232, %v624
        %v3237 = vadd.f32 %v3233, %v626
        %v3238 = vld [vmem:[%s11] sm:$0x3]
        %v3240 = vlaneseq
        %v3241 = vshrl.u32 %v3240, 7
        %v3242 = vsub.s32 0, %v3241
        %v3243 = vrot.slane %v3238, %v3242
        %v3244 = vlaneseq
        %v3245 = vshrl.u32 %v3244, 7
        %v3246 = vsub.s32 1, %v3245
        %v3247 = vrot.slane %v3238, %v3246
        %v3250 = vmul.f32 %v3234, %v3243
        %v3251 = vmul.f32 %v3235, %v3247
        %v3252 = vmul.f32 %v3236, %v3243
        %v3253 = vmul.f32 %v3237, %v3247
        %v3254 = vld [vmem:[%s12] sm:$0x3]
        %v3256 = vlaneseq
        %v3257 = vshrl.u32 %v3256, 7
        %v3258 = vsub.s32 0, %v3257
        %v3259 = vrot.slane %v3254, %v3258
        %v3260 = vlaneseq
        %v3261 = vshrl.u32 %v3260, 7
        %v3262 = vsub.s32 1, %v3261
        %v3263 = vrot.slane %v3254, %v3262
        %v3266 = vadd.f32 %v3250, %v3259
        %v3267 = vadd.f32 %v3251, %v3263
        %v3268 = vadd.f32 %v3252, %v3259
        %v3269 = vadd.f32 %v3253, %v3263
        %vm3270 = vcmp.ge.f32.partialorder %v3266, 0.0
        %vm3271 = vcmp.ge.f32.partialorder %v3267, 0.0
        %vm3272 = vcmp.ge.f32.partialorder %v3268, 0.0
        %vm3273 = vcmp.ge.f32.partialorder %v3269, 0.0
        %v3274 = vmul.f32 %v3266, 0.01
        %v3275 = vmul.f32 %v3267, 0.01
        %v3276 = vmul.f32 %v3268, 0.01
        %v3277 = vmul.f32 %v3269, 0.01
        %v3278 = vsel %vm3270, %v3266, %v3274
        %v3279 = vsel %vm3271, %v3267, %v3275
        %v3280 = vsel %vm3272, %v3268, %v3276
        %v3281 = vsel %vm3273, %v3269, %v3277
        %3282 = vst [vmem:[%s484] sm:$0xff] %v3278
        %3283 = vst [vmem:[%s484 + $0x8] sm:$0xff] %v3279
        %3284 = vst [vmem:[%s484 + $0x10] sm:$0xff] %v3280
        %3285 = vst [vmem:[%s484 + $0x18] sm:$0xff] %v3281
        %p3286 = scmp.lt.s32.totalorder %s26, 3
        %s3287 = scalar_select %p3286, %s26, 3
        %s3288 = smul.addr %s3287, 4
        %s3289 = smul.addr %s3288, 8
        %s3290 = scalar_lea.vmem %s13, %s3289
        // Predicated region
        $region85: #{_lambda_.4} parent=71 // pred_check
          %p3291 = pneg %p322
        $region86: #{_lambda_.4} parent=71 // pred_check_branch
          %3293 = sbr.rel (%p3291) target = $region88
        $region87: #{_lambda_.4} parent=71 // pred_region
          _
        $region88: #{_lambda_.4} parent=71 // pred_fallthru
          _
      $region72: #{_lambda_.4} parent=5 // pred_fallthru
        _
      %p3294 = scmp.le.s32.totalorder 2, %s21
      // Predicated region
      $region89: #{_lambda_.4} parent=5 // pred_check
        %p3295 = pneg %p3294
      $region90: #{_lambda_.4} parent=5 // pred_check_branch
        %3297 = sbr.rel (%p3295) target = $region92
      $region91: #{_lambda_.4} parent=5 // pred_region
        %s3298 = ssub.s32 %s21, 2
        // Predicated region
        $region93: #{_lambda_.4} parent=91 // pred_check
          %p3299 = pneg %p328
        $region94: #{_lambda_.4} parent=91 // pred_check_branch
          %3301 = sbr.rel (%p3299) target = $region96
        $region95: #{_lambda_.4} parent=91 // pred_region
          %p3302 = scmp.lt.s32.totalorder %s27, 3
          %s3303 = scalar_select %p3302, %s27, 3
          %s3304 = smul.addr %s3303, 4
          %s3305 = smul.addr %s3304, 8
          %s3306 = scalar_lea.vmem %s13, %s3305
        $region96: #{_lambda_.4} parent=91 // pred_fallthru
          _
      $region92: #{_lambda_.4} parent=5 // pred_fallthru
        _
    $region6: #{_lambda_.4} parent=1 // loop_footer
      %s25 = sadd.s32 1, %s21
    $region7: #{_lambda_.4} parent=1 // loop_footer_branch
      %20 = sbr.rel target = $region3
    $region8: #{_lambda_.4} parent=1 // loop_exit
      _
    %3307 = vsyncpa [#allocation5], 1
    %s3308 = scalar_lea.sflag [#allocation5], 1
    %3309 = vsyncpa %s3308, 1
    %3310 = vsyncpa [#allocation7], 1

</llo_original>
